<compile_context>
chip_gen: v7x
topology: tpu7x:2x2x1
jax: 0.10.0
libtpu: 0.0.40
codegen_flags: <defaults>
</compile_context>

<pallas_src>
import jax
import jax.numpy as jnp
from jax.experimental import pallas as pl
from jax.experimental.pallas import tpu as pltpu


# --------------------------------------------------------------------------- #
# Fused kernel: one grid step = one batch element (196 tokens = 14x14 grid).
# --------------------------------------------------------------------------- #
def _fused_kernel(x_ref, pos_ref, w1_ref, t1_ref, w2_ref, t2_ref,
                  w3_ref, t3_ref, w4_ref, t4_ref, o_ref):
    # pos-emb subtract + CLS-token drop done in VMEM.
    x = (x_ref[...] - pos_ref[...])[0, 1:, :]                       # (196, 768) f32

    # Layer 1: 768 -> cols (p1, 256).  bf16 operands, f32 accumulation on the MXU.
    h1 = jnp.dot(x.astype(jnp.bfloat16), w1_ref[...],
                 preferred_element_type=jnp.float32)
    h1 = jnp.maximum(h1 + t1_ref[...], 0.0)                         # (196, 1024)
    h1b = h1.astype(jnp.bfloat16)

    w2 = w2_ref[...]; w3 = w3_ref[...]; w4 = w4_ref[...]
    t2 = t2_ref[...]; t3 = t3_ref[...]; t4 = t4_ref[...]

    pieces = []
    for p1 in range(4):                              # lane-aligned 256-wide slices
        s = h1b[:, 256 * p1:256 * (p1 + 1)]                          # (196, 256)
        # Layer 2: per-pixel 256 -> cols (p2, 64).
        h2 = jnp.maximum(
            jnp.dot(s, w2, preferred_element_type=jnp.float32) + t2, 0.0)
        # Layer 3: block-diagonal over the 4 p2 positions -> cols (p2, p3, 16).
        h3 = jnp.maximum(
            jnp.dot(h2.astype(jnp.bfloat16), w3,
                    preferred_element_type=jnp.float32) + t3, 0.0)
        # Layer 4: block-diagonal over the 16 (p2,p3) positions -> cols (p2,p3,p4,3).
        y = jnp.dot(h3.astype(jnp.bfloat16), w4,
                    preferred_element_type=jnp.float32) + t4         # (196, 192)
        pieces.append(y)

    y = jnp.concatenate(pieces, axis=-1)             # (196, 768): only real columns
    y = 0.5 * (jnp.tanh(0.5 * y) + 1.0)              # sigmoid, single EUP op/elem
    o_ref[...] = y[None].astype(o_ref.dtype)


# --------------------------------------------------------------------------- #
# Weight packing (BN eval-mode scale folded into columns).
# --------------------------------------------------------------------------- #
def _pack_layer(p, last):
    """(Cin,Cout,2,2) conv-transpose weight -> per-pixel (Cin, 4*Cout) matrix,
    columns ordered (p = 2*ki + kj, co); shift carries bias/BN offset."""
    cout = p["w"].shape[1]
    if not last:
        eps = 1e-5
        s = p["gamma"] / jnp.sqrt(p["var"] + eps)
        t = (p["b"] - p["mean"]) * s + p["beta"]
    else:
        s = jnp.ones((cout,), jnp.float32)
        t = p["b"]
    w = jnp.transpose(p["w"], (0, 2, 3, 1)) * s               # (Cin, 2, 2, Cout)
    wp = w.reshape(w.shape[0], 4 * cout)                      # cols (p, co)
    return wp, jnp.tile(t, 4)


def _block_diag(w, n):
    """n copies of w on the diagonal: (K, M) -> (n*K, n*M)."""
    eye = jnp.eye(n, dtype=w.dtype)
    return jnp.einsum("ab,ij->aibj", eye, w).reshape(n * w.shape[0], n * w.shape[1])


def forward(x, params, pos_emb):
    """x: (B, 197, 768) f32  ->  (B, 3, 224, 224) f32 (NCHW, like PyTorch)."""
    B = x.shape[0]
    w1, t1 = _pack_layer(params[0], last=False)               # (768, 1024), (1024,)
    w2, t2 = _pack_layer(params[1], last=False)               # (256, 256),  (256,)
    w3, t3 = _pack_layer(params[2], last=False)               # (64, 64),    (64,)
    w4, t4 = _pack_layer(params[3], last=True)                # (16, 12),    (12,)
    w3 = _block_diag(w3, 4)                                   # (256, 256): (p2,p3,c3)
    t3 = jnp.tile(t3, 4)
    w4 = _block_diag(w4, 16)                                  # (256, 192): (p2,p3,p4,c)
    t4 = jnp.tile(t4, 16)
    bf = jnp.bfloat16

    out = pl.pallas_call(
        _fused_kernel,
        out_shape=jax.ShapeDtypeStruct((B, 196, 768), jnp.float32),
        grid_spec=pltpu.PrefetchScalarGridSpec(
            num_scalar_prefetch=0,
            grid=(B,),
            in_specs=[
                pl.BlockSpec((1, 197, 768), lambda n: (n, 0, 0)),   # tokens
                pl.BlockSpec((1, 197, 768), lambda n: (0, 0, 0)),   # pos_emb (resident)
                pl.BlockSpec((768, 1024), lambda n: (0, 0)),        # W1 bf16 (resident)
                pl.BlockSpec((1, 1024), lambda n: (0, 0)),          # t1
                pl.BlockSpec((256, 256), lambda n: (0, 0)),         # W2
                pl.BlockSpec((1, 256), lambda n: (0, 0)),           # t2
                pl.BlockSpec((256, 256), lambda n: (0, 0)),         # W3 block-diag x4
                pl.BlockSpec((1, 256), lambda n: (0, 0)),           # t3
                pl.BlockSpec((256, 192), lambda n: (0, 0)),         # W4 block-diag x16
                pl.BlockSpec((1, 192), lambda n: (0, 0)),           # t4
            ],
            out_specs=pl.BlockSpec((1, 196, 768), lambda n: (n, 0, 0)),
        ),
        compiler_params=pltpu.CompilerParams(
            dimension_semantics=("parallel",),
            vmem_limit_bytes=32 << 20,
        ),
    )(x, pos_emb,
      w1.astype(bf), t1.reshape(1, -1),
      w2.astype(bf), t2.reshape(1, -1),
      w3.astype(bf), t3.reshape(1, -1),
      w4.astype(bf), t4.reshape(1, -1))

    # Kernel output columns are (ki1,kj1, ki2,kj2, ki3,kj3, ki4,kj4, c):
    # H = 16*i0 + 8*ki1 + 4*ki2 + 2*ki3 + ki4 ;  W analogously with *j.
    y = out.reshape(B, 14, 14, 2, 2, 2, 2, 2, 2, 2, 2, 3)
    y = jnp.transpose(y, (0, 11, 1, 3, 5, 7, 9, 2, 4, 6, 8, 10))
    return y.reshape(B, 3, 224, 224)                          # NCHW like PyTorch


# --------------------------------------------------------------------------- #
# Params + pure-JAX (XLA) reference.
# --------------------------------------------------------------------------- #
def init_params(key):
    """Deterministic init mirroring the module's __init__ shapes."""
    dims = [(768, 256), (256, 64), (64, 16), (16, 3)]
    params = []
    for cin, cout in dims:
        key, kw, kb = jax.random.split(key, 3)
        bound = 1.0 / jnp.sqrt(cin * 2.0 * 2.0)
        w = jax.random.uniform(kw, (cin, cout, 2, 2), jnp.float32, -bound, bound)
        b = jax.random.uniform(kb, (cout,), jnp.float32, -bound, bound)
        params.append(dict(
            w=w, b=b,
            gamma=jnp.ones((cout,), jnp.float32),
            beta=jnp.zeros((cout,), jnp.float32),
            mean=jnp.zeros((cout,), jnp.float32),
            var=jnp.ones((cout,), jnp.float32),
        ))
    key, kp = jax.random.split(key)
    pos_emb = 0.02 * jax.random.normal(kp, (1, 197, 768), jnp.float32)
    return params, pos_emb


def forward_reference(x, params, pos_emb):
    """Pure-JAX (XLA) reference: identical math via einsum, no Pallas."""
    B = x.shape[0]
    x = (x - pos_emb)[:, 1:, :]
    h = x.reshape(B, 14, 14, 768)
    H = W = 14
    for li, p in enumerate(params):
        last = li == len(params) - 1
        cout = p["w"].shape[1]
        y = jnp.einsum("nijc,cokl->nijklo", h, p["w"],
                       precision=jax.lax.Precision.HIGHEST) + p["b"]
        if not last:
            eps = 1e-5
            y = (y - p["mean"]) / jnp.sqrt(p["var"] + eps) * p["gamma"] + p["beta"]
            y = jnp.maximum(y, 0.0)
        else:
            y = jax.nn.sigmoid(y)
        y = jnp.transpose(y, (0, 1, 3, 2, 4, 5)).reshape(B, 2 * H, 2 * W, cout)
        h, H, W = y, 2 * H, 2 * W
    return jnp.transpose(h, (0, 3, 1, 2))


if __name__ == "__main__":
    key = jax.random.PRNGKey(0)
    key, kx, kp = jax.random.split(key, 3)
    params, pos_emb = init_params(kp)

    # Input implied by the module: ViT tokens (B, 197, 768). Small batch.
    x = jax.random.normal(kx, (2, 197, 768), jnp.float32)

    out = jax.jit(forward)(x, params, pos_emb)
    out = jax.block_until_ready(out)
    assert out.shape == (2, 3, 224, 224), out.shape

    ref = jax.jit(forward_reference)(x, params, pos_emb)
    ref = jax.block_until_ready(ref)
    err = float(jnp.max(jnp.abs(out - ref)))
    assert jnp.allclose(out, ref, rtol=2e-3, atol=2e-3), err

    print("KERNEL_OK")
</pallas_src>

<mosaic_0001>
module attributes {stable_mosaic.version = 11 : i64} {
  func.func @_fused_kernel(%arg0: i32, %arg1: memref<1x197x768xf32, #tpu.memory_space<vmem>>, %arg2: memref<1x197x768xf32, #tpu.memory_space<vmem>>, %arg3: memref<768x1024xbf16, #tpu.memory_space<vmem>>, %arg4: memref<1x1024xf32, #tpu.memory_space<vmem>>, %arg5: memref<256x256xbf16, #tpu.memory_space<vmem>>, %arg6: memref<1x256xf32, #tpu.memory_space<vmem>>, %arg7: memref<256x256xbf16, #tpu.memory_space<vmem>>, %arg8: memref<1x256xf32, #tpu.memory_space<vmem>>, %arg9: memref<256x192xbf16, #tpu.memory_space<vmem>>, %arg10: memref<1x192xf32, #tpu.memory_space<vmem>>, %arg11: memref<1x196x768xf32, #tpu.memory_space<vmem>>) attributes {dimension_semantics = [#tpu.dimension_semantics<parallel>], iteration_bounds = array<i64: 2>, scalar_prefetch = 0 : i64, scratch_operands = 0 : i64, tpu.core_type = #tpu.core_type<tc>, window_params = [{transform_indices = @transform_0, window_bounds = array<i64: 1, 197, 768>}, {pipeline_mode = #tpu.pipeline_mode<synchronous>, transform_indices = @transform_1, window_bounds = array<i64: 1, 197, 768>}, {pipeline_mode = #tpu.pipeline_mode<synchronous>, transform_indices = @transform_2, window_bounds = array<i64: 768, 1024>}, {pipeline_mode = #tpu.pipeline_mode<synchronous>, transform_indices = @transform_3, window_bounds = array<i64: 1, 1024>}, {pipeline_mode = #tpu.pipeline_mode<synchronous>, transform_indices = @transform_4, window_bounds = array<i64: 256, 256>}, {pipeline_mode = #tpu.pipeline_mode<synchronous>, transform_indices = @transform_5, window_bounds = array<i64: 1, 256>}, {pipeline_mode = #tpu.pipeline_mode<synchronous>, transform_indices = @transform_6, window_bounds = array<i64: 256, 256>}, {pipeline_mode = #tpu.pipeline_mode<synchronous>, transform_indices = @transform_7, window_bounds = array<i64: 1, 256>}, {pipeline_mode = #tpu.pipeline_mode<synchronous>, transform_indices = @transform_8, window_bounds = array<i64: 256, 192>}, {pipeline_mode = #tpu.pipeline_mode<synchronous>, transform_indices = @transform_9, window_bounds = array<i64: 1, 192>}, {transform_indices = @transform_10, window_bounds = array<i64: 1, 196, 768>}]} {
    %c0 = arith.constant 0 : index
    %c0_0 = arith.constant 0 : index
    %c0_1 = arith.constant 0 : index
    %0 = vector.load %arg1[%c0, %c0_0, %c0_1] : memref<1x197x768xf32, #tpu.memory_space<vmem>>, vector<1x197x768xf32>
    %c0_2 = arith.constant 0 : index
    %c0_3 = arith.constant 0 : index
    %c0_4 = arith.constant 0 : index
    %1 = vector.load %arg2[%c0_2, %c0_3, %c0_4] : memref<1x197x768xf32, #tpu.memory_space<vmem>>, vector<1x197x768xf32>
    %2 = arith.subf %0, %1 : vector<1x197x768xf32>
    %3 = vector.extract_strided_slice %2 {offsets = [0, 1, 0], sizes = [1, 196, 768], strides = [1, 1, 1]} : vector<1x197x768xf32> to vector<1x196x768xf32>
    %4 = vector.shape_cast %3 : vector<1x196x768xf32> to vector<196x768xf32>
    %5 = arith.truncf %4 : vector<196x768xf32> to vector<196x768xbf16>
    %c0_5 = arith.constant 0 : index
    %c0_6 = arith.constant 0 : index
    %6 = vector.load %arg3[%c0_5, %c0_6] : memref<768x1024xbf16, #tpu.memory_space<vmem>>, vector<768x1024xbf16>
    %cst = arith.constant dense<0.000000e+00> : vector<196x1024xf32>
    %7 = tpu.matmul %5, %6, %cst {dimension_numbers = #tpu.dot_dimension_numbers<[1], [0], [0], [1], [0, 0, 1, 1], [], []>} : vector<196x768xbf16>, vector<768x1024xbf16>, vector<196x1024xf32> -> vector<196x1024xf32>
    %c0_7 = arith.constant 0 : index
    %c0_8 = arith.constant 0 : index
    %8 = vector.load %arg4[%c0_7, %c0_8] : memref<1x1024xf32, #tpu.memory_space<vmem>>, vector<1x1024xf32>
    %9 = vector.broadcast %8 : vector<1x1024xf32> to vector<196x1024xf32>
    %10 = arith.addf %7, %9 : vector<196x1024xf32>
    %cst_9 = arith.constant 0.000000e+00 : f32
    %11 = vector.broadcast %cst_9 : f32 to vector<196x1024xf32>
    %12 = arith.maximumf %10, %11 : vector<196x1024xf32>
    %13 = arith.truncf %12 : vector<196x1024xf32> to vector<196x1024xbf16>
    %c0_10 = arith.constant 0 : index
    %c0_11 = arith.constant 0 : index
    %14 = vector.load %arg5[%c0_10, %c0_11] : memref<256x256xbf16, #tpu.memory_space<vmem>>, vector<256x256xbf16>
    %c0_12 = arith.constant 0 : index
    %c0_13 = arith.constant 0 : index
    %15 = vector.load %arg7[%c0_12, %c0_13] : memref<256x256xbf16, #tpu.memory_space<vmem>>, vector<256x256xbf16>
    %c0_14 = arith.constant 0 : index
    %c0_15 = arith.constant 0 : index
    %16 = vector.load %arg9[%c0_14, %c0_15] : memref<256x192xbf16, #tpu.memory_space<vmem>>, vector<256x192xbf16>
    %c0_16 = arith.constant 0 : index
    %c0_17 = arith.constant 0 : index
    %17 = vector.load %arg6[%c0_16, %c0_17] : memref<1x256xf32, #tpu.memory_space<vmem>>, vector<1x256xf32>
    %c0_18 = arith.constant 0 : index
    %c0_19 = arith.constant 0 : index
    %18 = vector.load %arg8[%c0_18, %c0_19] : memref<1x256xf32, #tpu.memory_space<vmem>>, vector<1x256xf32>
    %c0_20 = arith.constant 0 : index
    %c0_21 = arith.constant 0 : index
    %19 = vector.load %arg10[%c0_20, %c0_21] : memref<1x192xf32, #tpu.memory_space<vmem>>, vector<1x192xf32>
    %20 = vector.extract_strided_slice %13 {offsets = [0, 0], sizes = [196, 256], strides = [1, 1]} : vector<196x1024xbf16> to vector<196x256xbf16>
    %cst_22 = arith.constant dense<0.000000e+00> : vector<196x256xf32>
    %21 = tpu.matmul %20, %14, %cst_22 {dimension_numbers = #tpu.dot_dimension_numbers<[1], [0], [0], [1], [0, 0, 1, 1], [], []>} : vector<196x256xbf16>, vector<256x256xbf16>, vector<196x256xf32> -> vector<196x256xf32>
    %22 = vector.broadcast %17 : vector<1x256xf32> to vector<196x256xf32>
    %23 = arith.addf %21, %22 : vector<196x256xf32>
    %cst_23 = arith.constant 0.000000e+00 : f32
    %24 = vector.broadcast %cst_23 : f32 to vector<196x256xf32>
    %25 = arith.maximumf %23, %24 : vector<196x256xf32>
    %26 = arith.truncf %25 : vector<196x256xf32> to vector<196x256xbf16>
    %cst_24 = arith.constant dense<0.000000e+00> : vector<196x256xf32>
    %27 = tpu.matmul %26, %15, %cst_24 {dimension_numbers = #tpu.dot_dimension_numbers<[1], [0], [0], [1], [0, 0, 1, 1], [], []>} : vector<196x256xbf16>, vector<256x256xbf16>, vector<196x256xf32> -> vector<196x256xf32>
    %28 = vector.broadcast %18 : vector<1x256xf32> to vector<196x256xf32>
    %29 = arith.addf %27, %28 : vector<196x256xf32>
    %cst_25 = arith.constant 0.000000e+00 : f32
    %30 = vector.broadcast %cst_25 : f32 to vector<196x256xf32>
    %31 = arith.maximumf %29, %30 : vector<196x256xf32>
    %32 = arith.truncf %31 : vector<196x256xf32> to vector<196x256xbf16>
    %cst_26 = arith.constant dense<0.000000e+00> : vector<196x192xf32>
    %33 = tpu.matmul %32, %16, %cst_26 {dimension_numbers = #tpu.dot_dimension_numbers<[1], [0], [0], [1], [0, 0, 1, 1], [], []>} : vector<196x256xbf16>, vector<256x192xbf16>, vector<196x192xf32> -> vector<196x192xf32>
    %34 = vector.broadcast %19 : vector<1x192xf32> to vector<196x192xf32>
    %35 = arith.addf %33, %34 : vector<196x192xf32>
    %36 = vector.extract_strided_slice %13 {offsets = [0, 256], sizes = [196, 256], strides = [1, 1]} : vector<196x1024xbf16> to vector<196x256xbf16>
    %cst_27 = arith.constant dense<0.000000e+00> : vector<196x256xf32>
    %37 = tpu.matmul %36, %14, %cst_27 {dimension_numbers = #tpu.dot_dimension_numbers<[1], [0], [0], [1], [0, 0, 1, 1], [], []>} : vector<196x256xbf16>, vector<256x256xbf16>, vector<196x256xf32> -> vector<196x256xf32>
    %38 = vector.broadcast %17 : vector<1x256xf32> to vector<196x256xf32>
    %39 = arith.addf %37, %38 : vector<196x256xf32>
    %cst_28 = arith.constant 0.000000e+00 : f32
    %40 = vector.broadcast %cst_28 : f32 to vector<196x256xf32>
    %41 = arith.maximumf %39, %40 : vector<196x256xf32>
    %42 = arith.truncf %41 : vector<196x256xf32> to vector<196x256xbf16>
    %cst_29 = arith.constant dense<0.000000e+00> : vector<196x256xf32>
    %43 = tpu.matmul %42, %15, %cst_29 {dimension_numbers = #tpu.dot_dimension_numbers<[1], [0], [0], [1], [0, 0, 1, 1], [], []>} : vector<196x256xbf16>, vector<256x256xbf16>, vector<196x256xf32> -> vector<196x256xf32>
    %44 = vector.broadcast %18 : vector<1x256xf32> to vector<196x256xf32>
    %45 = arith.addf %43, %44 : vector<196x256xf32>
    %cst_30 = arith.constant 0.000000e+00 : f32
    %46 = vector.broadcast %cst_30 : f32 to vector<196x256xf32>
    %47 = arith.maximumf %45, %46 : vector<196x256xf32>
    %48 = arith.truncf %47 : vector<196x256xf32> to vector<196x256xbf16>
    %cst_31 = arith.constant dense<0.000000e+00> : vector<196x192xf32>
    %49 = tpu.matmul %48, %16, %cst_31 {dimension_numbers = #tpu.dot_dimension_numbers<[1], [0], [0], [1], [0, 0, 1, 1], [], []>} : vector<196x256xbf16>, vector<256x192xbf16>, vector<196x192xf32> -> vector<196x192xf32>
    %50 = vector.broadcast %19 : vector<1x192xf32> to vector<196x192xf32>
    %51 = arith.addf %49, %50 : vector<196x192xf32>
    %52 = vector.extract_strided_slice %13 {offsets = [0, 512], sizes = [196, 256], strides = [1, 1]} : vector<196x1024xbf16> to vector<196x256xbf16>
    %cst_32 = arith.constant dense<0.000000e+00> : vector<196x256xf32>
    %53 = tpu.matmul %52, %14, %cst_32 {dimension_numbers = #tpu.dot_dimension_numbers<[1], [0], [0], [1], [0, 0, 1, 1], [], []>} : vector<196x256xbf16>, vector<256x256xbf16>, vector<196x256xf32> -> vector<196x256xf32>
    %54 = vector.broadcast %17 : vector<1x256xf32> to vector<196x256xf32>
    %55 = arith.addf %53, %54 : vector<196x256xf32>
    %cst_33 = arith.constant 0.000000e+00 : f32
    %56 = vector.broadcast %cst_33 : f32 to vector<196x256xf32>
    %57 = arith.maximumf %55, %56 : vector<196x256xf32>
    %58 = arith.truncf %57 : vector<196x256xf32> to vector<196x256xbf16>
    %cst_34 = arith.constant dense<0.000000e+00> : vector<196x256xf32>
    %59 = tpu.matmul %58, %15, %cst_34 {dimension_numbers = #tpu.dot_dimension_numbers<[1], [0], [0], [1], [0, 0, 1, 1], [], []>} : vector<196x256xbf16>, vector<256x256xbf16>, vector<196x256xf32> -> vector<196x256xf32>
    %60 = vector.broadcast %18 : vector<1x256xf32> to vector<196x256xf32>
    %61 = arith.addf %59, %60 : vector<196x256xf32>
    %cst_35 = arith.constant 0.000000e+00 : f32
    %62 = vector.broadcast %cst_35 : f32 to vector<196x256xf32>
    %63 = arith.maximumf %61, %62 : vector<196x256xf32>
    %64 = arith.truncf %63 : vector<196x256xf32> to vector<196x256xbf16>
    %cst_36 = arith.constant dense<0.000000e+00> : vector<196x192xf32>
    %65 = tpu.matmul %64, %16, %cst_36 {dimension_numbers = #tpu.dot_dimension_numbers<[1], [0], [0], [1], [0, 0, 1, 1], [], []>} : vector<196x256xbf16>, vector<256x192xbf16>, vector<196x192xf32> -> vector<196x192xf32>
    %66 = vector.broadcast %19 : vector<1x192xf32> to vector<196x192xf32>
    %67 = arith.addf %65, %66 : vector<196x192xf32>
    %68 = vector.extract_strided_slice %13 {offsets = [0, 768], sizes = [196, 256], strides = [1, 1]} : vector<196x1024xbf16> to vector<196x256xbf16>
    %cst_37 = arith.constant dense<0.000000e+00> : vector<196x256xf32>
    %69 = tpu.matmul %68, %14, %cst_37 {dimension_numbers = #tpu.dot_dimension_numbers<[1], [0], [0], [1], [0, 0, 1, 1], [], []>} : vector<196x256xbf16>, vector<256x256xbf16>, vector<196x256xf32> -> vector<196x256xf32>
    %70 = vector.broadcast %17 : vector<1x256xf32> to vector<196x256xf32>
    %71 = arith.addf %69, %70 : vector<196x256xf32>
    %cst_38 = arith.constant 0.000000e+00 : f32
    %72 = vector.broadcast %cst_38 : f32 to vector<196x256xf32>
    %73 = arith.maximumf %71, %72 : vector<196x256xf32>
    %74 = arith.truncf %73 : vector<196x256xf32> to vector<196x256xbf16>
    %cst_39 = arith.constant dense<0.000000e+00> : vector<196x256xf32>
    %75 = tpu.matmul %74, %15, %cst_39 {dimension_numbers = #tpu.dot_dimension_numbers<[1], [0], [0], [1], [0, 0, 1, 1], [], []>} : vector<196x256xbf16>, vector<256x256xbf16>, vector<196x256xf32> -> vector<196x256xf32>
    %76 = vector.broadcast %18 : vector<1x256xf32> to vector<196x256xf32>
    %77 = arith.addf %75, %76 : vector<196x256xf32>
    %cst_40 = arith.constant 0.000000e+00 : f32
    %78 = vector.broadcast %cst_40 : f32 to vector<196x256xf32>
    %79 = arith.maximumf %77, %78 : vector<196x256xf32>
    %80 = arith.truncf %79 : vector<196x256xf32> to vector<196x256xbf16>
    %cst_41 = arith.constant dense<0.000000e+00> : vector<196x192xf32>
    %81 = tpu.matmul %80, %16, %cst_41 {dimension_numbers = #tpu.dot_dimension_numbers<[1], [0], [0], [1], [0, 0, 1, 1], [], []>} : vector<196x256xbf16>, vector<256x192xbf16>, vector<196x192xf32> -> vector<196x192xf32>
    %82 = vector.broadcast %19 : vector<1x192xf32> to vector<196x192xf32>
    %83 = arith.addf %81, %82 : vector<196x192xf32>
    %84 = tpu.concatenate %35, %51, %67, %83 in 1 : vector<196x192xf32>, vector<196x192xf32>, vector<196x192xf32>, vector<196x192xf32> -> vector<196x768xf32>
    %cst_42 = arith.constant 5.000000e-01 : f32
    %85 = vector.broadcast %cst_42 : f32 to vector<196x768xf32>
    %86 = arith.mulf %85, %84 : vector<196x768xf32>
    %87 = math.tanh %86 : vector<196x768xf32>
    %cst_43 = arith.constant 1.000000e+00 : f32
    %88 = vector.broadcast %cst_43 : f32 to vector<196x768xf32>
    %89 = arith.addf %87, %88 : vector<196x768xf32>
    %cst_44 = arith.constant 5.000000e-01 : f32
    %90 = vector.broadcast %cst_44 : f32 to vector<196x768xf32>
    %91 = arith.mulf %90, %89 : vector<196x768xf32>
    %92 = vector.shape_cast %91 : vector<196x768xf32> to vector<1x196x768xf32>
    %c0_45 = arith.constant 0 : index
    %c0_46 = arith.constant 0 : index
    %c0_47 = arith.constant 0 : index
    %93 = vector.load %arg11[%c0_45, %c0_46, %c0_47] : memref<1x196x768xf32, #tpu.memory_space<vmem>>, vector<1x196x768xf32>
    tpu.vector_store %arg11[%c0_45, %c0_46, %c0_47], %92 {strides = array<i32>} : memref<1x196x768xf32, #tpu.memory_space<vmem>>, vector<1x196x768xf32>,
    return
  }
  func.func @transform_0(%arg0: i32) -> (i32, i32, i32) {
    %c0_i32 = arith.constant 0 : i32
    %c0_i32_0 = arith.constant 0 : i32
    %c0_i32_1 = arith.constant 0 : i32
    return %arg0, %c0_i32, %c0_i32_0 : i32, i32, i32
  }
  func.func @transform_1(%arg0: i32) -> (i32, i32, i32) {
    %c0_i32 = arith.constant 0 : i32
    %c0_i32_0 = arith.constant 0 : i32
    %c0_i32_1 = arith.constant 0 : i32
    %c0_i32_2 = arith.constant 0 : i32
    return %c0_i32, %c0_i32_0, %c0_i32_1 : i32, i32, i32
  }
  func.func @transform_2(%arg0: i32) -> (i32, i32) {
    %c0_i32 = arith.constant 0 : i32
    %c0_i32_0 = arith.constant 0 : i32
    %c0_i32_1 = arith.constant 0 : i32
    return %c0_i32, %c0_i32_0 : i32, i32
  }
  func.func @transform_3(%arg0: i32) -> (i32, i32) {
    %c0_i32 = arith.constant 0 : i32
    %c0_i32_0 = arith.constant 0 : i32
    %c0_i32_1 = arith.constant 0 : i32
    return %c0_i32, %c0_i32_0 : i32, i32
  }
  func.func @transform_4(%arg0: i32) -> (i32, i32) {
    %c0_i32 = arith.constant 0 : i32
    %c0_i32_0 = arith.constant 0 : i32
    %c0_i32_1 = arith.constant 0 : i32
    return %c0_i32, %c0_i32_0 : i32, i32
  }
  func.func @transform_5(%arg0: i32) -> (i32, i32) {
    %c0_i32 = arith.constant 0 : i32
    %c0_i32_0 = arith.constant 0 : i32
    %c0_i32_1 = arith.constant 0 : i32
    return %c0_i32, %c0_i32_0 : i32, i32
  }
  func.func @transform_6(%arg0: i32) -> (i32, i32) {
    %c0_i32 = arith.constant 0 : i32
    %c0_i32_0 = arith.constant 0 : i32
    %c0_i32_1 = arith.constant 0 : i32
    return %c0_i32, %c0_i32_0 : i32, i32
  }
  func.func @transform_7(%arg0: i32) -> (i32, i32) {
    %c0_i32 = arith.constant 0 : i32
    %c0_i32_0 = arith.constant 0 : i32
    %c0_i32_1 = arith.constant 0 : i32
    return %c0_i32, %c0_i32_0 : i32, i32
  }
  func.func @transform_8(%arg0: i32) -> (i32, i32) {
    %c0_i32 = arith.constant 0 : i32
    %c0_i32_0 = arith.constant 0 : i32
    %c0_i32_1 = arith.constant 0 : i32
    return %c0_i32, %c0_i32_0 : i32, i32
  }
  func.func @transform_9(%arg0: i32) -> (i32, i32) {
    %c0_i32 = arith.constant 0 : i32
    %c0_i32_0 = arith.constant 0 : i32
    %c0_i32_1 = arith.constant 0 : i32
    return %c0_i32, %c0_i32_0 : i32, i32
  }
  func.func @transform_10(%arg0: i32) -> (i32, i32, i32) {
    %c0_i32 = arith.constant 0 : i32
    %c0_i32_0 = arith.constant 0 : i32
    %c0_i32_1 = arith.constant 0 : i32
    return %arg0, %c0_i32, %c0_i32_0 : i32, i32, i32
  }
}

</mosaic_0001>

<llo_original>
// kernel: tile.39
$region0: #{tile.39}
  #allocation0 [shape = 's32[1]{0}', space=sflag, size = 0x4, scoped, tag = 'scoped memory for tile.39']
  %s0 = inlined_call_operand.vmem [shape: f32[16], index: 0, kind: input, shape index: {}]
  %s1 = inlined_call_operand.vmem [shape: f32[4,16], index: 1, kind: output, shape index: {}]
  // Predicated region
  $region2: #{tile.39} parent=0 // pred_check
    _
  $region3: #{tile.39} parent=0 // pred_check_branch
    %3 = sbr.rel (0) target = $region5
  $region4: #{tile.39} parent=0 // pred_region
    _
  $region5: #{tile.39} parent=0 // pred_fallthru
    _
  %v4 = vld [vmem:[%s0] ss:$0 sm:$0xff]
  %5 = vst [vmem:[%s1] sm:$0xf] %v4

// kernel: tile.46
$region0: #{tile.46}
  %s0 = inlined_call_operand.vmem [shape: f32[4,16], index: 0, kind: input, shape index: {}]
  %s1 = inlined_call_operand.vmem [shape: f32[64], index: 1, kind: output, shape index: {}]
  $region1: #{tile.46} parent=0
    #allocation0 [shape = 'u8[4096]{0}', space=vmem, size = 0x1000, scoped, tag = 'scoped mem for output reshape']
    #allocation1 [shape = 'u8[4096]{0}', space=vmem, size = 0x1000, scoped, tag = 'scoped mem for input reshape']
    %s3 = sshllo.u32 0, 4
    %v4 = vld [vmem:[%s0] sm:%s3]
    %5 = vst [vmem:[#allocation1] sm:%s3] %v4
    %v6 = vld [vmem:[#allocation1] sm:$0x1]
    %vm7 = vcmask 130048
    %8 = vst.msk [vmem:[#allocation0] sm:$0x1] %vm7, %v6
    %s9 = scalar_lea.vmem [#allocation1], 3
    %v10 = vld [vmem:[%s9] sm:$0x1]
    %11 = vrot.lane.b32.xlu0 %v10, 48
    %v12 = vpop.permute.xlu0 %11
    %vm13 = vcmask 523648
    %14 = vst.msk [vmem:[#allocation0] sm:$0x1] %vm13, %v12
    %s15 = scalar_lea.vmem [#allocation1], 2
    %v16 = vld [vmem:[%s15] sm:$0x1]
    %17 = vrot.lane.b32.xlu0 %v16, 32
    %v18 = vpop.permute.xlu0 %17
    %vm19 = vcmask 392448
    %20 = vst.msk [vmem:[#allocation0] sm:$0x1] %vm19, %v18
    %s21 = scalar_lea.vmem [#allocation1], 1
    %v22 = vld [vmem:[%s21] sm:$0x1]
    %23 = vrot.lane.b32.xlu0 %v22, 16
    %v24 = vpop.permute.xlu0 %23
    %vm25 = vcmask 261248
    %26 = vst.msk [vmem:[#allocation0] sm:$0x1] %vm25, %v24
    %s28 = sshllo.u32 0, 1
    %v30 = vld [vmem:[#allocation0] sm:%s28]
    %s31 = sshllo.u32 0, 1
    %32 = vst [vmem:[%s1] sm:%s31] %v30

// kernel: tile.47
$region0: #{tile.47}
  #allocation0 [shape = 's32[1]{0}', space=sflag, size = 0x4, scoped, tag = 'scoped memory for tile.47']
  %s0 = inlined_call_operand.vmem [shape: f32[64], index: 0, kind: input, shape index: {}]
  %s1 = inlined_call_operand.vmem [shape: f32[4,64], index: 1, kind: output, shape index: {}]
  // Predicated region
  $region2: #{tile.47} parent=0 // pred_check
    _
  $region3: #{tile.47} parent=0 // pred_check_branch
    %3 = sbr.rel (0) target = $region5
  $region4: #{tile.47} parent=0 // pred_region
    _
  $region5: #{tile.47} parent=0 // pred_fallthru
    _
  %v4 = vld [vmem:[%s0] ss:$0 sm:$0xff]
  %5 = vst [vmem:[%s1] sm:$0xf] %v4

// kernel: tile.54
$region0: #{tile.54}
  %s0 = inlined_call_operand.vmem [shape: f32[4,64], index: 0, kind: input, shape index: {}]
  %s1 = inlined_call_operand.vmem [shape: f32[1,256], index: 1, kind: output, shape index: {}]
  $region1: #{tile.54} parent=0
    #allocation0 [shape = 'u8[8192]{0}', space=vmem, size = 0x2000, scoped, tag = 'scoped mem for output reshape']
    #allocation1 [shape = 'u8[4096]{0}', space=vmem, size = 0x1000, scoped, tag = 'scoped mem for input reshape']
    %s3 = sshllo.u32 0, 4
    %v4 = vld [vmem:[%s0] sm:%s3]
    %5 = vst [vmem:[#allocation1] sm:%s3] %v4
    %s6 = smov 3
    %v7 = vld [vmem:[#allocation1] ss:$2 sm:%s6]
    %vm8 = vcmask 523264
    %9 = vst.msk [vmem:[#allocation0] ss:$8 sm:$0x3] %vm8, %v7
    %s10 = scalar_lea.vmem [#allocation1], 1
    %s11 = smov 3
    %v12 = vld [vmem:[%s10] ss:$2 sm:%s11]
    %13 = vrot.lane.b32.xlu0 %v12, 64
    %v14 = vpop.permute.xlu0 %13
    %vm15 = vcmask 1048064
    %16 = vst.msk [vmem:[#allocation0] ss:$8 sm:$0x3] %vm15, %v14
    %s18 = sshllo.u32 0, 1
    %v20 = vld [vmem:[#allocation0] sm:%s18]
    %s21 = sshllo.u32 0, 1
    %22 = vst [vmem:[%s1] sm:%s21] %v20
    %s23 = scalar_lea.vmem [#allocation0], 8
    %v24 = vld [vmem:[%s23] sm:%s18]
    %s25 = sshllo.u32 0, 1
    %s26 = scalar_lea.vmem %s1, 1
    %27 = vst [vmem:[%s26] sm:%s25] %v24

// kernel: tile.50
$region0: #{tile.50}
  %s0 = inlined_call_operand.vmem [shape: f32[4,3], index: 0, kind: input, shape index: {}]
  %s1 = inlined_call_operand.vmem [shape: f32[12], index: 1, kind: output, shape index: {}]
  $region1: #{tile.50} parent=0
    #allocation0 [shape = 'u8[4096]{0}', space=vmem, size = 0x1000, scoped, tag = 'scoped mem for output reshape']
    #allocation1 [shape = 'u8[4096]{0}', space=vmem, size = 0x1000, scoped, tag = 'scoped mem for input reshape']
    %s3 = sshllo.u32 0, 4
    %v4 = vld [vmem:[%s0] sm:%s3]
    %5 = vst [vmem:[#allocation1] sm:%s3] %v4
    %v6 = vld [vmem:[#allocation1] sm:$0x1]
    %vm7 = vcmask 23552
    %8 = vst.msk [vmem:[#allocation0] sm:$0x1] %vm7, %v6
    %s9 = scalar_lea.vmem [#allocation1], 3
    %v10 = vld [vmem:[%s9] sm:$0x1]
    %11 = vrot.lane.b32.xlu0 %v10, 9
    %v12 = vpop.permute.xlu0 %11
    %vm13 = vcmask 97352
    %14 = vst.msk [vmem:[#allocation0] sm:$0x1] %vm13, %v12
    %s15 = scalar_lea.vmem [#allocation1], 2
    %v16 = vld [vmem:[%s15] sm:$0x1]
    %17 = vrot.lane.b32.xlu0 %v16, 6
    %v18 = vpop.permute.xlu0 %17
    %vm19 = vcmask 72752
    %20 = vst.msk [vmem:[#allocation0] sm:$0x1] %vm19, %v18
    %s21 = scalar_lea.vmem [#allocation1], 1
    %v22 = vld [vmem:[%s21] sm:$0x1]
    %23 = vrot.lane.b32.xlu0 %v22, 3
    %v24 = vpop.permute.xlu0 %23
    %vm25 = vcmask 48152
    %26 = vst.msk [vmem:[#allocation0] sm:$0x1] %vm25, %v24
    %s28 = sshllo.u32 0, 1
    %v30 = vld [vmem:[#allocation0] sm:%s28]
    %s31 = sshllo.u32 0, 1
    %32 = vst [vmem:[%s1] sm:%s31] %v30

// kernel: tile.43
$region0: #{tile.43}
  #allocation2 [shape = 's32[1]{0}', space=sflag, size = 0x4, scoped, tag = 'scoped memory for tile.43']
  %s0 = inlined_call_operand.hbm [shape: f32[3], index: 0, kind: input, shape index: {}]
  %s1 = inlined_call_operand.vmem [shape: f32[4,3], index: 1, kind: output, shape index: {}]
  $region1: #{tile.43} parent=0
    #allocation0 [shape = 'u8[512]{0}', space=vmem, size = 0x400, scoped, tag = 'operand span for operand 0']
    #allocation1 [shape = 's32[1]{0}', space=sflag, size = 0x4, scoped, tag = 'scoped memory for tile.43']
    %2 = vsyncpa [#allocation1], 0
    // Predicated region
    $region2: #{tile.43} parent=1 // pred_check
      _
    $region3: #{tile.43} parent=1 // pred_check_branch
      %4 = sbr.rel (0) target = $region5
    $region4: #{tile.43} parent=1 // pred_region
      %s6 = ssub.s32 16, 16
      %7 = vsyncadd [#allocation1], %s6
      %s9 = sshll.u32 [#allocation0], 4
      %s10 = int_to_ptr.vmem [resolvable:$true] %s9
      %12 = dma.hbm_to_vmem [thread:$0]  %s0, 16, %s10, [#allocation1]
    $region5: #{tile.43} parent=1 // pred_fallthru
      _
    // Predicated region
    $region6: #{tile.43} parent=1 // pred_check
      _
    $region7: #{tile.43} parent=1 // pred_check_branch
      %14 = sbr.rel (0) target = $region9
    $region8: #{tile.43} parent=1 // pred_region
      %15 = dma.done [#allocation1], 16
    $region9: #{tile.43} parent=1 // pred_fallthru
      _
    %v16 = vld [vmem:[#allocation0] ss:$0 sm:$0xff]
    %17 = vst [vmem:[%s1] sm:$0xf] %v16
    %18 = vsyncpa [#allocation1], 1

// kernel: tile.51
$region0: #{tile.51}
  #allocation0 [shape = 's32[1]{0}', space=sflag, size = 0x4, scoped, tag = 'scoped memory for tile.51']
  %s0 = inlined_call_operand.vmem [shape: f32[12], index: 0, kind: input, shape index: {}]
  %s1 = inlined_call_operand.vmem [shape: f32[16,12], index: 1, kind: output, shape index: {}]
  // Predicated region
  $region2: #{tile.51} parent=0 // pred_check
    _
  $region3: #{tile.51} parent=0 // pred_check_branch
    %3 = sbr.rel (0) target = $region5
  $region4: #{tile.51} parent=0 // pred_region
    _
  $region5: #{tile.51} parent=0 // pred_fallthru
    _
  %v4 = vld [vmem:[%s0] ss:$0 sm:$0xff]
  %5 = vst [vmem:[%s1] sm:$0xff] %v4
  %s6 = scalar_lea.vmem %s1, 8
  %7 = vst [vmem:[%s6] sm:$0xff] %v4

// kernel: tile.55
$region0: #{tile.55}
  %s0 = inlined_call_operand.vmem [shape: f32[16,12], index: 0, kind: input, shape index: {}]
  %s1 = inlined_call_operand.vmem [shape: f32[1,192], index: 1, kind: output, shape index: {}]
  $region1: #{tile.55} parent=0
    #allocation0 [shape = 'u8[8192]{0}', space=vmem, size = 0x2000, scoped, tag = 'scoped mem for output reshape']
    %v2 = vld [vmem:[%s0] sm:$0x1]
    %vm3 = vcmask 97280
    %4 = vst.msk [vmem:[#allocation0] sm:$0x1] %vm3, %v2
    %s5 = scalar_lea.vmem %s0, 10
    %v6 = vld [vmem:[%s5] sm:$0x1]
    %s7 = scalar_lea.vmem %s0, 10
    %v8 = vld [vmem:[%s7] sm:$0x1]
    %vm9 = vcmask 64512
    %v10 = vsel %vm9, %v8, %v6
    %11 = vrot.lane.b32.xlu0 %v10, 120
    %v12 = vpop.permute.xlu0 %11
    %vm13 = vcmask 31744
    %s14 = scalar_lea.vmem [#allocation0], 8
    %15 = vst.msk [vmem:[%s14] sm:$0x1] %vm13, %v12
    %vm16 = vcmask 1048512
    %17 = vst.msk [vmem:[#allocation0] sm:$0x1] %vm16, %v12
    %s18 = scalar_lea.vmem %s0, 9
    %v19 = vld [vmem:[%s18] sm:$0x1]
    %20 = vrot.lane.b32.xlu0 %v19, 108
    %v21 = vpop.permute.xlu0 %20
    %vm22 = vcmask 982880
    %23 = vst.msk [vmem:[#allocation0] sm:$0x1] %vm22, %v21
    %s24 = scalar_lea.vmem %s0, 8
    %v25 = vld [vmem:[%s24] sm:$0x1]
    %26 = vrot.lane.b32.xlu0 %v25, 96
    %v27 = vpop.permute.xlu0 %26
    %vm28 = vcmask 884480
    %29 = vst.msk [vmem:[#allocation0] sm:$0x1] %vm28, %v27
    %s30 = scalar_lea.vmem %s0, 7
    %v31 = vld [vmem:[%s30] sm:$0x1]
    %32 = vrot.lane.b32.xlu0 %v31, 84
    %v33 = vpop.permute.xlu0 %32
    %vm34 = vcmask 786080
    %35 = vst.msk [vmem:[#allocation0] sm:$0x1] %vm34, %v33
    %s36 = scalar_lea.vmem %s0, 6
    %v37 = vld [vmem:[%s36] sm:$0x1]
    %38 = vrot.lane.b32.xlu0 %v37, 72
    %v39 = vpop.permute.xlu0 %38
    %vm40 = vcmask 687680
    %41 = vst.msk [vmem:[#allocation0] sm:$0x1] %vm40, %v39
    %s42 = scalar_lea.vmem %s0, 5
    %v43 = vld [vmem:[%s42] sm:$0x1]
    %44 = vrot.lane.b32.xlu0 %v43, 60
    %v45 = vpop.permute.xlu0 %44
    %vm46 = vcmask 589280
    %47 = vst.msk [vmem:[#allocation0] sm:$0x1] %vm46, %v45
    %s48 = scalar_lea.vmem %s0, 15
    %v49 = vld [vmem:[%s48] sm:$0x1]
    %50 = vrot.lane.b32.xlu0 %v49, 52
    %v51 = vpop.permute.xlu0 %50
    %vm52 = vcmask 523680
    %s53 = scalar_lea.vmem [#allocation0], 8
    %54 = vst.msk [vmem:[%s53] sm:$0x1] %vm52, %v51
    %s55 = scalar_lea.vmem %s0, 4
    %v56 = vld [vmem:[%s55] sm:$0x1]
    %57 = vrot.lane.b32.xlu0 %v56, 48
    %v58 = vpop.permute.xlu0 %57
    %vm59 = vcmask 490880
    %60 = vst.msk [vmem:[#allocation0] sm:$0x1] %vm59, %v58
    %s61 = scalar_lea.vmem %s0, 14
    %v62 = vld [vmem:[%s61] sm:$0x1]
    %63 = vrot.lane.b32.xlu0 %v62, 40
    %v64 = vpop.permute.xlu0 %63
    %vm65 = vcmask 425280
    %s66 = scalar_lea.vmem [#allocation0], 8
    %67 = vst.msk [vmem:[%s66] sm:$0x1] %vm65, %v64
    %s68 = scalar_lea.vmem %s0, 3
    %v69 = vld [vmem:[%s68] sm:$0x1]
    %70 = vrot.lane.b32.xlu0 %v69, 36
    %v71 = vpop.permute.xlu0 %70
    %vm72 = vcmask 392480
    %73 = vst.msk [vmem:[#allocation0] sm:$0x1] %vm72, %v71
    %s74 = scalar_lea.vmem %s0, 13
    %v75 = vld [vmem:[%s74] sm:$0x1]
    %76 = vrot.lane.b32.xlu0 %v75, 28
    %v77 = vpop.permute.xlu0 %76
    %vm78 = vcmask 326880
    %s79 = scalar_lea.vmem [#allocation0], 8
    %80 = vst.msk [vmem:[%s79] sm:$0x1] %vm78, %v77
    %s81 = scalar_lea.vmem %s0, 2
    %v82 = vld [vmem:[%s81] sm:$0x1]
    %83 = vrot.lane.b32.xlu0 %v82, 24
    %v84 = vpop.permute.xlu0 %83
    %vm85 = vcmask 294080
    %86 = vst.msk [vmem:[#allocation0] sm:$0x1] %vm85, %v84
    %s87 = scalar_lea.vmem %s0, 12
    %v88 = vld [vmem:[%s87] sm:$0x1]
    %89 = vrot.lane.b32.xlu0 %v88, 16
    %v90 = vpop.permute.xlu0 %89
    %vm91 = vcmask 228480
    %s92 = scalar_lea.vmem [#allocation0], 8
    %93 = vst.msk [vmem:[%s92] sm:$0x1] %vm91, %v90
    %s94 = scalar_lea.vmem %s0, 1
    %v95 = vld [vmem:[%s94] sm:$0x1]
    %96 = vrot.lane.b32.xlu0 %v95, 12
    %v97 = vpop.permute.xlu0 %96
    %vm98 = vcmask 195680
    %99 = vst.msk [vmem:[#allocation0] sm:$0x1] %vm98, %v97
    %s100 = scalar_lea.vmem %s0, 11
    %v101 = vld [vmem:[%s100] sm:$0x1]
    %102 = vrot.lane.b32.xlu0 %v101, 4
    %v103 = vpop.permute.xlu0 %102
    %vm104 = vcmask 130080
    %s105 = scalar_lea.vmem [#allocation0], 8
    %106 = vst.msk [vmem:[%s105] sm:$0x1] %vm104, %v103
    %s108 = sshllo.u32 0, 1
    %v110 = vld [vmem:[#allocation0] sm:%s108]
    %s111 = sshllo.u32 0, 1
    %112 = vst [vmem:[%s1] sm:%s111] %v110
    %s113 = scalar_lea.vmem [#allocation0], 8
    %v114 = vld [vmem:[%s113] sm:%s108]
    %s115 = sshllo.u32 0, 1
    %s116 = scalar_lea.vmem %s1, 1
    %117 = vst [vmem:[%s116] sm:%s115] %v114

// kernel: forward.1
$region0: #{forward.1}
  #allocation0 [shape = 'u32[]', space=smem, size = 0x4, offset = 0x4, fixed_abs, tag = 'smem constant byte address 0x4 - core index']
  #allocation1 [shape = 'u32[144,128]{1,0:T(1,128)}', space=vmem, size = 0x12000, scoped, tag = 'internal scratch']
  %s0 = inlined_call_operand.vmem [shape: f32[2,197,768], index: 0, kind: input, shape index: {}]
  %s1 = inlined_call_operand.vmem [shape: f32[1,197,768], index: 1, kind: input, shape index: {}]
  %s2 = inlined_call_operand.vmem [shape: bf16[768,1024], index: 2, kind: input, shape index: {}]
  %s3 = inlined_call_operand.vmem [shape: f32[1,1024], index: 3, kind: input, shape index: {}]
  %s4 = inlined_call_operand.vmem [shape: bf16[256,256], index: 4, kind: input, shape index: {}]
  %s5 = inlined_call_operand.vmem [shape: f32[1,256], index: 5, kind: input, shape index: {}]
  %s6 = inlined_call_operand.vmem [shape: bf16[256,256], index: 6, kind: input, shape index: {}]
  %s7 = inlined_call_operand.vmem [shape: f32[1,256], index: 7, kind: input, shape index: {}]
  %s8 = inlined_call_operand.vmem [shape: bf16[256,192], index: 8, kind: input, shape index: {}]
  %s9 = inlined_call_operand.vmem [shape: f32[1,192], index: 9, kind: input, shape index: {}]
  %s10 = inlined_call_operand.vmem [shape: f32[2,196,768], index: 10, kind: output, shape index: {}]
  %s11 = sld [smem:[#allocation0]]
  $region73: #{forward.1} parent=0
    _
  %s13 = ssub.s32 1, %s11
  %s14 = scalar_select 0, %s13, %s11
  loop: start=0, step=1, limit=4
  $region2: #{forward.1} parent=0 // loop_pre_header
    _
  $region3: #{forward.1} parent=0 // loop_header
    %s16 = sphi 0, %s20
    %p17 = scmp.ge.s32.totalorder %s16, 4
    %s26 = sphi 0, %s28
    %s29 = sphi 0, %s26
    %s30 = sphi 0, %s29
    %s46 = sphi 0, %s30
    %s50 = sphi 0, %s50
    %s52 = sphi 0, %s50
    %s53 = sphi 0, %s52
    %s67 = sphi 0, %s53
    %s71 = sphi 0, %s71
    %s73 = sphi 0, %s71
    %s74 = sphi 0, %s73
    %s88 = sphi 0, %s74
    %s92 = sphi 0, %s92
    %s94 = sphi 0, %s92
    %s95 = sphi 0, %s94
    %s109 = sphi 0, %s95
    %s113 = sphi 0, %s113
    %s115 = sphi 0, %s113
    %s116 = sphi 0, %s115
    %s130 = sphi 0, %s116
    %s134 = sphi 0, %s134
    %s136 = sphi 0, %s134
    %s137 = sphi 0, %s136
    %s151 = sphi 0, %s137
    %s155 = sphi 0, %s155
    %s157 = sphi 0, %s155
    %s158 = sphi 0, %s157
    %s172 = sphi 0, %s158
    %s176 = sphi 0, %s176
    %s178 = sphi 0, %s176
    %s179 = sphi 0, %s178
    %s193 = sphi 0, %s179
    %s197 = sphi 0, %s197
    %s199 = sphi 0, %s197
    %s200 = sphi 0, %s199
    %s214 = sphi 0, %s200
    %s218 = sphi 0, %s218
    %s220 = sphi 0, %s218
    %s221 = sphi 0, %s220
    %s235 = sphi 0, %s221
    %s241 = sphi 0, %s243
    %s244 = sphi 0, %s241
    %s245 = sphi 0, %s244
    %s261 = sphi 0, %s245
  $region4: #{forward.1} parent=0 // loop_header_branch
    %19 = sbr.rel (%p17) target = $region8
  $region5: #{forward.1} parent=0 // loop_body
    %s21 = ssub.s32 %s16, 1
    %s22 = ssub.s32 %s16, 2
    %s23 = sadd.s32 %s16, 1
    %s24 = ssub.s32 %s16, %s23
    %p25 = scmp.eq.s32.totalorder %s24, 0
    %s27 = sadd.s32 %s26, 1
    %s28 = scalar_select %p25, %s26, %s27
    %p31 = pneg %p25
    %p32 = scmp.eq.s32.totalorder %s16, 1
    %p33 = por %p31, %p32
    %p34 = scmp.ne.s32.totalorder %s26, %s29
    %p35 = scmp.eq.s32.totalorder %s16, 0
    %p36 = por %p34, %p35
    %p37 = scmp.ne.s32.totalorder %s26, %s29
    %p38 = scmp.eq.s32.totalorder %s21, 1
    %p39 = por %p37, %p38
    %p40 = scmp.ne.s32.totalorder %s29, %s30
    %p41 = scmp.eq.s32.totalorder %s21, 0
    %p42 = por %p40, %p41
    %p43 = scmp.ne.s32.totalorder %s29, %s30
    %p44 = scmp.eq.s32.totalorder %s22, 1
    %p45 = por %p43, %p44
    %p47 = scmp.ne.s32.totalorder %s30, %s46
    %p48 = scmp.eq.s32.totalorder %s22, 0
    %p49 = por %p47, %p48
    %s51 = sadd.s32 %s50, 1
    %p54 = scmp.eq.s32.totalorder %s16, 1
    %p55 = scmp.ne.s32.totalorder %s50, %s52
    %p56 = scmp.eq.s32.totalorder %s16, 0
    %p57 = por %p55, %p56
    %p58 = scmp.ne.s32.totalorder %s50, %s52
    %p59 = scmp.eq.s32.totalorder %s21, 1
    %p60 = por %p58, %p59
    %p61 = scmp.ne.s32.totalorder %s52, %s53
    %p62 = scmp.eq.s32.totalorder %s21, 0
    %p63 = por %p61, %p62
    %p64 = scmp.ne.s32.totalorder %s52, %s53
    %p65 = scmp.eq.s32.totalorder %s22, 1
    %p66 = por %p64, %p65
    %p68 = scmp.ne.s32.totalorder %s53, %s67
    %p69 = scmp.eq.s32.totalorder %s22, 0
    %p70 = por %p68, %p69
    %s72 = sadd.s32 %s71, 1
    %p75 = scmp.eq.s32.totalorder %s16, 1
    %p76 = scmp.ne.s32.totalorder %s71, %s73
    %p77 = scmp.eq.s32.totalorder %s16, 0
    %p78 = por %p76, %p77
    %p79 = scmp.ne.s32.totalorder %s71, %s73
    %p80 = scmp.eq.s32.totalorder %s21, 1
    %p81 = por %p79, %p80
    %p82 = scmp.ne.s32.totalorder %s73, %s74
    %p83 = scmp.eq.s32.totalorder %s21, 0
    %p84 = por %p82, %p83
    %p85 = scmp.ne.s32.totalorder %s73, %s74
    %p86 = scmp.eq.s32.totalorder %s22, 1
    %p87 = por %p85, %p86
    %p89 = scmp.ne.s32.totalorder %s74, %s88
    %p90 = scmp.eq.s32.totalorder %s22, 0
    %p91 = por %p89, %p90
    %s93 = sadd.s32 %s92, 1
    %p96 = scmp.eq.s32.totalorder %s16, 1
    %p97 = scmp.ne.s32.totalorder %s92, %s94
    %p98 = scmp.eq.s32.totalorder %s16, 0
    %p99 = por %p97, %p98
    %p100 = scmp.ne.s32.totalorder %s92, %s94
    %p101 = scmp.eq.s32.totalorder %s21, 1
    %p102 = por %p100, %p101
    %p103 = scmp.ne.s32.totalorder %s94, %s95
    %p104 = scmp.eq.s32.totalorder %s21, 0
    %p105 = por %p103, %p104
    %p106 = scmp.ne.s32.totalorder %s94, %s95
    %p107 = scmp.eq.s32.totalorder %s22, 1
    %p108 = por %p106, %p107
    %p110 = scmp.ne.s32.totalorder %s95, %s109
    %p111 = scmp.eq.s32.totalorder %s22, 0
    %p112 = por %p110, %p111
    %s114 = sadd.s32 %s113, 1
    %p117 = scmp.eq.s32.totalorder %s16, 1
    %p118 = scmp.ne.s32.totalorder %s113, %s115
    %p119 = scmp.eq.s32.totalorder %s16, 0
    %p120 = por %p118, %p119
    %p121 = scmp.ne.s32.totalorder %s113, %s115
    %p122 = scmp.eq.s32.totalorder %s21, 1
    %p123 = por %p121, %p122
    %p124 = scmp.ne.s32.totalorder %s115, %s116
    %p125 = scmp.eq.s32.totalorder %s21, 0
    %p126 = por %p124, %p125
    %p127 = scmp.ne.s32.totalorder %s115, %s116
    %p128 = scmp.eq.s32.totalorder %s22, 1
    %p129 = por %p127, %p128
    %p131 = scmp.ne.s32.totalorder %s116, %s130
    %p132 = scmp.eq.s32.totalorder %s22, 0
    %p133 = por %p131, %p132
    %s135 = sadd.s32 %s134, 1
    %p138 = scmp.eq.s32.totalorder %s16, 1
    %p139 = scmp.ne.s32.totalorder %s134, %s136
    %p140 = scmp.eq.s32.totalorder %s16, 0
    %p141 = por %p139, %p140
    %p142 = scmp.ne.s32.totalorder %s134, %s136
    %p143 = scmp.eq.s32.totalorder %s21, 1
    %p144 = por %p142, %p143
    %p145 = scmp.ne.s32.totalorder %s136, %s137
    %p146 = scmp.eq.s32.totalorder %s21, 0
    %p147 = por %p145, %p146
    %p148 = scmp.ne.s32.totalorder %s136, %s137
    %p149 = scmp.eq.s32.totalorder %s22, 1
    %p150 = por %p148, %p149
    %p152 = scmp.ne.s32.totalorder %s137, %s151
    %p153 = scmp.eq.s32.totalorder %s22, 0
    %p154 = por %p152, %p153
    %s156 = sadd.s32 %s155, 1
    %p159 = scmp.eq.s32.totalorder %s16, 1
    %p160 = scmp.ne.s32.totalorder %s155, %s157
    %p161 = scmp.eq.s32.totalorder %s16, 0
    %p162 = por %p160, %p161
    %p163 = scmp.ne.s32.totalorder %s155, %s157
    %p164 = scmp.eq.s32.totalorder %s21, 1
    %p165 = por %p163, %p164
    %p166 = scmp.ne.s32.totalorder %s157, %s158
    %p167 = scmp.eq.s32.totalorder %s21, 0
    %p168 = por %p166, %p167
    %p169 = scmp.ne.s32.totalorder %s157, %s158
    %p170 = scmp.eq.s32.totalorder %s22, 1
    %p171 = por %p169, %p170
    %p173 = scmp.ne.s32.totalorder %s158, %s172
    %p174 = scmp.eq.s32.totalorder %s22, 0
    %p175 = por %p173, %p174
    %s177 = sadd.s32 %s176, 1
    %p180 = scmp.eq.s32.totalorder %s16, 1
    %p181 = scmp.ne.s32.totalorder %s176, %s178
    %p182 = scmp.eq.s32.totalorder %s16, 0
    %p183 = por %p181, %p182
    %p184 = scmp.ne.s32.totalorder %s176, %s178
    %p185 = scmp.eq.s32.totalorder %s21, 1
    %p186 = por %p184, %p185
    %p187 = scmp.ne.s32.totalorder %s178, %s179
    %p188 = scmp.eq.s32.totalorder %s21, 0
    %p189 = por %p187, %p188
    %p190 = scmp.ne.s32.totalorder %s178, %s179
    %p191 = scmp.eq.s32.totalorder %s22, 1
    %p192 = por %p190, %p191
    %p194 = scmp.ne.s32.totalorder %s179, %s193
    %p195 = scmp.eq.s32.totalorder %s22, 0
    %p196 = por %p194, %p195
    %s198 = sadd.s32 %s197, 1
    %p201 = scmp.eq.s32.totalorder %s16, 1
    %p202 = scmp.ne.s32.totalorder %s197, %s199
    %p203 = scmp.eq.s32.totalorder %s16, 0
    %p204 = por %p202, %p203
    %p205 = scmp.ne.s32.totalorder %s197, %s199
    %p206 = scmp.eq.s32.totalorder %s21, 1
    %p207 = por %p205, %p206
    %p208 = scmp.ne.s32.totalorder %s199, %s200
    %p209 = scmp.eq.s32.totalorder %s21, 0
    %p210 = por %p208, %p209
    %p211 = scmp.ne.s32.totalorder %s199, %s200
    %p212 = scmp.eq.s32.totalorder %s22, 1
    %p213 = por %p211, %p212
    %p215 = scmp.ne.s32.totalorder %s200, %s214
    %p216 = scmp.eq.s32.totalorder %s22, 0
    %p217 = por %p215, %p216
    %s219 = sadd.s32 %s218, 1
    %p222 = scmp.eq.s32.totalorder %s16, 1
    %p223 = scmp.ne.s32.totalorder %s218, %s220
    %p224 = scmp.eq.s32.totalorder %s16, 0
    %p225 = por %p223, %p224
    %p226 = scmp.ne.s32.totalorder %s218, %s220
    %p227 = scmp.eq.s32.totalorder %s21, 1
    %p228 = por %p226, %p227
    %p229 = scmp.ne.s32.totalorder %s220, %s221
    %p230 = scmp.eq.s32.totalorder %s21, 0
    %p231 = por %p229, %p230
    %p232 = scmp.ne.s32.totalorder %s220, %s221
    %p233 = scmp.eq.s32.totalorder %s22, 1
    %p234 = por %p232, %p233
    %p236 = scmp.ne.s32.totalorder %s221, %s235
    %p237 = scmp.eq.s32.totalorder %s22, 0
    %p238 = por %p236, %p237
    %s239 = ssub.s32 %s16, %s23
    %p240 = scmp.eq.s32.totalorder %s239, 0
    %s242 = sadd.s32 %s241, 1
    %s243 = scalar_select %p240, %s241, %s242
    %p246 = pneg %p240
    %p247 = scmp.eq.s32.totalorder %s16, 1
    %p248 = por %p246, %p247
    %p249 = scmp.ne.s32.totalorder %s241, %s244
    %p250 = scmp.eq.s32.totalorder %s16, 0
    %p251 = por %p249, %p250
    %p252 = scmp.ne.s32.totalorder %s241, %s244
    %p253 = scmp.eq.s32.totalorder %s21, 1
    %p254 = por %p252, %p253
    %p255 = scmp.ne.s32.totalorder %s244, %s245
    %p256 = scmp.eq.s32.totalorder %s21, 0
    %p257 = por %p255, %p256
    %p258 = scmp.ne.s32.totalorder %s244, %s245
    %p259 = scmp.eq.s32.totalorder %s22, 1
    %p260 = por %p258, %p259
    %p262 = scmp.ne.s32.totalorder %s245, %s261
    %p263 = scmp.eq.s32.totalorder %s22, 0
    %p264 = por %p262, %p263
    %p265 = scmp.le.s32.totalorder 1, %s16
    %p266 = scmp.lt.s32.totalorder %s16, 3
    %p267 = pnand %p265, %p266
    %p268 = pneg %p267
    // Predicated region
    $region9: #{forward.1} parent=5 // pred_check
      _
    $region10: #{forward.1} parent=5 // pred_check_branch
      %270 = sbr.rel (%p267) target = $region12
    $region11: #{forward.1} parent=5 // pred_region
      %s271 = ssub.s32 %s16, 1
      // Predicated region
      $region13: #{forward.1} parent=11 // pred_check
        %p272 = pneg %p63
      $region14: #{forward.1} parent=11 // pred_check_branch
        %274 = sbr.rel (%p272) target = $region16
      $region15: #{forward.1} parent=11 // pred_region
        _
      $region16: #{forward.1} parent=11 // pred_fallthru
        _
      // Predicated region
      $region17: #{forward.1} parent=11 // pred_check
        %p275 = pneg %p84
      $region18: #{forward.1} parent=11 // pred_check_branch
        %277 = sbr.rel (%p275) target = $region20
      $region19: #{forward.1} parent=11 // pred_region
        _
      $region20: #{forward.1} parent=11 // pred_fallthru
        _
      // Predicated region
      $region21: #{forward.1} parent=11 // pred_check
        %p278 = pneg %p105
      $region22: #{forward.1} parent=11 // pred_check_branch
        %280 = sbr.rel (%p278) target = $region24
      $region23: #{forward.1} parent=11 // pred_region
        _
      $region24: #{forward.1} parent=11 // pred_fallthru
        _
      // Predicated region
      $region25: #{forward.1} parent=11 // pred_check
        %p281 = pneg %p126
      $region26: #{forward.1} parent=11 // pred_check_branch
        %283 = sbr.rel (%p281) target = $region28
      $region27: #{forward.1} parent=11 // pred_region
        _
      $region28: #{forward.1} parent=11 // pred_fallthru
        _
      // Predicated region
      $region29: #{forward.1} parent=11 // pred_check
        %p284 = pneg %p147
      $region30: #{forward.1} parent=11 // pred_check_branch
        %286 = sbr.rel (%p284) target = $region32
      $region31: #{forward.1} parent=11 // pred_region
        _
      $region32: #{forward.1} parent=11 // pred_fallthru
        _
      // Predicated region
      $region33: #{forward.1} parent=11 // pred_check
        %p287 = pneg %p168
      $region34: #{forward.1} parent=11 // pred_check_branch
        %289 = sbr.rel (%p287) target = $region36
      $region35: #{forward.1} parent=11 // pred_region
        _
      $region36: #{forward.1} parent=11 // pred_fallthru
        _
      // Predicated region
      $region37: #{forward.1} parent=11 // pred_check
        %p290 = pneg %p189
      $region38: #{forward.1} parent=11 // pred_check_branch
        %292 = sbr.rel (%p290) target = $region40
      $region39: #{forward.1} parent=11 // pred_region
        _
      $region40: #{forward.1} parent=11 // pred_fallthru
        _
      // Predicated region
      $region41: #{forward.1} parent=11 // pred_check
        %p293 = pneg %p210
      $region42: #{forward.1} parent=11 // pred_check_branch
        %295 = sbr.rel (%p293) target = $region44
      $region43: #{forward.1} parent=11 // pred_region
        _
      $region44: #{forward.1} parent=11 // pred_fallthru
        _
      // Predicated region
      $region45: #{forward.1} parent=11 // pred_check
        %p296 = pneg %p231
      $region46: #{forward.1} parent=11 // pred_check_branch
        %298 = sbr.rel (%p296) target = $region48
      $region47: #{forward.1} parent=11 // pred_region
        _
      $region48: #{forward.1} parent=11 // pred_fallthru
        _
    $region12: #{forward.1} parent=5 // pred_fallthru
      _
    %p299 = scmp.lt.s32.totalorder %s16, 2
    // Predicated region
    $region49: #{forward.1} parent=5 // pred_check
      %p300 = pneg %p299
    $region50: #{forward.1} parent=5 // pred_check_branch
      %302 = sbr.rel (%p300) target = $region52
    $region51: #{forward.1} parent=5 // pred_region
      // Predicated region
      $region53: #{forward.1} parent=51 // pred_check
        %p303 = pneg %p36
      $region54: #{forward.1} parent=51 // pred_check_branch
        %305 = sbr.rel (%p303) target = $region56
      $region55: #{forward.1} parent=51 // pred_region
        %p306 = scmp.lt.s32.totalorder %s16, 1
        %s307 = scalar_select %p306, %s16, 1
        %s308 = smul.addr %s307, 150
        %s309 = smul.addr %s308, 8
        %s310 = scalar_lea.vmem %s0, %s309
      $region56: #{forward.1} parent=51 // pred_fallthru
        _
    $region52: #{forward.1} parent=5 // pred_fallthru
      _
    %p311 = scmp.le.s32.totalorder 1, %s16
    %p312 = scmp.lt.s32.totalorder %s16, 3
    %p313 = pnand %p311, %p312
    %p314 = pneg %p313
    // Predicated region
    $region57: #{forward.1} parent=5 // pred_check
      _
    $region58: #{forward.1} parent=5 // pred_check_branch
      %316 = sbr.rel (%p313) target = $region60
    $region59: #{forward.1} parent=5 // pred_region
      %s317 = ssub.s32 %s16, 1
      %p318 = scmp.lt.s32.totalorder %s21, 1
      %s319 = scalar_select %p318, %s21, 1
      %s320 = smul.addr %s319, 150
      %s321 = smul.addr %s320, 8
      %s322 = scalar_lea.vmem %s0, %s321
      %p323 = pneg %p42
      %p324 = pneg %p39
      %p325 = pneg %p63
      %p326 = pneg %p60
      %p327 = pneg %p84
      %p328 = pneg %p81
      %p329 = pneg %p105
      %p330 = pneg %p102
      %p331 = pneg %p126
      %p332 = pneg %p123
      %p333 = pneg %p147
      %p334 = pneg %p144
      %p335 = pneg %p168
      %p336 = pneg %p165
      %p337 = pneg %p189
      %p338 = pneg %p186
      %p339 = pneg %p210
      %p340 = pneg %p207
      %p341 = pneg %p231
      %p342 = pneg %p228
      %p343 = pneg %p257
      %p344 = pneg %p254
      %p345 = scmp.lt.s32.totalorder %s21, 1
      %s346 = scalar_select %p345, %s21, 1
      %s347 = smul.addr %s346, 150
      %s348 = smul.addr %s347, 8
      %s349 = scalar_lea.vmem %s10, %s348
      %p350 = scmp.lt.s32.totalorder %s21, 1
      %s351 = scalar_select %p350, %s21, 1
      %s352 = smul.addr %s351, 150
      %s353 = smul.addr %s352, 8
      %s354 = scalar_lea.vmem %s0, %s353
      %p355 = scmp.lt.s32.totalorder %s21, 1
      %s356 = scalar_select %p355, %s21, 1
      %s357 = smul.addr %s356, 150
      %s358 = smul.addr %s357, 8
      %s359 = scalar_lea.vmem %s10, %s358
      %v360 = vld [vmem:[%s354] sm:$0xff]
      %v361 = vld [vmem:[%s354 + $0x8] sm:$0xff]
      %v362 = vld [vmem:[%s354 + $0x10] sm:$0xff]
      %v363 = vld [vmem:[%s354 + $0x18] sm:$0xff]
      %v364 = vld [vmem:[%s354 + $0x20] sm:$0xff]
      %v365 = vld [vmem:[%s354 + $0x28] sm:$0xff]
      %v366 = vld [vmem:[%s354 + $0x30] sm:$0xff]
      %v367 = vld [vmem:[%s354 + $0x38] sm:$0xff]
      %v368 = vld [vmem:[%s354 + $0x40] sm:$0xff]
      %v369 = vld [vmem:[%s354 + $0x48] sm:$0xff]
      %v370 = vld [vmem:[%s354 + $0x50] sm:$0xff]
      %v371 = vld [vmem:[%s354 + $0x58] sm:$0xff]
      %v372 = vld [vmem:[%s354 + $0x60] sm:$0xff]
      %v373 = vld [vmem:[%s354 + $0x68] sm:$0xff]
      %v374 = vld [vmem:[%s354 + $0x70] sm:$0xff]
      %v375 = vld [vmem:[%s354 + $0x78] sm:$0xff]
      %v376 = vld [vmem:[%s354 + $0x80] sm:$0xff]
      %v377 = vld [vmem:[%s354 + $0x88] sm:$0xff]
      %v378 = vld [vmem:[%s354 + $0x90] sm:$0xff]
      %v379 = vld [vmem:[%s354 + $0x98] sm:$0xff]
      %v380 = vld [vmem:[%s354 + $0xa0] sm:$0xff]
      %v381 = vld [vmem:[%s354 + $0xa8] sm:$0xff]
      %v382 = vld [vmem:[%s354 + $0xb0] sm:$0xff]
      %v383 = vld [vmem:[%s354 + $0xb8] sm:$0xff]
      %v384 = vld [vmem:[%s354 + $0xc0] sm:$0xff]
      %v385 = vld [vmem:[%s354 + $0xc8] sm:$0xff]
      %v386 = vld [vmem:[%s354 + $0xd0] sm:$0xff]
      %v387 = vld [vmem:[%s354 + $0xd8] sm:$0xff]
      %v388 = vld [vmem:[%s354 + $0xe0] sm:$0xff]
      %v389 = vld [vmem:[%s354 + $0xe8] sm:$0xff]
      %v390 = vld [vmem:[%s354 + $0xf0] sm:$0xff]
      %v391 = vld [vmem:[%s354 + $0xf8] sm:$0xff]
      %v392 = vld [vmem:[%s354 + $0x100] sm:$0xff]
      %v393 = vld [vmem:[%s354 + $0x108] sm:$0xff]
      %v394 = vld [vmem:[%s354 + $0x110] sm:$0xff]
      %v395 = vld [vmem:[%s354 + $0x118] sm:$0xff]
      %v396 = vld [vmem:[%s354 + $0x120] sm:$0xff]
      %v397 = vld [vmem:[%s354 + $0x128] sm:$0xff]
      %v398 = vld [vmem:[%s354 + $0x130] sm:$0xff]
      %v399 = vld [vmem:[%s354 + $0x138] sm:$0xff]
      %v400 = vld [vmem:[%s354 + $0x140] sm:$0xff]
      %v401 = vld [vmem:[%s354 + $0x148] sm:$0xff]
      %v402 = vld [vmem:[%s354 + $0x150] sm:$0xff]
      %v403 = vld [vmem:[%s354 + $0x158] sm:$0xff]
      %v404 = vld [vmem:[%s354 + $0x160] sm:$0xff]
      %v405 = vld [vmem:[%s354 + $0x168] sm:$0xff]
      %v406 = vld [vmem:[%s354 + $0x170] sm:$0xff]
      %v407 = vld [vmem:[%s354 + $0x178] sm:$0xff]
      %v408 = vld [vmem:[%s354 + $0x180] sm:$0xff]
      %v409 = vld [vmem:[%s354 + $0x188] sm:$0xff]
      %v410 = vld [vmem:[%s354 + $0x190] sm:$0xff]
      %v411 = vld [vmem:[%s354 + $0x198] sm:$0xff]
      %v412 = vld [vmem:[%s354 + $0x1a0] sm:$0xff]
      %v413 = vld [vmem:[%s354 + $0x1a8] sm:$0xff]
      %v414 = vld [vmem:[%s354 + $0x1b0] sm:$0xff]
      %v415 = vld [vmem:[%s354 + $0x1b8] sm:$0xff]
      %v416 = vld [vmem:[%s354 + $0x1c0] sm:$0xff]
      %v417 = vld [vmem:[%s354 + $0x1c8] sm:$0xff]
      %v418 = vld [vmem:[%s354 + $0x1d0] sm:$0xff]
      %v419 = vld [vmem:[%s354 + $0x1d8] sm:$0xff]
      %v420 = vld [vmem:[%s354 + $0x1e0] sm:$0xff]
      %v421 = vld [vmem:[%s354 + $0x1e8] sm:$0xff]
      %v422 = vld [vmem:[%s354 + $0x1f0] sm:$0xff]
      %v423 = vld [vmem:[%s354 + $0x1f8] sm:$0xff]
      %v424 = vld [vmem:[%s354 + $0x200] sm:$0xff]
      %v425 = vld [vmem:[%s354 + $0x208] sm:$0xff]
      %v426 = vld [vmem:[%s354 + $0x210] sm:$0xff]
      %v427 = vld [vmem:[%s354 + $0x218] sm:$0xff]
      %v428 = vld [vmem:[%s354 + $0x220] sm:$0xff]
      %v429 = vld [vmem:[%s354 + $0x228] sm:$0xff]
      %v430 = vld [vmem:[%s354 + $0x230] sm:$0xff]
      %v431 = vld [vmem:[%s354 + $0x238] sm:$0xff]
      %v432 = vld [vmem:[%s354 + $0x240] sm:$0xff]
      %v433 = vld [vmem:[%s354 + $0x248] sm:$0xff]
      %v434 = vld [vmem:[%s354 + $0x250] sm:$0xff]
      %v435 = vld [vmem:[%s354 + $0x258] sm:$0xff]
      %v436 = vld [vmem:[%s354 + $0x260] sm:$0xff]
      %v437 = vld [vmem:[%s354 + $0x268] sm:$0xff]
      %v438 = vld [vmem:[%s354 + $0x270] sm:$0xff]
      %v439 = vld [vmem:[%s354 + $0x278] sm:$0xff]
      %v440 = vld [vmem:[%s354 + $0x280] sm:$0xff]
      %v441 = vld [vmem:[%s354 + $0x288] sm:$0xff]
      %v442 = vld [vmem:[%s354 + $0x290] sm:$0xff]
      %v443 = vld [vmem:[%s354 + $0x298] sm:$0xff]
      %v444 = vld [vmem:[%s354 + $0x2a0] sm:$0xff]
      %v445 = vld [vmem:[%s354 + $0x2a8] sm:$0xff]
      %v446 = vld [vmem:[%s354 + $0x2b0] sm:$0xff]
      %v447 = vld [vmem:[%s354 + $0x2b8] sm:$0xff]
      %v448 = vld [vmem:[%s354 + $0x2c0] sm:$0xff]
      %v449 = vld [vmem:[%s354 + $0x2c8] sm:$0xff]
      %v450 = vld [vmem:[%s354 + $0x2d0] sm:$0xff]
      %v451 = vld [vmem:[%s354 + $0x2d8] sm:$0xff]
      %v452 = vld [vmem:[%s354 + $0x2e0] sm:$0xff]
      %v453 = vld [vmem:[%s354 + $0x2e8] sm:$0xff]
      %v454 = vld [vmem:[%s354 + $0x2f0] sm:$0xff]
      %v455 = vld [vmem:[%s354 + $0x2f8] sm:$0xff]
      %v456 = vld [vmem:[%s354 + $0x300] sm:$0xff]
      %v457 = vld [vmem:[%s354 + $0x308] sm:$0xff]
      %v458 = vld [vmem:[%s354 + $0x310] sm:$0xff]
      %v459 = vld [vmem:[%s354 + $0x318] sm:$0xff]
      %v460 = vld [vmem:[%s354 + $0x320] sm:$0xff]
      %v461 = vld [vmem:[%s354 + $0x328] sm:$0xff]
      %v462 = vld [vmem:[%s354 + $0x330] sm:$0xff]
      %v463 = vld [vmem:[%s354 + $0x338] sm:$0xff]
      %v464 = vld [vmem:[%s354 + $0x340] sm:$0xff]
      %v465 = vld [vmem:[%s354 + $0x348] sm:$0xff]
      %v466 = vld [vmem:[%s354 + $0x350] sm:$0xff]
      %v467 = vld [vmem:[%s354 + $0x358] sm:$0xff]
      %v468 = vld [vmem:[%s354 + $0x360] sm:$0xff]
      %v469 = vld [vmem:[%s354 + $0x368] sm:$0xff]
      %v470 = vld [vmem:[%s354 + $0x370] sm:$0xff]
      %v471 = vld [vmem:[%s354 + $0x378] sm:$0xff]
      %v472 = vld [vmem:[%s354 + $0x380] sm:$0xff]
      %v473 = vld [vmem:[%s354 + $0x388] sm:$0xff]
      %v474 = vld [vmem:[%s354 + $0x390] sm:$0xff]
      %v475 = vld [vmem:[%s354 + $0x398] sm:$0xff]
      %v476 = vld [vmem:[%s354 + $0x3a0] sm:$0xff]
      %v477 = vld [vmem:[%s354 + $0x3a8] sm:$0xff]
      %v478 = vld [vmem:[%s354 + $0x3b0] sm:$0xff]
      %v479 = vld [vmem:[%s354 + $0x3b8] sm:$0xff]
      %v480 = vld [vmem:[%s354 + $0x3c0] sm:$0xff]
      %v481 = vld [vmem:[%s354 + $0x3c8] sm:$0xff]
      %v482 = vld [vmem:[%s354 + $0x3d0] sm:$0xff]
      %v483 = vld [vmem:[%s354 + $0x3d8] sm:$0xff]
      %v484 = vld [vmem:[%s354 + $0x3e0] sm:$0xff]
      %v485 = vld [vmem:[%s354 + $0x3e8] sm:$0xff]
      %v486 = vld [vmem:[%s354 + $0x3f0] sm:$0xff]
      %v487 = vld [vmem:[%s354 + $0x3f8] sm:$0xff]
      %v488 = vld [vmem:[%s354 + $0x400] sm:$0xff]
      %v489 = vld [vmem:[%s354 + $0x408] sm:$0xff]
      %v490 = vld [vmem:[%s354 + $0x410] sm:$0xff]
      %v491 = vld [vmem:[%s354 + $0x418] sm:$0xff]
      %v492 = vld [vmem:[%s354 + $0x420] sm:$0xff]
      %v493 = vld [vmem:[%s354 + $0x428] sm:$0xff]
      %v494 = vld [vmem:[%s354 + $0x430] sm:$0xff]
      %v495 = vld [vmem:[%s354 + $0x438] sm:$0xff]
      %v496 = vld [vmem:[%s354 + $0x440] sm:$0xff]
      %v497 = vld [vmem:[%s354 + $0x448] sm:$0xff]
      %v498 = vld [vmem:[%s354 + $0x450] sm:$0xff]
      %v499 = vld [vmem:[%s354 + $0x458] sm:$0xff]
      %v500 = vld [vmem:[%s354 + $0x460] sm:$0xff]
      %v501 = vld [vmem:[%s354 + $0x468] sm:$0xff]
      %v502 = vld [vmem:[%s354 + $0x470] sm:$0xff]
      %v503 = vld [vmem:[%s354 + $0x478] sm:$0xff]
      %v504 = vld [vmem:[%s354 + $0x480] sm:$0x1f]
      %v505 = vld [vmem:[%s354 + $0x488] sm:$0x1f]
      %v506 = vld [vmem:[%s354 + $0x490] sm:$0x1f]
      %v507 = vld [vmem:[%s354 + $0x498] sm:$0x1f]
      %v508 = vld [vmem:[%s354 + $0x4a0] sm:$0x1f]
      %v509 = vld [vmem:[%s354 + $0x4a8] sm:$0x1f]
      %v510 = vld [vmem:[%s1] sm:$0xff]
      %v511 = vld [vmem:[%s1 + $0x8] sm:$0xff]
      %v512 = vld [vmem:[%s1 + $0x10] sm:$0xff]
      %v513 = vld [vmem:[%s1 + $0x18] sm:$0xff]
      %v514 = vld [vmem:[%s1 + $0x20] sm:$0xff]
      %v515 = vld [vmem:[%s1 + $0x28] sm:$0xff]
      %v516 = vld [vmem:[%s1 + $0x30] sm:$0xff]
      %v517 = vld [vmem:[%s1 + $0x38] sm:$0xff]
      %v518 = vld [vmem:[%s1 + $0x40] sm:$0xff]
      %v519 = vld [vmem:[%s1 + $0x48] sm:$0xff]
      %v520 = vld [vmem:[%s1 + $0x50] sm:$0xff]
      %v521 = vld [vmem:[%s1 + $0x58] sm:$0xff]
      %v522 = vld [vmem:[%s1 + $0x60] sm:$0xff]
      %v523 = vld [vmem:[%s1 + $0x68] sm:$0xff]
      %v524 = vld [vmem:[%s1 + $0x70] sm:$0xff]
      %v525 = vld [vmem:[%s1 + $0x78] sm:$0xff]
      %v526 = vld [vmem:[%s1 + $0x80] sm:$0xff]
      %v527 = vld [vmem:[%s1 + $0x88] sm:$0xff]
      %v528 = vld [vmem:[%s1 + $0x90] sm:$0xff]
      %v529 = vld [vmem:[%s1 + $0x98] sm:$0xff]
      %v530 = vld [vmem:[%s1 + $0xa0] sm:$0xff]
      %v531 = vld [vmem:[%s1 + $0xa8] sm:$0xff]
      %v532 = vld [vmem:[%s1 + $0xb0] sm:$0xff]
      %v533 = vld [vmem:[%s1 + $0xb8] sm:$0xff]
      %v534 = vld [vmem:[%s1 + $0xc0] sm:$0xff]
      %v535 = vld [vmem:[%s1 + $0xc8] sm:$0xff]
      %v536 = vld [vmem:[%s1 + $0xd0] sm:$0xff]
      %v537 = vld [vmem:[%s1 + $0xd8] sm:$0xff]
      %v538 = vld [vmem:[%s1 + $0xe0] sm:$0xff]
      %v539 = vld [vmem:[%s1 + $0xe8] sm:$0xff]
      %v540 = vld [vmem:[%s1 + $0xf0] sm:$0xff]
      %v541 = vld [vmem:[%s1 + $0xf8] sm:$0xff]
      %v542 = vld [vmem:[%s1 + $0x100] sm:$0xff]
      %v543 = vld [vmem:[%s1 + $0x108] sm:$0xff]
      %v544 = vld [vmem:[%s1 + $0x110] sm:$0xff]
      %v545 = vld [vmem:[%s1 + $0x118] sm:$0xff]
      %v546 = vld [vmem:[%s1 + $0x120] sm:$0xff]
      %v547 = vld [vmem:[%s1 + $0x128] sm:$0xff]
      %v548 = vld [vmem:[%s1 + $0x130] sm:$0xff]
      %v549 = vld [vmem:[%s1 + $0x138] sm:$0xff]
      %v550 = vld [vmem:[%s1 + $0x140] sm:$0xff]
      %v551 = vld [vmem:[%s1 + $0x148] sm:$0xff]
      %v552 = vld [vmem:[%s1 + $0x150] sm:$0xff]
      %v553 = vld [vmem:[%s1 + $0x158] sm:$0xff]
      %v554 = vld [vmem:[%s1 + $0x160] sm:$0xff]
      %v555 = vld [vmem:[%s1 + $0x168] sm:$0xff]
      %v556 = vld [vmem:[%s1 + $0x170] sm:$0xff]
      %v557 = vld [vmem:[%s1 + $0x178] sm:$0xff]
      %v558 = vld [vmem:[%s1 + $0x180] sm:$0xff]
      %v559 = vld [vmem:[%s1 + $0x188] sm:$0xff]
      %v560 = vld [vmem:[%s1 + $0x190] sm:$0xff]
      %v561 = vld [vmem:[%s1 + $0x198] sm:$0xff]
      %v562 = vld [vmem:[%s1 + $0x1a0] sm:$0xff]
      %v563 = vld [vmem:[%s1 + $0x1a8] sm:$0xff]
      %v564 = vld [vmem:[%s1 + $0x1b0] sm:$0xff]
      %v565 = vld [vmem:[%s1 + $0x1b8] sm:$0xff]
      %v566 = vld [vmem:[%s1 + $0x1c0] sm:$0xff]
      %v567 = vld [vmem:[%s1 + $0x1c8] sm:$0xff]
      %v568 = vld [vmem:[%s1 + $0x1d0] sm:$0xff]
      %v569 = vld [vmem:[%s1 + $0x1d8] sm:$0xff]
      %v570 = vld [vmem:[%s1 + $0x1e0] sm:$0xff]
      %v571 = vld [vmem:[%s1 + $0x1e8] sm:$0xff]
      %v572 = vld [vmem:[%s1 + $0x1f0] sm:$0xff]
      %v573 = vld [vmem:[%s1 + $0x1f8] sm:$0xff]
      %v574 = vld [vmem:[%s1 + $0x200] sm:$0xff]
      %v575 = vld [vmem:[%s1 + $0x208] sm:$0xff]
      %v576 = vld [vmem:[%s1 + $0x210] sm:$0xff]
      %v577 = vld [vmem:[%s1 + $0x218] sm:$0xff]
      %v578 = vld [vmem:[%s1 + $0x220] sm:$0xff]
      %v579 = vld [vmem:[%s1 + $0x228] sm:$0xff]
      %v580 = vld [vmem:[%s1 + $0x230] sm:$0xff]
      %v581 = vld [vmem:[%s1 + $0x238] sm:$0xff]
      %v582 = vld [vmem:[%s1 + $0x240] sm:$0xff]
      %v583 = vld [vmem:[%s1 + $0x248] sm:$0xff]
      %v584 = vld [vmem:[%s1 + $0x250] sm:$0xff]
      %v585 = vld [vmem:[%s1 + $0x258] sm:$0xff]
      %v586 = vld [vmem:[%s1 + $0x260] sm:$0xff]
      %v587 = vld [vmem:[%s1 + $0x268] sm:$0xff]
      %v588 = vld [vmem:[%s1 + $0x270] sm:$0xff]
      %v589 = vld [vmem:[%s1 + $0x278] sm:$0xff]
      %v590 = vld [vmem:[%s1 + $0x280] sm:$0xff]
      %v591 = vld [vmem:[%s1 + $0x288] sm:$0xff]
      %v592 = vld [vmem:[%s1 + $0x290] sm:$0xff]
      %v593 = vld [vmem:[%s1 + $0x298] sm:$0xff]
      %v594 = vld [vmem:[%s1 + $0x2a0] sm:$0xff]
      %v595 = vld [vmem:[%s1 + $0x2a8] sm:$0xff]
      %v596 = vld [vmem:[%s1 + $0x2b0] sm:$0xff]
      %v597 = vld [vmem:[%s1 + $0x2b8] sm:$0xff]
      %v598 = vld [vmem:[%s1 + $0x2c0] sm:$0xff]
      %v599 = vld [vmem:[%s1 + $0x2c8] sm:$0xff]
      %v600 = vld [vmem:[%s1 + $0x2d0] sm:$0xff]
      %v601 = vld [vmem:[%s1 + $0x2d8] sm:$0xff]
      %v602 = vld [vmem:[%s1 + $0x2e0] sm:$0xff]
      %v603 = vld [vmem:[%s1 + $0x2e8] sm:$0xff]
      %v604 = vld [vmem:[%s1 + $0x2f0] sm:$0xff]
      %v605 = vld [vmem:[%s1 + $0x2f8] sm:$0xff]
      %v606 = vld [vmem:[%s1 + $0x300] sm:$0xff]
      %v607 = vld [vmem:[%s1 + $0x308] sm:$0xff]
      %v608 = vld [vmem:[%s1 + $0x310] sm:$0xff]
      %v609 = vld [vmem:[%s1 + $0x318] sm:$0xff]
      %v610 = vld [vmem:[%s1 + $0x320] sm:$0xff]
      %v611 = vld [vmem:[%s1 + $0x328] sm:$0xff]
      %v612 = vld [vmem:[%s1 + $0x330] sm:$0xff]
      %v613 = vld [vmem:[%s1 + $0x338] sm:$0xff]
      %v614 = vld [vmem:[%s1 + $0x340] sm:$0xff]
      %v615 = vld [vmem:[%s1 + $0x348] sm:$0xff]
      %v616 = vld [vmem:[%s1 + $0x350] sm:$0xff]
      %v617 = vld [vmem:[%s1 + $0x358] sm:$0xff]
      %v618 = vld [vmem:[%s1 + $0x360] sm:$0xff]
      %v619 = vld [vmem:[%s1 + $0x368] sm:$0xff]
      %v620 = vld [vmem:[%s1 + $0x370] sm:$0xff]
      %v621 = vld [vmem:[%s1 + $0x378] sm:$0xff]
      %v622 = vld [vmem:[%s1 + $0x380] sm:$0xff]
      %v623 = vld [vmem:[%s1 + $0x388] sm:$0xff]
      %v624 = vld [vmem:[%s1 + $0x390] sm:$0xff]
      %v625 = vld [vmem:[%s1 + $0x398] sm:$0xff]
      %v626 = vld [vmem:[%s1 + $0x3a0] sm:$0xff]
      %v627 = vld [vmem:[%s1 + $0x3a8] sm:$0xff]
      %v628 = vld [vmem:[%s1 + $0x3b0] sm:$0xff]
      %v629 = vld [vmem:[%s1 + $0x3b8] sm:$0xff]
      %v630 = vld [vmem:[%s1 + $0x3c0] sm:$0xff]
      %v631 = vld [vmem:[%s1 + $0x3c8] sm:$0xff]
      %v632 = vld [vmem:[%s1 + $0x3d0] sm:$0xff]
      %v633 = vld [vmem:[%s1 + $0x3d8] sm:$0xff]
      %v634 = vld [vmem:[%s1 + $0x3e0] sm:$0xff]
      %v635 = vld [vmem:[%s1 + $0x3e8] sm:$0xff]
      %v636 = vld [vmem:[%s1 + $0x3f0] sm:$0xff]
      %v637 = vld [vmem:[%s1 + $0x3f8] sm:$0xff]
      %v638 = vld [vmem:[%s1 + $0x400] sm:$0xff]
      %v639 = vld [vmem:[%s1 + $0x408] sm:$0xff]
      %v640 = vld [vmem:[%s1 + $0x410] sm:$0xff]
      %v641 = vld [vmem:[%s1 + $0x418] sm:$0xff]
      %v642 = vld [vmem:[%s1 + $0x420] sm:$0xff]
      %v643 = vld [vmem:[%s1 + $0x428] sm:$0xff]
      %v644 = vld [vmem:[%s1 + $0x430] sm:$0xff]
      %v645 = vld [vmem:[%s1 + $0x438] sm:$0xff]
      %v646 = vld [vmem:[%s1 + $0x440] sm:$0xff]
      %v647 = vld [vmem:[%s1 + $0x448] sm:$0xff]
      %v648 = vld [vmem:[%s1 + $0x450] sm:$0xff]
      %v649 = vld [vmem:[%s1 + $0x458] sm:$0xff]
      %v650 = vld [vmem:[%s1 + $0x460] sm:$0xff]
      %v651 = vld [vmem:[%s1 + $0x468] sm:$0xff]
      %v652 = vld [vmem:[%s1 + $0x470] sm:$0xff]
      %v653 = vld [vmem:[%s1 + $0x478] sm:$0xff]
      %v654 = vld [vmem:[%s1 + $0x480] sm:$0x1f]
      %v655 = vld [vmem:[%s1 + $0x488] sm:$0x1f]
      %v656 = vld [vmem:[%s1 + $0x490] sm:$0x1f]
      %v657 = vld [vmem:[%s1 + $0x498] sm:$0x1f]
      %v658 = vld [vmem:[%s1 + $0x4a0] sm:$0x1f]
      %v659 = vld [vmem:[%s1 + $0x4a8] sm:$0x1f]
      %v660 = vsub.f32 %v360, %v510
      %v661 = vsub.f32 %v361, %v511
      %v662 = vsub.f32 %v362, %v512
      %v663 = vsub.f32 %v363, %v513
      %v664 = vsub.f32 %v364, %v514
      %v665 = vsub.f32 %v365, %v515
      %v666 = vsub.f32 %v366, %v516
      %v667 = vsub.f32 %v367, %v517
      %v668 = vsub.f32 %v368, %v518
      %v669 = vsub.f32 %v369, %v519
      %v670 = vsub.f32 %v370, %v520
      %v671 = vsub.f32 %v371, %v521
      %v672 = vsub.f32 %v372, %v522
      %v673 = vsub.f32 %v373, %v523
      %v674 = vsub.f32 %v374, %v524
      %v675 = vsub.f32 %v375, %v525
      %v676 = vsub.f32 %v376, %v526
      %v677 = vsub.f32 %v377, %v527
      %v678 = vsub.f32 %v378, %v528
      %v679 = vsub.f32 %v379, %v529
      %v680 = vsub.f32 %v380, %v530
      %v681 = vsub.f32 %v381, %v531
      %v682 = vsub.f32 %v382, %v532
      %v683 = vsub.f32 %v383, %v533
      %v684 = vsub.f32 %v384, %v534
      %v685 = vsub.f32 %v385, %v535
      %v686 = vsub.f32 %v386, %v536
      %v687 = vsub.f32 %v387, %v537
      %v688 = vsub.f32 %v388, %v538
      %v689 = vsub.f32 %v389, %v539
      %v690 = vsub.f32 %v390, %v540
      %v691 = vsub.f32 %v391, %v541
      %v692 = vsub.f32 %v392, %v542
      %v693 = vsub.f32 %v393, %v543
      %v694 = vsub.f32 %v394, %v544
      %v695 = vsub.f32 %v395, %v545
      %v696 = vsub.f32 %v396, %v546
      %v697 = vsub.f32 %v397, %v547
      %v698 = vsub.f32 %v398, %v548
      %v699 = vsub.f32 %v399, %v549
      %v700 = vsub.f32 %v400, %v550
      %v701 = vsub.f32 %v401, %v551
      %v702 = vsub.f32 %v402, %v552
      %v703 = vsub.f32 %v403, %v553
      %v704 = vsub.f32 %v404, %v554
      %v705 = vsub.f32 %v405, %v555
      %v706 = vsub.f32 %v406, %v556
      %v707 = vsub.f32 %v407, %v557
      %v708 = vsub.f32 %v408, %v558
      %v709 = vsub.f32 %v409, %v559
      %v710 = vsub.f32 %v410, %v560
      %v711 = vsub.f32 %v411, %v561
      %v712 = vsub.f32 %v412, %v562
      %v713 = vsub.f32 %v413, %v563
      %v714 = vsub.f32 %v414, %v564
      %v715 = vsub.f32 %v415, %v565
      %v716 = vsub.f32 %v416, %v566
      %v717 = vsub.f32 %v417, %v567
      %v718 = vsub.f32 %v418, %v568
      %v719 = vsub.f32 %v419, %v569
      %v720 = vsub.f32 %v420, %v570
      %v721 = vsub.f32 %v421, %v571
      %v722 = vsub.f32 %v422, %v572
      %v723 = vsub.f32 %v423, %v573
      %v724 = vsub.f32 %v424, %v574
      %v725 = vsub.f32 %v425, %v575
      %v726 = vsub.f32 %v426, %v576
      %v727 = vsub.f32 %v427, %v577
      %v728 = vsub.f32 %v428, %v578
      %v729 = vsub.f32 %v429, %v579
      %v730 = vsub.f32 %v430, %v580
      %v731 = vsub.f32 %v431, %v581
      %v732 = vsub.f32 %v432, %v582
      %v733 = vsub.f32 %v433, %v583
      %v734 = vsub.f32 %v434, %v584
      %v735 = vsub.f32 %v435, %v585
      %v736 = vsub.f32 %v436, %v586
      %v737 = vsub.f32 %v437, %v587
      %v738 = vsub.f32 %v438, %v588
      %v739 = vsub.f32 %v439, %v589
      %v740 = vsub.f32 %v440, %v590
      %v741 = vsub.f32 %v441, %v591
      %v742 = vsub.f32 %v442, %v592
      %v743 = vsub.f32 %v443, %v593
      %v744 = vsub.f32 %v444, %v594
      %v745 = vsub.f32 %v445, %v595
      %v746 = vsub.f32 %v446, %v596
      %v747 = vsub.f32 %v447, %v597
      %v748 = vsub.f32 %v448, %v598
      %v749 = vsub.f32 %v449, %v599
      %v750 = vsub.f32 %v450, %v600
      %v751 = vsub.f32 %v451, %v601
      %v752 = vsub.f32 %v452, %v602
      %v753 = vsub.f32 %v453, %v603
      %v754 = vsub.f32 %v454, %v604
      %v755 = vsub.f32 %v455, %v605
      %v756 = vsub.f32 %v456, %v606
      %v757 = vsub.f32 %v457, %v607
      %v758 = vsub.f32 %v458, %v608
      %v759 = vsub.f32 %v459, %v609
      %v760 = vsub.f32 %v460, %v610
      %v761 = vsub.f32 %v461, %v611
      %v762 = vsub.f32 %v462, %v612
      %v763 = vsub.f32 %v463, %v613
      %v764 = vsub.f32 %v464, %v614
      %v765 = vsub.f32 %v465, %v615
      %v766 = vsub.f32 %v466, %v616
      %v767 = vsub.f32 %v467, %v617
      %v768 = vsub.f32 %v468, %v618
      %v769 = vsub.f32 %v469, %v619
      %v770 = vsub.f32 %v470, %v620
      %v771 = vsub.f32 %v471, %v621
      %v772 = vsub.f32 %v472, %v622
      %v773 = vsub.f32 %v473, %v623
      %v774 = vsub.f32 %v474, %v624
      %v775 = vsub.f32 %v475, %v625
      %v776 = vsub.f32 %v476, %v626
      %v777 = vsub.f32 %v477, %v627
      %v778 = vsub.f32 %v478, %v628
      %v779 = vsub.f32 %v479, %v629
      %v780 = vsub.f32 %v480, %v630
      %v781 = vsub.f32 %v481, %v631
      %v782 = vsub.f32 %v482, %v632
      %v783 = vsub.f32 %v483, %v633
      %v784 = vsub.f32 %v484, %v634
      %v785 = vsub.f32 %v485, %v635
      %v786 = vsub.f32 %v486, %v636
      %v787 = vsub.f32 %v487, %v637
      %v788 = vsub.f32 %v488, %v638
      %v789 = vsub.f32 %v489, %v639
      %v790 = vsub.f32 %v490, %v640
      %v791 = vsub.f32 %v491, %v641
      %v792 = vsub.f32 %v492, %v642
      %v793 = vsub.f32 %v493, %v643
      %v794 = vsub.f32 %v494, %v644
      %v795 = vsub.f32 %v495, %v645
      %v796 = vsub.f32 %v496, %v646
      %v797 = vsub.f32 %v497, %v647
      %v798 = vsub.f32 %v498, %v648
      %v799 = vsub.f32 %v499, %v649
      %v800 = vsub.f32 %v500, %v650
      %v801 = vsub.f32 %v501, %v651
      %v802 = vsub.f32 %v502, %v652
      %v803 = vsub.f32 %v503, %v653
      %v804 = vsub.f32 %v504, %v654
      %v805 = vsub.f32 %v505, %v655
      %v806 = vsub.f32 %v506, %v656
      %v807 = vsub.f32 %v507, %v657
      %v808 = vsub.f32 %v508, %v658
      %v809 = vsub.f32 %v509, %v659
      %v810 = vpack.c.bf16 %v666, %v660
      %v811 = vpack.c.bf16 %v667, %v661
      %v812 = vpack.c.bf16 %v668, %v662
      %v813 = vpack.c.bf16 %v669, %v663
      %v814 = vpack.c.bf16 %v670, %v664
      %v815 = vpack.c.bf16 %v671, %v665
      %v816 = vpack.c.bf16 %v678, %v672
      %v817 = vpack.c.bf16 %v679, %v673
      %v818 = vpack.c.bf16 %v680, %v674
      %v819 = vpack.c.bf16 %v681, %v675
      %v820 = vpack.c.bf16 %v682, %v676
      %v821 = vpack.c.bf16 %v683, %v677
      %v822 = vpack.c.bf16 %v690, %v684
      %v823 = vpack.c.bf16 %v691, %v685
      %v824 = vpack.c.bf16 %v692, %v686
      %v825 = vpack.c.bf16 %v693, %v687
      %v826 = vpack.c.bf16 %v694, %v688
      %v827 = vpack.c.bf16 %v695, %v689
      %v828 = vpack.c.bf16 %v702, %v696
      %v829 = vpack.c.bf16 %v703, %v697
      %v830 = vpack.c.bf16 %v704, %v698
      %v831 = vpack.c.bf16 %v705, %v699
      %v832 = vpack.c.bf16 %v706, %v700
      %v833 = vpack.c.bf16 %v707, %v701
      %v834 = vpack.c.bf16 %v714, %v708
      %v835 = vpack.c.bf16 %v715, %v709
      %v836 = vpack.c.bf16 %v716, %v710
      %v837 = vpack.c.bf16 %v717, %v711
      %v838 = vpack.c.bf16 %v718, %v712
      %v839 = vpack.c.bf16 %v719, %v713
      %v840 = vpack.c.bf16 %v726, %v720
      %v841 = vpack.c.bf16 %v727, %v721
      %v842 = vpack.c.bf16 %v728, %v722
      %v843 = vpack.c.bf16 %v729, %v723
      %v844 = vpack.c.bf16 %v730, %v724
      %v845 = vpack.c.bf16 %v731, %v725
      %v846 = vpack.c.bf16 %v738, %v732
      %v847 = vpack.c.bf16 %v739, %v733
      %v848 = vpack.c.bf16 %v740, %v734
      %v849 = vpack.c.bf16 %v741, %v735
      %v850 = vpack.c.bf16 %v742, %v736
      %v851 = vpack.c.bf16 %v743, %v737
      %v852 = vpack.c.bf16 %v750, %v744
      %v853 = vpack.c.bf16 %v751, %v745
      %v854 = vpack.c.bf16 %v752, %v746
      %v855 = vpack.c.bf16 %v753, %v747
      %v856 = vpack.c.bf16 %v754, %v748
      %v857 = vpack.c.bf16 %v755, %v749
      %v858 = vpack.c.bf16 %v762, %v756
      %v859 = vpack.c.bf16 %v763, %v757
      %v860 = vpack.c.bf16 %v764, %v758
      %v861 = vpack.c.bf16 %v765, %v759
      %v862 = vpack.c.bf16 %v766, %v760
      %v863 = vpack.c.bf16 %v767, %v761
      %v864 = vpack.c.bf16 %v774, %v768
      %v865 = vpack.c.bf16 %v775, %v769
      %v866 = vpack.c.bf16 %v776, %v770
      %v867 = vpack.c.bf16 %v777, %v771
      %v868 = vpack.c.bf16 %v778, %v772
      %v869 = vpack.c.bf16 %v779, %v773
      %v870 = vpack.c.bf16 %v786, %v780
      %v871 = vpack.c.bf16 %v787, %v781
      %v872 = vpack.c.bf16 %v788, %v782
      %v873 = vpack.c.bf16 %v789, %v783
      %v874 = vpack.c.bf16 %v790, %v784
      %v875 = vpack.c.bf16 %v791, %v785
      %v876 = vpack.c.bf16 %v798, %v792
      %v877 = vpack.c.bf16 %v799, %v793
      %v878 = vpack.c.bf16 %v800, %v794
      %v879 = vpack.c.bf16 %v801, %v795
      %v880 = vpack.c.bf16 %v802, %v796
      %v881 = vpack.c.bf16 %v803, %v797
      %v882 = vpack.c.bf16 %v804, %v804
      %v883 = vpack.c.bf16 %v805, %v805
      %v884 = vpack.c.bf16 %v806, %v806
      %v885 = vpack.c.bf16 %v807, %v807
      %v886 = vpack.c.bf16 %v808, %v808
      %v887 = vpack.c.bf16 %v809, %v809
      %v888 = vld [vmem:[%s2] sm:$0xff]
      %v889 = vld [vmem:[%s2 + $0x8] sm:$0xff]
      %v890 = vld [vmem:[%s2 + $0x10] sm:$0xff]
      %v891 = vld [vmem:[%s2 + $0x18] sm:$0xff]
      %v892 = vld [vmem:[%s2 + $0x20] sm:$0xff]
      %v893 = vld [vmem:[%s2 + $0x28] sm:$0xff]
      %v894 = vld [vmem:[%s2 + $0x30] sm:$0xff]
      %v895 = vld [vmem:[%s2 + $0x38] sm:$0xff]
      %v896 = vld [vmem:[%s2 + $0x40] sm:$0xff]
      %v897 = vld [vmem:[%s2 + $0x48] sm:$0xff]
      %v898 = vld [vmem:[%s2 + $0x50] sm:$0xff]
      %v899 = vld [vmem:[%s2 + $0x58] sm:$0xff]
      %v900 = vld [vmem:[%s2 + $0x60] sm:$0xff]
      %v901 = vld [vmem:[%s2 + $0x68] sm:$0xff]
      %v902 = vld [vmem:[%s2 + $0x70] sm:$0xff]
      %v903 = vld [vmem:[%s2 + $0x78] sm:$0xff]
      %v904 = vld [vmem:[%s2 + $0x80] sm:$0xff]
      %v905 = vld [vmem:[%s2 + $0x88] sm:$0xff]
      %v906 = vld [vmem:[%s2 + $0x90] sm:$0xff]
      %v907 = vld [vmem:[%s2 + $0x98] sm:$0xff]
      %v908 = vld [vmem:[%s2 + $0xa0] sm:$0xff]
      %v909 = vld [vmem:[%s2 + $0xa8] sm:$0xff]
      %v910 = vld [vmem:[%s2 + $0xb0] sm:$0xff]
      %v911 = vld [vmem:[%s2 + $0xb8] sm:$0xff]
      %v912 = vld [vmem:[%s2 + $0xc0] sm:$0xff]
      %v913 = vld [vmem:[%s2 + $0xc8] sm:$0xff]
      %v914 = vld [vmem:[%s2 + $0xd0] sm:$0xff]
      %v915 = vld [vmem:[%s2 + $0xd8] sm:$0xff]
      %v916 = vld [vmem:[%s2 + $0xe0] sm:$0xff]
      %v917 = vld [vmem:[%s2 + $0xe8] sm:$0xff]
      %v918 = vld [vmem:[%s2 + $0xf0] sm:$0xff]
      %v919 = vld [vmem:[%s2 + $0xf8] sm:$0xff]
      %v920 = vld [vmem:[%s2 + $0x100] sm:$0xff]
      %v921 = vld [vmem:[%s2 + $0x108] sm:$0xff]
      %v922 = vld [vmem:[%s2 + $0x110] sm:$0xff]
      %v923 = vld [vmem:[%s2 + $0x118] sm:$0xff]
      %v924 = vld [vmem:[%s2 + $0x120] sm:$0xff]
      %v925 = vld [vmem:[%s2 + $0x128] sm:$0xff]
      %v926 = vld [vmem:[%s2 + $0x130] sm:$0xff]
      %v927 = vld [vmem:[%s2 + $0x138] sm:$0xff]
      %v928 = vld [vmem:[%s2 + $0x140] sm:$0xff]
      %v929 = vld [vmem:[%s2 + $0x148] sm:$0xff]
      %v930 = vld [vmem:[%s2 + $0x150] sm:$0xff]
      %v931 = vld [vmem:[%s2 + $0x158] sm:$0xff]
      %v932 = vld [vmem:[%s2 + $0x160] sm:$0xff]
      %v933 = vld [vmem:[%s2 + $0x168] sm:$0xff]
      %v934 = vld [vmem:[%s2 + $0x170] sm:$0xff]
      %v935 = vld [vmem:[%s2 + $0x178] sm:$0xff]
      %v936 = vld [vmem:[%s2 + $0x180] sm:$0xff]
      %v937 = vld [vmem:[%s2 + $0x188] sm:$0xff]
      %v938 = vld [vmem:[%s2 + $0x190] sm:$0xff]
      %v939 = vld [vmem:[%s2 + $0x198] sm:$0xff]
      %v940 = vld [vmem:[%s2 + $0x1a0] sm:$0xff]
      %v941 = vld [vmem:[%s2 + $0x1a8] sm:$0xff]
      %v942 = vld [vmem:[%s2 + $0x1b0] sm:$0xff]
      %v943 = vld [vmem:[%s2 + $0x1b8] sm:$0xff]
      %v944 = vld [vmem:[%s2 + $0x1c0] sm:$0xff]
      %v945 = vld [vmem:[%s2 + $0x1c8] sm:$0xff]
      %v946 = vld [vmem:[%s2 + $0x1d0] sm:$0xff]
      %v947 = vld [vmem:[%s2 + $0x1d8] sm:$0xff]
      %v948 = vld [vmem:[%s2 + $0x1e0] sm:$0xff]
      %v949 = vld [vmem:[%s2 + $0x1e8] sm:$0xff]
      %v950 = vld [vmem:[%s2 + $0x1f0] sm:$0xff]
      %v951 = vld [vmem:[%s2 + $0x1f8] sm:$0xff]
      %v952 = vld [vmem:[%s2 + $0x200] sm:$0xff]
      %v953 = vld [vmem:[%s2 + $0x208] sm:$0xff]
      %v954 = vld [vmem:[%s2 + $0x210] sm:$0xff]
      %v955 = vld [vmem:[%s2 + $0x218] sm:$0xff]
      %v956 = vld [vmem:[%s2 + $0x220] sm:$0xff]
      %v957 = vld [vmem:[%s2 + $0x228] sm:$0xff]
      %v958 = vld [vmem:[%s2 + $0x230] sm:$0xff]
      %v959 = vld [vmem:[%s2 + $0x238] sm:$0xff]
      %v960 = vld [vmem:[%s2 + $0x240] sm:$0xff]
      %v961 = vld [vmem:[%s2 + $0x248] sm:$0xff]
      %v962 = vld [vmem:[%s2 + $0x250] sm:$0xff]
      %v963 = vld [vmem:[%s2 + $0x258] sm:$0xff]
      %v964 = vld [vmem:[%s2 + $0x260] sm:$0xff]
      %v965 = vld [vmem:[%s2 + $0x268] sm:$0xff]
      %v966 = vld [vmem:[%s2 + $0x270] sm:$0xff]
      %v967 = vld [vmem:[%s2 + $0x278] sm:$0xff]
      %v968 = vld [vmem:[%s2 + $0x280] sm:$0xff]
      %v969 = vld [vmem:[%s2 + $0x288] sm:$0xff]
      %v970 = vld [vmem:[%s2 + $0x290] sm:$0xff]
      %v971 = vld [vmem:[%s2 + $0x298] sm:$0xff]
      %v972 = vld [vmem:[%s2 + $0x2a0] sm:$0xff]
      %v973 = vld [vmem:[%s2 + $0x2a8] sm:$0xff]
      %v974 = vld [vmem:[%s2 + $0x2b0] sm:$0xff]
      %v975 = vld [vmem:[%s2 + $0x2b8] sm:$0xff]
      %v976 = vld [vmem:[%s2 + $0x2c0] sm:$0xff]
      %v977 = vld [vmem:[%s2 + $0x2c8] sm:$0xff]
      %v978 = vld [vmem:[%s2 + $0x2d0] sm:$0xff]
      %v979 = vld [vmem:[%s2 + $0x2d8] sm:$0xff]
      %v980 = vld [vmem:[%s2 + $0x2e0] sm:$0xff]
      %v981 = vld [vmem:[%s2 + $0x2e8] sm:$0xff]
      %v982 = vld [vmem:[%s2 + $0x2f0] sm:$0xff]
      %v983 = vld [vmem:[%s2 + $0x2f8] sm:$0xff]
      %v984 = vld [vmem:[%s2 + $0x300] sm:$0xff]
      %v985 = vld [vmem:[%s2 + $0x308] sm:$0xff]
      %v986 = vld [vmem:[%s2 + $0x310] sm:$0xff]
      %v987 = vld [vmem:[%s2 + $0x318] sm:$0xff]
      %v988 = vld [vmem:[%s2 + $0x320] sm:$0xff]
      %v989 = vld [vmem:[%s2 + $0x328] sm:$0xff]
      %v990 = vld [vmem:[%s2 + $0x330] sm:$0xff]
      %v991 = vld [vmem:[%s2 + $0x338] sm:$0xff]
      %v992 = vld [vmem:[%s2 + $0x340] sm:$0xff]
      %v993 = vld [vmem:[%s2 + $0x348] sm:$0xff]
      %v994 = vld [vmem:[%s2 + $0x350] sm:$0xff]
      %v995 = vld [vmem:[%s2 + $0x358] sm:$0xff]
      %v996 = vld [vmem:[%s2 + $0x360] sm:$0xff]
      %v997 = vld [vmem:[%s2 + $0x368] sm:$0xff]
      %v998 = vld [vmem:[%s2 + $0x370] sm:$0xff]
      %v999 = vld [vmem:[%s2 + $0x378] sm:$0xff]
      %v1000 = vld [vmem:[%s2 + $0x380] sm:$0xff]
      %v1001 = vld [vmem:[%s2 + $0x388] sm:$0xff]
      %v1002 = vld [vmem:[%s2 + $0x390] sm:$0xff]
      %v1003 = vld [vmem:[%s2 + $0x398] sm:$0xff]
      %v1004 = vld [vmem:[%s2 + $0x3a0] sm:$0xff]
      %v1005 = vld [vmem:[%s2 + $0x3a8] sm:$0xff]
      %v1006 = vld [vmem:[%s2 + $0x3b0] sm:$0xff]
      %v1007 = vld [vmem:[%s2 + $0x3b8] sm:$0xff]
      %v1008 = vld [vmem:[%s2 + $0x3c0] sm:$0xff]
      %v1009 = vld [vmem:[%s2 + $0x3c8] sm:$0xff]
      %v1010 = vld [vmem:[%s2 + $0x3d0] sm:$0xff]
      %v1011 = vld [vmem:[%s2 + $0x3d8] sm:$0xff]
      %v1012 = vld [vmem:[%s2 + $0x3e0] sm:$0xff]
      %v1013 = vld [vmem:[%s2 + $0x3e8] sm:$0xff]
      %v1014 = vld [vmem:[%s2 + $0x3f0] sm:$0xff]
      %v1015 = vld [vmem:[%s2 + $0x3f8] sm:$0xff]
      %v1016 = vld [vmem:[%s2 + $0x400] sm:$0xff]
      %v1017 = vld [vmem:[%s2 + $0x408] sm:$0xff]
      %v1018 = vld [vmem:[%s2 + $0x410] sm:$0xff]
      %v1019 = vld [vmem:[%s2 + $0x418] sm:$0xff]
      %v1020 = vld [vmem:[%s2 + $0x420] sm:$0xff]
      %v1021 = vld [vmem:[%s2 + $0x428] sm:$0xff]
      %v1022 = vld [vmem:[%s2 + $0x430] sm:$0xff]
      %v1023 = vld [vmem:[%s2 + $0x438] sm:$0xff]
      %v1024 = vld [vmem:[%s2 + $0x440] sm:$0xff]
      %v1025 = vld [vmem:[%s2 + $0x448] sm:$0xff]
      %v1026 = vld [vmem:[%s2 + $0x450] sm:$0xff]
      %v1027 = vld [vmem:[%s2 + $0x458] sm:$0xff]
      %v1028 = vld [vmem:[%s2 + $0x460] sm:$0xff]
      %v1029 = vld [vmem:[%s2 + $0x468] sm:$0xff]
      %v1030 = vld [vmem:[%s2 + $0x470] sm:$0xff]
      %v1031 = vld [vmem:[%s2 + $0x478] sm:$0xff]
      %v1032 = vld [vmem:[%s2 + $0x480] sm:$0xff]
      %v1033 = vld [vmem:[%s2 + $0x488] sm:$0xff]
      %v1034 = vld [vmem:[%s2 + $0x490] sm:$0xff]
      %v1035 = vld [vmem:[%s2 + $0x498] sm:$0xff]
      %v1036 = vld [vmem:[%s2 + $0x4a0] sm:$0xff]
      %v1037 = vld [vmem:[%s2 + $0x4a8] sm:$0xff]
      %v1038 = vld [vmem:[%s2 + $0x4b0] sm:$0xff]
      %v1039 = vld [vmem:[%s2 + $0x4b8] sm:$0xff]
      %v1040 = vld [vmem:[%s2 + $0x4c0] sm:$0xff]
      %v1041 = vld [vmem:[%s2 + $0x4c8] sm:$0xff]
      %v1042 = vld [vmem:[%s2 + $0x4d0] sm:$0xff]
      %v1043 = vld [vmem:[%s2 + $0x4d8] sm:$0xff]
      %v1044 = vld [vmem:[%s2 + $0x4e0] sm:$0xff]
      %v1045 = vld [vmem:[%s2 + $0x4e8] sm:$0xff]
      %v1046 = vld [vmem:[%s2 + $0x4f0] sm:$0xff]
      %v1047 = vld [vmem:[%s2 + $0x4f8] sm:$0xff]
      %v1048 = vld [vmem:[%s2 + $0x500] sm:$0xff]
      %v1049 = vld [vmem:[%s2 + $0x508] sm:$0xff]
      %v1050 = vld [vmem:[%s2 + $0x510] sm:$0xff]
      %v1051 = vld [vmem:[%s2 + $0x518] sm:$0xff]
      %v1052 = vld [vmem:[%s2 + $0x520] sm:$0xff]
      %v1053 = vld [vmem:[%s2 + $0x528] sm:$0xff]
      %v1054 = vld [vmem:[%s2 + $0x530] sm:$0xff]
      %v1055 = vld [vmem:[%s2 + $0x538] sm:$0xff]
      %v1056 = vld [vmem:[%s2 + $0x540] sm:$0xff]
      %v1057 = vld [vmem:[%s2 + $0x548] sm:$0xff]
      %v1058 = vld [vmem:[%s2 + $0x550] sm:$0xff]
      %v1059 = vld [vmem:[%s2 + $0x558] sm:$0xff]
      %v1060 = vld [vmem:[%s2 + $0x560] sm:$0xff]
      %v1061 = vld [vmem:[%s2 + $0x568] sm:$0xff]
      %v1062 = vld [vmem:[%s2 + $0x570] sm:$0xff]
      %v1063 = vld [vmem:[%s2 + $0x578] sm:$0xff]
      %v1064 = vld [vmem:[%s2 + $0x580] sm:$0xff]
      %v1065 = vld [vmem:[%s2 + $0x588] sm:$0xff]
      %v1066 = vld [vmem:[%s2 + $0x590] sm:$0xff]
      %v1067 = vld [vmem:[%s2 + $0x598] sm:$0xff]
      %v1068 = vld [vmem:[%s2 + $0x5a0] sm:$0xff]
      %v1069 = vld [vmem:[%s2 + $0x5a8] sm:$0xff]
      %v1070 = vld [vmem:[%s2 + $0x5b0] sm:$0xff]
      %v1071 = vld [vmem:[%s2 + $0x5b8] sm:$0xff]
      %v1072 = vld [vmem:[%s2 + $0x5c0] sm:$0xff]
      %v1073 = vld [vmem:[%s2 + $0x5c8] sm:$0xff]
      %v1074 = vld [vmem:[%s2 + $0x5d0] sm:$0xff]
      %v1075 = vld [vmem:[%s2 + $0x5d8] sm:$0xff]
      %v1076 = vld [vmem:[%s2 + $0x5e0] sm:$0xff]
      %v1077 = vld [vmem:[%s2 + $0x5e8] sm:$0xff]
      %v1078 = vld [vmem:[%s2 + $0x5f0] sm:$0xff]
      %v1079 = vld [vmem:[%s2 + $0x5f8] sm:$0xff]
      %v1080 = vld [vmem:[%s2 + $0x600] sm:$0xff]
      %v1081 = vld [vmem:[%s2 + $0x608] sm:$0xff]
      %v1082 = vld [vmem:[%s2 + $0x610] sm:$0xff]
      %v1083 = vld [vmem:[%s2 + $0x618] sm:$0xff]
      %v1084 = vld [vmem:[%s2 + $0x620] sm:$0xff]
      %v1085 = vld [vmem:[%s2 + $0x628] sm:$0xff]
      %v1086 = vld [vmem:[%s2 + $0x630] sm:$0xff]
      %v1087 = vld [vmem:[%s2 + $0x638] sm:$0xff]
      %v1088 = vld [vmem:[%s2 + $0x640] sm:$0xff]
      %v1089 = vld [vmem:[%s2 + $0x648] sm:$0xff]
      %v1090 = vld [vmem:[%s2 + $0x650] sm:$0xff]
      %v1091 = vld [vmem:[%s2 + $0x658] sm:$0xff]
      %v1092 = vld [vmem:[%s2 + $0x660] sm:$0xff]
      %v1093 = vld [vmem:[%s2 + $0x668] sm:$0xff]
      %v1094 = vld [vmem:[%s2 + $0x670] sm:$0xff]
      %v1095 = vld [vmem:[%s2 + $0x678] sm:$0xff]
      %v1096 = vld [vmem:[%s2 + $0x680] sm:$0xff]
      %v1097 = vld [vmem:[%s2 + $0x688] sm:$0xff]
      %v1098 = vld [vmem:[%s2 + $0x690] sm:$0xff]
      %v1099 = vld [vmem:[%s2 + $0x698] sm:$0xff]
      %v1100 = vld [vmem:[%s2 + $0x6a0] sm:$0xff]
      %v1101 = vld [vmem:[%s2 + $0x6a8] sm:$0xff]
      %v1102 = vld [vmem:[%s2 + $0x6b0] sm:$0xff]
      %v1103 = vld [vmem:[%s2 + $0x6b8] sm:$0xff]
      %v1104 = vld [vmem:[%s2 + $0x6c0] sm:$0xff]
      %v1105 = vld [vmem:[%s2 + $0x6c8] sm:$0xff]
      %v1106 = vld [vmem:[%s2 + $0x6d0] sm:$0xff]
      %v1107 = vld [vmem:[%s2 + $0x6d8] sm:$0xff]
      %v1108 = vld [vmem:[%s2 + $0x6e0] sm:$0xff]
      %v1109 = vld [vmem:[%s2 + $0x6e8] sm:$0xff]
      %v1110 = vld [vmem:[%s2 + $0x6f0] sm:$0xff]
      %v1111 = vld [vmem:[%s2 + $0x6f8] sm:$0xff]
      %v1112 = vld [vmem:[%s2 + $0x700] sm:$0xff]
      %v1113 = vld [vmem:[%s2 + $0x708] sm:$0xff]
      %v1114 = vld [vmem:[%s2 + $0x710] sm:$0xff]
      %v1115 = vld [vmem:[%s2 + $0x718] sm:$0xff]
      %v1116 = vld [vmem:[%s2 + $0x720] sm:$0xff]
      %v1117 = vld [vmem:[%s2 + $0x728] sm:$0xff]
      %v1118 = vld [vmem:[%s2 + $0x730] sm:$0xff]
      %v1119 = vld [vmem:[%s2 + $0x738] sm:$0xff]
      %v1120 = vld [vmem:[%s2 + $0x740] sm:$0xff]
      %v1121 = vld [vmem:[%s2 + $0x748] sm:$0xff]
      %v1122 = vld [vmem:[%s2 + $0x750] sm:$0xff]
      %v1123 = vld [vmem:[%s2 + $0x758] sm:$0xff]
      %v1124 = vld [vmem:[%s2 + $0x760] sm:$0xff]
      %v1125 = vld [vmem:[%s2 + $0x768] sm:$0xff]
      %v1126 = vld [vmem:[%s2 + $0x770] sm:$0xff]
      %v1127 = vld [vmem:[%s2 + $0x778] sm:$0xff]
      %v1128 = vld [vmem:[%s2 + $0x780] sm:$0xff]
      %v1129 = vld [vmem:[%s2 + $0x788] sm:$0xff]
      %v1130 = vld [vmem:[%s2 + $0x790] sm:$0xff]
      %v1131 = vld [vmem:[%s2 + $0x798] sm:$0xff]
      %v1132 = vld [vmem:[%s2 + $0x7a0] sm:$0xff]
      %v1133 = vld [vmem:[%s2 + $0x7a8] sm:$0xff]
      %v1134 = vld [vmem:[%s2 + $0x7b0] sm:$0xff]
      %v1135 = vld [vmem:[%s2 + $0x7b8] sm:$0xff]
      %v1136 = vld [vmem:[%s2 + $0x7c0] sm:$0xff]
      %v1137 = vld [vmem:[%s2 + $0x7c8] sm:$0xff]
      %v1138 = vld [vmem:[%s2 + $0x7d0] sm:$0xff]
      %v1139 = vld [vmem:[%s2 + $0x7d8] sm:$0xff]
      %v1140 = vld [vmem:[%s2 + $0x7e0] sm:$0xff]
      %v1141 = vld [vmem:[%s2 + $0x7e8] sm:$0xff]
      %v1142 = vld [vmem:[%s2 + $0x7f0] sm:$0xff]
      %v1143 = vld [vmem:[%s2 + $0x7f8] sm:$0xff]
      %v1144 = vld [vmem:[%s2 + $0x800] sm:$0xff]
      %v1145 = vld [vmem:[%s2 + $0x808] sm:$0xff]
      %v1146 = vld [vmem:[%s2 + $0x810] sm:$0xff]
      %v1147 = vld [vmem:[%s2 + $0x818] sm:$0xff]
      %v1148 = vld [vmem:[%s2 + $0x820] sm:$0xff]
      %v1149 = vld [vmem:[%s2 + $0x828] sm:$0xff]
      %v1150 = vld [vmem:[%s2 + $0x830] sm:$0xff]
      %v1151 = vld [vmem:[%s2 + $0x838] sm:$0xff]
      %v1152 = vld [vmem:[%s2 + $0x840] sm:$0xff]
      %v1153 = vld [vmem:[%s2 + $0x848] sm:$0xff]
      %v1154 = vld [vmem:[%s2 + $0x850] sm:$0xff]
      %v1155 = vld [vmem:[%s2 + $0x858] sm:$0xff]
      %v1156 = vld [vmem:[%s2 + $0x860] sm:$0xff]
      %v1157 = vld [vmem:[%s2 + $0x868] sm:$0xff]
      %v1158 = vld [vmem:[%s2 + $0x870] sm:$0xff]
      %v1159 = vld [vmem:[%s2 + $0x878] sm:$0xff]
      %v1160 = vld [vmem:[%s2 + $0x880] sm:$0xff]
      %v1161 = vld [vmem:[%s2 + $0x888] sm:$0xff]
      %v1162 = vld [vmem:[%s2 + $0x890] sm:$0xff]
      %v1163 = vld [vmem:[%s2 + $0x898] sm:$0xff]
      %v1164 = vld [vmem:[%s2 + $0x8a0] sm:$0xff]
      %v1165 = vld [vmem:[%s2 + $0x8a8] sm:$0xff]
      %v1166 = vld [vmem:[%s2 + $0x8b0] sm:$0xff]
      %v1167 = vld [vmem:[%s2 + $0x8b8] sm:$0xff]
      %v1168 = vld [vmem:[%s2 + $0x8c0] sm:$0xff]
      %v1169 = vld [vmem:[%s2 + $0x8c8] sm:$0xff]
      %v1170 = vld [vmem:[%s2 + $0x8d0] sm:$0xff]
      %v1171 = vld [vmem:[%s2 + $0x8d8] sm:$0xff]
      %v1172 = vld [vmem:[%s2 + $0x8e0] sm:$0xff]
      %v1173 = vld [vmem:[%s2 + $0x8e8] sm:$0xff]
      %v1174 = vld [vmem:[%s2 + $0x8f0] sm:$0xff]
      %v1175 = vld [vmem:[%s2 + $0x8f8] sm:$0xff]
      %v1176 = vld [vmem:[%s2 + $0x900] sm:$0xff]
      %v1177 = vld [vmem:[%s2 + $0x908] sm:$0xff]
      %v1178 = vld [vmem:[%s2 + $0x910] sm:$0xff]
      %v1179 = vld [vmem:[%s2 + $0x918] sm:$0xff]
      %v1180 = vld [vmem:[%s2 + $0x920] sm:$0xff]
      %v1181 = vld [vmem:[%s2 + $0x928] sm:$0xff]
      %v1182 = vld [vmem:[%s2 + $0x930] sm:$0xff]
      %v1183 = vld [vmem:[%s2 + $0x938] sm:$0xff]
      %v1184 = vld [vmem:[%s2 + $0x940] sm:$0xff]
      %v1185 = vld [vmem:[%s2 + $0x948] sm:$0xff]
      %v1186 = vld [vmem:[%s2 + $0x950] sm:$0xff]
      %v1187 = vld [vmem:[%s2 + $0x958] sm:$0xff]
      %v1188 = vld [vmem:[%s2 + $0x960] sm:$0xff]
      %v1189 = vld [vmem:[%s2 + $0x968] sm:$0xff]
      %v1190 = vld [vmem:[%s2 + $0x970] sm:$0xff]
      %v1191 = vld [vmem:[%s2 + $0x978] sm:$0xff]
      %v1192 = vld [vmem:[%s2 + $0x980] sm:$0xff]
      %v1193 = vld [vmem:[%s2 + $0x988] sm:$0xff]
      %v1194 = vld [vmem:[%s2 + $0x990] sm:$0xff]
      %v1195 = vld [vmem:[%s2 + $0x998] sm:$0xff]
      %v1196 = vld [vmem:[%s2 + $0x9a0] sm:$0xff]
      %v1197 = vld [vmem:[%s2 + $0x9a8] sm:$0xff]
      %v1198 = vld [vmem:[%s2 + $0x9b0] sm:$0xff]
      %v1199 = vld [vmem:[%s2 + $0x9b8] sm:$0xff]
      %v1200 = vld [vmem:[%s2 + $0x9c0] sm:$0xff]
      %v1201 = vld [vmem:[%s2 + $0x9c8] sm:$0xff]
      %v1202 = vld [vmem:[%s2 + $0x9d0] sm:$0xff]
      %v1203 = vld [vmem:[%s2 + $0x9d8] sm:$0xff]
      %v1204 = vld [vmem:[%s2 + $0x9e0] sm:$0xff]
      %v1205 = vld [vmem:[%s2 + $0x9e8] sm:$0xff]
      %v1206 = vld [vmem:[%s2 + $0x9f0] sm:$0xff]
      %v1207 = vld [vmem:[%s2 + $0x9f8] sm:$0xff]
      %v1208 = vld [vmem:[%s2 + $0xa00] sm:$0xff]
      %v1209 = vld [vmem:[%s2 + $0xa08] sm:$0xff]
      %v1210 = vld [vmem:[%s2 + $0xa10] sm:$0xff]
      %v1211 = vld [vmem:[%s2 + $0xa18] sm:$0xff]
      %v1212 = vld [vmem:[%s2 + $0xa20] sm:$0xff]
      %v1213 = vld [vmem:[%s2 + $0xa28] sm:$0xff]
      %v1214 = vld [vmem:[%s2 + $0xa30] sm:$0xff]
      %v1215 = vld [vmem:[%s2 + $0xa38] sm:$0xff]
      %v1216 = vld [vmem:[%s2 + $0xa40] sm:$0xff]
      %v1217 = vld [vmem:[%s2 + $0xa48] sm:$0xff]
      %v1218 = vld [vmem:[%s2 + $0xa50] sm:$0xff]
      %v1219 = vld [vmem:[%s2 + $0xa58] sm:$0xff]
      %v1220 = vld [vmem:[%s2 + $0xa60] sm:$0xff]
      %v1221 = vld [vmem:[%s2 + $0xa68] sm:$0xff]
      %v1222 = vld [vmem:[%s2 + $0xa70] sm:$0xff]
      %v1223 = vld [vmem:[%s2 + $0xa78] sm:$0xff]
      %v1224 = vld [vmem:[%s2 + $0xa80] sm:$0xff]
      %v1225 = vld [vmem:[%s2 + $0xa88] sm:$0xff]
      %v1226 = vld [vmem:[%s2 + $0xa90] sm:$0xff]
      %v1227 = vld [vmem:[%s2 + $0xa98] sm:$0xff]
      %v1228 = vld [vmem:[%s2 + $0xaa0] sm:$0xff]
      %v1229 = vld [vmem:[%s2 + $0xaa8] sm:$0xff]
      %v1230 = vld [vmem:[%s2 + $0xab0] sm:$0xff]
      %v1231 = vld [vmem:[%s2 + $0xab8] sm:$0xff]
      %v1232 = vld [vmem:[%s2 + $0xac0] sm:$0xff]
      %v1233 = vld [vmem:[%s2 + $0xac8] sm:$0xff]
      %v1234 = vld [vmem:[%s2 + $0xad0] sm:$0xff]
      %v1235 = vld [vmem:[%s2 + $0xad8] sm:$0xff]
      %v1236 = vld [vmem:[%s2 + $0xae0] sm:$0xff]
      %v1237 = vld [vmem:[%s2 + $0xae8] sm:$0xff]
      %v1238 = vld [vmem:[%s2 + $0xaf0] sm:$0xff]
      %v1239 = vld [vmem:[%s2 + $0xaf8] sm:$0xff]
      %v1240 = vld [vmem:[%s2 + $0xb00] sm:$0xff]
      %v1241 = vld [vmem:[%s2 + $0xb08] sm:$0xff]
      %v1242 = vld [vmem:[%s2 + $0xb10] sm:$0xff]
      %v1243 = vld [vmem:[%s2 + $0xb18] sm:$0xff]
      %v1244 = vld [vmem:[%s2 + $0xb20] sm:$0xff]
      %v1245 = vld [vmem:[%s2 + $0xb28] sm:$0xff]
      %v1246 = vld [vmem:[%s2 + $0xb30] sm:$0xff]
      %v1247 = vld [vmem:[%s2 + $0xb38] sm:$0xff]
      %v1248 = vld [vmem:[%s2 + $0xb40] sm:$0xff]
      %v1249 = vld [vmem:[%s2 + $0xb48] sm:$0xff]
      %v1250 = vld [vmem:[%s2 + $0xb50] sm:$0xff]
      %v1251 = vld [vmem:[%s2 + $0xb58] sm:$0xff]
      %v1252 = vld [vmem:[%s2 + $0xb60] sm:$0xff]
      %v1253 = vld [vmem:[%s2 + $0xb68] sm:$0xff]
      %v1254 = vld [vmem:[%s2 + $0xb70] sm:$0xff]
      %v1255 = vld [vmem:[%s2 + $0xb78] sm:$0xff]
      %v1256 = vld [vmem:[%s2 + $0xb80] sm:$0xff]
      %v1257 = vld [vmem:[%s2 + $0xb88] sm:$0xff]
      %v1258 = vld [vmem:[%s2 + $0xb90] sm:$0xff]
      %v1259 = vld [vmem:[%s2 + $0xb98] sm:$0xff]
      %v1260 = vld [vmem:[%s2 + $0xba0] sm:$0xff]
      %v1261 = vld [vmem:[%s2 + $0xba8] sm:$0xff]
      %v1262 = vld [vmem:[%s2 + $0xbb0] sm:$0xff]
      %v1263 = vld [vmem:[%s2 + $0xbb8] sm:$0xff]
      %v1264 = vld [vmem:[%s2 + $0xbc0] sm:$0xff]
      %v1265 = vld [vmem:[%s2 + $0xbc8] sm:$0xff]
      %v1266 = vld [vmem:[%s2 + $0xbd0] sm:$0xff]
      %v1267 = vld [vmem:[%s2 + $0xbd8] sm:$0xff]
      %v1268 = vld [vmem:[%s2 + $0xbe0] sm:$0xff]
      %v1269 = vld [vmem:[%s2 + $0xbe8] sm:$0xff]
      %v1270 = vld [vmem:[%s2 + $0xbf0] sm:$0xff]
      %v1271 = vld [vmem:[%s2 + $0xbf8] sm:$0xff]
      %v1272 = vld [vmem:[%s3] sm:$0xff]
      %v1274 = vlaneseq
      %v1275 = vshrl.u32 %v1274, 7
      %v1276 = vsub.s32 0, %v1275
      %v1277 = vrot.slane %v1272, %v1276
      %v1278 = vlaneseq
      %v1279 = vshrl.u32 %v1278, 7
      %v1280 = vsub.s32 1, %v1279
      %v1281 = vrot.slane %v1272, %v1280
      %v1282 = vlaneseq
      %v1283 = vshrl.u32 %v1282, 7
      %v1284 = vsub.s32 2, %v1283
      %v1285 = vrot.slane %v1272, %v1284
      %v1286 = vlaneseq
      %v1287 = vshrl.u32 %v1286, 7
      %v1288 = vsub.s32 3, %v1287
      %v1289 = vrot.slane %v1272, %v1288
      %v1290 = vlaneseq
      %v1291 = vshrl.u32 %v1290, 7
      %v1292 = vsub.s32 4, %v1291
      %v1293 = vrot.slane %v1272, %v1292
      %v1294 = vlaneseq
      %v1295 = vshrl.u32 %v1294, 7
      %v1296 = vsub.s32 5, %v1295
      %v1297 = vrot.slane %v1272, %v1296
      %v1298 = vlaneseq
      %v1299 = vshrl.u32 %v1298, 7
      %v1300 = vsub.s32 6, %v1299
      %v1301 = vrot.slane %v1272, %v1300
      %v1302 = vlaneseq
      %v1303 = vshrl.u32 %v1302, 7
      %v1304 = vsub.s32 7, %v1303
      %v1305 = vrot.slane %v1272, %v1304
      %vm1314 = vsmask.f32 7424
      %v1316 = vshrl.u32 %v810, 16
      %v1318 = vshll.u32 %v810, 16
      %v1320 = vrot.slane %v1318, 1
      %v1321 = vor.u32 %v1316, %v1320
      %v1323 = vshll.u32 %v816, 16
      %v1325 = vrot.slane %v1323, 1
      %v1326 = vsel %vm1314, %v1321, %v1325
      %v1328 = vshrl.u32 %v811, 16
      %v1330 = vshll.u32 %v811, 16
      %v1332 = vrot.slane %v1330, 1
      %v1333 = vor.u32 %v1328, %v1332
      %v1335 = vshll.u32 %v817, 16
      %v1337 = vrot.slane %v1335, 1
      %v1338 = vsel %vm1314, %v1333, %v1337
      %v1340 = vshrl.u32 %v812, 16
      %v1342 = vshll.u32 %v812, 16
      %v1344 = vrot.slane %v1342, 1
      %v1345 = vor.u32 %v1340, %v1344
      %v1347 = vshll.u32 %v818, 16
      %v1349 = vrot.slane %v1347, 1
      %v1350 = vsel %vm1314, %v1345, %v1349
      %v1352 = vshrl.u32 %v813, 16
      %v1354 = vshll.u32 %v813, 16
      %v1356 = vrot.slane %v1354, 1
      %v1357 = vor.u32 %v1352, %v1356
      %v1359 = vshll.u32 %v819, 16
      %v1361 = vrot.slane %v1359, 1
      %v1362 = vsel %vm1314, %v1357, %v1361
      %v1364 = vshrl.u32 %v814, 16
      %v1366 = vshll.u32 %v814, 16
      %v1368 = vrot.slane %v1366, 1
      %v1369 = vor.u32 %v1364, %v1368
      %v1371 = vshll.u32 %v820, 16
      %v1373 = vrot.slane %v1371, 1
      %v1374 = vsel %vm1314, %v1369, %v1373
      %v1376 = vshrl.u32 %v815, 16
      %v1378 = vshll.u32 %v815, 16
      %v1380 = vrot.slane %v1378, 1
      %v1381 = vor.u32 %v1376, %v1380
      %v1383 = vshll.u32 %v821, 16
      %v1385 = vrot.slane %v1383, 1
      %v1386 = vsel %vm1314, %v1381, %v1385
      %v1387 = vshrl.u32 %v816, 16
      %v1389 = vor.u32 %v1387, %v1325
      %v1391 = vshll.u32 %v822, 16
      %v1393 = vrot.slane %v1391, 1
      %v1394 = vsel %vm1314, %v1389, %v1393
      %v1395 = vshrl.u32 %v817, 16
      %v1397 = vor.u32 %v1395, %v1337
      %v1399 = vshll.u32 %v823, 16
      %v1401 = vrot.slane %v1399, 1
      %v1402 = vsel %vm1314, %v1397, %v1401
      %v1403 = vshrl.u32 %v818, 16
      %v1405 = vor.u32 %v1403, %v1349
      %v1407 = vshll.u32 %v824, 16
      %v1409 = vrot.slane %v1407, 1
      %v1410 = vsel %vm1314, %v1405, %v1409
      %v1411 = vshrl.u32 %v819, 16
      %v1413 = vor.u32 %v1411, %v1361
      %v1415 = vshll.u32 %v825, 16
      %v1417 = vrot.slane %v1415, 1
      %v1418 = vsel %vm1314, %v1413, %v1417
      %v1419 = vshrl.u32 %v820, 16
      %v1421 = vor.u32 %v1419, %v1373
      %v1423 = vshll.u32 %v826, 16
      %v1425 = vrot.slane %v1423, 1
      %v1426 = vsel %vm1314, %v1421, %v1425
      %v1427 = vshrl.u32 %v821, 16
      %v1429 = vor.u32 %v1427, %v1385
      %v1431 = vshll.u32 %v827, 16
      %v1433 = vrot.slane %v1431, 1
      %v1434 = vsel %vm1314, %v1429, %v1433
      %v1435 = vshrl.u32 %v822, 16
      %v1437 = vor.u32 %v1435, %v1393
      %v1439 = vshll.u32 %v828, 16
      %v1441 = vrot.slane %v1439, 1
      %v1442 = vsel %vm1314, %v1437, %v1441
      %v1443 = vshrl.u32 %v823, 16
      %v1445 = vor.u32 %v1443, %v1401
      %v1447 = vshll.u32 %v829, 16
      %v1449 = vrot.slane %v1447, 1
      %v1450 = vsel %vm1314, %v1445, %v1449
      %v1451 = vshrl.u32 %v824, 16
      %v1453 = vor.u32 %v1451, %v1409
      %v1455 = vshll.u32 %v830, 16
      %v1457 = vrot.slane %v1455, 1
      %v1458 = vsel %vm1314, %v1453, %v1457
      %v1459 = vshrl.u32 %v825, 16
      %v1461 = vor.u32 %v1459, %v1417
      %v1463 = vshll.u32 %v831, 16
      %v1465 = vrot.slane %v1463, 1
      %v1466 = vsel %vm1314, %v1461, %v1465
      %v1467 = vshrl.u32 %v826, 16
      %v1469 = vor.u32 %v1467, %v1425
      %v1471 = vshll.u32 %v832, 16
      %v1473 = vrot.slane %v1471, 1
      %v1474 = vsel %vm1314, %v1469, %v1473
      %v1475 = vshrl.u32 %v827, 16
      %v1477 = vor.u32 %v1475, %v1433
      %v1479 = vshll.u32 %v833, 16
      %v1481 = vrot.slane %v1479, 1
      %v1482 = vsel %vm1314, %v1477, %v1481
      %v1483 = vshrl.u32 %v828, 16
      %v1485 = vor.u32 %v1483, %v1441
      %v1487 = vshll.u32 %v834, 16
      %v1489 = vrot.slane %v1487, 1
      %v1490 = vsel %vm1314, %v1485, %v1489
      %v1491 = vshrl.u32 %v829, 16
      %v1493 = vor.u32 %v1491, %v1449
      %v1495 = vshll.u32 %v835, 16
      %v1497 = vrot.slane %v1495, 1
      %v1498 = vsel %vm1314, %v1493, %v1497
      %v1499 = vshrl.u32 %v830, 16
      %v1501 = vor.u32 %v1499, %v1457
      %v1503 = vshll.u32 %v836, 16
      %v1505 = vrot.slane %v1503, 1
      %v1506 = vsel %vm1314, %v1501, %v1505
      %v1507 = vshrl.u32 %v831, 16
      %v1509 = vor.u32 %v1507, %v1465
      %v1511 = vshll.u32 %v837, 16
      %v1513 = vrot.slane %v1511, 1
      %v1514 = vsel %vm1314, %v1509, %v1513
      %v1515 = vshrl.u32 %v832, 16
      %v1517 = vor.u32 %v1515, %v1473
      %v1519 = vshll.u32 %v838, 16
      %v1521 = vrot.slane %v1519, 1
      %v1522 = vsel %vm1314, %v1517, %v1521
      %v1523 = vshrl.u32 %v833, 16
      %v1525 = vor.u32 %v1523, %v1481
      %v1527 = vshll.u32 %v839, 16
      %v1529 = vrot.slane %v1527, 1
      %v1530 = vsel %vm1314, %v1525, %v1529
      %v1531 = vshrl.u32 %v834, 16
      %v1533 = vor.u32 %v1531, %v1489
      %v1535 = vshll.u32 %v840, 16
      %v1537 = vrot.slane %v1535, 1
      %v1538 = vsel %vm1314, %v1533, %v1537
      %v1539 = vshrl.u32 %v835, 16
      %v1541 = vor.u32 %v1539, %v1497
      %v1543 = vshll.u32 %v841, 16
      %v1545 = vrot.slane %v1543, 1
      %v1546 = vsel %vm1314, %v1541, %v1545
      %v1547 = vshrl.u32 %v836, 16
      %v1549 = vor.u32 %v1547, %v1505
      %v1551 = vshll.u32 %v842, 16
      %v1553 = vrot.slane %v1551, 1
      %v1554 = vsel %vm1314, %v1549, %v1553
      %v1555 = vshrl.u32 %v837, 16
      %v1557 = vor.u32 %v1555, %v1513
      %v1559 = vshll.u32 %v843, 16
      %v1561 = vrot.slane %v1559, 1
      %v1562 = vsel %vm1314, %v1557, %v1561
      %v1563 = vshrl.u32 %v838, 16
      %v1565 = vor.u32 %v1563, %v1521
      %v1567 = vshll.u32 %v844, 16
      %v1569 = vrot.slane %v1567, 1
      %v1570 = vsel %vm1314, %v1565, %v1569
      %v1571 = vshrl.u32 %v839, 16
      %v1573 = vor.u32 %v1571, %v1529
      %v1575 = vshll.u32 %v845, 16
      %v1577 = vrot.slane %v1575, 1
      %v1578 = vsel %vm1314, %v1573, %v1577
      %v1579 = vshrl.u32 %v840, 16
      %v1581 = vor.u32 %v1579, %v1537
      %v1583 = vshll.u32 %v846, 16
      %v1585 = vrot.slane %v1583, 1
      %v1586 = vsel %vm1314, %v1581, %v1585
      %v1587 = vshrl.u32 %v841, 16
      %v1589 = vor.u32 %v1587, %v1545
      %v1591 = vshll.u32 %v847, 16
      %v1593 = vrot.slane %v1591, 1
      %v1594 = vsel %vm1314, %v1589, %v1593
      %v1595 = vshrl.u32 %v842, 16
      %v1597 = vor.u32 %v1595, %v1553
      %v1599 = vshll.u32 %v848, 16
      %v1601 = vrot.slane %v1599, 1
      %v1602 = vsel %vm1314, %v1597, %v1601
      %v1603 = vshrl.u32 %v843, 16
      %v1605 = vor.u32 %v1603, %v1561
      %v1607 = vshll.u32 %v849, 16
      %v1609 = vrot.slane %v1607, 1
      %v1610 = vsel %vm1314, %v1605, %v1609
      %v1611 = vshrl.u32 %v844, 16
      %v1613 = vor.u32 %v1611, %v1569
      %v1615 = vshll.u32 %v850, 16
      %v1617 = vrot.slane %v1615, 1
      %v1618 = vsel %vm1314, %v1613, %v1617
      %v1619 = vshrl.u32 %v845, 16
      %v1621 = vor.u32 %v1619, %v1577
      %v1623 = vshll.u32 %v851, 16
      %v1625 = vrot.slane %v1623, 1
      %v1626 = vsel %vm1314, %v1621, %v1625
      %v1627 = vshrl.u32 %v846, 16
      %v1629 = vor.u32 %v1627, %v1585
      %v1631 = vshll.u32 %v852, 16
      %v1633 = vrot.slane %v1631, 1
      %v1634 = vsel %vm1314, %v1629, %v1633
      %v1635 = vshrl.u32 %v847, 16
      %v1637 = vor.u32 %v1635, %v1593
      %v1639 = vshll.u32 %v853, 16
      %v1641 = vrot.slane %v1639, 1
      %v1642 = vsel %vm1314, %v1637, %v1641
      %v1643 = vshrl.u32 %v848, 16
      %v1645 = vor.u32 %v1643, %v1601
      %v1647 = vshll.u32 %v854, 16
      %v1649 = vrot.slane %v1647, 1
      %v1650 = vsel %vm1314, %v1645, %v1649
      %v1651 = vshrl.u32 %v849, 16
      %v1653 = vor.u32 %v1651, %v1609
      %v1655 = vshll.u32 %v855, 16
      %v1657 = vrot.slane %v1655, 1
      %v1658 = vsel %vm1314, %v1653, %v1657
      %v1659 = vshrl.u32 %v850, 16
      %v1661 = vor.u32 %v1659, %v1617
      %v1663 = vshll.u32 %v856, 16
      %v1665 = vrot.slane %v1663, 1
      %v1666 = vsel %vm1314, %v1661, %v1665
      %v1667 = vshrl.u32 %v851, 16
      %v1669 = vor.u32 %v1667, %v1625
      %v1671 = vshll.u32 %v857, 16
      %v1673 = vrot.slane %v1671, 1
      %v1674 = vsel %vm1314, %v1669, %v1673
      %v1675 = vshrl.u32 %v852, 16
      %v1677 = vor.u32 %v1675, %v1633
      %v1679 = vshll.u32 %v858, 16
      %v1681 = vrot.slane %v1679, 1
      %v1682 = vsel %vm1314, %v1677, %v1681
      %v1683 = vshrl.u32 %v853, 16
      %v1685 = vor.u32 %v1683, %v1641
      %v1687 = vshll.u32 %v859, 16
      %v1689 = vrot.slane %v1687, 1
      %v1690 = vsel %vm1314, %v1685, %v1689
      %v1691 = vshrl.u32 %v854, 16
      %v1693 = vor.u32 %v1691, %v1649
      %v1695 = vshll.u32 %v860, 16
      %v1697 = vrot.slane %v1695, 1
      %v1698 = vsel %vm1314, %v1693, %v1697
      %v1699 = vshrl.u32 %v855, 16
      %v1701 = vor.u32 %v1699, %v1657
      %v1703 = vshll.u32 %v861, 16
      %v1705 = vrot.slane %v1703, 1
      %v1706 = vsel %vm1314, %v1701, %v1705
      %v1707 = vshrl.u32 %v856, 16
      %v1709 = vor.u32 %v1707, %v1665
      %v1711 = vshll.u32 %v862, 16
      %v1713 = vrot.slane %v1711, 1
      %v1714 = vsel %vm1314, %v1709, %v1713
      %v1715 = vshrl.u32 %v857, 16
      %v1717 = vor.u32 %v1715, %v1673
      %v1719 = vshll.u32 %v863, 16
      %v1721 = vrot.slane %v1719, 1
      %v1722 = vsel %vm1314, %v1717, %v1721
      %v1723 = vshrl.u32 %v858, 16
      %v1725 = vor.u32 %v1723, %v1681
      %v1727 = vshll.u32 %v864, 16
      %v1729 = vrot.slane %v1727, 1
      %v1730 = vsel %vm1314, %v1725, %v1729
      %v1731 = vshrl.u32 %v859, 16
      %v1733 = vor.u32 %v1731, %v1689
      %v1735 = vshll.u32 %v865, 16
      %v1737 = vrot.slane %v1735, 1
      %v1738 = vsel %vm1314, %v1733, %v1737
      %v1739 = vshrl.u32 %v860, 16
      %v1741 = vor.u32 %v1739, %v1697
      %v1743 = vshll.u32 %v866, 16
      %v1745 = vrot.slane %v1743, 1
      %v1746 = vsel %vm1314, %v1741, %v1745
      %v1747 = vshrl.u32 %v861, 16
      %v1749 = vor.u32 %v1747, %v1705
      %v1751 = vshll.u32 %v867, 16
      %v1753 = vrot.slane %v1751, 1
      %v1754 = vsel %vm1314, %v1749, %v1753
      %v1755 = vshrl.u32 %v862, 16
      %v1757 = vor.u32 %v1755, %v1713
      %v1759 = vshll.u32 %v868, 16
      %v1761 = vrot.slane %v1759, 1
      %v1762 = vsel %vm1314, %v1757, %v1761
      %v1763 = vshrl.u32 %v863, 16
      %v1765 = vor.u32 %v1763, %v1721
      %v1767 = vshll.u32 %v869, 16
      %v1769 = vrot.slane %v1767, 1
      %v1770 = vsel %vm1314, %v1765, %v1769
      %v1771 = vshrl.u32 %v864, 16
      %v1773 = vor.u32 %v1771, %v1729
      %v1775 = vshll.u32 %v870, 16
      %v1777 = vrot.slane %v1775, 1
      %v1778 = vsel %vm1314, %v1773, %v1777
      %v1779 = vshrl.u32 %v865, 16
      %v1781 = vor.u32 %v1779, %v1737
      %v1783 = vshll.u32 %v871, 16
      %v1785 = vrot.slane %v1783, 1
      %v1786 = vsel %vm1314, %v1781, %v1785
      %v1787 = vshrl.u32 %v866, 16
      %v1789 = vor.u32 %v1787, %v1745
      %v1791 = vshll.u32 %v872, 16
      %v1793 = vrot.slane %v1791, 1
      %v1794 = vsel %vm1314, %v1789, %v1793
      %v1795 = vshrl.u32 %v867, 16
      %v1797 = vor.u32 %v1795, %v1753
      %v1799 = vshll.u32 %v873, 16
      %v1801 = vrot.slane %v1799, 1
      %v1802 = vsel %vm1314, %v1797, %v1801
      %v1803 = vshrl.u32 %v868, 16
      %v1805 = vor.u32 %v1803, %v1761
      %v1807 = vshll.u32 %v874, 16
      %v1809 = vrot.slane %v1807, 1
      %v1810 = vsel %vm1314, %v1805, %v1809
      %v1811 = vshrl.u32 %v869, 16
      %v1813 = vor.u32 %v1811, %v1769
      %v1815 = vshll.u32 %v875, 16
      %v1817 = vrot.slane %v1815, 1
      %v1818 = vsel %vm1314, %v1813, %v1817
      %v1819 = vshrl.u32 %v870, 16
      %v1821 = vor.u32 %v1819, %v1777
      %v1823 = vshll.u32 %v876, 16
      %v1825 = vrot.slane %v1823, 1
      %v1826 = vsel %vm1314, %v1821, %v1825
      %v1827 = vshrl.u32 %v871, 16
      %v1829 = vor.u32 %v1827, %v1785
      %v1831 = vshll.u32 %v877, 16
      %v1833 = vrot.slane %v1831, 1
      %v1834 = vsel %vm1314, %v1829, %v1833
      %v1835 = vshrl.u32 %v872, 16
      %v1837 = vor.u32 %v1835, %v1793
      %v1839 = vshll.u32 %v878, 16
      %v1841 = vrot.slane %v1839, 1
      %v1842 = vsel %vm1314, %v1837, %v1841
      %v1843 = vshrl.u32 %v873, 16
      %v1845 = vor.u32 %v1843, %v1801
      %v1847 = vshll.u32 %v879, 16
      %v1849 = vrot.slane %v1847, 1
      %v1850 = vsel %vm1314, %v1845, %v1849
      %v1851 = vshrl.u32 %v874, 16
      %v1853 = vor.u32 %v1851, %v1809
      %v1855 = vshll.u32 %v880, 16
      %v1857 = vrot.slane %v1855, 1
      %v1858 = vsel %vm1314, %v1853, %v1857
      %v1859 = vshrl.u32 %v875, 16
      %v1861 = vor.u32 %v1859, %v1817
      %v1863 = vshll.u32 %v881, 16
      %v1865 = vrot.slane %v1863, 1
      %v1866 = vsel %vm1314, %v1861, %v1865
      %v1867 = vshrl.u32 %v876, 16
      %v1869 = vor.u32 %v1867, %v1825
      %v1871 = vshll.u32 %v882, 16
      %v1873 = vrot.slane %v1871, 1
      %v1874 = vsel %vm1314, %v1869, %v1873
      %v1875 = vshrl.u32 %v877, 16
      %v1877 = vor.u32 %v1875, %v1833
      %v1879 = vshll.u32 %v883, 16
      %v1881 = vrot.slane %v1879, 1
      %v1882 = vsel %vm1314, %v1877, %v1881
      %v1883 = vshrl.u32 %v878, 16
      %v1885 = vor.u32 %v1883, %v1841
      %v1887 = vshll.u32 %v884, 16
      %v1889 = vrot.slane %v1887, 1
      %v1890 = vsel %vm1314, %v1885, %v1889
      %v1891 = vshrl.u32 %v879, 16
      %v1893 = vor.u32 %v1891, %v1849
      %v1895 = vshll.u32 %v885, 16
      %v1897 = vrot.slane %v1895, 1
      %v1898 = vsel %vm1314, %v1893, %v1897
      %v1899 = vshrl.u32 %v880, 16
      %v1901 = vor.u32 %v1899, %v1857
      %v1903 = vshll.u32 %v886, 16
      %v1905 = vrot.slane %v1903, 1
      %v1906 = vsel %vm1314, %v1901, %v1905
      %v1907 = vshrl.u32 %v881, 16
      %v1909 = vor.u32 %v1907, %v1865
      %v1911 = vshll.u32 %v887, 16
      %v1913 = vrot.slane %v1911, 1
      %v1914 = vsel %vm1314, %v1909, %v1913
      %v1915 = vshrl.u32 %v882, 16
      %v1917 = vor.u32 %v1915, %v1873
      %v1918 = vshrl.u32 %v883, 16
      %v1920 = vor.u32 %v1918, %v1881
      %v1921 = vshrl.u32 %v884, 16
      %v1923 = vor.u32 %v1921, %v1889
      %v1924 = vshrl.u32 %v885, 16
      %v1926 = vor.u32 %v1924, %v1897
      %v1927 = vshrl.u32 %v886, 16
      %v1929 = vor.u32 %v1927, %v1905
      %v1930 = vshrl.u32 %v887, 16
      %v1932 = vor.u32 %v1930, %v1913
      %v2395 = vunpack.c.l.b16 %v888
      %v2396 = vunpack.c.h.b16 %v888
      %v2397 = vunpack.c.l.b16 %v889
      %v2398 = vunpack.c.h.b16 %v889
      %v2399 = vunpack.c.l.b16 %v890
      %v2400 = vunpack.c.h.b16 %v890
      %v2401 = vunpack.c.l.b16 %v891
      %v2402 = vunpack.c.h.b16 %v891
      %v2403 = vunpack.c.l.b16 %v892
      %v2404 = vunpack.c.h.b16 %v892
      %v2405 = vunpack.c.l.b16 %v893
      %v2406 = vunpack.c.h.b16 %v893
      %v2407 = vunpack.c.l.b16 %v894
      %v2408 = vunpack.c.h.b16 %v894
      %v2409 = vunpack.c.l.b16 %v895
      %v2410 = vunpack.c.h.b16 %v895
      %v2411 = vunpack.c.l.b16 %v896
      %v2412 = vunpack.c.h.b16 %v896
      %v2413 = vunpack.c.l.b16 %v897
      %v2414 = vunpack.c.h.b16 %v897
      %v2415 = vunpack.c.l.b16 %v898
      %v2416 = vunpack.c.h.b16 %v898
      %v2417 = vunpack.c.l.b16 %v899
      %v2418 = vunpack.c.h.b16 %v899
      %v2419 = vunpack.c.l.b16 %v900
      %v2420 = vunpack.c.h.b16 %v900
      %v2421 = vunpack.c.l.b16 %v901
      %v2422 = vunpack.c.h.b16 %v901
      %v2423 = vunpack.c.l.b16 %v902
      %v2424 = vunpack.c.h.b16 %v902
      %v2425 = vunpack.c.l.b16 %v903
      %v2426 = vunpack.c.h.b16 %v903
      %v2427 = vunpack.c.l.b16 %v904
      %v2428 = vunpack.c.h.b16 %v904
      %v2429 = vunpack.c.l.b16 %v905
      %v2430 = vunpack.c.h.b16 %v905
      %v2431 = vunpack.c.l.b16 %v906
      %v2432 = vunpack.c.h.b16 %v906
      %v2433 = vunpack.c.l.b16 %v907
      %v2434 = vunpack.c.h.b16 %v907
      %v2435 = vunpack.c.l.b16 %v908
      %v2436 = vunpack.c.h.b16 %v908
      %v2437 = vunpack.c.l.b16 %v909
      %v2438 = vunpack.c.h.b16 %v909
      %v2439 = vunpack.c.l.b16 %v910
      %v2440 = vunpack.c.h.b16 %v910
      %v2441 = vunpack.c.l.b16 %v911
      %v2442 = vunpack.c.h.b16 %v911
      %v2443 = vunpack.c.l.b16 %v912
      %v2444 = vunpack.c.h.b16 %v912
      %v2445 = vunpack.c.l.b16 %v913
      %v2446 = vunpack.c.h.b16 %v913
      %v2447 = vunpack.c.l.b16 %v914
      %v2448 = vunpack.c.h.b16 %v914
      %v2449 = vunpack.c.l.b16 %v915
      %v2450 = vunpack.c.h.b16 %v915
      %v2451 = vunpack.c.l.b16 %v916
      %v2452 = vunpack.c.h.b16 %v916
      %v2453 = vunpack.c.l.b16 %v917
      %v2454 = vunpack.c.h.b16 %v917
      %v2455 = vunpack.c.l.b16 %v918
      %v2456 = vunpack.c.h.b16 %v918
      %v2457 = vunpack.c.l.b16 %v919
      %v2458 = vunpack.c.h.b16 %v919
      %v2459 = vunpack.c.l.b16 %v920
      %v2460 = vunpack.c.h.b16 %v920
      %v2461 = vunpack.c.l.b16 %v921
      %v2462 = vunpack.c.h.b16 %v921
      %v2463 = vunpack.c.l.b16 %v922
      %v2464 = vunpack.c.h.b16 %v922
      %v2465 = vunpack.c.l.b16 %v923
      %v2466 = vunpack.c.h.b16 %v923
      %v2467 = vunpack.c.l.b16 %v924
      %v2468 = vunpack.c.h.b16 %v924
      %v2469 = vunpack.c.l.b16 %v925
      %v2470 = vunpack.c.h.b16 %v925
      %v2471 = vunpack.c.l.b16 %v926
      %v2472 = vunpack.c.h.b16 %v926
      %v2473 = vunpack.c.l.b16 %v927
      %v2474 = vunpack.c.h.b16 %v927
      %v2475 = vunpack.c.l.b16 %v928
      %v2476 = vunpack.c.h.b16 %v928
      %v2477 = vunpack.c.l.b16 %v929
      %v2478 = vunpack.c.h.b16 %v929
      %v2479 = vunpack.c.l.b16 %v930
      %v2480 = vunpack.c.h.b16 %v930
      %v2481 = vunpack.c.l.b16 %v931
      %v2482 = vunpack.c.h.b16 %v931
      %v2483 = vunpack.c.l.b16 %v932
      %v2484 = vunpack.c.h.b16 %v932
      %v2485 = vunpack.c.l.b16 %v933
      %v2486 = vunpack.c.h.b16 %v933
      %v2487 = vunpack.c.l.b16 %v934
      %v2488 = vunpack.c.h.b16 %v934
      %v2489 = vunpack.c.l.b16 %v935
      %v2490 = vunpack.c.h.b16 %v935
      %v2491 = vunpack.c.l.b16 %v936
      %v2492 = vunpack.c.h.b16 %v936
      %v2493 = vunpack.c.l.b16 %v937
      %v2494 = vunpack.c.h.b16 %v937
      %v2495 = vunpack.c.l.b16 %v938
      %v2496 = vunpack.c.h.b16 %v938
      %v2497 = vunpack.c.l.b16 %v939
      %v2498 = vunpack.c.h.b16 %v939
      %v2499 = vunpack.c.l.b16 %v940
      %v2500 = vunpack.c.h.b16 %v940
      %v2501 = vunpack.c.l.b16 %v941
      %v2502 = vunpack.c.h.b16 %v941
      %v2503 = vunpack.c.l.b16 %v942
      %v2504 = vunpack.c.h.b16 %v942
      %v2505 = vunpack.c.l.b16 %v943
      %v2506 = vunpack.c.h.b16 %v943
      %v2507 = vunpack.c.l.b16 %v944
      %v2508 = vunpack.c.h.b16 %v944
      %v2509 = vunpack.c.l.b16 %v945
      %v2510 = vunpack.c.h.b16 %v945
      %v2511 = vunpack.c.l.b16 %v946
      %v2512 = vunpack.c.h.b16 %v946
      %v2513 = vunpack.c.l.b16 %v947
      %v2514 = vunpack.c.h.b16 %v947
      %v2515 = vunpack.c.l.b16 %v948
      %v2516 = vunpack.c.h.b16 %v948
      %v2517 = vunpack.c.l.b16 %v949
      %v2518 = vunpack.c.h.b16 %v949
      %v2519 = vunpack.c.l.b16 %v950
      %v2520 = vunpack.c.h.b16 %v950
      %v2521 = vunpack.c.l.b16 %v951
      %v2522 = vunpack.c.h.b16 %v951
      %v2523 = vunpack.c.l.b16 %v952
      %v2524 = vunpack.c.h.b16 %v952
      %v2525 = vunpack.c.l.b16 %v953
      %v2526 = vunpack.c.h.b16 %v953
      %v2527 = vunpack.c.l.b16 %v954
      %v2528 = vunpack.c.h.b16 %v954
      %v2529 = vunpack.c.l.b16 %v955
      %v2530 = vunpack.c.h.b16 %v955
      %v2531 = vunpack.c.l.b16 %v956
      %v2532 = vunpack.c.h.b16 %v956
      %v2533 = vunpack.c.l.b16 %v957
      %v2534 = vunpack.c.h.b16 %v957
      %v2535 = vunpack.c.l.b16 %v958
      %v2536 = vunpack.c.h.b16 %v958
      %v2537 = vunpack.c.l.b16 %v959
      %v2538 = vunpack.c.h.b16 %v959
      %v2539 = vunpack.c.l.b16 %v960
      %v2540 = vunpack.c.h.b16 %v960
      %v2541 = vunpack.c.l.b16 %v961
      %v2542 = vunpack.c.h.b16 %v961
      %v2543 = vunpack.c.l.b16 %v962
      %v2544 = vunpack.c.h.b16 %v962
      %v2545 = vunpack.c.l.b16 %v963
      %v2546 = vunpack.c.h.b16 %v963
      %v2547 = vunpack.c.l.b16 %v964
      %v2548 = vunpack.c.h.b16 %v964
      %v2549 = vunpack.c.l.b16 %v965
      %v2550 = vunpack.c.h.b16 %v965
      %v2551 = vunpack.c.l.b16 %v966
      %v2552 = vunpack.c.h.b16 %v966
      %v2553 = vunpack.c.l.b16 %v967
      %v2554 = vunpack.c.h.b16 %v967
      %v2555 = vunpack.c.l.b16 %v968
      %v2556 = vunpack.c.h.b16 %v968
      %v2557 = vunpack.c.l.b16 %v969
      %v2558 = vunpack.c.h.b16 %v969
      %v2559 = vunpack.c.l.b16 %v970
      %v2560 = vunpack.c.h.b16 %v970
      %v2561 = vunpack.c.l.b16 %v971
      %v2562 = vunpack.c.h.b16 %v971
      %v2563 = vunpack.c.l.b16 %v972
      %v2564 = vunpack.c.h.b16 %v972
      %v2565 = vunpack.c.l.b16 %v973
      %v2566 = vunpack.c.h.b16 %v973
      %v2567 = vunpack.c.l.b16 %v974
      %v2568 = vunpack.c.h.b16 %v974
      %v2569 = vunpack.c.l.b16 %v975
      %v2570 = vunpack.c.h.b16 %v975
      %v2571 = vunpack.c.l.b16 %v976
      %v2572 = vunpack.c.h.b16 %v976
      %v2573 = vunpack.c.l.b16 %v977
      %v2574 = vunpack.c.h.b16 %v977
      %v2575 = vunpack.c.l.b16 %v978
      %v2576 = vunpack.c.h.b16 %v978
      %v2577 = vunpack.c.l.b16 %v979
      %v2578 = vunpack.c.h.b16 %v979
      %v2579 = vunpack.c.l.b16 %v980
      %v2580 = vunpack.c.h.b16 %v980
      %v2581 = vunpack.c.l.b16 %v981
      %v2582 = vunpack.c.h.b16 %v981
      %v2583 = vunpack.c.l.b16 %v982
      %v2584 = vunpack.c.h.b16 %v982
      %v2585 = vunpack.c.l.b16 %v983
      %v2586 = vunpack.c.h.b16 %v983
      %v2587 = vunpack.c.l.b16 %v984
      %v2588 = vunpack.c.h.b16 %v984
      %v2589 = vunpack.c.l.b16 %v985
      %v2590 = vunpack.c.h.b16 %v985
      %v2591 = vunpack.c.l.b16 %v986
      %v2592 = vunpack.c.h.b16 %v986
      %v2593 = vunpack.c.l.b16 %v987
      %v2594 = vunpack.c.h.b16 %v987
      %v2595 = vunpack.c.l.b16 %v988
      %v2596 = vunpack.c.h.b16 %v988
      %v2597 = vunpack.c.l.b16 %v989
      %v2598 = vunpack.c.h.b16 %v989
      %v2599 = vunpack.c.l.b16 %v990
      %v2600 = vunpack.c.h.b16 %v990
      %v2601 = vunpack.c.l.b16 %v991
      %v2602 = vunpack.c.h.b16 %v991
      %v2603 = vunpack.c.l.b16 %v992
      %v2604 = vunpack.c.h.b16 %v992
      %v2605 = vunpack.c.l.b16 %v993
      %v2606 = vunpack.c.h.b16 %v993
      %v2607 = vunpack.c.l.b16 %v994
      %v2608 = vunpack.c.h.b16 %v994
      %v2609 = vunpack.c.l.b16 %v995
      %v2610 = vunpack.c.h.b16 %v995
      %v2611 = vunpack.c.l.b16 %v996
      %v2612 = vunpack.c.h.b16 %v996
      %v2613 = vunpack.c.l.b16 %v997
      %v2614 = vunpack.c.h.b16 %v997
      %v2615 = vunpack.c.l.b16 %v998
      %v2616 = vunpack.c.h.b16 %v998
      %v2617 = vunpack.c.l.b16 %v999
      %v2618 = vunpack.c.h.b16 %v999
      %v2619 = vunpack.c.l.b16 %v1000
      %v2620 = vunpack.c.h.b16 %v1000
      %v2621 = vunpack.c.l.b16 %v1001
      %v2622 = vunpack.c.h.b16 %v1001
      %v2623 = vunpack.c.l.b16 %v1002
      %v2624 = vunpack.c.h.b16 %v1002
      %v2625 = vunpack.c.l.b16 %v1003
      %v2626 = vunpack.c.h.b16 %v1003
      %v2627 = vunpack.c.l.b16 %v1004
      %v2628 = vunpack.c.h.b16 %v1004
      %v2629 = vunpack.c.l.b16 %v1005
      %v2630 = vunpack.c.h.b16 %v1005
      %v2631 = vunpack.c.l.b16 %v1006
      %v2632 = vunpack.c.h.b16 %v1006
      %v2633 = vunpack.c.l.b16 %v1007
      %v2634 = vunpack.c.h.b16 %v1007
      %v2635 = vunpack.c.l.b16 %v1008
      %v2636 = vunpack.c.h.b16 %v1008
      %v2637 = vunpack.c.l.b16 %v1009
      %v2638 = vunpack.c.h.b16 %v1009
      %v2639 = vunpack.c.l.b16 %v1010
      %v2640 = vunpack.c.h.b16 %v1010
      %v2641 = vunpack.c.l.b16 %v1011
      %v2642 = vunpack.c.h.b16 %v1011
      %v2643 = vunpack.c.l.b16 %v1012
      %v2644 = vunpack.c.h.b16 %v1012
      %v2645 = vunpack.c.l.b16 %v1013
      %v2646 = vunpack.c.h.b16 %v1013
      %v2647 = vunpack.c.l.b16 %v1014
      %v2648 = vunpack.c.h.b16 %v1014
      %v2649 = vunpack.c.l.b16 %v1015
      %v2650 = vunpack.c.h.b16 %v1015
      %v2651 = vunpack.c.l.b16 %v1016
      %v2652 = vunpack.c.h.b16 %v1016
      %v2653 = vunpack.c.l.b16 %v1017
      %v2654 = vunpack.c.h.b16 %v1017
      %v2655 = vunpack.c.l.b16 %v1018
      %v2656 = vunpack.c.h.b16 %v1018
      %v2657 = vunpack.c.l.b16 %v1019
      %v2658 = vunpack.c.h.b16 %v1019
      %v2659 = vunpack.c.l.b16 %v1020
      %v2660 = vunpack.c.h.b16 %v1020
      %v2661 = vunpack.c.l.b16 %v1021
      %v2662 = vunpack.c.h.b16 %v1021
      %v2663 = vunpack.c.l.b16 %v1022
      %v2664 = vunpack.c.h.b16 %v1022
      %v2665 = vunpack.c.l.b16 %v1023
      %v2666 = vunpack.c.h.b16 %v1023
      %v2667 = vunpack.c.l.b16 %v1024
      %v2668 = vunpack.c.h.b16 %v1024
      %v2669 = vunpack.c.l.b16 %v1025
      %v2670 = vunpack.c.h.b16 %v1025
      %v2671 = vunpack.c.l.b16 %v1026
      %v2672 = vunpack.c.h.b16 %v1026
      %v2673 = vunpack.c.l.b16 %v1027
      %v2674 = vunpack.c.h.b16 %v1027
      %v2675 = vunpack.c.l.b16 %v1028
      %v2676 = vunpack.c.h.b16 %v1028
      %v2677 = vunpack.c.l.b16 %v1029
      %v2678 = vunpack.c.h.b16 %v1029
      %v2679 = vunpack.c.l.b16 %v1030
      %v2680 = vunpack.c.h.b16 %v1030
      %v2681 = vunpack.c.l.b16 %v1031
      %v2682 = vunpack.c.h.b16 %v1031
      %v2683 = vunpack.c.l.b16 %v1032
      %v2684 = vunpack.c.h.b16 %v1032
      %v2685 = vunpack.c.l.b16 %v1033
      %v2686 = vunpack.c.h.b16 %v1033
      %v2687 = vunpack.c.l.b16 %v1034
      %v2688 = vunpack.c.h.b16 %v1034
      %v2689 = vunpack.c.l.b16 %v1035
      %v2690 = vunpack.c.h.b16 %v1035
      %v2691 = vunpack.c.l.b16 %v1036
      %v2692 = vunpack.c.h.b16 %v1036
      %v2693 = vunpack.c.l.b16 %v1037
      %v2694 = vunpack.c.h.b16 %v1037
      %v2695 = vunpack.c.l.b16 %v1038
      %v2696 = vunpack.c.h.b16 %v1038
      %v2697 = vunpack.c.l.b16 %v1039
      %v2698 = vunpack.c.h.b16 %v1039
      %v2699 = vunpack.c.l.b16 %v1040
      %v2700 = vunpack.c.h.b16 %v1040
      %v2701 = vunpack.c.l.b16 %v1041
      %v2702 = vunpack.c.h.b16 %v1041
      %v2703 = vunpack.c.l.b16 %v1042
      %v2704 = vunpack.c.h.b16 %v1042
      %v2705 = vunpack.c.l.b16 %v1043
      %v2706 = vunpack.c.h.b16 %v1043
      %v2707 = vunpack.c.l.b16 %v1044
      %v2708 = vunpack.c.h.b16 %v1044
      %v2709 = vunpack.c.l.b16 %v1045
      %v2710 = vunpack.c.h.b16 %v1045
      %v2711 = vunpack.c.l.b16 %v1046
      %v2712 = vunpack.c.h.b16 %v1046
      %v2713 = vunpack.c.l.b16 %v1047
      %v2714 = vunpack.c.h.b16 %v1047
      %v2715 = vunpack.c.l.b16 %v1048
      %v2716 = vunpack.c.h.b16 %v1048
      %v2717 = vunpack.c.l.b16 %v1049
      %v2718 = vunpack.c.h.b16 %v1049
      %v2719 = vunpack.c.l.b16 %v1050
      %v2720 = vunpack.c.h.b16 %v1050
      %v2721 = vunpack.c.l.b16 %v1051
      %v2722 = vunpack.c.h.b16 %v1051
      %v2723 = vunpack.c.l.b16 %v1052
      %v2724 = vunpack.c.h.b16 %v1052
      %v2725 = vunpack.c.l.b16 %v1053
      %v2726 = vunpack.c.h.b16 %v1053
      %v2727 = vunpack.c.l.b16 %v1054
      %v2728 = vunpack.c.h.b16 %v1054
      %v2729 = vunpack.c.l.b16 %v1055
      %v2730 = vunpack.c.h.b16 %v1055
      %v2731 = vunpack.c.l.b16 %v1056
      %v2732 = vunpack.c.h.b16 %v1056
      %v2733 = vunpack.c.l.b16 %v1057
      %v2734 = vunpack.c.h.b16 %v1057
      %v2735 = vunpack.c.l.b16 %v1058
      %v2736 = vunpack.c.h.b16 %v1058
      %v2737 = vunpack.c.l.b16 %v1059
      %v2738 = vunpack.c.h.b16 %v1059
      %v2739 = vunpack.c.l.b16 %v1060
      %v2740 = vunpack.c.h.b16 %v1060
      %v2741 = vunpack.c.l.b16 %v1061
      %v2742 = vunpack.c.h.b16 %v1061
      %v2743 = vunpack.c.l.b16 %v1062
      %v2744 = vunpack.c.h.b16 %v1062
      %v2745 = vunpack.c.l.b16 %v1063
      %v2746 = vunpack.c.h.b16 %v1063
      %v2747 = vunpack.c.l.b16 %v1064
      %v2748 = vunpack.c.h.b16 %v1064
      %v2749 = vunpack.c.l.b16 %v1065
      %v2750 = vunpack.c.h.b16 %v1065
      %v2751 = vunpack.c.l.b16 %v1066
      %v2752 = vunpack.c.h.b16 %v1066
      %v2753 = vunpack.c.l.b16 %v1067
      %v2754 = vunpack.c.h.b16 %v1067
      %v2755 = vunpack.c.l.b16 %v1068
      %v2756 = vunpack.c.h.b16 %v1068
      %v2757 = vunpack.c.l.b16 %v1069
      %v2758 = vunpack.c.h.b16 %v1069
      %v2759 = vunpack.c.l.b16 %v1070
      %v2760 = vunpack.c.h.b16 %v1070
      %v2761 = vunpack.c.l.b16 %v1071
      %v2762 = vunpack.c.h.b16 %v1071
      %v2763 = vunpack.c.l.b16 %v1072
      %v2764 = vunpack.c.h.b16 %v1072
      %v2765 = vunpack.c.l.b16 %v1073
      %v2766 = vunpack.c.h.b16 %v1073
      %v2767 = vunpack.c.l.b16 %v1074
      %v2768 = vunpack.c.h.b16 %v1074
      %v2769 = vunpack.c.l.b16 %v1075
      %v2770 = vunpack.c.h.b16 %v1075
      %v2771 = vunpack.c.l.b16 %v1076
      %v2772 = vunpack.c.h.b16 %v1076
      %v2773 = vunpack.c.l.b16 %v1077
      %v2774 = vunpack.c.h.b16 %v1077
      %v2775 = vunpack.c.l.b16 %v1078
      %v2776 = vunpack.c.h.b16 %v1078
      %v2777 = vunpack.c.l.b16 %v1079
      %v2778 = vunpack.c.h.b16 %v1079
      %v2779 = vunpack.c.l.b16 %v1080
      %v2780 = vunpack.c.h.b16 %v1080
      %v2781 = vunpack.c.l.b16 %v1081
      %v2782 = vunpack.c.h.b16 %v1081
      %v2783 = vunpack.c.l.b16 %v1082
      %v2784 = vunpack.c.h.b16 %v1082
      %v2785 = vunpack.c.l.b16 %v1083
      %v2786 = vunpack.c.h.b16 %v1083
      %v2787 = vunpack.c.l.b16 %v1084
      %v2788 = vunpack.c.h.b16 %v1084
      %v2789 = vunpack.c.l.b16 %v1085
      %v2790 = vunpack.c.h.b16 %v1085
      %v2791 = vunpack.c.l.b16 %v1086
      %v2792 = vunpack.c.h.b16 %v1086
      %v2793 = vunpack.c.l.b16 %v1087
      %v2794 = vunpack.c.h.b16 %v1087
      %v2795 = vunpack.c.l.b16 %v1088
      %v2796 = vunpack.c.h.b16 %v1088
      %v2797 = vunpack.c.l.b16 %v1089
      %v2798 = vunpack.c.h.b16 %v1089
      %v2799 = vunpack.c.l.b16 %v1090
      %v2800 = vunpack.c.h.b16 %v1090
      %v2801 = vunpack.c.l.b16 %v1091
      %v2802 = vunpack.c.h.b16 %v1091
      %v2803 = vunpack.c.l.b16 %v1092
      %v2804 = vunpack.c.h.b16 %v1092
      %v2805 = vunpack.c.l.b16 %v1093
      %v2806 = vunpack.c.h.b16 %v1093
      %v2807 = vunpack.c.l.b16 %v1094
      %v2808 = vunpack.c.h.b16 %v1094
      %v2809 = vunpack.c.l.b16 %v1095
      %v2810 = vunpack.c.h.b16 %v1095
      %v2811 = vunpack.c.l.b16 %v1096
      %v2812 = vunpack.c.h.b16 %v1096
      %v2813 = vunpack.c.l.b16 %v1097
      %v2814 = vunpack.c.h.b16 %v1097
      %v2815 = vunpack.c.l.b16 %v1098
      %v2816 = vunpack.c.h.b16 %v1098
      %v2817 = vunpack.c.l.b16 %v1099
      %v2818 = vunpack.c.h.b16 %v1099
      %v2819 = vunpack.c.l.b16 %v1100
      %v2820 = vunpack.c.h.b16 %v1100
      %v2821 = vunpack.c.l.b16 %v1101
      %v2822 = vunpack.c.h.b16 %v1101
      %v2823 = vunpack.c.l.b16 %v1102
      %v2824 = vunpack.c.h.b16 %v1102
      %v2825 = vunpack.c.l.b16 %v1103
      %v2826 = vunpack.c.h.b16 %v1103
      %v2827 = vunpack.c.l.b16 %v1104
      %v2828 = vunpack.c.h.b16 %v1104
      %v2829 = vunpack.c.l.b16 %v1105
      %v2830 = vunpack.c.h.b16 %v1105
      %v2831 = vunpack.c.l.b16 %v1106
      %v2832 = vunpack.c.h.b16 %v1106
      %v2833 = vunpack.c.l.b16 %v1107
      %v2834 = vunpack.c.h.b16 %v1107
      %v2835 = vunpack.c.l.b16 %v1108
      %v2836 = vunpack.c.h.b16 %v1108
      %v2837 = vunpack.c.l.b16 %v1109
      %v2838 = vunpack.c.h.b16 %v1109
      %v2839 = vunpack.c.l.b16 %v1110
      %v2840 = vunpack.c.h.b16 %v1110
      %v2841 = vunpack.c.l.b16 %v1111
      %v2842 = vunpack.c.h.b16 %v1111
      %v2843 = vunpack.c.l.b16 %v1112
      %v2844 = vunpack.c.h.b16 %v1112
      %v2845 = vunpack.c.l.b16 %v1113
      %v2846 = vunpack.c.h.b16 %v1113
      %v2847 = vunpack.c.l.b16 %v1114
      %v2848 = vunpack.c.h.b16 %v1114
      %v2849 = vunpack.c.l.b16 %v1115
      %v2850 = vunpack.c.h.b16 %v1115
      %v2851 = vunpack.c.l.b16 %v1116
      %v2852 = vunpack.c.h.b16 %v1116
      %v2853 = vunpack.c.l.b16 %v1117
      %v2854 = vunpack.c.h.b16 %v1117
      %v2855 = vunpack.c.l.b16 %v1118
      %v2856 = vunpack.c.h.b16 %v1118
      %v2857 = vunpack.c.l.b16 %v1119
      %v2858 = vunpack.c.h.b16 %v1119
      %v2859 = vunpack.c.l.b16 %v1120
      %v2860 = vunpack.c.h.b16 %v1120
      %v2861 = vunpack.c.l.b16 %v1121
      %v2862 = vunpack.c.h.b16 %v1121
      %v2863 = vunpack.c.l.b16 %v1122
      %v2864 = vunpack.c.h.b16 %v1122
      %v2865 = vunpack.c.l.b16 %v1123
      %v2866 = vunpack.c.h.b16 %v1123
      %v2867 = vunpack.c.l.b16 %v1124
      %v2868 = vunpack.c.h.b16 %v1124
      %v2869 = vunpack.c.l.b16 %v1125
      %v2870 = vunpack.c.h.b16 %v1125
      %v2871 = vunpack.c.l.b16 %v1126
      %v2872 = vunpack.c.h.b16 %v1126
      %v2873 = vunpack.c.l.b16 %v1127
      %v2874 = vunpack.c.h.b16 %v1127
      %v2875 = vunpack.c.l.b16 %v1128
      %v2876 = vunpack.c.h.b16 %v1128
      %v2877 = vunpack.c.l.b16 %v1129
      %v2878 = vunpack.c.h.b16 %v1129
      %v2879 = vunpack.c.l.b16 %v1130
      %v2880 = vunpack.c.h.b16 %v1130
      %v2881 = vunpack.c.l.b16 %v1131
      %v2882 = vunpack.c.h.b16 %v1131
      %v2883 = vunpack.c.l.b16 %v1132
      %v2884 = vunpack.c.h.b16 %v1132
      %v2885 = vunpack.c.l.b16 %v1133
      %v2886 = vunpack.c.h.b16 %v1133
      %v2887 = vunpack.c.l.b16 %v1134
      %v2888 = vunpack.c.h.b16 %v1134
      %v2889 = vunpack.c.l.b16 %v1135
      %v2890 = vunpack.c.h.b16 %v1135
      %v2891 = vunpack.c.l.b16 %v1136
      %v2892 = vunpack.c.h.b16 %v1136
      %v2893 = vunpack.c.l.b16 %v1137
      %v2894 = vunpack.c.h.b16 %v1137
      %v2895 = vunpack.c.l.b16 %v1138
      %v2896 = vunpack.c.h.b16 %v1138
      %v2897 = vunpack.c.l.b16 %v1139
      %v2898 = vunpack.c.h.b16 %v1139
      %v2899 = vunpack.c.l.b16 %v1140
      %v2900 = vunpack.c.h.b16 %v1140
      %v2901 = vunpack.c.l.b16 %v1141
      %v2902 = vunpack.c.h.b16 %v1141
      %v2903 = vunpack.c.l.b16 %v1142
      %v2904 = vunpack.c.h.b16 %v1142
      %v2905 = vunpack.c.l.b16 %v1143
      %v2906 = vunpack.c.h.b16 %v1143
      %v2907 = vunpack.c.l.b16 %v1144
      %v2908 = vunpack.c.h.b16 %v1144
      %v2909 = vunpack.c.l.b16 %v1145
      %v2910 = vunpack.c.h.b16 %v1145
      %v2911 = vunpack.c.l.b16 %v1146
      %v2912 = vunpack.c.h.b16 %v1146
      %v2913 = vunpack.c.l.b16 %v1147
      %v2914 = vunpack.c.h.b16 %v1147
      %v2915 = vunpack.c.l.b16 %v1148
      %v2916 = vunpack.c.h.b16 %v1148
      %v2917 = vunpack.c.l.b16 %v1149
      %v2918 = vunpack.c.h.b16 %v1149
      %v2919 = vunpack.c.l.b16 %v1150
      %v2920 = vunpack.c.h.b16 %v1150
      %v2921 = vunpack.c.l.b16 %v1151
      %v2922 = vunpack.c.h.b16 %v1151
      %v2923 = vunpack.c.l.b16 %v1152
      %v2924 = vunpack.c.h.b16 %v1152
      %v2925 = vunpack.c.l.b16 %v1153
      %v2926 = vunpack.c.h.b16 %v1153
      %v2927 = vunpack.c.l.b16 %v1154
      %v2928 = vunpack.c.h.b16 %v1154
      %v2929 = vunpack.c.l.b16 %v1155
      %v2930 = vunpack.c.h.b16 %v1155
      %v2931 = vunpack.c.l.b16 %v1156
      %v2932 = vunpack.c.h.b16 %v1156
      %v2933 = vunpack.c.l.b16 %v1157
      %v2934 = vunpack.c.h.b16 %v1157
      %v2935 = vunpack.c.l.b16 %v1158
      %v2936 = vunpack.c.h.b16 %v1158
      %v2937 = vunpack.c.l.b16 %v1159
      %v2938 = vunpack.c.h.b16 %v1159
      %v2939 = vunpack.c.l.b16 %v1160
      %v2940 = vunpack.c.h.b16 %v1160
      %v2941 = vunpack.c.l.b16 %v1161
      %v2942 = vunpack.c.h.b16 %v1161
      %v2943 = vunpack.c.l.b16 %v1162
      %v2944 = vunpack.c.h.b16 %v1162
      %v2945 = vunpack.c.l.b16 %v1163
      %v2946 = vunpack.c.h.b16 %v1163
      %v2947 = vunpack.c.l.b16 %v1164
      %v2948 = vunpack.c.h.b16 %v1164
      %v2949 = vunpack.c.l.b16 %v1165
      %v2950 = vunpack.c.h.b16 %v1165
      %v2951 = vunpack.c.l.b16 %v1166
      %v2952 = vunpack.c.h.b16 %v1166
      %v2953 = vunpack.c.l.b16 %v1167
      %v2954 = vunpack.c.h.b16 %v1167
      %v2955 = vunpack.c.l.b16 %v1168
      %v2956 = vunpack.c.h.b16 %v1168
      %v2957 = vunpack.c.l.b16 %v1169
      %v2958 = vunpack.c.h.b16 %v1169
      %v2959 = vunpack.c.l.b16 %v1170
      %v2960 = vunpack.c.h.b16 %v1170
      %v2961 = vunpack.c.l.b16 %v1171
      %v2962 = vunpack.c.h.b16 %v1171
      %v2963 = vunpack.c.l.b16 %v1172
      %v2964 = vunpack.c.h.b16 %v1172
      %v2965 = vunpack.c.l.b16 %v1173
      %v2966 = vunpack.c.h.b16 %v1173
      %v2967 = vunpack.c.l.b16 %v1174
      %v2968 = vunpack.c.h.b16 %v1174
      %v2969 = vunpack.c.l.b16 %v1175
      %v2970 = vunpack.c.h.b16 %v1175
      %v2971 = vunpack.c.l.b16 %v1176
      %v2972 = vunpack.c.h.b16 %v1176
      %v2973 = vunpack.c.l.b16 %v1177
      %v2974 = vunpack.c.h.b16 %v1177
      %v2975 = vunpack.c.l.b16 %v1178
      %v2976 = vunpack.c.h.b16 %v1178
      %v2977 = vunpack.c.l.b16 %v1179
      %v2978 = vunpack.c.h.b16 %v1179
      %v2979 = vunpack.c.l.b16 %v1180
      %v2980 = vunpack.c.h.b16 %v1180
      %v2981 = vunpack.c.l.b16 %v1181
      %v2982 = vunpack.c.h.b16 %v1181
      %v2983 = vunpack.c.l.b16 %v1182
      %v2984 = vunpack.c.h.b16 %v1182
      %v2985 = vunpack.c.l.b16 %v1183
      %v2986 = vunpack.c.h.b16 %v1183
      %v2987 = vunpack.c.l.b16 %v1184
      %v2988 = vunpack.c.h.b16 %v1184
      %v2989 = vunpack.c.l.b16 %v1185
      %v2990 = vunpack.c.h.b16 %v1185
      %v2991 = vunpack.c.l.b16 %v1186
      %v2992 = vunpack.c.h.b16 %v1186
      %v2993 = vunpack.c.l.b16 %v1187
      %v2994 = vunpack.c.h.b16 %v1187
      %v2995 = vunpack.c.l.b16 %v1188
      %v2996 = vunpack.c.h.b16 %v1188
      %v2997 = vunpack.c.l.b16 %v1189
      %v2998 = vunpack.c.h.b16 %v1189
      %v2999 = vunpack.c.l.b16 %v1190
      %v3000 = vunpack.c.h.b16 %v1190
      %v3001 = vunpack.c.l.b16 %v1191
      %v3002 = vunpack.c.h.b16 %v1191
      %v3003 = vunpack.c.l.b16 %v1192
      %v3004 = vunpack.c.h.b16 %v1192
      %v3005 = vunpack.c.l.b16 %v1193
      %v3006 = vunpack.c.h.b16 %v1193
      %v3007 = vunpack.c.l.b16 %v1194
      %v3008 = vunpack.c.h.b16 %v1194
      %v3009 = vunpack.c.l.b16 %v1195
      %v3010 = vunpack.c.h.b16 %v1195
      %v3011 = vunpack.c.l.b16 %v1196
      %v3012 = vunpack.c.h.b16 %v1196
      %v3013 = vunpack.c.l.b16 %v1197
      %v3014 = vunpack.c.h.b16 %v1197
      %v3015 = vunpack.c.l.b16 %v1198
      %v3016 = vunpack.c.h.b16 %v1198
      %v3017 = vunpack.c.l.b16 %v1199
      %v3018 = vunpack.c.h.b16 %v1199
      %v3019 = vunpack.c.l.b16 %v1200
      %v3020 = vunpack.c.h.b16 %v1200
      %v3021 = vunpack.c.l.b16 %v1201
      %v3022 = vunpack.c.h.b16 %v1201
      %v3023 = vunpack.c.l.b16 %v1202
      %v3024 = vunpack.c.h.b16 %v1202
      %v3025 = vunpack.c.l.b16 %v1203
      %v3026 = vunpack.c.h.b16 %v1203
      %v3027 = vunpack.c.l.b16 %v1204
      %v3028 = vunpack.c.h.b16 %v1204
      %v3029 = vunpack.c.l.b16 %v1205
      %v3030 = vunpack.c.h.b16 %v1205
      %v3031 = vunpack.c.l.b16 %v1206
      %v3032 = vunpack.c.h.b16 %v1206
      %v3033 = vunpack.c.l.b16 %v1207
      %v3034 = vunpack.c.h.b16 %v1207
      %v3035 = vunpack.c.l.b16 %v1208
      %v3036 = vunpack.c.h.b16 %v1208
      %v3037 = vunpack.c.l.b16 %v1209
      %v3038 = vunpack.c.h.b16 %v1209
      %v3039 = vunpack.c.l.b16 %v1210
      %v3040 = vunpack.c.h.b16 %v1210
      %v3041 = vunpack.c.l.b16 %v1211
      %v3042 = vunpack.c.h.b16 %v1211
      %v3043 = vunpack.c.l.b16 %v1212
      %v3044 = vunpack.c.h.b16 %v1212
      %v3045 = vunpack.c.l.b16 %v1213
      %v3046 = vunpack.c.h.b16 %v1213
      %v3047 = vunpack.c.l.b16 %v1214
      %v3048 = vunpack.c.h.b16 %v1214
      %v3049 = vunpack.c.l.b16 %v1215
      %v3050 = vunpack.c.h.b16 %v1215
      %v3051 = vunpack.c.l.b16 %v1216
      %v3052 = vunpack.c.h.b16 %v1216
      %v3053 = vunpack.c.l.b16 %v1217
      %v3054 = vunpack.c.h.b16 %v1217
      %v3055 = vunpack.c.l.b16 %v1218
      %v3056 = vunpack.c.h.b16 %v1218
      %v3057 = vunpack.c.l.b16 %v1219
      %v3058 = vunpack.c.h.b16 %v1219
      %v3059 = vunpack.c.l.b16 %v1220
      %v3060 = vunpack.c.h.b16 %v1220
      %v3061 = vunpack.c.l.b16 %v1221
      %v3062 = vunpack.c.h.b16 %v1221
      %v3063 = vunpack.c.l.b16 %v1222
      %v3064 = vunpack.c.h.b16 %v1222
      %v3065 = vunpack.c.l.b16 %v1223
      %v3066 = vunpack.c.h.b16 %v1223
      %v3067 = vunpack.c.l.b16 %v1224
      %v3068 = vunpack.c.h.b16 %v1224
      %v3069 = vunpack.c.l.b16 %v1225
      %v3070 = vunpack.c.h.b16 %v1225
      %v3071 = vunpack.c.l.b16 %v1226
      %v3072 = vunpack.c.h.b16 %v1226
      %v3073 = vunpack.c.l.b16 %v1227
      %v3074 = vunpack.c.h.b16 %v1227
      %v3075 = vunpack.c.l.b16 %v1228
      %v3076 = vunpack.c.h.b16 %v1228
      %v3077 = vunpack.c.l.b16 %v1229
      %v3078 = vunpack.c.h.b16 %v1229
      %v3079 = vunpack.c.l.b16 %v1230
      %v3080 = vunpack.c.h.b16 %v1230
      %v3081 = vunpack.c.l.b16 %v1231
      %v3082 = vunpack.c.h.b16 %v1231
      %v3083 = vunpack.c.l.b16 %v1232
      %v3084 = vunpack.c.h.b16 %v1232
      %v3085 = vunpack.c.l.b16 %v1233
      %v3086 = vunpack.c.h.b16 %v1233
      %v3087 = vunpack.c.l.b16 %v1234
      %v3088 = vunpack.c.h.b16 %v1234
      %v3089 = vunpack.c.l.b16 %v1235
      %v3090 = vunpack.c.h.b16 %v1235
      %v3091 = vunpack.c.l.b16 %v1236
      %v3092 = vunpack.c.h.b16 %v1236
      %v3093 = vunpack.c.l.b16 %v1237
      %v3094 = vunpack.c.h.b16 %v1237
      %v3095 = vunpack.c.l.b16 %v1238
      %v3096 = vunpack.c.h.b16 %v1238
      %v3097 = vunpack.c.l.b16 %v1239
      %v3098 = vunpack.c.h.b16 %v1239
      %v3099 = vunpack.c.l.b16 %v1240
      %v3100 = vunpack.c.h.b16 %v1240
      %v3101 = vunpack.c.l.b16 %v1241
      %v3102 = vunpack.c.h.b16 %v1241
      %v3103 = vunpack.c.l.b16 %v1242
      %v3104 = vunpack.c.h.b16 %v1242
      %v3105 = vunpack.c.l.b16 %v1243
      %v3106 = vunpack.c.h.b16 %v1243
      %v3107 = vunpack.c.l.b16 %v1244
      %v3108 = vunpack.c.h.b16 %v1244
      %v3109 = vunpack.c.l.b16 %v1245
      %v3110 = vunpack.c.h.b16 %v1245
      %v3111 = vunpack.c.l.b16 %v1246
      %v3112 = vunpack.c.h.b16 %v1246
      %v3113 = vunpack.c.l.b16 %v1247
      %v3114 = vunpack.c.h.b16 %v1247
      %v3115 = vunpack.c.l.b16 %v1248
      %v3116 = vunpack.c.h.b16 %v1248
      %v3117 = vunpack.c.l.b16 %v1249
      %v3118 = vunpack.c.h.b16 %v1249
      %v3119 = vunpack.c.l.b16 %v1250
      %v3120 = vunpack.c.h.b16 %v1250
      %v3121 = vunpack.c.l.b16 %v1251
      %v3122 = vunpack.c.h.b16 %v1251
      %v3123 = vunpack.c.l.b16 %v1252
      %v3124 = vunpack.c.h.b16 %v1252
      %v3125 = vunpack.c.l.b16 %v1253
      %v3126 = vunpack.c.h.b16 %v1253
      %v3127 = vunpack.c.l.b16 %v1254
      %v3128 = vunpack.c.h.b16 %v1254
      %v3129 = vunpack.c.l.b16 %v1255
      %v3130 = vunpack.c.h.b16 %v1255
      %v3131 = vunpack.c.l.b16 %v1256
      %v3132 = vunpack.c.h.b16 %v1256
      %v3133 = vunpack.c.l.b16 %v1257
      %v3134 = vunpack.c.h.b16 %v1257
      %v3135 = vunpack.c.l.b16 %v1258
      %v3136 = vunpack.c.h.b16 %v1258
      %v3137 = vunpack.c.l.b16 %v1259
      %v3138 = vunpack.c.h.b16 %v1259
      %v3139 = vunpack.c.l.b16 %v1260
      %v3140 = vunpack.c.h.b16 %v1260
      %v3141 = vunpack.c.l.b16 %v1261
      %v3142 = vunpack.c.h.b16 %v1261
      %v3143 = vunpack.c.l.b16 %v1262
      %v3144 = vunpack.c.h.b16 %v1262
      %v3145 = vunpack.c.l.b16 %v1263
      %v3146 = vunpack.c.h.b16 %v1263
      %v3147 = vunpack.c.l.b16 %v1264
      %v3148 = vunpack.c.h.b16 %v1264
      %v3149 = vunpack.c.l.b16 %v1265
      %v3150 = vunpack.c.h.b16 %v1265
      %v3151 = vunpack.c.l.b16 %v1266
      %v3152 = vunpack.c.h.b16 %v1266
      %v3153 = vunpack.c.l.b16 %v1267
      %v3154 = vunpack.c.h.b16 %v1267
      %v3155 = vunpack.c.l.b16 %v1268
      %v3156 = vunpack.c.h.b16 %v1268
      %v3157 = vunpack.c.l.b16 %v1269
      %v3158 = vunpack.c.h.b16 %v1269
      %v3159 = vunpack.c.l.b16 %v1270
      %v3160 = vunpack.c.h.b16 %v1270
      %v3161 = vunpack.c.l.b16 %v1271
      %v3162 = vunpack.c.h.b16 %v1271
      %v3163 = vpack.c.b16 %v2403, %v2395
      %v3164 = vpack.c.b16 %v2404, %v2396
      %v3165 = vpack.c.b16 %v2405, %v2397
      %v3166 = vpack.c.b16 %v2406, %v2398
      %v3167 = vpack.c.b16 %v2407, %v2399
      %v3168 = vpack.c.b16 %v2408, %v2400
      %v3169 = vpack.c.b16 %v2409, %v2401
      %v3170 = vpack.c.b16 %v2410, %v2402
      %v3171 = vpack.c.b16 %v2419, %v2411
      %v3172 = vpack.c.b16 %v2420, %v2412
      %v3173 = vpack.c.b16 %v2421, %v2413
      %v3174 = vpack.c.b16 %v2422, %v2414
      %v3175 = vpack.c.b16 %v2423, %v2415
      %v3176 = vpack.c.b16 %v2424, %v2416
      %v3177 = vpack.c.b16 %v2425, %v2417
      %v3178 = vpack.c.b16 %v2426, %v2418
      %v3179 = vpack.c.b16 %v2435, %v2427
      %v3180 = vpack.c.b16 %v2436, %v2428
      %v3181 = vpack.c.b16 %v2437, %v2429
      %v3182 = vpack.c.b16 %v2438, %v2430
      %v3183 = vpack.c.b16 %v2439, %v2431
      %v3184 = vpack.c.b16 %v2440, %v2432
      %v3185 = vpack.c.b16 %v2441, %v2433
      %v3186 = vpack.c.b16 %v2442, %v2434
      %v3187 = vpack.c.b16 %v2451, %v2443
      %v3188 = vpack.c.b16 %v2452, %v2444
      %v3189 = vpack.c.b16 %v2453, %v2445
      %v3190 = vpack.c.b16 %v2454, %v2446
      %v3191 = vpack.c.b16 %v2455, %v2447
      %v3192 = vpack.c.b16 %v2456, %v2448
      %v3193 = vpack.c.b16 %v2457, %v2449
      %v3194 = vpack.c.b16 %v2458, %v2450
      %v3195 = vpack.c.b16 %v2467, %v2459
      %v3196 = vpack.c.b16 %v2468, %v2460
      %v3197 = vpack.c.b16 %v2469, %v2461
      %v3198 = vpack.c.b16 %v2470, %v2462
      %v3199 = vpack.c.b16 %v2471, %v2463
      %v3200 = vpack.c.b16 %v2472, %v2464
      %v3201 = vpack.c.b16 %v2473, %v2465
      %v3202 = vpack.c.b16 %v2474, %v2466
      %v3203 = vpack.c.b16 %v2483, %v2475
      %v3204 = vpack.c.b16 %v2484, %v2476
      %v3205 = vpack.c.b16 %v2485, %v2477
      %v3206 = vpack.c.b16 %v2486, %v2478
      %v3207 = vpack.c.b16 %v2487, %v2479
      %v3208 = vpack.c.b16 %v2488, %v2480
      %v3209 = vpack.c.b16 %v2489, %v2481
      %v3210 = vpack.c.b16 %v2490, %v2482
      %v3211 = vpack.c.b16 %v2499, %v2491
      %v3212 = vpack.c.b16 %v2500, %v2492
      %v3213 = vpack.c.b16 %v2501, %v2493
      %v3214 = vpack.c.b16 %v2502, %v2494
      %v3215 = vpack.c.b16 %v2503, %v2495
      %v3216 = vpack.c.b16 %v2504, %v2496
      %v3217 = vpack.c.b16 %v2505, %v2497
      %v3218 = vpack.c.b16 %v2506, %v2498
      %v3219 = vpack.c.b16 %v2515, %v2507
      %v3220 = vpack.c.b16 %v2516, %v2508
      %v3221 = vpack.c.b16 %v2517, %v2509
      %v3222 = vpack.c.b16 %v2518, %v2510
      %v3223 = vpack.c.b16 %v2519, %v2511
      %v3224 = vpack.c.b16 %v2520, %v2512
      %v3225 = vpack.c.b16 %v2521, %v2513
      %v3226 = vpack.c.b16 %v2522, %v2514
      %v3227 = vpack.c.b16 %v2531, %v2523
      %v3228 = vpack.c.b16 %v2532, %v2524
      %v3229 = vpack.c.b16 %v2533, %v2525
      %v3230 = vpack.c.b16 %v2534, %v2526
      %v3231 = vpack.c.b16 %v2535, %v2527
      %v3232 = vpack.c.b16 %v2536, %v2528
      %v3233 = vpack.c.b16 %v2537, %v2529
      %v3234 = vpack.c.b16 %v2538, %v2530
      %v3235 = vpack.c.b16 %v2547, %v2539
      %v3236 = vpack.c.b16 %v2548, %v2540
      %v3237 = vpack.c.b16 %v2549, %v2541
      %v3238 = vpack.c.b16 %v2550, %v2542
      %v3239 = vpack.c.b16 %v2551, %v2543
      %v3240 = vpack.c.b16 %v2552, %v2544
      %v3241 = vpack.c.b16 %v2553, %v2545
      %v3242 = vpack.c.b16 %v2554, %v2546
      %v3243 = vpack.c.b16 %v2563, %v2555
      %v3244 = vpack.c.b16 %v2564, %v2556
      %v3245 = vpack.c.b16 %v2565, %v2557
      %v3246 = vpack.c.b16 %v2566, %v2558
      %v3247 = vpack.c.b16 %v2567, %v2559
      %v3248 = vpack.c.b16 %v2568, %v2560
      %v3249 = vpack.c.b16 %v2569, %v2561
      %v3250 = vpack.c.b16 %v2570, %v2562
      %v3251 = vpack.c.b16 %v2579, %v2571
      %v3252 = vpack.c.b16 %v2580, %v2572
      %v3253 = vpack.c.b16 %v2581, %v2573
      %v3254 = vpack.c.b16 %v2582, %v2574
      %v3255 = vpack.c.b16 %v2583, %v2575
      %v3256 = vpack.c.b16 %v2584, %v2576
      %v3257 = vpack.c.b16 %v2585, %v2577
      %v3258 = vpack.c.b16 %v2586, %v2578
      %v3259 = vpack.c.b16 %v2595, %v2587
      %v3260 = vpack.c.b16 %v2596, %v2588
      %v3261 = vpack.c.b16 %v2597, %v2589
      %v3262 = vpack.c.b16 %v2598, %v2590
      %v3263 = vpack.c.b16 %v2599, %v2591
      %v3264 = vpack.c.b16 %v2600, %v2592
      %v3265 = vpack.c.b16 %v2601, %v2593
      %v3266 = vpack.c.b16 %v2602, %v2594
      %v3267 = vpack.c.b16 %v2611, %v2603
      %v3268 = vpack.c.b16 %v2612, %v2604
      %v3269 = vpack.c.b16 %v2613, %v2605
      %v3270 = vpack.c.b16 %v2614, %v2606
      %v3271 = vpack.c.b16 %v2615, %v2607
      %v3272 = vpack.c.b16 %v2616, %v2608
      %v3273 = vpack.c.b16 %v2617, %v2609
      %v3274 = vpack.c.b16 %v2618, %v2610
      %v3275 = vpack.c.b16 %v2627, %v2619
      %v3276 = vpack.c.b16 %v2628, %v2620
      %v3277 = vpack.c.b16 %v2629, %v2621
      %v3278 = vpack.c.b16 %v2630, %v2622
      %v3279 = vpack.c.b16 %v2631, %v2623
      %v3280 = vpack.c.b16 %v2632, %v2624
      %v3281 = vpack.c.b16 %v2633, %v2625
      %v3282 = vpack.c.b16 %v2634, %v2626
      %v3283 = vpack.c.b16 %v2643, %v2635
      %v3284 = vpack.c.b16 %v2644, %v2636
      %v3285 = vpack.c.b16 %v2645, %v2637
      %v3286 = vpack.c.b16 %v2646, %v2638
      %v3287 = vpack.c.b16 %v2647, %v2639
      %v3288 = vpack.c.b16 %v2648, %v2640
      %v3289 = vpack.c.b16 %v2649, %v2641
      %v3290 = vpack.c.b16 %v2650, %v2642
      %v3291 = vpack.c.b16 %v2659, %v2651
      %v3292 = vpack.c.b16 %v2660, %v2652
      %v3293 = vpack.c.b16 %v2661, %v2653
      %v3294 = vpack.c.b16 %v2662, %v2654
      %v3295 = vpack.c.b16 %v2663, %v2655
      %v3296 = vpack.c.b16 %v2664, %v2656
      %v3297 = vpack.c.b16 %v2665, %v2657
      %v3298 = vpack.c.b16 %v2666, %v2658
      %v3299 = vpack.c.b16 %v2675, %v2667
      %v3300 = vpack.c.b16 %v2676, %v2668
      %v3301 = vpack.c.b16 %v2677, %v2669
      %v3302 = vpack.c.b16 %v2678, %v2670
      %v3303 = vpack.c.b16 %v2679, %v2671
      %v3304 = vpack.c.b16 %v2680, %v2672
      %v3305 = vpack.c.b16 %v2681, %v2673
      %v3306 = vpack.c.b16 %v2682, %v2674
      %v3307 = vpack.c.b16 %v2691, %v2683
      %v3308 = vpack.c.b16 %v2692, %v2684
      %v3309 = vpack.c.b16 %v2693, %v2685
      %v3310 = vpack.c.b16 %v2694, %v2686
      %v3311 = vpack.c.b16 %v2695, %v2687
      %v3312 = vpack.c.b16 %v2696, %v2688
      %v3313 = vpack.c.b16 %v2697, %v2689
      %v3314 = vpack.c.b16 %v2698, %v2690
      %v3315 = vpack.c.b16 %v2707, %v2699
      %v3316 = vpack.c.b16 %v2708, %v2700
      %v3317 = vpack.c.b16 %v2709, %v2701
      %v3318 = vpack.c.b16 %v2710, %v2702
      %v3319 = vpack.c.b16 %v2711, %v2703
      %v3320 = vpack.c.b16 %v2712, %v2704
      %v3321 = vpack.c.b16 %v2713, %v2705
      %v3322 = vpack.c.b16 %v2714, %v2706
      %v3323 = vpack.c.b16 %v2723, %v2715
      %v3324 = vpack.c.b16 %v2724, %v2716
      %v3325 = vpack.c.b16 %v2725, %v2717
      %v3326 = vpack.c.b16 %v2726, %v2718
      %v3327 = vpack.c.b16 %v2727, %v2719
      %v3328 = vpack.c.b16 %v2728, %v2720
      %v3329 = vpack.c.b16 %v2729, %v2721
      %v3330 = vpack.c.b16 %v2730, %v2722
      %v3331 = vpack.c.b16 %v2739, %v2731
      %v3332 = vpack.c.b16 %v2740, %v2732
      %v3333 = vpack.c.b16 %v2741, %v2733
      %v3334 = vpack.c.b16 %v2742, %v2734
      %v3335 = vpack.c.b16 %v2743, %v2735
      %v3336 = vpack.c.b16 %v2744, %v2736
      %v3337 = vpack.c.b16 %v2745, %v2737
      %v3338 = vpack.c.b16 %v2746, %v2738
      %v3339 = vpack.c.b16 %v2755, %v2747
      %v3340 = vpack.c.b16 %v2756, %v2748
      %v3341 = vpack.c.b16 %v2757, %v2749
      %v3342 = vpack.c.b16 %v2758, %v2750
      %v3343 = vpack.c.b16 %v2759, %v2751
      %v3344 = vpack.c.b16 %v2760, %v2752
      %v3345 = vpack.c.b16 %v2761, %v2753
      %v3346 = vpack.c.b16 %v2762, %v2754
      %v3347 = vpack.c.b16 %v2771, %v2763
      %v3348 = vpack.c.b16 %v2772, %v2764
      %v3349 = vpack.c.b16 %v2773, %v2765
      %v3350 = vpack.c.b16 %v2774, %v2766
      %v3351 = vpack.c.b16 %v2775, %v2767
      %v3352 = vpack.c.b16 %v2776, %v2768
      %v3353 = vpack.c.b16 %v2777, %v2769
      %v3354 = vpack.c.b16 %v2778, %v2770
      %v3355 = vpack.c.b16 %v2787, %v2779
      %v3356 = vpack.c.b16 %v2788, %v2780
      %v3357 = vpack.c.b16 %v2789, %v2781
      %v3358 = vpack.c.b16 %v2790, %v2782
      %v3359 = vpack.c.b16 %v2791, %v2783
      %v3360 = vpack.c.b16 %v2792, %v2784
      %v3361 = vpack.c.b16 %v2793, %v2785
      %v3362 = vpack.c.b16 %v2794, %v2786
      %v3363 = vpack.c.b16 %v2803, %v2795
      %v3364 = vpack.c.b16 %v2804, %v2796
      %v3365 = vpack.c.b16 %v2805, %v2797
      %v3366 = vpack.c.b16 %v2806, %v2798
      %v3367 = vpack.c.b16 %v2807, %v2799
      %v3368 = vpack.c.b16 %v2808, %v2800
      %v3369 = vpack.c.b16 %v2809, %v2801
      %v3370 = vpack.c.b16 %v2810, %v2802
      %v3371 = vpack.c.b16 %v2819, %v2811
      %v3372 = vpack.c.b16 %v2820, %v2812
      %v3373 = vpack.c.b16 %v2821, %v2813
      %v3374 = vpack.c.b16 %v2822, %v2814
      %v3375 = vpack.c.b16 %v2823, %v2815
      %v3376 = vpack.c.b16 %v2824, %v2816
      %v3377 = vpack.c.b16 %v2825, %v2817
      %v3378 = vpack.c.b16 %v2826, %v2818
      %v3379 = vpack.c.b16 %v2835, %v2827
      %v3380 = vpack.c.b16 %v2836, %v2828
      %v3381 = vpack.c.b16 %v2837, %v2829
      %v3382 = vpack.c.b16 %v2838, %v2830
      %v3383 = vpack.c.b16 %v2839, %v2831
      %v3384 = vpack.c.b16 %v2840, %v2832
      %v3385 = vpack.c.b16 %v2841, %v2833
      %v3386 = vpack.c.b16 %v2842, %v2834
      %v3387 = vpack.c.b16 %v2851, %v2843
      %v3388 = vpack.c.b16 %v2852, %v2844
      %v3389 = vpack.c.b16 %v2853, %v2845
      %v3390 = vpack.c.b16 %v2854, %v2846
      %v3391 = vpack.c.b16 %v2855, %v2847
      %v3392 = vpack.c.b16 %v2856, %v2848
      %v3393 = vpack.c.b16 %v2857, %v2849
      %v3394 = vpack.c.b16 %v2858, %v2850
      %v3395 = vpack.c.b16 %v2867, %v2859
      %v3396 = vpack.c.b16 %v2868, %v2860
      %v3397 = vpack.c.b16 %v2869, %v2861
      %v3398 = vpack.c.b16 %v2870, %v2862
      %v3399 = vpack.c.b16 %v2871, %v2863
      %v3400 = vpack.c.b16 %v2872, %v2864
      %v3401 = vpack.c.b16 %v2873, %v2865
      %v3402 = vpack.c.b16 %v2874, %v2866
      %v3403 = vpack.c.b16 %v2883, %v2875
      %v3404 = vpack.c.b16 %v2884, %v2876
      %v3405 = vpack.c.b16 %v2885, %v2877
      %v3406 = vpack.c.b16 %v2886, %v2878
      %v3407 = vpack.c.b16 %v2887, %v2879
      %v3408 = vpack.c.b16 %v2888, %v2880
      %v3409 = vpack.c.b16 %v2889, %v2881
      %v3410 = vpack.c.b16 %v2890, %v2882
      %v3411 = vpack.c.b16 %v2899, %v2891
      %v3412 = vpack.c.b16 %v2900, %v2892
      %v3413 = vpack.c.b16 %v2901, %v2893
      %v3414 = vpack.c.b16 %v2902, %v2894
      %v3415 = vpack.c.b16 %v2903, %v2895
      %v3416 = vpack.c.b16 %v2904, %v2896
      %v3417 = vpack.c.b16 %v2905, %v2897
      %v3418 = vpack.c.b16 %v2906, %v2898
      %v3419 = vpack.c.b16 %v2915, %v2907
      %v3420 = vpack.c.b16 %v2916, %v2908
      %v3421 = vpack.c.b16 %v2917, %v2909
      %v3422 = vpack.c.b16 %v2918, %v2910
      %v3423 = vpack.c.b16 %v2919, %v2911
      %v3424 = vpack.c.b16 %v2920, %v2912
      %v3425 = vpack.c.b16 %v2921, %v2913
      %v3426 = vpack.c.b16 %v2922, %v2914
      %v3427 = vpack.c.b16 %v2931, %v2923
      %v3428 = vpack.c.b16 %v2932, %v2924
      %v3429 = vpack.c.b16 %v2933, %v2925
      %v3430 = vpack.c.b16 %v2934, %v2926
      %v3431 = vpack.c.b16 %v2935, %v2927
      %v3432 = vpack.c.b16 %v2936, %v2928
      %v3433 = vpack.c.b16 %v2937, %v2929
      %v3434 = vpack.c.b16 %v2938, %v2930
      %v3435 = vpack.c.b16 %v2947, %v2939
      %v3436 = vpack.c.b16 %v2948, %v2940
      %v3437 = vpack.c.b16 %v2949, %v2941
      %v3438 = vpack.c.b16 %v2950, %v2942
      %v3439 = vpack.c.b16 %v2951, %v2943
      %v3440 = vpack.c.b16 %v2952, %v2944
      %v3441 = vpack.c.b16 %v2953, %v2945
      %v3442 = vpack.c.b16 %v2954, %v2946
      %v3443 = vpack.c.b16 %v2963, %v2955
      %v3444 = vpack.c.b16 %v2964, %v2956
      %v3445 = vpack.c.b16 %v2965, %v2957
      %v3446 = vpack.c.b16 %v2966, %v2958
      %v3447 = vpack.c.b16 %v2967, %v2959
      %v3448 = vpack.c.b16 %v2968, %v2960
      %v3449 = vpack.c.b16 %v2969, %v2961
      %v3450 = vpack.c.b16 %v2970, %v2962
      %v3451 = vpack.c.b16 %v2979, %v2971
      %v3452 = vpack.c.b16 %v2980, %v2972
      %v3453 = vpack.c.b16 %v2981, %v2973
      %v3454 = vpack.c.b16 %v2982, %v2974
      %v3455 = vpack.c.b16 %v2983, %v2975
      %v3456 = vpack.c.b16 %v2984, %v2976
      %v3457 = vpack.c.b16 %v2985, %v2977
      %v3458 = vpack.c.b16 %v2986, %v2978
      %v3459 = vpack.c.b16 %v2995, %v2987
      %v3460 = vpack.c.b16 %v2996, %v2988
      %v3461 = vpack.c.b16 %v2997, %v2989
      %v3462 = vpack.c.b16 %v2998, %v2990
      %v3463 = vpack.c.b16 %v2999, %v2991
      %v3464 = vpack.c.b16 %v3000, %v2992
      %v3465 = vpack.c.b16 %v3001, %v2993
      %v3466 = vpack.c.b16 %v3002, %v2994
      %v3467 = vpack.c.b16 %v3011, %v3003
      %v3468 = vpack.c.b16 %v3012, %v3004
      %v3469 = vpack.c.b16 %v3013, %v3005
      %v3470 = vpack.c.b16 %v3014, %v3006
      %v3471 = vpack.c.b16 %v3015, %v3007
      %v3472 = vpack.c.b16 %v3016, %v3008
      %v3473 = vpack.c.b16 %v3017, %v3009
      %v3474 = vpack.c.b16 %v3018, %v3010
      %v3475 = vpack.c.b16 %v3027, %v3019
      %v3476 = vpack.c.b16 %v3028, %v3020
      %v3477 = vpack.c.b16 %v3029, %v3021
      %v3478 = vpack.c.b16 %v3030, %v3022
      %v3479 = vpack.c.b16 %v3031, %v3023
      %v3480 = vpack.c.b16 %v3032, %v3024
      %v3481 = vpack.c.b16 %v3033, %v3025
      %v3482 = vpack.c.b16 %v3034, %v3026
      %v3483 = vpack.c.b16 %v3043, %v3035
      %v3484 = vpack.c.b16 %v3044, %v3036
      %v3485 = vpack.c.b16 %v3045, %v3037
      %v3486 = vpack.c.b16 %v3046, %v3038
      %v3487 = vpack.c.b16 %v3047, %v3039
      %v3488 = vpack.c.b16 %v3048, %v3040
      %v3489 = vpack.c.b16 %v3049, %v3041
      %v3490 = vpack.c.b16 %v3050, %v3042
      %v3491 = vpack.c.b16 %v3059, %v3051
      %v3492 = vpack.c.b16 %v3060, %v3052
      %v3493 = vpack.c.b16 %v3061, %v3053
      %v3494 = vpack.c.b16 %v3062, %v3054
      %v3495 = vpack.c.b16 %v3063, %v3055
      %v3496 = vpack.c.b16 %v3064, %v3056
      %v3497 = vpack.c.b16 %v3065, %v3057
      %v3498 = vpack.c.b16 %v3066, %v3058
      %v3499 = vpack.c.b16 %v3075, %v3067
      %v3500 = vpack.c.b16 %v3076, %v3068
      %v3501 = vpack.c.b16 %v3077, %v3069
      %v3502 = vpack.c.b16 %v3078, %v3070
      %v3503 = vpack.c.b16 %v3079, %v3071
      %v3504 = vpack.c.b16 %v3080, %v3072
      %v3505 = vpack.c.b16 %v3081, %v3073
      %v3506 = vpack.c.b16 %v3082, %v3074
      %v3507 = vpack.c.b16 %v3091, %v3083
      %v3508 = vpack.c.b16 %v3092, %v3084
      %v3509 = vpack.c.b16 %v3093, %v3085
      %v3510 = vpack.c.b16 %v3094, %v3086
      %v3511 = vpack.c.b16 %v3095, %v3087
      %v3512 = vpack.c.b16 %v3096, %v3088
      %v3513 = vpack.c.b16 %v3097, %v3089
      %v3514 = vpack.c.b16 %v3098, %v3090
      %v3515 = vpack.c.b16 %v3107, %v3099
      %v3516 = vpack.c.b16 %v3108, %v3100
      %v3517 = vpack.c.b16 %v3109, %v3101
      %v3518 = vpack.c.b16 %v3110, %v3102
      %v3519 = vpack.c.b16 %v3111, %v3103
      %v3520 = vpack.c.b16 %v3112, %v3104
      %v3521 = vpack.c.b16 %v3113, %v3105
      %v3522 = vpack.c.b16 %v3114, %v3106
      %v3523 = vpack.c.b16 %v3123, %v3115
      %v3524 = vpack.c.b16 %v3124, %v3116
      %v3525 = vpack.c.b16 %v3125, %v3117
      %v3526 = vpack.c.b16 %v3126, %v3118
      %v3527 = vpack.c.b16 %v3127, %v3119
      %v3528 = vpack.c.b16 %v3128, %v3120
      %v3529 = vpack.c.b16 %v3129, %v3121
      %v3530 = vpack.c.b16 %v3130, %v3122
      %v3531 = vpack.c.b16 %v3139, %v3131
      %v3532 = vpack.c.b16 %v3140, %v3132
      %v3533 = vpack.c.b16 %v3141, %v3133
      %v3534 = vpack.c.b16 %v3142, %v3134
      %v3535 = vpack.c.b16 %v3143, %v3135
      %v3536 = vpack.c.b16 %v3144, %v3136
      %v3537 = vpack.c.b16 %v3145, %v3137
      %v3538 = vpack.c.b16 %v3146, %v3138
      %v3539 = vpack.c.b16 %v3155, %v3147
      %v3540 = vpack.c.b16 %v3156, %v3148
      %v3541 = vpack.c.b16 %v3157, %v3149
      %v3542 = vpack.c.b16 %v3158, %v3150
      %v3543 = vpack.c.b16 %v3159, %v3151
      %v3544 = vpack.c.b16 %v3160, %v3152
      %v3545 = vpack.c.b16 %v3161, %v3153
      %v3546 = vpack.c.b16 %v3162, %v3154
      %3931 = vmatprep.subr.bf16.mxu0 %v3164
      %3932 = vmatpush1.bf16.msra.mxu0 %v3163
      %3933 = vmatprep.subr.bf16.mxu0 %v3172
      %3934 = vmatpush1.bf16.msra.mxu0 %v3171
      %3935 = vmatprep.subr.bf16.mxu0 %v3180
      %3936 = vmatpush1.bf16.msra.mxu0 %v3179
      %3937 = vmatprep.subr.bf16.mxu0 %v3188
      %3938 = vmatpush1.bf16.msra.mxu0 %v3187
      %3939 = vmatprep.subr.bf16.mxu0 %v3196
      %3940 = vmatpush1.bf16.msra.mxu0 %v3195
      %3941 = vmatprep.subr.bf16.mxu0 %v3204
      %3942 = vmatpush1.bf16.msra.mxu0 %v3203
      %3943 = vmatprep.subr.bf16.mxu0 %v3212
      %3944 = vmatpush1.bf16.msra.mxu0 %v3211
      %3945 = vmatprep.subr.bf16.mxu0 %v3220
      %3946 = vmatpush1.bf16.msra.mxu0 %v3219
      %3947 = vmatprep.subr.bf16.mxu0 %v3228
      %3948 = vmatpush1.bf16.msra.mxu0 %v3227
      %3949 = vmatprep.subr.bf16.mxu0 %v3236
      %3950 = vmatpush1.bf16.msra.mxu0 %v3235
      %3951 = vmatprep.subr.bf16.mxu0 %v3244
      %3952 = vmatpush1.bf16.msra.mxu0 %v3243
      %3953 = vmatprep.subr.bf16.mxu0 %v3252
      %3954 = vmatpush1.bf16.msra.mxu0 %v3251
      %3955 = vmatprep.subr.bf16.mxu0 %v3260
      %3956 = vmatpush1.bf16.msra.mxu0 %v3259
      %3957 = vmatprep.subr.bf16.mxu0 %v3268
      %3958 = vmatpush1.bf16.msra.mxu0 %v3267
      %3959 = vmatprep.subr.bf16.mxu0 %v3276
      %3960 = vmatpush1.bf16.msra.mxu0 %v3275
      %3961 = vmatprep.subr.bf16.mxu0 %v3284
      %3962 = vmatpush1.bf16.msra.mxu0 %v3283
      %3963 = vmatprep.mubr.bf16.mxu0 %v1338
      %3964 = vmatmul.mubr.bf16.gmra.mrb[0].mxu0 %v1326
      %v3965 = vpop.f32.mrb[0].mxu0
      %v3966 = vadd.f32 %v1277, %v3965
      %v3967 = vpop.f32.mrb[0].mxu0
      %v3968 = vadd.f32 %v1281, %v3967
      %v3969 = vpop.f32.mrb[0].mxu0
      %v3970 = vadd.f32 %v1277, %v3969
      %v3971 = vpop.f32.mrb[0].mxu0
      %v3972 = vadd.f32 %v1281, %v3971
      %3973 = vmatprep.mubr.bf16.mxu0 %v1402
      %3974 = vmatmul.mubr.bf16.gmra.mrb[0].mxu0 %v1394
      %v3975 = vpop.f32.mrb[0].mxu0
      %v3976 = vadd.f32 %v1277, %v3975
      %v3977 = vpop.f32.mrb[0].mxu0
      %v3978 = vadd.f32 %v1281, %v3977
      %v3979 = vpop.f32.mrb[0].mxu0
      %v3980 = vadd.f32 %v1277, %v3979
      %v3981 = vpop.f32.mrb[0].mxu0
      %v3982 = vadd.f32 %v1281, %v3981
      %3983 = vmatprep.mubr.bf16.mxu0 %v1450
      %3984 = vmatmul.mubr.bf16.gmra.mrb[0].mxu0 %v1442
      %v3985 = vpop.f32.mrb[0].mxu0
      %v3986 = vadd.f32 %v1277, %v3985
      %v3987 = vpop.f32.mrb[0].mxu0
      %v3988 = vadd.f32 %v1281, %v3987
      %v3989 = vpop.f32.mrb[0].mxu0
      %v3990 = vadd.f32 %v1277, %v3989
      %v3991 = vpop.f32.mrb[0].mxu0
      %v3992 = vadd.f32 %v1281, %v3991
      %3993 = vmatprep.mubr.bf16.mxu0 %v1498
      %3994 = vmatmul.mubr.bf16.gmra.mrb[0].mxu0 %v1490
      %v3995 = vpop.f32.mrb[0].mxu0
      %v3996 = vadd.f32 %v1277, %v3995
      %v3997 = vpop.f32.mrb[0].mxu0
      %v3998 = vadd.f32 %v1281, %v3997
      %v3999 = vpop.f32.mrb[0].mxu0
      %v4000 = vadd.f32 %v1277, %v3999
      %v4001 = vpop.f32.mrb[0].mxu0
      %v4002 = vadd.f32 %v1281, %v4001
      %4003 = vmatprep.mubr.bf16.mxu0 %v1546
      %4004 = vmatmul.mubr.bf16.gmra.mrb[0].mxu0 %v1538
      %v4005 = vpop.f32.mrb[0].mxu0
      %v4006 = vadd.f32 %v1277, %v4005
      %v4007 = vpop.f32.mrb[0].mxu0
      %v4008 = vadd.f32 %v1281, %v4007
      %v4009 = vpop.f32.mrb[0].mxu0
      %v4010 = vadd.f32 %v1277, %v4009
      %v4011 = vpop.f32.mrb[0].mxu0
      %v4012 = vadd.f32 %v1281, %v4011
      %4013 = vmatprep.mubr.bf16.mxu0 %v1594
      %4014 = vmatmul.mubr.bf16.gmra.mrb[0].mxu0 %v1586
      %v4015 = vpop.f32.mrb[0].mxu0
      %v4016 = vadd.f32 %v1277, %v4015
      %v4017 = vpop.f32.mrb[0].mxu0
      %v4018 = vadd.f32 %v1281, %v4017
      %v4019 = vpop.f32.mrb[0].mxu0
      %v4020 = vadd.f32 %v1277, %v4019
      %v4021 = vpop.f32.mrb[0].mxu0
      %v4022 = vadd.f32 %v1281, %v4021
      %4023 = vmatprep.mubr.bf16.mxu0 %v1642
      %4024 = vmatmul.mubr.bf16.gmra.mrb[0].mxu0 %v1634
      %v4025 = vpop.f32.mrb[0].mxu0
      %v4026 = vadd.f32 %v1277, %v4025
      %v4027 = vpop.f32.mrb[0].mxu0
      %v4028 = vadd.f32 %v1281, %v4027
      %v4029 = vpop.f32.mrb[0].mxu0
      %v4030 = vadd.f32 %v1277, %v4029
      %v4031 = vpop.f32.mrb[0].mxu0
      %v4032 = vadd.f32 %v1281, %v4031
      %4033 = vmatprep.mubr.bf16.mxu0 %v1690
      %4034 = vmatmul.mubr.bf16.gmra.mrb[0].mxu0 %v1682
      %v4035 = vpop.f32.mrb[0].mxu0
      %v4036 = vadd.f32 %v1277, %v4035
      %v4037 = vpop.f32.mrb[0].mxu0
      %v4038 = vadd.f32 %v1281, %v4037
      %v4039 = vpop.f32.mrb[0].mxu0
      %v4040 = vadd.f32 %v1277, %v4039
      %v4041 = vpop.f32.mrb[0].mxu0
      %v4042 = vadd.f32 %v1281, %v4041
      %4043 = vmatprep.mubr.bf16.mxu0 %v1738
      %4044 = vmatmul.mubr.bf16.gmra.mrb[0].mxu0 %v1730
      %v4045 = vpop.f32.mrb[0].mxu0
      %v4046 = vadd.f32 %v1277, %v4045
      %v4047 = vpop.f32.mrb[0].mxu0
      %v4048 = vadd.f32 %v1281, %v4047
      %v4049 = vpop.f32.mrb[0].mxu0
      %v4050 = vadd.f32 %v1277, %v4049
      %v4051 = vpop.f32.mrb[0].mxu0
      %v4052 = vadd.f32 %v1281, %v4051
      %4053 = vmatprep.mubr.bf16.mxu0 %v1786
      %4054 = vmatmul.mubr.bf16.gmra.mrb[0].mxu0 %v1778
      %v4055 = vpop.f32.mrb[0].mxu0
      %v4056 = vadd.f32 %v1277, %v4055
      %v4057 = vpop.f32.mrb[0].mxu0
      %v4058 = vadd.f32 %v1281, %v4057
      %v4059 = vpop.f32.mrb[0].mxu0
      %v4060 = vadd.f32 %v1277, %v4059
      %v4061 = vpop.f32.mrb[0].mxu0
      %v4062 = vadd.f32 %v1281, %v4061
      %4063 = vmatprep.mubr.bf16.mxu0 %v1834
      %4064 = vmatmul.mubr.bf16.gmra.mrb[0].mxu0 %v1826
      %v4065 = vpop.f32.mrb[0].mxu0
      %v4066 = vadd.f32 %v1277, %v4065
      %v4067 = vpop.f32.mrb[0].mxu0
      %v4068 = vadd.f32 %v1281, %v4067
      %v4069 = vpop.f32.mrb[0].mxu0
      %v4070 = vadd.f32 %v1277, %v4069
      %v4071 = vpop.f32.mrb[0].mxu0
      %v4072 = vadd.f32 %v1281, %v4071
      %4073 = vmatprep.mubr.bf16.mxu0 %v1882
      %4074 = vmatmul.mubr.bf16.gmra.mrb[0].mxu0 %v1874
      %v4075 = vpop.f32.mrb[0].mxu0
      %v4076 = vadd.f32 %v1277, %v4075
      %v4077 = vpop.f32.mrb[0].mxu0
      %v4078 = vadd.f32 %v1281, %v4077
      %v4079 = vpop.f32.mrb[0].mxu0
      %v4080 = vadd.f32 %v1277, %v4079
      %v4081 = vpop.f32.mrb[0].mxu0
      %v4082 = vadd.f32 %v1281, %v4081
      %4083 = vmatprep.mubr.bf16.mxu0 %v1920
      %4084 = vmatmul.mubr.bf16.gmra.mrb[0].mxu0 %v1917
      %v4085 = vpop.f32.mrb[0].mxu0
      %v4086 = vadd.f32 %v1277, %v4085
      %v4087 = vpop.f32.mrb[0].mxu0
      %v4088 = vadd.f32 %v1281, %v4087
      %v4089 = vpop.f32.mrb[0].mxu0
      %v4090 = vpop.f32.mrb[0].mxu0
      %4091 = vdwg.mxu0
      %4092 = vmatprep.subr.bf16.mxu0 %v3292
      %4093 = vmatpush1.bf16.msra.mxu0 %v3291
      %4094 = vmatprep.subr.bf16.mxu0 %v3300
      %4095 = vmatpush1.bf16.msra.mxu0 %v3299
      %4096 = vmatprep.subr.bf16.mxu0 %v3308
      %4097 = vmatpush1.bf16.msra.mxu0 %v3307
      %4098 = vmatprep.subr.bf16.mxu0 %v3316
      %4099 = vmatpush1.bf16.msra.mxu0 %v3315
      %4100 = vmatprep.subr.bf16.mxu0 %v3324
      %4101 = vmatpush1.bf16.msra.mxu0 %v3323
      %4102 = vmatprep.subr.bf16.mxu0 %v3332
      %4103 = vmatpush1.bf16.msra.mxu0 %v3331
      %4104 = vmatprep.subr.bf16.mxu0 %v3340
      %4105 = vmatpush1.bf16.msra.mxu0 %v3339
      %4106 = vmatprep.subr.bf16.mxu0 %v3348
      %4107 = vmatpush1.bf16.msra.mxu0 %v3347
      %4108 = vmatprep.subr.bf16.mxu0 %v3356
      %4109 = vmatpush1.bf16.msra.mxu0 %v3355
      %4110 = vmatprep.subr.bf16.mxu0 %v3364
      %4111 = vmatpush1.bf16.msra.mxu0 %v3363
      %4112 = vmatprep.subr.bf16.mxu0 %v3372
      %4113 = vmatpush1.bf16.msra.mxu0 %v3371
      %4114 = vmatprep.subr.bf16.mxu0 %v3380
      %4115 = vmatpush1.bf16.msra.mxu0 %v3379
      %4116 = vmatprep.subr.bf16.mxu0 %v3388
      %4117 = vmatpush1.bf16.msra.mxu0 %v3387
      %4118 = vmatprep.subr.bf16.mxu0 %v3396
      %4119 = vmatpush1.bf16.msra.mxu0 %v3395
      %4120 = vmatprep.subr.bf16.mxu0 %v3404
      %4121 = vmatpush1.bf16.msra.mxu0 %v3403
      %4122 = vmatprep.subr.bf16.mxu0 %v3412
      %4123 = vmatpush1.bf16.msra.mxu0 %v3411
      %4124 = vmatprep.mubr.bf16.mxu0 %v1362
      %4125 = vmatmul.mubr.bf16.gmra.mrb[0].mxu0 %v1350
      %v4126 = vpop.f32.mrb[0].mxu0
      %v4127 = vadd.f32 %v3966, %v4126
      %v4128 = vpop.f32.mrb[0].mxu0
      %v4129 = vadd.f32 %v3968, %v4128
      %v4130 = vpop.f32.mrb[0].mxu0
      %v4131 = vadd.f32 %v3970, %v4130
      %v4132 = vpop.f32.mrb[0].mxu0
      %v4133 = vadd.f32 %v3972, %v4132
      %4134 = vmatprep.mubr.bf16.mxu0 %v1418
      %4135 = vmatmul.mubr.bf16.gmra.mrb[0].mxu0 %v1410
      %v4136 = vpop.f32.mrb[0].mxu0
      %v4137 = vadd.f32 %v3976, %v4136
      %v4138 = vpop.f32.mrb[0].mxu0
      %v4139 = vadd.f32 %v3978, %v4138
      %v4140 = vpop.f32.mrb[0].mxu0
      %v4141 = vadd.f32 %v3980, %v4140
      %v4142 = vpop.f32.mrb[0].mxu0
      %v4143 = vadd.f32 %v3982, %v4142
      %4144 = vmatprep.mubr.bf16.mxu0 %v1466
      %4145 = vmatmul.mubr.bf16.gmra.mrb[0].mxu0 %v1458
      %v4146 = vpop.f32.mrb[0].mxu0
      %v4147 = vadd.f32 %v3986, %v4146
      %v4148 = vpop.f32.mrb[0].mxu0
      %v4149 = vadd.f32 %v3988, %v4148
      %v4150 = vpop.f32.mrb[0].mxu0
      %v4151 = vadd.f32 %v3990, %v4150
      %v4152 = vpop.f32.mrb[0].mxu0
      %v4153 = vadd.f32 %v3992, %v4152
      %4154 = vmatprep.mubr.bf16.mxu0 %v1514
      %4155 = vmatmul.mubr.bf16.gmra.mrb[0].mxu0 %v1506
      %v4156 = vpop.f32.mrb[0].mxu0
      %v4157 = vadd.f32 %v3996, %v4156
      %v4158 = vpop.f32.mrb[0].mxu0
      %v4159 = vadd.f32 %v3998, %v4158
      %v4160 = vpop.f32.mrb[0].mxu0
      %v4161 = vadd.f32 %v4000, %v4160
      %v4162 = vpop.f32.mrb[0].mxu0
      %v4163 = vadd.f32 %v4002, %v4162
      %4164 = vmatprep.mubr.bf16.mxu0 %v1562
      %4165 = vmatmul.mubr.bf16.gmra.mrb[0].mxu0 %v1554
      %v4166 = vpop.f32.mrb[0].mxu0
      %v4167 = vadd.f32 %v4006, %v4166
      %v4168 = vpop.f32.mrb[0].mxu0
      %v4169 = vadd.f32 %v4008, %v4168
      %v4170 = vpop.f32.mrb[0].mxu0
      %v4171 = vadd.f32 %v4010, %v4170
      %v4172 = vpop.f32.mrb[0].mxu0
      %v4173 = vadd.f32 %v4012, %v4172
      %4174 = vmatprep.mubr.bf16.mxu0 %v1610
      %4175 = vmatmul.mubr.bf16.gmra.mrb[0].mxu0 %v1602
      %v4176 = vpop.f32.mrb[0].mxu0
      %v4177 = vadd.f32 %v4016, %v4176
      %v4178 = vpop.f32.mrb[0].mxu0
      %v4179 = vadd.f32 %v4018, %v4178
      %v4180 = vpop.f32.mrb[0].mxu0
      %v4181 = vadd.f32 %v4020, %v4180
      %v4182 = vpop.f32.mrb[0].mxu0
      %v4183 = vadd.f32 %v4022, %v4182
      %4184 = vmatprep.mubr.bf16.mxu0 %v1658
      %4185 = vmatmul.mubr.bf16.gmra.mrb[0].mxu0 %v1650
      %v4186 = vpop.f32.mrb[0].mxu0
      %v4187 = vadd.f32 %v4026, %v4186
      %v4188 = vpop.f32.mrb[0].mxu0
      %v4189 = vadd.f32 %v4028, %v4188
      %v4190 = vpop.f32.mrb[0].mxu0
      %v4191 = vadd.f32 %v4030, %v4190
      %v4192 = vpop.f32.mrb[0].mxu0
      %v4193 = vadd.f32 %v4032, %v4192
      %4194 = vmatprep.mubr.bf16.mxu0 %v1706
      %4195 = vmatmul.mubr.bf16.gmra.mrb[0].mxu0 %v1698
      %v4196 = vpop.f32.mrb[0].mxu0
      %v4197 = vadd.f32 %v4036, %v4196
      %v4198 = vpop.f32.mrb[0].mxu0
      %v4199 = vadd.f32 %v4038, %v4198
      %v4200 = vpop.f32.mrb[0].mxu0
      %v4201 = vadd.f32 %v4040, %v4200
      %v4202 = vpop.f32.mrb[0].mxu0
      %v4203 = vadd.f32 %v4042, %v4202
      %4204 = vmatprep.mubr.bf16.mxu0 %v1754
      %4205 = vmatmul.mubr.bf16.gmra.mrb[0].mxu0 %v1746
      %v4206 = vpop.f32.mrb[0].mxu0
      %v4207 = vadd.f32 %v4046, %v4206
      %v4208 = vpop.f32.mrb[0].mxu0
      %v4209 = vadd.f32 %v4048, %v4208
      %v4210 = vpop.f32.mrb[0].mxu0
      %v4211 = vadd.f32 %v4050, %v4210
      %v4212 = vpop.f32.mrb[0].mxu0
      %v4213 = vadd.f32 %v4052, %v4212
      %4214 = vmatprep.mubr.bf16.mxu0 %v1802
      %4215 = vmatmul.mubr.bf16.gmra.mrb[0].mxu0 %v1794
      %v4216 = vpop.f32.mrb[0].mxu0
      %v4217 = vadd.f32 %v4056, %v4216
      %v4218 = vpop.f32.mrb[0].mxu0
      %v4219 = vadd.f32 %v4058, %v4218
      %v4220 = vpop.f32.mrb[0].mxu0
      %v4221 = vadd.f32 %v4060, %v4220
      %v4222 = vpop.f32.mrb[0].mxu0
      %v4223 = vadd.f32 %v4062, %v4222
      %4224 = vmatprep.mubr.bf16.mxu0 %v1850
      %4225 = vmatmul.mubr.bf16.gmra.mrb[0].mxu0 %v1842
      %v4226 = vpop.f32.mrb[0].mxu0
      %v4227 = vadd.f32 %v4066, %v4226
      %v4228 = vpop.f32.mrb[0].mxu0
      %v4229 = vadd.f32 %v4068, %v4228
      %v4230 = vpop.f32.mrb[0].mxu0
      %v4231 = vadd.f32 %v4070, %v4230
      %v4232 = vpop.f32.mrb[0].mxu0
      %v4233 = vadd.f32 %v4072, %v4232
      %4234 = vmatprep.mubr.bf16.mxu0 %v1898
      %4235 = vmatmul.mubr.bf16.gmra.mrb[0].mxu0 %v1890
      %v4236 = vpop.f32.mrb[0].mxu0
      %v4237 = vadd.f32 %v4076, %v4236
      %v4238 = vpop.f32.mrb[0].mxu0
      %v4239 = vadd.f32 %v4078, %v4238
      %v4240 = vpop.f32.mrb[0].mxu0
      %v4241 = vadd.f32 %v4080, %v4240
      %v4242 = vpop.f32.mrb[0].mxu0
      %v4243 = vadd.f32 %v4082, %v4242
      %4244 = vmatprep.mubr.bf16.mxu0 %v1926
      %4245 = vmatmul.mubr.bf16.gmra.mrb[0].mxu0 %v1923
      %v4246 = vpop.f32.mrb[0].mxu0
      %v4247 = vadd.f32 %v4086, %v4246
      %v4248 = vpop.f32.mrb[0].mxu0
      %v4249 = vadd.f32 %v4088, %v4248
      %v4250 = vpop.f32.mrb[0].mxu0
      %v4251 = vpop.f32.mrb[0].mxu0
      %4252 = vdwg.mxu0
      %4253 = vmatprep.subr.bf16.mxu0 %v3420
      %4254 = vmatpush1.bf16.msra.mxu0 %v3419
      %4255 = vmatprep.subr.bf16.mxu0 %v3428
      %4256 = vmatpush1.bf16.msra.mxu0 %v3427
      %4257 = vmatprep.subr.bf16.mxu0 %v3436
      %4258 = vmatpush1.bf16.msra.mxu0 %v3435
      %4259 = vmatprep.subr.bf16.mxu0 %v3444
      %4260 = vmatpush1.bf16.msra.mxu0 %v3443
      %4261 = vmatprep.subr.bf16.mxu0 %v3452
      %4262 = vmatpush1.bf16.msra.mxu0 %v3451
      %4263 = vmatprep.subr.bf16.mxu0 %v3460
      %4264 = vmatpush1.bf16.msra.mxu0 %v3459
      %4265 = vmatprep.subr.bf16.mxu0 %v3468
      %4266 = vmatpush1.bf16.msra.mxu0 %v3467
      %4267 = vmatprep.subr.bf16.mxu0 %v3476
      %4268 = vmatpush1.bf16.msra.mxu0 %v3475
      %4269 = vmatprep.subr.bf16.mxu0 %v3484
      %4270 = vmatpush1.bf16.msra.mxu0 %v3483
      %4271 = vmatprep.subr.bf16.mxu0 %v3492
      %4272 = vmatpush1.bf16.msra.mxu0 %v3491
      %4273 = vmatprep.subr.bf16.mxu0 %v3500
      %4274 = vmatpush1.bf16.msra.mxu0 %v3499
      %4275 = vmatprep.subr.bf16.mxu0 %v3508
      %4276 = vmatpush1.bf16.msra.mxu0 %v3507
      %4277 = vmatprep.subr.bf16.mxu0 %v3516
      %4278 = vmatpush1.bf16.msra.mxu0 %v3515
      %4279 = vmatprep.subr.bf16.mxu0 %v3524
      %4280 = vmatpush1.bf16.msra.mxu0 %v3523
      %4281 = vmatprep.subr.bf16.mxu0 %v3532
      %4282 = vmatpush1.bf16.msra.mxu0 %v3531
      %4283 = vmatprep.subr.bf16.mxu0 %v3540
      %4284 = vmatpush1.bf16.msra.mxu0 %v3539
      %4285 = vmatprep.mubr.bf16.mxu0 %v1386
      %4286 = vmatmul.mubr.bf16.gmra.mrb[0].mxu0 %v1374
      %v4287 = vpop.f32.mrb[0].mxu0
      %v4288 = vadd.f32 %v4127, %v4287
      %v4289 = vpop.f32.mrb[0].mxu0
      %v4290 = vadd.f32 %v4129, %v4289
      %v4291 = vpop.f32.mrb[0].mxu0
      %v4292 = vadd.f32 %v4131, %v4291
      %v4293 = vpop.f32.mrb[0].mxu0
      %v4294 = vadd.f32 %v4133, %v4293
      %4295 = vmatprep.mubr.bf16.mxu0 %v1434
      %4296 = vmatmul.mubr.bf16.gmra.mrb[0].mxu0 %v1426
      %v4297 = vpop.f32.mrb[0].mxu0
      %v4298 = vadd.f32 %v4137, %v4297
      %v4299 = vpop.f32.mrb[0].mxu0
      %v4300 = vadd.f32 %v4139, %v4299
      %v4301 = vpop.f32.mrb[0].mxu0
      %v4302 = vadd.f32 %v4141, %v4301
      %v4303 = vpop.f32.mrb[0].mxu0
      %v4304 = vadd.f32 %v4143, %v4303
      %4305 = vmatprep.mubr.bf16.mxu0 %v1482
      %4306 = vmatmul.mubr.bf16.gmra.mrb[0].mxu0 %v1474
      %v4307 = vpop.f32.mrb[0].mxu0
      %v4308 = vadd.f32 %v4147, %v4307
      %v4309 = vpop.f32.mrb[0].mxu0
      %v4310 = vadd.f32 %v4149, %v4309
      %v4311 = vpop.f32.mrb[0].mxu0
      %v4312 = vadd.f32 %v4151, %v4311
      %v4313 = vpop.f32.mrb[0].mxu0
      %v4314 = vadd.f32 %v4153, %v4313
      %4315 = vmatprep.mubr.bf16.mxu0 %v1530
      %4316 = vmatmul.mubr.bf16.gmra.mrb[0].mxu0 %v1522
      %v4317 = vpop.f32.mrb[0].mxu0
      %v4318 = vadd.f32 %v4157, %v4317
      %v4319 = vpop.f32.mrb[0].mxu0
      %v4320 = vadd.f32 %v4159, %v4319
      %v4321 = vpop.f32.mrb[0].mxu0
      %v4322 = vadd.f32 %v4161, %v4321
      %v4323 = vpop.f32.mrb[0].mxu0
      %v4324 = vadd.f32 %v4163, %v4323
      %4325 = vmatprep.mubr.bf16.mxu0 %v1578
      %4326 = vmatmul.mubr.bf16.gmra.mrb[0].mxu0 %v1570
      %v4327 = vpop.f32.mrb[0].mxu0
      %v4328 = vadd.f32 %v4167, %v4327
      %v4329 = vpop.f32.mrb[0].mxu0
      %v4330 = vadd.f32 %v4169, %v4329
      %v4331 = vpop.f32.mrb[0].mxu0
      %v4332 = vadd.f32 %v4171, %v4331
      %v4333 = vpop.f32.mrb[0].mxu0
      %v4334 = vadd.f32 %v4173, %v4333
      %4335 = vmatprep.mubr.bf16.mxu0 %v1626
      %4336 = vmatmul.mubr.bf16.gmra.mrb[0].mxu0 %v1618
      %v4337 = vpop.f32.mrb[0].mxu0
      %v4338 = vadd.f32 %v4177, %v4337
      %v4339 = vpop.f32.mrb[0].mxu0
      %v4340 = vadd.f32 %v4179, %v4339
      %v4341 = vpop.f32.mrb[0].mxu0
      %v4342 = vadd.f32 %v4181, %v4341
      %v4343 = vpop.f32.mrb[0].mxu0
      %v4344 = vadd.f32 %v4183, %v4343
      %4345 = vmatprep.mubr.bf16.mxu0 %v1674
      %4346 = vmatmul.mubr.bf16.gmra.mrb[0].mxu0 %v1666
      %v4347 = vpop.f32.mrb[0].mxu0
      %v4348 = vadd.f32 %v4187, %v4347
      %v4349 = vpop.f32.mrb[0].mxu0
      %v4350 = vadd.f32 %v4189, %v4349
      %v4351 = vpop.f32.mrb[0].mxu0
      %v4352 = vadd.f32 %v4191, %v4351
      %v4353 = vpop.f32.mrb[0].mxu0
      %v4354 = vadd.f32 %v4193, %v4353
      %4355 = vmatprep.mubr.bf16.mxu0 %v1722
      %4356 = vmatmul.mubr.bf16.gmra.mrb[0].mxu0 %v1714
      %v4357 = vpop.f32.mrb[0].mxu0
      %v4358 = vadd.f32 %v4197, %v4357
      %v4359 = vpop.f32.mrb[0].mxu0
      %v4360 = vadd.f32 %v4199, %v4359
      %v4361 = vpop.f32.mrb[0].mxu0
      %v4362 = vadd.f32 %v4201, %v4361
      %v4363 = vpop.f32.mrb[0].mxu0
      %v4364 = vadd.f32 %v4203, %v4363
      %4365 = vmatprep.mubr.bf16.mxu0 %v1770
      %4366 = vmatmul.mubr.bf16.gmra.mrb[0].mxu0 %v1762
      %v4367 = vpop.f32.mrb[0].mxu0
      %v4368 = vadd.f32 %v4207, %v4367
      %v4369 = vpop.f32.mrb[0].mxu0
      %v4370 = vadd.f32 %v4209, %v4369
      %v4371 = vpop.f32.mrb[0].mxu0
      %v4372 = vadd.f32 %v4211, %v4371
      %v4373 = vpop.f32.mrb[0].mxu0
      %v4374 = vadd.f32 %v4213, %v4373
      %4375 = vmatprep.mubr.bf16.mxu0 %v1818
      %4376 = vmatmul.mubr.bf16.gmra.mrb[0].mxu0 %v1810
      %v4377 = vpop.f32.mrb[0].mxu0
      %v4378 = vadd.f32 %v4217, %v4377
      %v4379 = vpop.f32.mrb[0].mxu0
      %v4380 = vadd.f32 %v4219, %v4379
      %v4381 = vpop.f32.mrb[0].mxu0
      %v4382 = vadd.f32 %v4221, %v4381
      %v4383 = vpop.f32.mrb[0].mxu0
      %v4384 = vadd.f32 %v4223, %v4383
      %4385 = vmatprep.mubr.bf16.mxu0 %v1866
      %4386 = vmatmul.mubr.bf16.gmra.mrb[0].mxu0 %v1858
      %v4387 = vpop.f32.mrb[0].mxu0
      %v4388 = vadd.f32 %v4227, %v4387
      %v4389 = vpop.f32.mrb[0].mxu0
      %v4390 = vadd.f32 %v4229, %v4389
      %v4391 = vpop.f32.mrb[0].mxu0
      %v4392 = vadd.f32 %v4231, %v4391
      %v4393 = vpop.f32.mrb[0].mxu0
      %v4394 = vadd.f32 %v4233, %v4393
      %4395 = vmatprep.mubr.bf16.mxu0 %v1914
      %4396 = vmatmul.mubr.bf16.gmra.mrb[0].mxu0 %v1906
      %v4397 = vpop.f32.mrb[0].mxu0
      %v4398 = vadd.f32 %v4237, %v4397
      %v4399 = vpop.f32.mrb[0].mxu0
      %v4400 = vadd.f32 %v4239, %v4399
      %v4401 = vpop.f32.mrb[0].mxu0
      %v4402 = vadd.f32 %v4241, %v4401
      %v4403 = vpop.f32.mrb[0].mxu0
      %v4404 = vadd.f32 %v4243, %v4403
      %4405 = vmatprep.mubr.bf16.mxu0 %v1932
      %4406 = vmatmul.mubr.bf16.gmra.mrb[0].mxu0 %v1929
      %v4407 = vpop.f32.mrb[0].mxu0
      %v4408 = vadd.f32 %v4247, %v4407
      %v4409 = vpop.f32.mrb[0].mxu0
      %v4410 = vadd.f32 %v4249, %v4409
      %v4411 = vpop.f32.mrb[0].mxu0
      %v4412 = vpop.f32.mrb[0].mxu0
      %4413 = vdwg.mxu0
      %4414 = vmatprep.subr.bf16.mxu0 %v3166
      %4415 = vmatpush1.bf16.msra.mxu0 %v3165
      %4416 = vmatprep.subr.bf16.mxu0 %v3174
      %4417 = vmatpush1.bf16.msra.mxu0 %v3173
      %4418 = vmatprep.subr.bf16.mxu0 %v3182
      %4419 = vmatpush1.bf16.msra.mxu0 %v3181
      %4420 = vmatprep.subr.bf16.mxu0 %v3190
      %4421 = vmatpush1.bf16.msra.mxu0 %v3189
      %4422 = vmatprep.subr.bf16.mxu0 %v3198
      %4423 = vmatpush1.bf16.msra.mxu0 %v3197
      %4424 = vmatprep.subr.bf16.mxu0 %v3206
      %4425 = vmatpush1.bf16.msra.mxu0 %v3205
      %4426 = vmatprep.subr.bf16.mxu0 %v3214
      %4427 = vmatpush1.bf16.msra.mxu0 %v3213
      %4428 = vmatprep.subr.bf16.mxu0 %v3222
      %4429 = vmatpush1.bf16.msra.mxu0 %v3221
      %4430 = vmatprep.subr.bf16.mxu0 %v3230
      %4431 = vmatpush1.bf16.msra.mxu0 %v3229
      %4432 = vmatprep.subr.bf16.mxu0 %v3238
      %4433 = vmatpush1.bf16.msra.mxu0 %v3237
      %4434 = vmatprep.subr.bf16.mxu0 %v3246
      %4435 = vmatpush1.bf16.msra.mxu0 %v3245
      %4436 = vmatprep.subr.bf16.mxu0 %v3254
      %4437 = vmatpush1.bf16.msra.mxu0 %v3253
      %4438 = vmatprep.subr.bf16.mxu0 %v3262
      %4439 = vmatpush1.bf16.msra.mxu0 %v3261
      %4440 = vmatprep.subr.bf16.mxu0 %v3270
      %4441 = vmatpush1.bf16.msra.mxu0 %v3269
      %4442 = vmatprep.subr.bf16.mxu0 %v3278
      %4443 = vmatpush1.bf16.msra.mxu0 %v3277
      %4444 = vmatprep.subr.bf16.mxu0 %v3286
      %4445 = vmatpush1.bf16.msra.mxu0 %v3285
      %4446 = vmatprep.mubr.bf16.mxu0 %v1338
      %4447 = vmatmul.mubr.bf16.gmra.mrb[0].mxu0 %v1326
      %v4448 = vpop.f32.mrb[0].mxu0
      %v4449 = vadd.f32 %v1285, %v4448
      %v4450 = vpop.f32.mrb[0].mxu0
      %v4451 = vadd.f32 %v1289, %v4450
      %v4452 = vpop.f32.mrb[0].mxu0
      %v4453 = vadd.f32 %v1285, %v4452
      %v4454 = vpop.f32.mrb[0].mxu0
      %v4455 = vadd.f32 %v1289, %v4454
      %4456 = vmatprep.mubr.bf16.mxu0 %v1402
      %4457 = vmatmul.mubr.bf16.gmra.mrb[0].mxu0 %v1394
      %v4458 = vpop.f32.mrb[0].mxu0
      %v4459 = vadd.f32 %v1285, %v4458
      %v4460 = vpop.f32.mrb[0].mxu0
      %v4461 = vadd.f32 %v1289, %v4460
      %v4462 = vpop.f32.mrb[0].mxu0
      %v4463 = vadd.f32 %v1285, %v4462
      %v4464 = vpop.f32.mrb[0].mxu0
      %v4465 = vadd.f32 %v1289, %v4464
      %4466 = vmatprep.mubr.bf16.mxu0 %v1450
      %4467 = vmatmul.mubr.bf16.gmra.mrb[0].mxu0 %v1442
      %v4468 = vpop.f32.mrb[0].mxu0
      %v4469 = vadd.f32 %v1285, %v4468
      %v4470 = vpop.f32.mrb[0].mxu0
      %v4471 = vadd.f32 %v1289, %v4470
      %v4472 = vpop.f32.mrb[0].mxu0
      %v4473 = vadd.f32 %v1285, %v4472
      %v4474 = vpop.f32.mrb[0].mxu0
      %v4475 = vadd.f32 %v1289, %v4474
      %4476 = vmatprep.mubr.bf16.mxu0 %v1498
      %4477 = vmatmul.mubr.bf16.gmra.mrb[0].mxu0 %v1490
      %v4478 = vpop.f32.mrb[0].mxu0
      %v4479 = vadd.f32 %v1285, %v4478
      %v4480 = vpop.f32.mrb[0].mxu0
      %v4481 = vadd.f32 %v1289, %v4480
      %v4482 = vpop.f32.mrb[0].mxu0
      %v4483 = vadd.f32 %v1285, %v4482
      %v4484 = vpop.f32.mrb[0].mxu0
      %v4485 = vadd.f32 %v1289, %v4484
      %4486 = vmatprep.mubr.bf16.mxu0 %v1546
      %4487 = vmatmul.mubr.bf16.gmra.mrb[0].mxu0 %v1538
      %v4488 = vpop.f32.mrb[0].mxu0
      %v4489 = vadd.f32 %v1285, %v4488
      %v4490 = vpop.f32.mrb[0].mxu0
      %v4491 = vadd.f32 %v1289, %v4490
      %v4492 = vpop.f32.mrb[0].mxu0
      %v4493 = vadd.f32 %v1285, %v4492
      %v4494 = vpop.f32.mrb[0].mxu0
      %v4495 = vadd.f32 %v1289, %v4494
      %4496 = vmatprep.mubr.bf16.mxu0 %v1594
      %4497 = vmatmul.mubr.bf16.gmra.mrb[0].mxu0 %v1586
      %v4498 = vpop.f32.mrb[0].mxu0
      %v4499 = vadd.f32 %v1285, %v4498
      %v4500 = vpop.f32.mrb[0].mxu0
      %v4501 = vadd.f32 %v1289, %v4500
      %v4502 = vpop.f32.mrb[0].mxu0
      %v4503 = vadd.f32 %v1285, %v4502
      %v4504 = vpop.f32.mrb[0].mxu0
      %v4505 = vadd.f32 %v1289, %v4504
      %4506 = vmatprep.mubr.bf16.mxu0 %v1642
      %4507 = vmatmul.mubr.bf16.gmra.mrb[0].mxu0 %v1634
      %v4508 = vpop.f32.mrb[0].mxu0
      %v4509 = vadd.f32 %v1285, %v4508
      %v4510 = vpop.f32.mrb[0].mxu0
      %v4511 = vadd.f32 %v1289, %v4510
      %v4512 = vpop.f32.mrb[0].mxu0
      %v4513 = vadd.f32 %v1285, %v4512
      %v4514 = vpop.f32.mrb[0].mxu0
      %v4515 = vadd.f32 %v1289, %v4514
      %4516 = vmatprep.mubr.bf16.mxu0 %v1690
      %4517 = vmatmul.mubr.bf16.gmra.mrb[0].mxu0 %v1682
      %v4518 = vpop.f32.mrb[0].mxu0
      %v4519 = vadd.f32 %v1285, %v4518
      %v4520 = vpop.f32.mrb[0].mxu0
      %v4521 = vadd.f32 %v1289, %v4520
      %v4522 = vpop.f32.mrb[0].mxu0
      %v4523 = vadd.f32 %v1285, %v4522
      %v4524 = vpop.f32.mrb[0].mxu0
      %v4525 = vadd.f32 %v1289, %v4524
      %4526 = vmatprep.mubr.bf16.mxu0 %v1738
      %4527 = vmatmul.mubr.bf16.gmra.mrb[0].mxu0 %v1730
      %v4528 = vpop.f32.mrb[0].mxu0
      %v4529 = vadd.f32 %v1285, %v4528
      %v4530 = vpop.f32.mrb[0].mxu0
      %v4531 = vadd.f32 %v1289, %v4530
      %v4532 = vpop.f32.mrb[0].mxu0
      %v4533 = vadd.f32 %v1285, %v4532
      %v4534 = vpop.f32.mrb[0].mxu0
      %v4535 = vadd.f32 %v1289, %v4534
      %4536 = vmatprep.mubr.bf16.mxu0 %v1786
      %4537 = vmatmul.mubr.bf16.gmra.mrb[0].mxu0 %v1778
      %v4538 = vpop.f32.mrb[0].mxu0
      %v4539 = vadd.f32 %v1285, %v4538
      %v4540 = vpop.f32.mrb[0].mxu0
      %v4541 = vadd.f32 %v1289, %v4540
      %v4542 = vpop.f32.mrb[0].mxu0
      %v4543 = vadd.f32 %v1285, %v4542
      %v4544 = vpop.f32.mrb[0].mxu0
      %v4545 = vadd.f32 %v1289, %v4544
      %4546 = vmatprep.mubr.bf16.mxu0 %v1834
      %4547 = vmatmul.mubr.bf16.gmra.mrb[0].mxu0 %v1826
      %v4548 = vpop.f32.mrb[0].mxu0
      %v4549 = vadd.f32 %v1285, %v4548
      %v4550 = vpop.f32.mrb[0].mxu0
      %v4551 = vadd.f32 %v1289, %v4550
      %v4552 = vpop.f32.mrb[0].mxu0
      %v4553 = vadd.f32 %v1285, %v4552
      %v4554 = vpop.f32.mrb[0].mxu0
      %v4555 = vadd.f32 %v1289, %v4554
      %4556 = vmatprep.mubr.bf16.mxu0 %v1882
      %4557 = vmatmul.mubr.bf16.gmra.mrb[0].mxu0 %v1874
      %v4558 = vpop.f32.mrb[0].mxu0
      %v4559 = vadd.f32 %v1285, %v4558
      %v4560 = vpop.f32.mrb[0].mxu0
      %v4561 = vadd.f32 %v1289, %v4560
      %v4562 = vpop.f32.mrb[0].mxu0
      %v4563 = vadd.f32 %v1285, %v4562
      %v4564 = vpop.f32.mrb[0].mxu0
      %v4565 = vadd.f32 %v1289, %v4564
      %4566 = vmatprep.mubr.bf16.mxu0 %v1920
      %4567 = vmatmul.mubr.bf16.gmra.mrb[0].mxu0 %v1917
      %v4568 = vpop.f32.mrb[0].mxu0
      %v4569 = vadd.f32 %v1285, %v4568
      %v4570 = vpop.f32.mrb[0].mxu0
      %v4571 = vadd.f32 %v1289, %v4570
      %v4572 = vpop.f32.mrb[0].mxu0
      %v4573 = vpop.f32.mrb[0].mxu0
      %4574 = vdwg.mxu0
      %4575 = vmatprep.subr.bf16.mxu0 %v3294
      %4576 = vmatpush1.bf16.msra.mxu0 %v3293
      %4577 = vmatprep.subr.bf16.mxu0 %v3302
      %4578 = vmatpush1.bf16.msra.mxu0 %v3301
      %4579 = vmatprep.subr.bf16.mxu0 %v3310
      %4580 = vmatpush1.bf16.msra.mxu0 %v3309
      %4581 = vmatprep.subr.bf16.mxu0 %v3318
      %4582 = vmatpush1.bf16.msra.mxu0 %v3317
      %4583 = vmatprep.subr.bf16.mxu0 %v3326
      %4584 = vmatpush1.bf16.msra.mxu0 %v3325
      %4585 = vmatprep.subr.bf16.mxu0 %v3334
      %4586 = vmatpush1.bf16.msra.mxu0 %v3333
      %4587 = vmatprep.subr.bf16.mxu0 %v3342
      %4588 = vmatpush1.bf16.msra.mxu0 %v3341
      %4589 = vmatprep.subr.bf16.mxu0 %v3350
      %4590 = vmatpush1.bf16.msra.mxu0 %v3349
      %4591 = vmatprep.subr.bf16.mxu0 %v3358
      %4592 = vmatpush1.bf16.msra.mxu0 %v3357
      %4593 = vmatprep.subr.bf16.mxu0 %v3366
      %4594 = vmatpush1.bf16.msra.mxu0 %v3365
      %4595 = vmatprep.subr.bf16.mxu0 %v3374
      %4596 = vmatpush1.bf16.msra.mxu0 %v3373
      %4597 = vmatprep.subr.bf16.mxu0 %v3382
      %4598 = vmatpush1.bf16.msra.mxu0 %v3381
      %4599 = vmatprep.subr.bf16.mxu0 %v3390
      %4600 = vmatpush1.bf16.msra.mxu0 %v3389
      %4601 = vmatprep.subr.bf16.mxu0 %v3398
      %4602 = vmatpush1.bf16.msra.mxu0 %v3397
      %4603 = vmatprep.subr.bf16.mxu0 %v3406
      %4604 = vmatpush1.bf16.msra.mxu0 %v3405
      %4605 = vmatprep.subr.bf16.mxu0 %v3414
      %4606 = vmatpush1.bf16.msra.mxu0 %v3413
      %4607 = vmatprep.mubr.bf16.mxu0 %v1362
      %4608 = vmatmul.mubr.bf16.gmra.mrb[0].mxu0 %v1350
      %v4609 = vpop.f32.mrb[0].mxu0
      %v4610 = vadd.f32 %v4449, %v4609
      %v4611 = vpop.f32.mrb[0].mxu0
      %v4612 = vadd.f32 %v4451, %v4611
      %v4613 = vpop.f32.mrb[0].mxu0
      %v4614 = vadd.f32 %v4453, %v4613
      %v4615 = vpop.f32.mrb[0].mxu0
      %v4616 = vadd.f32 %v4455, %v4615
      %4617 = vmatprep.mubr.bf16.mxu0 %v1418
      %4618 = vmatmul.mubr.bf16.gmra.mrb[0].mxu0 %v1410
      %v4619 = vpop.f32.mrb[0].mxu0
      %v4620 = vadd.f32 %v4459, %v4619
      %v4621 = vpop.f32.mrb[0].mxu0
      %v4622 = vadd.f32 %v4461, %v4621
      %v4623 = vpop.f32.mrb[0].mxu0
      %v4624 = vadd.f32 %v4463, %v4623
      %v4625 = vpop.f32.mrb[0].mxu0
      %v4626 = vadd.f32 %v4465, %v4625
      %4627 = vmatprep.mubr.bf16.mxu0 %v1466
      %4628 = vmatmul.mubr.bf16.gmra.mrb[0].mxu0 %v1458
      %v4629 = vpop.f32.mrb[0].mxu0
      %v4630 = vadd.f32 %v4469, %v4629
      %v4631 = vpop.f32.mrb[0].mxu0
      %v4632 = vadd.f32 %v4471, %v4631
      %v4633 = vpop.f32.mrb[0].mxu0
      %v4634 = vadd.f32 %v4473, %v4633
      %v4635 = vpop.f32.mrb[0].mxu0
      %v4636 = vadd.f32 %v4475, %v4635
      %4637 = vmatprep.mubr.bf16.mxu0 %v1514
      %4638 = vmatmul.mubr.bf16.gmra.mrb[0].mxu0 %v1506
      %v4639 = vpop.f32.mrb[0].mxu0
      %v4640 = vadd.f32 %v4479, %v4639
      %v4641 = vpop.f32.mrb[0].mxu0
      %v4642 = vadd.f32 %v4481, %v4641
      %v4643 = vpop.f32.mrb[0].mxu0
      %v4644 = vadd.f32 %v4483, %v4643
      %v4645 = vpop.f32.mrb[0].mxu0
      %v4646 = vadd.f32 %v4485, %v4645
      %4647 = vmatprep.mubr.bf16.mxu0 %v1562
      %4648 = vmatmul.mubr.bf16.gmra.mrb[0].mxu0 %v1554
      %v4649 = vpop.f32.mrb[0].mxu0
      %v4650 = vadd.f32 %v4489, %v4649
      %v4651 = vpop.f32.mrb[0].mxu0
      %v4652 = vadd.f32 %v4491, %v4651
      %v4653 = vpop.f32.mrb[0].mxu0
      %v4654 = vadd.f32 %v4493, %v4653
      %v4655 = vpop.f32.mrb[0].mxu0
      %v4656 = vadd.f32 %v4495, %v4655
      %4657 = vmatprep.mubr.bf16.mxu0 %v1610
      %4658 = vmatmul.mubr.bf16.gmra.mrb[0].mxu0 %v1602
      %v4659 = vpop.f32.mrb[0].mxu0
      %v4660 = vadd.f32 %v4499, %v4659
      %v4661 = vpop.f32.mrb[0].mxu0
      %v4662 = vadd.f32 %v4501, %v4661
      %v4663 = vpop.f32.mrb[0].mxu0
      %v4664 = vadd.f32 %v4503, %v4663
      %v4665 = vpop.f32.mrb[0].mxu0
      %v4666 = vadd.f32 %v4505, %v4665
      %4667 = vmatprep.mubr.bf16.mxu0 %v1658
      %4668 = vmatmul.mubr.bf16.gmra.mrb[0].mxu0 %v1650
      %v4669 = vpop.f32.mrb[0].mxu0
      %v4670 = vadd.f32 %v4509, %v4669
      %v4671 = vpop.f32.mrb[0].mxu0
      %v4672 = vadd.f32 %v4511, %v4671
      %v4673 = vpop.f32.mrb[0].mxu0
      %v4674 = vadd.f32 %v4513, %v4673
      %v4675 = vpop.f32.mrb[0].mxu0
      %v4676 = vadd.f32 %v4515, %v4675
      %4677 = vmatprep.mubr.bf16.mxu0 %v1706
      %4678 = vmatmul.mubr.bf16.gmra.mrb[0].mxu0 %v1698
      %v4679 = vpop.f32.mrb[0].mxu0
      %v4680 = vadd.f32 %v4519, %v4679
      %v4681 = vpop.f32.mrb[0].mxu0
      %v4682 = vadd.f32 %v4521, %v4681
      %v4683 = vpop.f32.mrb[0].mxu0
      %v4684 = vadd.f32 %v4523, %v4683
      %v4685 = vpop.f32.mrb[0].mxu0
      %v4686 = vadd.f32 %v4525, %v4685
      %4687 = vmatprep.mubr.bf16.mxu0 %v1754
      %4688 = vmatmul.mubr.bf16.gmra.mrb[0].mxu0 %v1746
      %v4689 = vpop.f32.mrb[0].mxu0
      %v4690 = vadd.f32 %v4529, %v4689
      %v4691 = vpop.f32.mrb[0].mxu0
      %v4692 = vadd.f32 %v4531, %v4691
      %v4693 = vpop.f32.mrb[0].mxu0
      %v4694 = vadd.f32 %v4533, %v4693
      %v4695 = vpop.f32.mrb[0].mxu0
      %v4696 = vadd.f32 %v4535, %v4695
      %4697 = vmatprep.mubr.bf16.mxu0 %v1802
      %4698 = vmatmul.mubr.bf16.gmra.mrb[0].mxu0 %v1794
      %v4699 = vpop.f32.mrb[0].mxu0
      %v4700 = vadd.f32 %v4539, %v4699
      %v4701 = vpop.f32.mrb[0].mxu0
      %v4702 = vadd.f32 %v4541, %v4701
      %v4703 = vpop.f32.mrb[0].mxu0
      %v4704 = vadd.f32 %v4543, %v4703
      %v4705 = vpop.f32.mrb[0].mxu0
      %v4706 = vadd.f32 %v4545, %v4705
      %4707 = vmatprep.mubr.bf16.mxu0 %v1850
      %4708 = vmatmul.mubr.bf16.gmra.mrb[0].mxu0 %v1842
      %v4709 = vpop.f32.mrb[0].mxu0
      %v4710 = vadd.f32 %v4549, %v4709
      %v4711 = vpop.f32.mrb[0].mxu0
      %v4712 = vadd.f32 %v4551, %v4711
      %v4713 = vpop.f32.mrb[0].mxu0
      %v4714 = vadd.f32 %v4553, %v4713
      %v4715 = vpop.f32.mrb[0].mxu0
      %v4716 = vadd.f32 %v4555, %v4715
      %4717 = vmatprep.mubr.bf16.mxu0 %v1898
      %4718 = vmatmul.mubr.bf16.gmra.mrb[0].mxu0 %v1890
      %v4719 = vpop.f32.mrb[0].mxu0
      %v4720 = vadd.f32 %v4559, %v4719
      %v4721 = vpop.f32.mrb[0].mxu0
      %v4722 = vadd.f32 %v4561, %v4721
      %v4723 = vpop.f32.mrb[0].mxu0
      %v4724 = vadd.f32 %v4563, %v4723
      %v4725 = vpop.f32.mrb[0].mxu0
      %v4726 = vadd.f32 %v4565, %v4725
      %4727 = vmatprep.mubr.bf16.mxu0 %v1926
      %4728 = vmatmul.mubr.bf16.gmra.mrb[0].mxu0 %v1923
      %v4729 = vpop.f32.mrb[0].mxu0
      %v4730 = vadd.f32 %v4569, %v4729
      %v4731 = vpop.f32.mrb[0].mxu0
      %v4732 = vadd.f32 %v4571, %v4731
      %v4733 = vpop.f32.mrb[0].mxu0
      %v4734 = vpop.f32.mrb[0].mxu0
      %4735 = vdwg.mxu0
      %4736 = vmatprep.subr.bf16.mxu0 %v3422
      %4737 = vmatpush1.bf16.msra.mxu0 %v3421
      %4738 = vmatprep.subr.bf16.mxu0 %v3430
      %4739 = vmatpush1.bf16.msra.mxu0 %v3429
      %4740 = vmatprep.subr.bf16.mxu0 %v3438
      %4741 = vmatpush1.bf16.msra.mxu0 %v3437
      %4742 = vmatprep.subr.bf16.mxu0 %v3446
      %4743 = vmatpush1.bf16.msra.mxu0 %v3445
      %4744 = vmatprep.subr.bf16.mxu0 %v3454
      %4745 = vmatpush1.bf16.msra.mxu0 %v3453
      %4746 = vmatprep.subr.bf16.mxu0 %v3462
      %4747 = vmatpush1.bf16.msra.mxu0 %v3461
      %4748 = vmatprep.subr.bf16.mxu0 %v3470
      %4749 = vmatpush1.bf16.msra.mxu0 %v3469
      %4750 = vmatprep.subr.bf16.mxu0 %v3478
      %4751 = vmatpush1.bf16.msra.mxu0 %v3477
      %4752 = vmatprep.subr.bf16.mxu0 %v3486
      %4753 = vmatpush1.bf16.msra.mxu0 %v3485
      %4754 = vmatprep.subr.bf16.mxu0 %v3494
      %4755 = vmatpush1.bf16.msra.mxu0 %v3493
      %4756 = vmatprep.subr.bf16.mxu0 %v3502
      %4757 = vmatpush1.bf16.msra.mxu0 %v3501
      %4758 = vmatprep.subr.bf16.mxu0 %v3510
      %4759 = vmatpush1.bf16.msra.mxu0 %v3509
      %4760 = vmatprep.subr.bf16.mxu0 %v3518
      %4761 = vmatpush1.bf16.msra.mxu0 %v3517
      %4762 = vmatprep.subr.bf16.mxu0 %v3526
      %4763 = vmatpush1.bf16.msra.mxu0 %v3525
      %4764 = vmatprep.subr.bf16.mxu0 %v3534
      %4765 = vmatpush1.bf16.msra.mxu0 %v3533
      %4766 = vmatprep.subr.bf16.mxu0 %v3542
      %4767 = vmatpush1.bf16.msra.mxu0 %v3541
      %4768 = vmatprep.mubr.bf16.mxu0 %v1386
      %4769 = vmatmul.mubr.bf16.gmra.mrb[0].mxu0 %v1374
      %v4770 = vpop.f32.mrb[0].mxu0
      %v4771 = vadd.f32 %v4610, %v4770
      %v4772 = vpop.f32.mrb[0].mxu0
      %v4773 = vadd.f32 %v4612, %v4772
      %v4774 = vpop.f32.mrb[0].mxu0
      %v4775 = vadd.f32 %v4614, %v4774
      %v4776 = vpop.f32.mrb[0].mxu0
      %v4777 = vadd.f32 %v4616, %v4776
      %4778 = vmatprep.mubr.bf16.mxu0 %v1434
      %4779 = vmatmul.mubr.bf16.gmra.mrb[0].mxu0 %v1426
      %v4780 = vpop.f32.mrb[0].mxu0
      %v4781 = vadd.f32 %v4620, %v4780
      %v4782 = vpop.f32.mrb[0].mxu0
      %v4783 = vadd.f32 %v4622, %v4782
      %v4784 = vpop.f32.mrb[0].mxu0
      %v4785 = vadd.f32 %v4624, %v4784
      %v4786 = vpop.f32.mrb[0].mxu0
      %v4787 = vadd.f32 %v4626, %v4786
      %4788 = vmatprep.mubr.bf16.mxu0 %v1482
      %4789 = vmatmul.mubr.bf16.gmra.mrb[0].mxu0 %v1474
      %v4790 = vpop.f32.mrb[0].mxu0
      %v4791 = vadd.f32 %v4630, %v4790
      %v4792 = vpop.f32.mrb[0].mxu0
      %v4793 = vadd.f32 %v4632, %v4792
      %v4794 = vpop.f32.mrb[0].mxu0
      %v4795 = vadd.f32 %v4634, %v4794
      %v4796 = vpop.f32.mrb[0].mxu0
      %v4797 = vadd.f32 %v4636, %v4796
      %4798 = vmatprep.mubr.bf16.mxu0 %v1530
      %4799 = vmatmul.mubr.bf16.gmra.mrb[0].mxu0 %v1522
      %v4800 = vpop.f32.mrb[0].mxu0
      %v4801 = vadd.f32 %v4640, %v4800
      %v4802 = vpop.f32.mrb[0].mxu0
      %v4803 = vadd.f32 %v4642, %v4802
      %v4804 = vpop.f32.mrb[0].mxu0
      %v4805 = vadd.f32 %v4644, %v4804
      %v4806 = vpop.f32.mrb[0].mxu0
      %v4807 = vadd.f32 %v4646, %v4806
      %4808 = vmatprep.mubr.bf16.mxu0 %v1578
      %4809 = vmatmul.mubr.bf16.gmra.mrb[0].mxu0 %v1570
      %v4810 = vpop.f32.mrb[0].mxu0
      %v4811 = vadd.f32 %v4650, %v4810
      %v4812 = vpop.f32.mrb[0].mxu0
      %v4813 = vadd.f32 %v4652, %v4812
      %v4814 = vpop.f32.mrb[0].mxu0
      %v4815 = vadd.f32 %v4654, %v4814
      %v4816 = vpop.f32.mrb[0].mxu0
      %v4817 = vadd.f32 %v4656, %v4816
      %4818 = vmatprep.mubr.bf16.mxu0 %v1626
      %4819 = vmatmul.mubr.bf16.gmra.mrb[0].mxu0 %v1618
      %v4820 = vpop.f32.mrb[0].mxu0
      %v4821 = vadd.f32 %v4660, %v4820
      %v4822 = vpop.f32.mrb[0].mxu0
      %v4823 = vadd.f32 %v4662, %v4822
      %v4824 = vpop.f32.mrb[0].mxu0
      %v4825 = vadd.f32 %v4664, %v4824
      %v4826 = vpop.f32.mrb[0].mxu0
      %v4827 = vadd.f32 %v4666, %v4826
      %4828 = vmatprep.mubr.bf16.mxu0 %v1674
      %4829 = vmatmul.mubr.bf16.gmra.mrb[0].mxu0 %v1666
      %v4830 = vpop.f32.mrb[0].mxu0
      %v4831 = vadd.f32 %v4670, %v4830
      %v4832 = vpop.f32.mrb[0].mxu0
      %v4833 = vadd.f32 %v4672, %v4832
      %v4834 = vpop.f32.mrb[0].mxu0
      %v4835 = vadd.f32 %v4674, %v4834
      %v4836 = vpop.f32.mrb[0].mxu0
      %v4837 = vadd.f32 %v4676, %v4836
      %4838 = vmatprep.mubr.bf16.mxu0 %v1722
      %4839 = vmatmul.mubr.bf16.gmra.mrb[0].mxu0 %v1714
      %v4840 = vpop.f32.mrb[0].mxu0
      %v4841 = vadd.f32 %v4680, %v4840
      %v4842 = vpop.f32.mrb[0].mxu0
      %v4843 = vadd.f32 %v4682, %v4842
      %v4844 = vpop.f32.mrb[0].mxu0
      %v4845 = vadd.f32 %v4684, %v4844
      %v4846 = vpop.f32.mrb[0].mxu0
      %v4847 = vadd.f32 %v4686, %v4846
      %4848 = vmatprep.mubr.bf16.mxu0 %v1770
      %4849 = vmatmul.mubr.bf16.gmra.mrb[0].mxu0 %v1762
      %v4850 = vpop.f32.mrb[0].mxu0
      %v4851 = vadd.f32 %v4690, %v4850
      %v4852 = vpop.f32.mrb[0].mxu0
      %v4853 = vadd.f32 %v4692, %v4852
      %v4854 = vpop.f32.mrb[0].mxu0
      %v4855 = vadd.f32 %v4694, %v4854
      %v4856 = vpop.f32.mrb[0].mxu0
      %v4857 = vadd.f32 %v4696, %v4856
      %4858 = vmatprep.mubr.bf16.mxu0 %v1818
      %4859 = vmatmul.mubr.bf16.gmra.mrb[0].mxu0 %v1810
      %v4860 = vpop.f32.mrb[0].mxu0
      %v4861 = vadd.f32 %v4700, %v4860
      %v4862 = vpop.f32.mrb[0].mxu0
      %v4863 = vadd.f32 %v4702, %v4862
      %v4864 = vpop.f32.mrb[0].mxu0
      %v4865 = vadd.f32 %v4704, %v4864
      %v4866 = vpop.f32.mrb[0].mxu0
      %v4867 = vadd.f32 %v4706, %v4866
      %4868 = vmatprep.mubr.bf16.mxu0 %v1866
      %4869 = vmatmul.mubr.bf16.gmra.mrb[0].mxu0 %v1858
      %v4870 = vpop.f32.mrb[0].mxu0
      %v4871 = vadd.f32 %v4710, %v4870
      %v4872 = vpop.f32.mrb[0].mxu0
      %v4873 = vadd.f32 %v4712, %v4872
      %v4874 = vpop.f32.mrb[0].mxu0
      %v4875 = vadd.f32 %v4714, %v4874
      %v4876 = vpop.f32.mrb[0].mxu0
      %v4877 = vadd.f32 %v4716, %v4876
      %4878 = vmatprep.mubr.bf16.mxu0 %v1914
      %4879 = vmatmul.mubr.bf16.gmra.mrb[0].mxu0 %v1906
      %v4880 = vpop.f32.mrb[0].mxu0
      %v4881 = vadd.f32 %v4720, %v4880
      %v4882 = vpop.f32.mrb[0].mxu0
      %v4883 = vadd.f32 %v4722, %v4882
      %v4884 = vpop.f32.mrb[0].mxu0
      %v4885 = vadd.f32 %v4724, %v4884
      %v4886 = vpop.f32.mrb[0].mxu0
      %v4887 = vadd.f32 %v4726, %v4886
      %4888 = vmatprep.mubr.bf16.mxu0 %v1932
      %4889 = vmatmul.mubr.bf16.gmra.mrb[0].mxu0 %v1929
      %v4890 = vpop.f32.mrb[0].mxu0
      %v4891 = vadd.f32 %v4730, %v4890
      %v4892 = vpop.f32.mrb[0].mxu0
      %v4893 = vadd.f32 %v4732, %v4892
      %v4894 = vpop.f32.mrb[0].mxu0
      %v4895 = vpop.f32.mrb[0].mxu0
      %4896 = vdwg.mxu0
      %4897 = vmatprep.subr.bf16.mxu0 %v3168
      %4898 = vmatpush1.bf16.msra.mxu0 %v3167
      %4899 = vmatprep.subr.bf16.mxu0 %v3176
      %4900 = vmatpush1.bf16.msra.mxu0 %v3175
      %4901 = vmatprep.subr.bf16.mxu0 %v3184
      %4902 = vmatpush1.bf16.msra.mxu0 %v3183
      %4903 = vmatprep.subr.bf16.mxu0 %v3192
      %4904 = vmatpush1.bf16.msra.mxu0 %v3191
      %4905 = vmatprep.subr.bf16.mxu0 %v3200
      %4906 = vmatpush1.bf16.msra.mxu0 %v3199
      %4907 = vmatprep.subr.bf16.mxu0 %v3208
      %4908 = vmatpush1.bf16.msra.mxu0 %v3207
      %4909 = vmatprep.subr.bf16.mxu0 %v3216
      %4910 = vmatpush1.bf16.msra.mxu0 %v3215
      %4911 = vmatprep.subr.bf16.mxu0 %v3224
      %4912 = vmatpush1.bf16.msra.mxu0 %v3223
      %4913 = vmatprep.subr.bf16.mxu0 %v3232
      %4914 = vmatpush1.bf16.msra.mxu0 %v3231
      %4915 = vmatprep.subr.bf16.mxu0 %v3240
      %4916 = vmatpush1.bf16.msra.mxu0 %v3239
      %4917 = vmatprep.subr.bf16.mxu0 %v3248
      %4918 = vmatpush1.bf16.msra.mxu0 %v3247
      %4919 = vmatprep.subr.bf16.mxu0 %v3256
      %4920 = vmatpush1.bf16.msra.mxu0 %v3255
      %4921 = vmatprep.subr.bf16.mxu0 %v3264
      %4922 = vmatpush1.bf16.msra.mxu0 %v3263
      %4923 = vmatprep.subr.bf16.mxu0 %v3272
      %4924 = vmatpush1.bf16.msra.mxu0 %v3271
      %4925 = vmatprep.subr.bf16.mxu0 %v3280
      %4926 = vmatpush1.bf16.msra.mxu0 %v3279
      %4927 = vmatprep.subr.bf16.mxu0 %v3288
      %4928 = vmatpush1.bf16.msra.mxu0 %v3287
      %4929 = vmatprep.mubr.bf16.mxu0 %v1338
      %4930 = vmatmul.mubr.bf16.gmra.mrb[0].mxu0 %v1326
      %v4931 = vpop.f32.mrb[0].mxu0
      %v4932 = vadd.f32 %v1293, %v4931
      %v4933 = vpop.f32.mrb[0].mxu0
      %v4934 = vadd.f32 %v1297, %v4933
      %v4935 = vpop.f32.mrb[0].mxu0
      %v4936 = vadd.f32 %v1293, %v4935
      %v4937 = vpop.f32.mrb[0].mxu0
      %v4938 = vadd.f32 %v1297, %v4937
      %4939 = vmatprep.mubr.bf16.mxu0 %v1402
      %4940 = vmatmul.mubr.bf16.gmra.mrb[0].mxu0 %v1394
      %v4941 = vpop.f32.mrb[0].mxu0
      %v4942 = vadd.f32 %v1293, %v4941
      %v4943 = vpop.f32.mrb[0].mxu0
      %v4944 = vadd.f32 %v1297, %v4943
      %v4945 = vpop.f32.mrb[0].mxu0
      %v4946 = vadd.f32 %v1293, %v4945
      %v4947 = vpop.f32.mrb[0].mxu0
      %v4948 = vadd.f32 %v1297, %v4947
      %4949 = vmatprep.mubr.bf16.mxu0 %v1450
      %4950 = vmatmul.mubr.bf16.gmra.mrb[0].mxu0 %v1442
      %v4951 = vpop.f32.mrb[0].mxu0
      %v4952 = vadd.f32 %v1293, %v4951
      %v4953 = vpop.f32.mrb[0].mxu0
      %v4954 = vadd.f32 %v1297, %v4953
      %v4955 = vpop.f32.mrb[0].mxu0
      %v4956 = vadd.f32 %v1293, %v4955
      %v4957 = vpop.f32.mrb[0].mxu0
      %v4958 = vadd.f32 %v1297, %v4957
      %4959 = vmatprep.mubr.bf16.mxu0 %v1498
      %4960 = vmatmul.mubr.bf16.gmra.mrb[0].mxu0 %v1490
      %v4961 = vpop.f32.mrb[0].mxu0
      %v4962 = vadd.f32 %v1293, %v4961
      %v4963 = vpop.f32.mrb[0].mxu0
      %v4964 = vadd.f32 %v1297, %v4963
      %v4965 = vpop.f32.mrb[0].mxu0
      %v4966 = vadd.f32 %v1293, %v4965
      %v4967 = vpop.f32.mrb[0].mxu0
      %v4968 = vadd.f32 %v1297, %v4967
      %4969 = vmatprep.mubr.bf16.mxu0 %v1546
      %4970 = vmatmul.mubr.bf16.gmra.mrb[0].mxu0 %v1538
      %v4971 = vpop.f32.mrb[0].mxu0
      %v4972 = vadd.f32 %v1293, %v4971
      %v4973 = vpop.f32.mrb[0].mxu0
      %v4974 = vadd.f32 %v1297, %v4973
      %v4975 = vpop.f32.mrb[0].mxu0
      %v4976 = vadd.f32 %v1293, %v4975
      %v4977 = vpop.f32.mrb[0].mxu0
      %v4978 = vadd.f32 %v1297, %v4977
      %4979 = vmatprep.mubr.bf16.mxu0 %v1594
      %4980 = vmatmul.mubr.bf16.gmra.mrb[0].mxu0 %v1586
      %v4981 = vpop.f32.mrb[0].mxu0
      %v4982 = vadd.f32 %v1293, %v4981
      %v4983 = vpop.f32.mrb[0].mxu0
      %v4984 = vadd.f32 %v1297, %v4983
      %v4985 = vpop.f32.mrb[0].mxu0
      %v4986 = vadd.f32 %v1293, %v4985
      %v4987 = vpop.f32.mrb[0].mxu0
      %v4988 = vadd.f32 %v1297, %v4987
      %4989 = vmatprep.mubr.bf16.mxu0 %v1642
      %4990 = vmatmul.mubr.bf16.gmra.mrb[0].mxu0 %v1634
      %v4991 = vpop.f32.mrb[0].mxu0
      %v4992 = vadd.f32 %v1293, %v4991
      %v4993 = vpop.f32.mrb[0].mxu0
      %v4994 = vadd.f32 %v1297, %v4993
      %v4995 = vpop.f32.mrb[0].mxu0
      %v4996 = vadd.f32 %v1293, %v4995
      %v4997 = vpop.f32.mrb[0].mxu0
      %v4998 = vadd.f32 %v1297, %v4997
      %4999 = vmatprep.mubr.bf16.mxu0 %v1690
      %5000 = vmatmul.mubr.bf16.gmra.mrb[0].mxu0 %v1682
      %v5001 = vpop.f32.mrb[0].mxu0
      %v5002 = vadd.f32 %v1293, %v5001
      %v5003 = vpop.f32.mrb[0].mxu0
      %v5004 = vadd.f32 %v1297, %v5003
      %v5005 = vpop.f32.mrb[0].mxu0
      %v5006 = vadd.f32 %v1293, %v5005
      %v5007 = vpop.f32.mrb[0].mxu0
      %v5008 = vadd.f32 %v1297, %v5007
      %5009 = vmatprep.mubr.bf16.mxu0 %v1738
      %5010 = vmatmul.mubr.bf16.gmra.mrb[0].mxu0 %v1730
      %v5011 = vpop.f32.mrb[0].mxu0
      %v5012 = vadd.f32 %v1293, %v5011
      %v5013 = vpop.f32.mrb[0].mxu0
      %v5014 = vadd.f32 %v1297, %v5013
      %v5015 = vpop.f32.mrb[0].mxu0
      %v5016 = vadd.f32 %v1293, %v5015
      %v5017 = vpop.f32.mrb[0].mxu0
      %v5018 = vadd.f32 %v1297, %v5017
      %5019 = vmatprep.mubr.bf16.mxu0 %v1786
      %5020 = vmatmul.mubr.bf16.gmra.mrb[0].mxu0 %v1778
      %v5021 = vpop.f32.mrb[0].mxu0
      %v5022 = vadd.f32 %v1293, %v5021
      %v5023 = vpop.f32.mrb[0].mxu0
      %v5024 = vadd.f32 %v1297, %v5023
      %v5025 = vpop.f32.mrb[0].mxu0
      %v5026 = vadd.f32 %v1293, %v5025
      %v5027 = vpop.f32.mrb[0].mxu0
      %v5028 = vadd.f32 %v1297, %v5027
      %5029 = vmatprep.mubr.bf16.mxu0 %v1834
      %5030 = vmatmul.mubr.bf16.gmra.mrb[0].mxu0 %v1826
      %v5031 = vpop.f32.mrb[0].mxu0
      %v5032 = vadd.f32 %v1293, %v5031
      %v5033 = vpop.f32.mrb[0].mxu0
      %v5034 = vadd.f32 %v1297, %v5033
      %v5035 = vpop.f32.mrb[0].mxu0
      %v5036 = vadd.f32 %v1293, %v5035
      %v5037 = vpop.f32.mrb[0].mxu0
      %v5038 = vadd.f32 %v1297, %v5037
      %5039 = vmatprep.mubr.bf16.mxu0 %v1882
      %5040 = vmatmul.mubr.bf16.gmra.mrb[0].mxu0 %v1874
      %v5041 = vpop.f32.mrb[0].mxu0
      %v5042 = vadd.f32 %v1293, %v5041
      %v5043 = vpop.f32.mrb[0].mxu0
      %v5044 = vadd.f32 %v1297, %v5043
      %v5045 = vpop.f32.mrb[0].mxu0
      %v5046 = vadd.f32 %v1293, %v5045
      %v5047 = vpop.f32.mrb[0].mxu0
      %v5048 = vadd.f32 %v1297, %v5047
      %5049 = vmatprep.mubr.bf16.mxu0 %v1920
      %5050 = vmatmul.mubr.bf16.gmra.mrb[0].mxu0 %v1917
      %v5051 = vpop.f32.mrb[0].mxu0
      %v5052 = vadd.f32 %v1293, %v5051
      %v5053 = vpop.f32.mrb[0].mxu0
      %v5054 = vadd.f32 %v1297, %v5053
      %v5055 = vpop.f32.mrb[0].mxu0
      %v5056 = vpop.f32.mrb[0].mxu0
      %5057 = vdwg.mxu0
      %5058 = vmatprep.subr.bf16.mxu0 %v3296
      %5059 = vmatpush1.bf16.msra.mxu0 %v3295
      %5060 = vmatprep.subr.bf16.mxu0 %v3304
      %5061 = vmatpush1.bf16.msra.mxu0 %v3303
      %5062 = vmatprep.subr.bf16.mxu0 %v3312
      %5063 = vmatpush1.bf16.msra.mxu0 %v3311
      %5064 = vmatprep.subr.bf16.mxu0 %v3320
      %5065 = vmatpush1.bf16.msra.mxu0 %v3319
      %5066 = vmatprep.subr.bf16.mxu0 %v3328
      %5067 = vmatpush1.bf16.msra.mxu0 %v3327
      %5068 = vmatprep.subr.bf16.mxu0 %v3336
      %5069 = vmatpush1.bf16.msra.mxu0 %v3335
      %5070 = vmatprep.subr.bf16.mxu0 %v3344
      %5071 = vmatpush1.bf16.msra.mxu0 %v3343
      %5072 = vmatprep.subr.bf16.mxu0 %v3352
      %5073 = vmatpush1.bf16.msra.mxu0 %v3351
      %5074 = vmatprep.subr.bf16.mxu0 %v3360
      %5075 = vmatpush1.bf16.msra.mxu0 %v3359
      %5076 = vmatprep.subr.bf16.mxu0 %v3368
      %5077 = vmatpush1.bf16.msra.mxu0 %v3367
      %5078 = vmatprep.subr.bf16.mxu0 %v3376
      %5079 = vmatpush1.bf16.msra.mxu0 %v3375
      %5080 = vmatprep.subr.bf16.mxu0 %v3384
      %5081 = vmatpush1.bf16.msra.mxu0 %v3383
      %5082 = vmatprep.subr.bf16.mxu0 %v3392
      %5083 = vmatpush1.bf16.msra.mxu0 %v3391
      %5084 = vmatprep.subr.bf16.mxu0 %v3400
      %5085 = vmatpush1.bf16.msra.mxu0 %v3399
      %5086 = vmatprep.subr.bf16.mxu0 %v3408
      %5087 = vmatpush1.bf16.msra.mxu0 %v3407
      %5088 = vmatprep.subr.bf16.mxu0 %v3416
      %5089 = vmatpush1.bf16.msra.mxu0 %v3415
      %5090 = vmatprep.mubr.bf16.mxu0 %v1362
      %5091 = vmatmul.mubr.bf16.gmra.mrb[0].mxu0 %v1350
      %v5092 = vpop.f32.mrb[0].mxu0
      %v5093 = vadd.f32 %v4932, %v5092
      %v5094 = vpop.f32.mrb[0].mxu0
      %v5095 = vadd.f32 %v4934, %v5094
      %v5096 = vpop.f32.mrb[0].mxu0
      %v5097 = vadd.f32 %v4936, %v5096
      %v5098 = vpop.f32.mrb[0].mxu0
      %v5099 = vadd.f32 %v4938, %v5098
      %5100 = vmatprep.mubr.bf16.mxu0 %v1418
      %5101 = vmatmul.mubr.bf16.gmra.mrb[0].mxu0 %v1410
      %v5102 = vpop.f32.mrb[0].mxu0
      %v5103 = vadd.f32 %v4942, %v5102
      %v5104 = vpop.f32.mrb[0].mxu0
      %v5105 = vadd.f32 %v4944, %v5104
      %v5106 = vpop.f32.mrb[0].mxu0
      %v5107 = vadd.f32 %v4946, %v5106
      %v5108 = vpop.f32.mrb[0].mxu0
      %v5109 = vadd.f32 %v4948, %v5108
      %5110 = vmatprep.mubr.bf16.mxu0 %v1466
      %5111 = vmatmul.mubr.bf16.gmra.mrb[0].mxu0 %v1458
      %v5112 = vpop.f32.mrb[0].mxu0
      %v5113 = vadd.f32 %v4952, %v5112
      %v5114 = vpop.f32.mrb[0].mxu0
      %v5115 = vadd.f32 %v4954, %v5114
      %v5116 = vpop.f32.mrb[0].mxu0
      %v5117 = vadd.f32 %v4956, %v5116
      %v5118 = vpop.f32.mrb[0].mxu0
      %v5119 = vadd.f32 %v4958, %v5118
      %5120 = vmatprep.mubr.bf16.mxu0 %v1514
      %5121 = vmatmul.mubr.bf16.gmra.mrb[0].mxu0 %v1506
      %v5122 = vpop.f32.mrb[0].mxu0
      %v5123 = vadd.f32 %v4962, %v5122
      %v5124 = vpop.f32.mrb[0].mxu0
      %v5125 = vadd.f32 %v4964, %v5124
      %v5126 = vpop.f32.mrb[0].mxu0
      %v5127 = vadd.f32 %v4966, %v5126
      %v5128 = vpop.f32.mrb[0].mxu0
      %v5129 = vadd.f32 %v4968, %v5128
      %5130 = vmatprep.mubr.bf16.mxu0 %v1562
      %5131 = vmatmul.mubr.bf16.gmra.mrb[0].mxu0 %v1554
      %v5132 = vpop.f32.mrb[0].mxu0
      %v5133 = vadd.f32 %v4972, %v5132
      %v5134 = vpop.f32.mrb[0].mxu0
      %v5135 = vadd.f32 %v4974, %v5134
      %v5136 = vpop.f32.mrb[0].mxu0
      %v5137 = vadd.f32 %v4976, %v5136
      %v5138 = vpop.f32.mrb[0].mxu0
      %v5139 = vadd.f32 %v4978, %v5138
      %5140 = vmatprep.mubr.bf16.mxu0 %v1610
      %5141 = vmatmul.mubr.bf16.gmra.mrb[0].mxu0 %v1602
      %v5142 = vpop.f32.mrb[0].mxu0
      %v5143 = vadd.f32 %v4982, %v5142
      %v5144 = vpop.f32.mrb[0].mxu0
      %v5145 = vadd.f32 %v4984, %v5144
      %v5146 = vpop.f32.mrb[0].mxu0
      %v5147 = vadd.f32 %v4986, %v5146
      %v5148 = vpop.f32.mrb[0].mxu0
      %v5149 = vadd.f32 %v4988, %v5148
      %5150 = vmatprep.mubr.bf16.mxu0 %v1658
      %5151 = vmatmul.mubr.bf16.gmra.mrb[0].mxu0 %v1650
      %v5152 = vpop.f32.mrb[0].mxu0
      %v5153 = vadd.f32 %v4992, %v5152
      %v5154 = vpop.f32.mrb[0].mxu0
      %v5155 = vadd.f32 %v4994, %v5154
      %v5156 = vpop.f32.mrb[0].mxu0
      %v5157 = vadd.f32 %v4996, %v5156
      %v5158 = vpop.f32.mrb[0].mxu0
      %v5159 = vadd.f32 %v4998, %v5158
      %5160 = vmatprep.mubr.bf16.mxu0 %v1706
      %5161 = vmatmul.mubr.bf16.gmra.mrb[0].mxu0 %v1698
      %v5162 = vpop.f32.mrb[0].mxu0
      %v5163 = vadd.f32 %v5002, %v5162
      %v5164 = vpop.f32.mrb[0].mxu0
      %v5165 = vadd.f32 %v5004, %v5164
      %v5166 = vpop.f32.mrb[0].mxu0
      %v5167 = vadd.f32 %v5006, %v5166
      %v5168 = vpop.f32.mrb[0].mxu0
      %v5169 = vadd.f32 %v5008, %v5168
      %5170 = vmatprep.mubr.bf16.mxu0 %v1754
      %5171 = vmatmul.mubr.bf16.gmra.mrb[0].mxu0 %v1746
      %v5172 = vpop.f32.mrb[0].mxu0
      %v5173 = vadd.f32 %v5012, %v5172
      %v5174 = vpop.f32.mrb[0].mxu0
      %v5175 = vadd.f32 %v5014, %v5174
      %v5176 = vpop.f32.mrb[0].mxu0
      %v5177 = vadd.f32 %v5016, %v5176
      %v5178 = vpop.f32.mrb[0].mxu0
      %v5179 = vadd.f32 %v5018, %v5178
      %5180 = vmatprep.mubr.bf16.mxu0 %v1802
      %5181 = vmatmul.mubr.bf16.gmra.mrb[0].mxu0 %v1794
      %v5182 = vpop.f32.mrb[0].mxu0
      %v5183 = vadd.f32 %v5022, %v5182
      %v5184 = vpop.f32.mrb[0].mxu0
      %v5185 = vadd.f32 %v5024, %v5184
      %v5186 = vpop.f32.mrb[0].mxu0
      %v5187 = vadd.f32 %v5026, %v5186
      %v5188 = vpop.f32.mrb[0].mxu0
      %v5189 = vadd.f32 %v5028, %v5188
      %5190 = vmatprep.mubr.bf16.mxu0 %v1850
      %5191 = vmatmul.mubr.bf16.gmra.mrb[0].mxu0 %v1842
      %v5192 = vpop.f32.mrb[0].mxu0
      %v5193 = vadd.f32 %v5032, %v5192
      %v5194 = vpop.f32.mrb[0].mxu0
      %v5195 = vadd.f32 %v5034, %v5194
      %v5196 = vpop.f32.mrb[0].mxu0
      %v5197 = vadd.f32 %v5036, %v5196
      %v5198 = vpop.f32.mrb[0].mxu0
      %v5199 = vadd.f32 %v5038, %v5198
      %5200 = vmatprep.mubr.bf16.mxu0 %v1898
      %5201 = vmatmul.mubr.bf16.gmra.mrb[0].mxu0 %v1890
      %v5202 = vpop.f32.mrb[0].mxu0
      %v5203 = vadd.f32 %v5042, %v5202
      %v5204 = vpop.f32.mrb[0].mxu0
      %v5205 = vadd.f32 %v5044, %v5204
      %v5206 = vpop.f32.mrb[0].mxu0
      %v5207 = vadd.f32 %v5046, %v5206
      %v5208 = vpop.f32.mrb[0].mxu0
      %v5209 = vadd.f32 %v5048, %v5208
      %5210 = vmatprep.mubr.bf16.mxu0 %v1926
      %5211 = vmatmul.mubr.bf16.gmra.mrb[0].mxu0 %v1923
      %v5212 = vpop.f32.mrb[0].mxu0
      %v5213 = vadd.f32 %v5052, %v5212
      %v5214 = vpop.f32.mrb[0].mxu0
      %v5215 = vadd.f32 %v5054, %v5214
      %v5216 = vpop.f32.mrb[0].mxu0
      %v5217 = vpop.f32.mrb[0].mxu0
      %5218 = vdwg.mxu0
      %5219 = vmatprep.subr.bf16.mxu0 %v3424
      %5220 = vmatpush1.bf16.msra.mxu0 %v3423
      %5221 = vmatprep.subr.bf16.mxu0 %v3432
      %5222 = vmatpush1.bf16.msra.mxu0 %v3431
      %5223 = vmatprep.subr.bf16.mxu0 %v3440
      %5224 = vmatpush1.bf16.msra.mxu0 %v3439
      %5225 = vmatprep.subr.bf16.mxu0 %v3448
      %5226 = vmatpush1.bf16.msra.mxu0 %v3447
      %5227 = vmatprep.subr.bf16.mxu0 %v3456
      %5228 = vmatpush1.bf16.msra.mxu0 %v3455
      %5229 = vmatprep.subr.bf16.mxu0 %v3464
      %5230 = vmatpush1.bf16.msra.mxu0 %v3463
      %5231 = vmatprep.subr.bf16.mxu0 %v3472
      %5232 = vmatpush1.bf16.msra.mxu0 %v3471
      %5233 = vmatprep.subr.bf16.mxu0 %v3480
      %5234 = vmatpush1.bf16.msra.mxu0 %v3479
      %5235 = vmatprep.subr.bf16.mxu0 %v3488
      %5236 = vmatpush1.bf16.msra.mxu0 %v3487
      %5237 = vmatprep.subr.bf16.mxu0 %v3496
      %5238 = vmatpush1.bf16.msra.mxu0 %v3495
      %5239 = vmatprep.subr.bf16.mxu0 %v3504
      %5240 = vmatpush1.bf16.msra.mxu0 %v3503
      %5241 = vmatprep.subr.bf16.mxu0 %v3512
      %5242 = vmatpush1.bf16.msra.mxu0 %v3511
      %5243 = vmatprep.subr.bf16.mxu0 %v3520
      %5244 = vmatpush1.bf16.msra.mxu0 %v3519
      %5245 = vmatprep.subr.bf16.mxu0 %v3528
      %5246 = vmatpush1.bf16.msra.mxu0 %v3527
      %5247 = vmatprep.subr.bf16.mxu0 %v3536
      %5248 = vmatpush1.bf16.msra.mxu0 %v3535
      %5249 = vmatprep.subr.bf16.mxu0 %v3544
      %5250 = vmatpush1.bf16.msra.mxu0 %v3543
      %5251 = vmatprep.mubr.bf16.mxu0 %v1386
      %5252 = vmatmul.mubr.bf16.gmra.mrb[0].mxu0 %v1374
      %v5253 = vpop.f32.mrb[0].mxu0
      %v5254 = vadd.f32 %v5093, %v5253
      %v5255 = vpop.f32.mrb[0].mxu0
      %v5256 = vadd.f32 %v5095, %v5255
      %v5257 = vpop.f32.mrb[0].mxu0
      %v5258 = vadd.f32 %v5097, %v5257
      %v5259 = vpop.f32.mrb[0].mxu0
      %v5260 = vadd.f32 %v5099, %v5259
      %5261 = vmatprep.mubr.bf16.mxu0 %v1434
      %5262 = vmatmul.mubr.bf16.gmra.mrb[0].mxu0 %v1426
      %v5263 = vpop.f32.mrb[0].mxu0
      %v5264 = vadd.f32 %v5103, %v5263
      %v5265 = vpop.f32.mrb[0].mxu0
      %v5266 = vadd.f32 %v5105, %v5265
      %v5267 = vpop.f32.mrb[0].mxu0
      %v5268 = vadd.f32 %v5107, %v5267
      %v5269 = vpop.f32.mrb[0].mxu0
      %v5270 = vadd.f32 %v5109, %v5269
      %5271 = vmatprep.mubr.bf16.mxu0 %v1482
      %5272 = vmatmul.mubr.bf16.gmra.mrb[0].mxu0 %v1474
      %v5273 = vpop.f32.mrb[0].mxu0
      %v5274 = vadd.f32 %v5113, %v5273
      %v5275 = vpop.f32.mrb[0].mxu0
      %v5276 = vadd.f32 %v5115, %v5275
      %v5277 = vpop.f32.mrb[0].mxu0
      %v5278 = vadd.f32 %v5117, %v5277
      %v5279 = vpop.f32.mrb[0].mxu0
      %v5280 = vadd.f32 %v5119, %v5279
      %5281 = vmatprep.mubr.bf16.mxu0 %v1530
      %5282 = vmatmul.mubr.bf16.gmra.mrb[0].mxu0 %v1522
      %v5283 = vpop.f32.mrb[0].mxu0
      %v5284 = vadd.f32 %v5123, %v5283
      %v5285 = vpop.f32.mrb[0].mxu0
      %v5286 = vadd.f32 %v5125, %v5285
      %v5287 = vpop.f32.mrb[0].mxu0
      %v5288 = vadd.f32 %v5127, %v5287
      %v5289 = vpop.f32.mrb[0].mxu0
      %v5290 = vadd.f32 %v5129, %v5289
      %5291 = vmatprep.mubr.bf16.mxu0 %v1578
      %5292 = vmatmul.mubr.bf16.gmra.mrb[0].mxu0 %v1570
      %v5293 = vpop.f32.mrb[0].mxu0
      %v5294 = vadd.f32 %v5133, %v5293
      %v5295 = vpop.f32.mrb[0].mxu0
      %v5296 = vadd.f32 %v5135, %v5295
      %v5297 = vpop.f32.mrb[0].mxu0
      %v5298 = vadd.f32 %v5137, %v5297
      %v5299 = vpop.f32.mrb[0].mxu0
      %v5300 = vadd.f32 %v5139, %v5299
      %5301 = vmatprep.mubr.bf16.mxu0 %v1626
      %5302 = vmatmul.mubr.bf16.gmra.mrb[0].mxu0 %v1618
      %v5303 = vpop.f32.mrb[0].mxu0
      %v5304 = vadd.f32 %v5143, %v5303
      %v5305 = vpop.f32.mrb[0].mxu0
      %v5306 = vadd.f32 %v5145, %v5305
      %v5307 = vpop.f32.mrb[0].mxu0
      %v5308 = vadd.f32 %v5147, %v5307
      %v5309 = vpop.f32.mrb[0].mxu0
      %v5310 = vadd.f32 %v5149, %v5309
      %5311 = vmatprep.mubr.bf16.mxu0 %v1674
      %5312 = vmatmul.mubr.bf16.gmra.mrb[0].mxu0 %v1666
      %v5313 = vpop.f32.mrb[0].mxu0
      %v5314 = vadd.f32 %v5153, %v5313
      %v5315 = vpop.f32.mrb[0].mxu0
      %v5316 = vadd.f32 %v5155, %v5315
      %v5317 = vpop.f32.mrb[0].mxu0
      %v5318 = vadd.f32 %v5157, %v5317
      %v5319 = vpop.f32.mrb[0].mxu0
      %v5320 = vadd.f32 %v5159, %v5319
      %5321 = vmatprep.mubr.bf16.mxu0 %v1722
      %5322 = vmatmul.mubr.bf16.gmra.mrb[0].mxu0 %v1714
      %v5323 = vpop.f32.mrb[0].mxu0
      %v5324 = vadd.f32 %v5163, %v5323
      %v5325 = vpop.f32.mrb[0].mxu0
      %v5326 = vadd.f32 %v5165, %v5325
      %v5327 = vpop.f32.mrb[0].mxu0
      %v5328 = vadd.f32 %v5167, %v5327
      %v5329 = vpop.f32.mrb[0].mxu0
      %v5330 = vadd.f32 %v5169, %v5329
      %5331 = vmatprep.mubr.bf16.mxu0 %v1770
      %5332 = vmatmul.mubr.bf16.gmra.mrb[0].mxu0 %v1762
      %v5333 = vpop.f32.mrb[0].mxu0
      %v5334 = vadd.f32 %v5173, %v5333
      %v5335 = vpop.f32.mrb[0].mxu0
      %v5336 = vadd.f32 %v5175, %v5335
      %v5337 = vpop.f32.mrb[0].mxu0
      %v5338 = vadd.f32 %v5177, %v5337
      %v5339 = vpop.f32.mrb[0].mxu0
      %v5340 = vadd.f32 %v5179, %v5339
      %5341 = vmatprep.mubr.bf16.mxu0 %v1818
      %5342 = vmatmul.mubr.bf16.gmra.mrb[0].mxu0 %v1810
      %v5343 = vpop.f32.mrb[0].mxu0
      %v5344 = vadd.f32 %v5183, %v5343
      %v5345 = vpop.f32.mrb[0].mxu0
      %v5346 = vadd.f32 %v5185, %v5345
      %v5347 = vpop.f32.mrb[0].mxu0
      %v5348 = vadd.f32 %v5187, %v5347
      %v5349 = vpop.f32.mrb[0].mxu0
      %v5350 = vadd.f32 %v5189, %v5349
      %5351 = vmatprep.mubr.bf16.mxu0 %v1866
      %5352 = vmatmul.mubr.bf16.gmra.mrb[0].mxu0 %v1858
      %v5353 = vpop.f32.mrb[0].mxu0
      %v5354 = vadd.f32 %v5193, %v5353
      %v5355 = vpop.f32.mrb[0].mxu0
      %v5356 = vadd.f32 %v5195, %v5355
      %v5357 = vpop.f32.mrb[0].mxu0
      %v5358 = vadd.f32 %v5197, %v5357
      %v5359 = vpop.f32.mrb[0].mxu0
      %v5360 = vadd.f32 %v5199, %v5359
      %5361 = vmatprep.mubr.bf16.mxu0 %v1914
      %5362 = vmatmul.mubr.bf16.gmra.mrb[0].mxu0 %v1906
      %v5363 = vpop.f32.mrb[0].mxu0
      %v5364 = vadd.f32 %v5203, %v5363
      %v5365 = vpop.f32.mrb[0].mxu0
      %v5366 = vadd.f32 %v5205, %v5365
      %v5367 = vpop.f32.mrb[0].mxu0
      %v5368 = vadd.f32 %v5207, %v5367
      %v5369 = vpop.f32.mrb[0].mxu0
      %v5370 = vadd.f32 %v5209, %v5369
      %5371 = vmatprep.mubr.bf16.mxu0 %v1932
      %5372 = vmatmul.mubr.bf16.gmra.mrb[0].mxu0 %v1929
      %v5373 = vpop.f32.mrb[0].mxu0
      %v5374 = vadd.f32 %v5213, %v5373
      %v5375 = vpop.f32.mrb[0].mxu0
      %v5376 = vadd.f32 %v5215, %v5375
      %v5377 = vpop.f32.mrb[0].mxu0
      %v5378 = vpop.f32.mrb[0].mxu0
      %5379 = vdwg.mxu0
      %5380 = vmatprep.subr.bf16.mxu0 %v3170
      %5381 = vmatpush1.bf16.msra.mxu0 %v3169
      %5382 = vmatprep.subr.bf16.mxu0 %v3178
      %5383 = vmatpush1.bf16.msra.mxu0 %v3177
      %5384 = vmatprep.subr.bf16.mxu0 %v3186
      %5385 = vmatpush1.bf16.msra.mxu0 %v3185
      %5386 = vmatprep.subr.bf16.mxu0 %v3194
      %5387 = vmatpush1.bf16.msra.mxu0 %v3193
      %5388 = vmatprep.subr.bf16.mxu0 %v3202
      %5389 = vmatpush1.bf16.msra.mxu0 %v3201
      %5390 = vmatprep.subr.bf16.mxu0 %v3210
      %5391 = vmatpush1.bf16.msra.mxu0 %v3209
      %5392 = vmatprep.subr.bf16.mxu0 %v3218
      %5393 = vmatpush1.bf16.msra.mxu0 %v3217
      %5394 = vmatprep.subr.bf16.mxu0 %v3226
      %5395 = vmatpush1.bf16.msra.mxu0 %v3225
      %5396 = vmatprep.subr.bf16.mxu0 %v3234
      %5397 = vmatpush1.bf16.msra.mxu0 %v3233
      %5398 = vmatprep.subr.bf16.mxu0 %v3242
      %5399 = vmatpush1.bf16.msra.mxu0 %v3241
      %5400 = vmatprep.subr.bf16.mxu0 %v3250
      %5401 = vmatpush1.bf16.msra.mxu0 %v3249
      %5402 = vmatprep.subr.bf16.mxu0 %v3258
      %5403 = vmatpush1.bf16.msra.mxu0 %v3257
      %5404 = vmatprep.subr.bf16.mxu0 %v3266
      %5405 = vmatpush1.bf16.msra.mxu0 %v3265
      %5406 = vmatprep.subr.bf16.mxu0 %v3274
      %5407 = vmatpush1.bf16.msra.mxu0 %v3273
      %5408 = vmatprep.subr.bf16.mxu0 %v3282
      %5409 = vmatpush1.bf16.msra.mxu0 %v3281
      %5410 = vmatprep.subr.bf16.mxu0 %v3290
      %5411 = vmatpush1.bf16.msra.mxu0 %v3289
      %5412 = vmatprep.mubr.bf16.mxu0 %v1338
      %5413 = vmatmul.mubr.bf16.gmra.mrb[0].mxu0 %v1326
      %v5414 = vpop.f32.mrb[0].mxu0
      %v5415 = vadd.f32 %v1301, %v5414
      %v5416 = vpop.f32.mrb[0].mxu0
      %v5417 = vadd.f32 %v1305, %v5416
      %v5418 = vpop.f32.mrb[0].mxu0
      %v5419 = vadd.f32 %v1301, %v5418
      %v5420 = vpop.f32.mrb[0].mxu0
      %v5421 = vadd.f32 %v1305, %v5420
      %5422 = vmatprep.mubr.bf16.mxu0 %v1402
      %5423 = vmatmul.mubr.bf16.gmra.mrb[0].mxu0 %v1394
      %v5424 = vpop.f32.mrb[0].mxu0
      %v5425 = vadd.f32 %v1301, %v5424
      %v5426 = vpop.f32.mrb[0].mxu0
      %v5427 = vadd.f32 %v1305, %v5426
      %v5428 = vpop.f32.mrb[0].mxu0
      %v5429 = vadd.f32 %v1301, %v5428
      %v5430 = vpop.f32.mrb[0].mxu0
      %v5431 = vadd.f32 %v1305, %v5430
      %5432 = vmatprep.mubr.bf16.mxu0 %v1450
      %5433 = vmatmul.mubr.bf16.gmra.mrb[0].mxu0 %v1442
      %v5434 = vpop.f32.mrb[0].mxu0
      %v5435 = vadd.f32 %v1301, %v5434
      %v5436 = vpop.f32.mrb[0].mxu0
      %v5437 = vadd.f32 %v1305, %v5436
      %v5438 = vpop.f32.mrb[0].mxu0
      %v5439 = vadd.f32 %v1301, %v5438
      %v5440 = vpop.f32.mrb[0].mxu0
      %v5441 = vadd.f32 %v1305, %v5440
      %5442 = vmatprep.mubr.bf16.mxu0 %v1498
      %5443 = vmatmul.mubr.bf16.gmra.mrb[0].mxu0 %v1490
      %v5444 = vpop.f32.mrb[0].mxu0
      %v5445 = vadd.f32 %v1301, %v5444
      %v5446 = vpop.f32.mrb[0].mxu0
      %v5447 = vadd.f32 %v1305, %v5446
      %v5448 = vpop.f32.mrb[0].mxu0
      %v5449 = vadd.f32 %v1301, %v5448
      %v5450 = vpop.f32.mrb[0].mxu0
      %v5451 = vadd.f32 %v1305, %v5450
      %5452 = vmatprep.mubr.bf16.mxu0 %v1546
      %5453 = vmatmul.mubr.bf16.gmra.mrb[0].mxu0 %v1538
      %v5454 = vpop.f32.mrb[0].mxu0
      %v5455 = vadd.f32 %v1301, %v5454
      %v5456 = vpop.f32.mrb[0].mxu0
      %v5457 = vadd.f32 %v1305, %v5456
      %v5458 = vpop.f32.mrb[0].mxu0
      %v5459 = vadd.f32 %v1301, %v5458
      %v5460 = vpop.f32.mrb[0].mxu0
      %v5461 = vadd.f32 %v1305, %v5460
      %5462 = vmatprep.mubr.bf16.mxu0 %v1594
      %5463 = vmatmul.mubr.bf16.gmra.mrb[0].mxu0 %v1586
      %v5464 = vpop.f32.mrb[0].mxu0
      %v5465 = vadd.f32 %v1301, %v5464
      %v5466 = vpop.f32.mrb[0].mxu0
      %v5467 = vadd.f32 %v1305, %v5466
      %v5468 = vpop.f32.mrb[0].mxu0
      %v5469 = vadd.f32 %v1301, %v5468
      %v5470 = vpop.f32.mrb[0].mxu0
      %v5471 = vadd.f32 %v1305, %v5470
      %5472 = vmatprep.mubr.bf16.mxu0 %v1642
      %5473 = vmatmul.mubr.bf16.gmra.mrb[0].mxu0 %v1634
      %v5474 = vpop.f32.mrb[0].mxu0
      %v5475 = vadd.f32 %v1301, %v5474
      %v5476 = vpop.f32.mrb[0].mxu0
      %v5477 = vadd.f32 %v1305, %v5476
      %v5478 = vpop.f32.mrb[0].mxu0
      %v5479 = vadd.f32 %v1301, %v5478
      %v5480 = vpop.f32.mrb[0].mxu0
      %v5481 = vadd.f32 %v1305, %v5480
      %5482 = vmatprep.mubr.bf16.mxu0 %v1690
      %5483 = vmatmul.mubr.bf16.gmra.mrb[0].mxu0 %v1682
      %v5484 = vpop.f32.mrb[0].mxu0
      %v5485 = vadd.f32 %v1301, %v5484
      %v5486 = vpop.f32.mrb[0].mxu0
      %v5487 = vadd.f32 %v1305, %v5486
      %v5488 = vpop.f32.mrb[0].mxu0
      %v5489 = vadd.f32 %v1301, %v5488
      %v5490 = vpop.f32.mrb[0].mxu0
      %v5491 = vadd.f32 %v1305, %v5490
      %5492 = vmatprep.mubr.bf16.mxu0 %v1738
      %5493 = vmatmul.mubr.bf16.gmra.mrb[0].mxu0 %v1730
      %v5494 = vpop.f32.mrb[0].mxu0
      %v5495 = vadd.f32 %v1301, %v5494
      %v5496 = vpop.f32.mrb[0].mxu0
      %v5497 = vadd.f32 %v1305, %v5496
      %v5498 = vpop.f32.mrb[0].mxu0
      %v5499 = vadd.f32 %v1301, %v5498
      %v5500 = vpop.f32.mrb[0].mxu0
      %v5501 = vadd.f32 %v1305, %v5500
      %5502 = vmatprep.mubr.bf16.mxu0 %v1786
      %5503 = vmatmul.mubr.bf16.gmra.mrb[0].mxu0 %v1778
      %v5504 = vpop.f32.mrb[0].mxu0
      %v5505 = vadd.f32 %v1301, %v5504
      %v5506 = vpop.f32.mrb[0].mxu0
      %v5507 = vadd.f32 %v1305, %v5506
      %v5508 = vpop.f32.mrb[0].mxu0
      %v5509 = vadd.f32 %v1301, %v5508
      %v5510 = vpop.f32.mrb[0].mxu0
      %v5511 = vadd.f32 %v1305, %v5510
      %5512 = vmatprep.mubr.bf16.mxu0 %v1834
      %5513 = vmatmul.mubr.bf16.gmra.mrb[0].mxu0 %v1826
      %v5514 = vpop.f32.mrb[0].mxu0
      %v5515 = vadd.f32 %v1301, %v5514
      %v5516 = vpop.f32.mrb[0].mxu0
      %v5517 = vadd.f32 %v1305, %v5516
      %v5518 = vpop.f32.mrb[0].mxu0
      %v5519 = vadd.f32 %v1301, %v5518
      %v5520 = vpop.f32.mrb[0].mxu0
      %v5521 = vadd.f32 %v1305, %v5520
      %5522 = vmatprep.mubr.bf16.mxu0 %v1882
      %5523 = vmatmul.mubr.bf16.gmra.mrb[0].mxu0 %v1874
      %v5524 = vpop.f32.mrb[0].mxu0
      %v5525 = vadd.f32 %v1301, %v5524
      %v5526 = vpop.f32.mrb[0].mxu0
      %v5527 = vadd.f32 %v1305, %v5526
      %v5528 = vpop.f32.mrb[0].mxu0
      %v5529 = vadd.f32 %v1301, %v5528
      %v5530 = vpop.f32.mrb[0].mxu0
      %v5531 = vadd.f32 %v1305, %v5530
      %5532 = vmatprep.mubr.bf16.mxu0 %v1920
      %5533 = vmatmul.mubr.bf16.gmra.mrb[0].mxu0 %v1917
      %v5534 = vpop.f32.mrb[0].mxu0
      %v5535 = vadd.f32 %v1301, %v5534
      %v5536 = vpop.f32.mrb[0].mxu0
      %v5537 = vadd.f32 %v1305, %v5536
      %v5538 = vpop.f32.mrb[0].mxu0
      %v5539 = vpop.f32.mrb[0].mxu0
      %5540 = vdwg.mxu0
      %5541 = vmatprep.subr.bf16.mxu0 %v3298
      %5542 = vmatpush1.bf16.msra.mxu0 %v3297
      %5543 = vmatprep.subr.bf16.mxu0 %v3306
      %5544 = vmatpush1.bf16.msra.mxu0 %v3305
      %5545 = vmatprep.subr.bf16.mxu0 %v3314
      %5546 = vmatpush1.bf16.msra.mxu0 %v3313
      %5547 = vmatprep.subr.bf16.mxu0 %v3322
      %5548 = vmatpush1.bf16.msra.mxu0 %v3321
      %5549 = vmatprep.subr.bf16.mxu0 %v3330
      %5550 = vmatpush1.bf16.msra.mxu0 %v3329
      %5551 = vmatprep.subr.bf16.mxu0 %v3338
      %5552 = vmatpush1.bf16.msra.mxu0 %v3337
      %5553 = vmatprep.subr.bf16.mxu0 %v3346
      %5554 = vmatpush1.bf16.msra.mxu0 %v3345
      %5555 = vmatprep.subr.bf16.mxu0 %v3354
      %5556 = vmatpush1.bf16.msra.mxu0 %v3353
      %5557 = vmatprep.subr.bf16.mxu0 %v3362
      %5558 = vmatpush1.bf16.msra.mxu0 %v3361
      %5559 = vmatprep.subr.bf16.mxu0 %v3370
      %5560 = vmatpush1.bf16.msra.mxu0 %v3369
      %5561 = vmatprep.subr.bf16.mxu0 %v3378
      %5562 = vmatpush1.bf16.msra.mxu0 %v3377
      %5563 = vmatprep.subr.bf16.mxu0 %v3386
      %5564 = vmatpush1.bf16.msra.mxu0 %v3385
      %5565 = vmatprep.subr.bf16.mxu0 %v3394
      %5566 = vmatpush1.bf16.msra.mxu0 %v3393
      %5567 = vmatprep.subr.bf16.mxu0 %v3402
      %5568 = vmatpush1.bf16.msra.mxu0 %v3401
      %5569 = vmatprep.subr.bf16.mxu0 %v3410
      %5570 = vmatpush1.bf16.msra.mxu0 %v3409
      %5571 = vmatprep.subr.bf16.mxu0 %v3418
      %5572 = vmatpush1.bf16.msra.mxu0 %v3417
      %5573 = vmatprep.mubr.bf16.mxu0 %v1362
      %5574 = vmatmul.mubr.bf16.gmra.mrb[0].mxu0 %v1350
      %v5575 = vpop.f32.mrb[0].mxu0
      %v5576 = vadd.f32 %v5415, %v5575
      %v5577 = vpop.f32.mrb[0].mxu0
      %v5578 = vadd.f32 %v5417, %v5577
      %v5579 = vpop.f32.mrb[0].mxu0
      %v5580 = vadd.f32 %v5419, %v5579
      %v5581 = vpop.f32.mrb[0].mxu0
      %v5582 = vadd.f32 %v5421, %v5581
      %5583 = vmatprep.mubr.bf16.mxu0 %v1418
      %5584 = vmatmul.mubr.bf16.gmra.mrb[0].mxu0 %v1410
      %v5585 = vpop.f32.mrb[0].mxu0
      %v5586 = vadd.f32 %v5425, %v5585
      %v5587 = vpop.f32.mrb[0].mxu0
      %v5588 = vadd.f32 %v5427, %v5587
      %v5589 = vpop.f32.mrb[0].mxu0
      %v5590 = vadd.f32 %v5429, %v5589
      %v5591 = vpop.f32.mrb[0].mxu0
      %v5592 = vadd.f32 %v5431, %v5591
      %5593 = vmatprep.mubr.bf16.mxu0 %v1466
      %5594 = vmatmul.mubr.bf16.gmra.mrb[0].mxu0 %v1458
      %v5595 = vpop.f32.mrb[0].mxu0
      %v5596 = vadd.f32 %v5435, %v5595
      %v5597 = vpop.f32.mrb[0].mxu0
      %v5598 = vadd.f32 %v5437, %v5597
      %v5599 = vpop.f32.mrb[0].mxu0
      %v5600 = vadd.f32 %v5439, %v5599
      %v5601 = vpop.f32.mrb[0].mxu0
      %v5602 = vadd.f32 %v5441, %v5601
      %5603 = vmatprep.mubr.bf16.mxu0 %v1514
      %5604 = vmatmul.mubr.bf16.gmra.mrb[0].mxu0 %v1506
      %v5605 = vpop.f32.mrb[0].mxu0
      %v5606 = vadd.f32 %v5445, %v5605
      %v5607 = vpop.f32.mrb[0].mxu0
      %v5608 = vadd.f32 %v5447, %v5607
      %v5609 = vpop.f32.mrb[0].mxu0
      %v5610 = vadd.f32 %v5449, %v5609
      %v5611 = vpop.f32.mrb[0].mxu0
      %v5612 = vadd.f32 %v5451, %v5611
      %5613 = vmatprep.mubr.bf16.mxu0 %v1562
      %5614 = vmatmul.mubr.bf16.gmra.mrb[0].mxu0 %v1554
      %v5615 = vpop.f32.mrb[0].mxu0
      %v5616 = vadd.f32 %v5455, %v5615
      %v5617 = vpop.f32.mrb[0].mxu0
      %v5618 = vadd.f32 %v5457, %v5617
      %v5619 = vpop.f32.mrb[0].mxu0
      %v5620 = vadd.f32 %v5459, %v5619
      %v5621 = vpop.f32.mrb[0].mxu0
      %v5622 = vadd.f32 %v5461, %v5621
      %5623 = vmatprep.mubr.bf16.mxu0 %v1610
      %5624 = vmatmul.mubr.bf16.gmra.mrb[0].mxu0 %v1602
      %v5625 = vpop.f32.mrb[0].mxu0
      %v5626 = vadd.f32 %v5465, %v5625
      %v5627 = vpop.f32.mrb[0].mxu0
      %v5628 = vadd.f32 %v5467, %v5627
      %v5629 = vpop.f32.mrb[0].mxu0
      %v5630 = vadd.f32 %v5469, %v5629
      %v5631 = vpop.f32.mrb[0].mxu0
      %v5632 = vadd.f32 %v5471, %v5631
      %5633 = vmatprep.mubr.bf16.mxu0 %v1658
      %5634 = vmatmul.mubr.bf16.gmra.mrb[0].mxu0 %v1650
      %v5635 = vpop.f32.mrb[0].mxu0
      %v5636 = vadd.f32 %v5475, %v5635
      %v5637 = vpop.f32.mrb[0].mxu0
      %v5638 = vadd.f32 %v5477, %v5637
      %v5639 = vpop.f32.mrb[0].mxu0
      %v5640 = vadd.f32 %v5479, %v5639
      %v5641 = vpop.f32.mrb[0].mxu0
      %v5642 = vadd.f32 %v5481, %v5641
      %5643 = vmatprep.mubr.bf16.mxu0 %v1706
      %5644 = vmatmul.mubr.bf16.gmra.mrb[0].mxu0 %v1698
      %v5645 = vpop.f32.mrb[0].mxu0
      %v5646 = vadd.f32 %v5485, %v5645
      %v5647 = vpop.f32.mrb[0].mxu0
      %v5648 = vadd.f32 %v5487, %v5647
      %v5649 = vpop.f32.mrb[0].mxu0
      %v5650 = vadd.f32 %v5489, %v5649
      %v5651 = vpop.f32.mrb[0].mxu0
      %v5652 = vadd.f32 %v5491, %v5651
      %5653 = vmatprep.mubr.bf16.mxu0 %v1754
      %5654 = vmatmul.mubr.bf16.gmra.mrb[0].mxu0 %v1746
      %v5655 = vpop.f32.mrb[0].mxu0
      %v5656 = vadd.f32 %v5495, %v5655
      %v5657 = vpop.f32.mrb[0].mxu0
      %v5658 = vadd.f32 %v5497, %v5657
      %v5659 = vpop.f32.mrb[0].mxu0
      %v5660 = vadd.f32 %v5499, %v5659
      %v5661 = vpop.f32.mrb[0].mxu0
      %v5662 = vadd.f32 %v5501, %v5661
      %5663 = vmatprep.mubr.bf16.mxu0 %v1802
      %5664 = vmatmul.mubr.bf16.gmra.mrb[0].mxu0 %v1794
      %v5665 = vpop.f32.mrb[0].mxu0
      %v5666 = vadd.f32 %v5505, %v5665
      %v5667 = vpop.f32.mrb[0].mxu0
      %v5668 = vadd.f32 %v5507, %v5667
      %v5669 = vpop.f32.mrb[0].mxu0
      %v5670 = vadd.f32 %v5509, %v5669
      %v5671 = vpop.f32.mrb[0].mxu0
      %v5672 = vadd.f32 %v5511, %v5671
      %5673 = vmatprep.mubr.bf16.mxu0 %v1850
      %5674 = vmatmul.mubr.bf16.gmra.mrb[0].mxu0 %v1842
      %v5675 = vpop.f32.mrb[0].mxu0
      %v5676 = vadd.f32 %v5515, %v5675
      %v5677 = vpop.f32.mrb[0].mxu0
      %v5678 = vadd.f32 %v5517, %v5677
      %v5679 = vpop.f32.mrb[0].mxu0
      %v5680 = vadd.f32 %v5519, %v5679
      %v5681 = vpop.f32.mrb[0].mxu0
      %v5682 = vadd.f32 %v5521, %v5681
      %5683 = vmatprep.mubr.bf16.mxu0 %v1898
      %5684 = vmatmul.mubr.bf16.gmra.mrb[0].mxu0 %v1890
      %v5685 = vpop.f32.mrb[0].mxu0
      %v5686 = vadd.f32 %v5525, %v5685
      %v5687 = vpop.f32.mrb[0].mxu0
      %v5688 = vadd.f32 %v5527, %v5687
      %v5689 = vpop.f32.mrb[0].mxu0
      %v5690 = vadd.f32 %v5529, %v5689
      %v5691 = vpop.f32.mrb[0].mxu0
      %v5692 = vadd.f32 %v5531, %v5691
      %5693 = vmatprep.mubr.bf16.mxu0 %v1926
      %5694 = vmatmul.mubr.bf16.gmra.mrb[0].mxu0 %v1923
      %v5695 = vpop.f32.mrb[0].mxu0
      %v5696 = vadd.f32 %v5535, %v5695
      %v5697 = vpop.f32.mrb[0].mxu0
      %v5698 = vadd.f32 %v5537, %v5697
      %v5699 = vpop.f32.mrb[0].mxu0
      %v5700 = vpop.f32.mrb[0].mxu0
      %5701 = vdwg.mxu0
      %5702 = vmatprep.subr.bf16.mxu0 %v3426
      %5703 = vmatpush1.bf16.msra.mxu0 %v3425
      %5704 = vmatprep.subr.bf16.mxu0 %v3434
      %5705 = vmatpush1.bf16.msra.mxu0 %v3433
      %5706 = vmatprep.subr.bf16.mxu0 %v3442
      %5707 = vmatpush1.bf16.msra.mxu0 %v3441
      %5708 = vmatprep.subr.bf16.mxu0 %v3450
      %5709 = vmatpush1.bf16.msra.mxu0 %v3449
      %5710 = vmatprep.subr.bf16.mxu0 %v3458
      %5711 = vmatpush1.bf16.msra.mxu0 %v3457
      %5712 = vmatprep.subr.bf16.mxu0 %v3466
      %5713 = vmatpush1.bf16.msra.mxu0 %v3465
      %5714 = vmatprep.subr.bf16.mxu0 %v3474
      %5715 = vmatpush1.bf16.msra.mxu0 %v3473
      %5716 = vmatprep.subr.bf16.mxu0 %v3482
      %5717 = vmatpush1.bf16.msra.mxu0 %v3481
      %5718 = vmatprep.subr.bf16.mxu0 %v3490
      %5719 = vmatpush1.bf16.msra.mxu0 %v3489
      %5720 = vmatprep.subr.bf16.mxu0 %v3498
      %5721 = vmatpush1.bf16.msra.mxu0 %v3497
      %5722 = vmatprep.subr.bf16.mxu0 %v3506
      %5723 = vmatpush1.bf16.msra.mxu0 %v3505
      %5724 = vmatprep.subr.bf16.mxu0 %v3514
      %5725 = vmatpush1.bf16.msra.mxu0 %v3513
      %5726 = vmatprep.subr.bf16.mxu0 %v3522
      %5727 = vmatpush1.bf16.msra.mxu0 %v3521
      %5728 = vmatprep.subr.bf16.mxu0 %v3530
      %5729 = vmatpush1.bf16.msra.mxu0 %v3529
      %5730 = vmatprep.subr.bf16.mxu0 %v3538
      %5731 = vmatpush1.bf16.msra.mxu0 %v3537
      %5732 = vmatprep.subr.bf16.mxu0 %v3546
      %5733 = vmatpush1.bf16.msra.mxu0 %v3545
      %5734 = vmatprep.mubr.bf16.mxu0 %v1386
      %5735 = vmatmul.mubr.bf16.gmra.mrb[0].mxu0 %v1374
      %v5736 = vpop.f32.mrb[0].mxu0
      %v5737 = vadd.f32 %v5576, %v5736
      %v5738 = vpop.f32.mrb[0].mxu0
      %v5739 = vadd.f32 %v5578, %v5738
      %v5740 = vpop.f32.mrb[0].mxu0
      %v5741 = vadd.f32 %v5580, %v5740
      %v5742 = vpop.f32.mrb[0].mxu0
      %v5743 = vadd.f32 %v5582, %v5742
      %5744 = vmatprep.mubr.bf16.mxu0 %v1434
      %5745 = vmatmul.mubr.bf16.gmra.mrb[0].mxu0 %v1426
      %v5746 = vpop.f32.mrb[0].mxu0
      %v5747 = vadd.f32 %v5586, %v5746
      %v5748 = vpop.f32.mrb[0].mxu0
      %v5749 = vadd.f32 %v5588, %v5748
      %v5750 = vpop.f32.mrb[0].mxu0
      %v5751 = vadd.f32 %v5590, %v5750
      %v5752 = vpop.f32.mrb[0].mxu0
      %v5753 = vadd.f32 %v5592, %v5752
      %5754 = vmatprep.mubr.bf16.mxu0 %v1482
      %5755 = vmatmul.mubr.bf16.gmra.mrb[0].mxu0 %v1474
      %v5756 = vpop.f32.mrb[0].mxu0
      %v5757 = vadd.f32 %v5596, %v5756
      %v5758 = vpop.f32.mrb[0].mxu0
      %v5759 = vadd.f32 %v5598, %v5758
      %v5760 = vpop.f32.mrb[0].mxu0
      %v5761 = vadd.f32 %v5600, %v5760
      %v5762 = vpop.f32.mrb[0].mxu0
      %v5763 = vadd.f32 %v5602, %v5762
      %5764 = vmatprep.mubr.bf16.mxu0 %v1530
      %5765 = vmatmul.mubr.bf16.gmra.mrb[0].mxu0 %v1522
      %v5766 = vpop.f32.mrb[0].mxu0
      %v5767 = vadd.f32 %v5606, %v5766
      %v5768 = vpop.f32.mrb[0].mxu0
      %v5769 = vadd.f32 %v5608, %v5768
      %v5770 = vpop.f32.mrb[0].mxu0
      %v5771 = vadd.f32 %v5610, %v5770
      %v5772 = vpop.f32.mrb[0].mxu0
      %v5773 = vadd.f32 %v5612, %v5772
      %5774 = vmatprep.mubr.bf16.mxu0 %v1578
      %5775 = vmatmul.mubr.bf16.gmra.mrb[0].mxu0 %v1570
      %v5776 = vpop.f32.mrb[0].mxu0
      %v5777 = vadd.f32 %v5616, %v5776
      %v5778 = vpop.f32.mrb[0].mxu0
      %v5779 = vadd.f32 %v5618, %v5778
      %v5780 = vpop.f32.mrb[0].mxu0
      %v5781 = vadd.f32 %v5620, %v5780
      %v5782 = vpop.f32.mrb[0].mxu0
      %v5783 = vadd.f32 %v5622, %v5782
      %5784 = vmatprep.mubr.bf16.mxu0 %v1626
      %5785 = vmatmul.mubr.bf16.gmra.mrb[0].mxu0 %v1618
      %v5786 = vpop.f32.mrb[0].mxu0
      %v5787 = vadd.f32 %v5626, %v5786
      %v5788 = vpop.f32.mrb[0].mxu0
      %v5789 = vadd.f32 %v5628, %v5788
      %v5790 = vpop.f32.mrb[0].mxu0
      %v5791 = vadd.f32 %v5630, %v5790
      %v5792 = vpop.f32.mrb[0].mxu0
      %v5793 = vadd.f32 %v5632, %v5792
      %5794 = vmatprep.mubr.bf16.mxu0 %v1674
      %5795 = vmatmul.mubr.bf16.gmra.mrb[0].mxu0 %v1666
      %v5796 = vpop.f32.mrb[0].mxu0
      %v5797 = vadd.f32 %v5636, %v5796
      %v5798 = vpop.f32.mrb[0].mxu0
      %v5799 = vadd.f32 %v5638, %v5798
      %v5800 = vpop.f32.mrb[0].mxu0
      %v5801 = vadd.f32 %v5640, %v5800
      %v5802 = vpop.f32.mrb[0].mxu0
      %v5803 = vadd.f32 %v5642, %v5802
      %5804 = vmatprep.mubr.bf16.mxu0 %v1722
      %5805 = vmatmul.mubr.bf16.gmra.mrb[0].mxu0 %v1714
      %v5806 = vpop.f32.mrb[0].mxu0
      %v5807 = vadd.f32 %v5646, %v5806
      %v5808 = vpop.f32.mrb[0].mxu0
      %v5809 = vadd.f32 %v5648, %v5808
      %v5810 = vpop.f32.mrb[0].mxu0
      %v5811 = vadd.f32 %v5650, %v5810
      %v5812 = vpop.f32.mrb[0].mxu0
      %v5813 = vadd.f32 %v5652, %v5812
      %5814 = vmatprep.mubr.bf16.mxu0 %v1770
      %5815 = vmatmul.mubr.bf16.gmra.mrb[0].mxu0 %v1762
      %v5816 = vpop.f32.mrb[0].mxu0
      %v5817 = vadd.f32 %v5656, %v5816
      %v5818 = vpop.f32.mrb[0].mxu0
      %v5819 = vadd.f32 %v5658, %v5818
      %v5820 = vpop.f32.mrb[0].mxu0
      %v5821 = vadd.f32 %v5660, %v5820
      %v5822 = vpop.f32.mrb[0].mxu0
      %v5823 = vadd.f32 %v5662, %v5822
      %5824 = vmatprep.mubr.bf16.mxu0 %v1818
      %5825 = vmatmul.mubr.bf16.gmra.mrb[0].mxu0 %v1810
      %v5826 = vpop.f32.mrb[0].mxu0
      %v5827 = vadd.f32 %v5666, %v5826
      %v5828 = vpop.f32.mrb[0].mxu0
      %v5829 = vadd.f32 %v5668, %v5828
      %v5830 = vpop.f32.mrb[0].mxu0
      %v5831 = vadd.f32 %v5670, %v5830
      %v5832 = vpop.f32.mrb[0].mxu0
      %v5833 = vadd.f32 %v5672, %v5832
      %5834 = vmatprep.mubr.bf16.mxu0 %v1866
      %5835 = vmatmul.mubr.bf16.gmra.mrb[0].mxu0 %v1858
      %v5836 = vpop.f32.mrb[0].mxu0
      %v5837 = vadd.f32 %v5676, %v5836
      %v5838 = vpop.f32.mrb[0].mxu0
      %v5839 = vadd.f32 %v5678, %v5838
      %v5840 = vpop.f32.mrb[0].mxu0
      %v5841 = vadd.f32 %v5680, %v5840
      %v5842 = vpop.f32.mrb[0].mxu0
      %v5843 = vadd.f32 %v5682, %v5842
      %5844 = vmatprep.mubr.bf16.mxu0 %v1914
      %5845 = vmatmul.mubr.bf16.gmra.mrb[0].mxu0 %v1906
      %v5846 = vpop.f32.mrb[0].mxu0
      %v5847 = vadd.f32 %v5686, %v5846
      %v5848 = vpop.f32.mrb[0].mxu0
      %v5849 = vadd.f32 %v5688, %v5848
      %v5850 = vpop.f32.mrb[0].mxu0
      %v5851 = vadd.f32 %v5690, %v5850
      %v5852 = vpop.f32.mrb[0].mxu0
      %v5853 = vadd.f32 %v5692, %v5852
      %5854 = vmatprep.mubr.bf16.mxu0 %v1932
      %5855 = vmatmul.mubr.bf16.gmra.mrb[0].mxu0 %v1929
      %v5856 = vpop.f32.mrb[0].mxu0
      %v5857 = vadd.f32 %v5696, %v5856
      %v5858 = vpop.f32.mrb[0].mxu0
      %v5859 = vadd.f32 %v5698, %v5858
      %v5860 = vpop.f32.mrb[0].mxu0
      %v5861 = vpop.f32.mrb[0].mxu0
      %5862 = vdwg.mxu0
      %v5863 = vmax.f32 %v4288, 0.0
      %v5864 = vmax.f32 %v4290, 0.0
      %v5865 = vmax.f32 %v4771, 0.0
      %v5866 = vmax.f32 %v4773, 0.0
      %v5867 = vmax.f32 %v5254, 0.0
      %v5868 = vmax.f32 %v5256, 0.0
      %v5869 = vmax.f32 %v5737, 0.0
      %v5870 = vmax.f32 %v5739, 0.0
      %v5871 = vmax.f32 %v4292, 0.0
      %v5872 = vmax.f32 %v4294, 0.0
      %v5873 = vmax.f32 %v4775, 0.0
      %v5874 = vmax.f32 %v4777, 0.0
      %v5875 = vmax.f32 %v5258, 0.0
      %v5876 = vmax.f32 %v5260, 0.0
      %v5877 = vmax.f32 %v5741, 0.0
      %v5878 = vmax.f32 %v5743, 0.0
      %v5879 = vmax.f32 %v4298, 0.0
      %v5880 = vmax.f32 %v4300, 0.0
      %v5881 = vmax.f32 %v4781, 0.0
      %v5882 = vmax.f32 %v4783, 0.0
      %v5883 = vmax.f32 %v5264, 0.0
      %v5884 = vmax.f32 %v5266, 0.0
      %v5885 = vmax.f32 %v5747, 0.0
      %v5886 = vmax.f32 %v5749, 0.0
      %v5887 = vmax.f32 %v4302, 0.0
      %v5888 = vmax.f32 %v4304, 0.0
      %v5889 = vmax.f32 %v4785, 0.0
      %v5890 = vmax.f32 %v4787, 0.0
      %v5891 = vmax.f32 %v5268, 0.0
      %v5892 = vmax.f32 %v5270, 0.0
      %v5893 = vmax.f32 %v5751, 0.0
      %v5894 = vmax.f32 %v5753, 0.0
      %v5895 = vmax.f32 %v4308, 0.0
      %v5896 = vmax.f32 %v4310, 0.0
      %v5897 = vmax.f32 %v4791, 0.0
      %v5898 = vmax.f32 %v4793, 0.0
      %v5899 = vmax.f32 %v5274, 0.0
      %v5900 = vmax.f32 %v5276, 0.0
      %v5901 = vmax.f32 %v5757, 0.0
      %v5902 = vmax.f32 %v5759, 0.0
      %v5903 = vmax.f32 %v4312, 0.0
      %v5904 = vmax.f32 %v4314, 0.0
      %v5905 = vmax.f32 %v4795, 0.0
      %v5906 = vmax.f32 %v4797, 0.0
      %v5907 = vmax.f32 %v5278, 0.0
      %v5908 = vmax.f32 %v5280, 0.0
      %v5909 = vmax.f32 %v5761, 0.0
      %v5910 = vmax.f32 %v5763, 0.0
      %v5911 = vmax.f32 %v4318, 0.0
      %v5912 = vmax.f32 %v4320, 0.0
      %v5913 = vmax.f32 %v4801, 0.0
      %v5914 = vmax.f32 %v4803, 0.0
      %v5915 = vmax.f32 %v5284, 0.0
      %v5916 = vmax.f32 %v5286, 0.0
      %v5917 = vmax.f32 %v5767, 0.0
      %v5918 = vmax.f32 %v5769, 0.0
      %v5919 = vmax.f32 %v4322, 0.0
      %v5920 = vmax.f32 %v4324, 0.0
      %v5921 = vmax.f32 %v4805, 0.0
      %v5922 = vmax.f32 %v4807, 0.0
      %v5923 = vmax.f32 %v5288, 0.0
      %v5924 = vmax.f32 %v5290, 0.0
      %v5925 = vmax.f32 %v5771, 0.0
      %v5926 = vmax.f32 %v5773, 0.0
      %v5927 = vmax.f32 %v4328, 0.0
      %v5928 = vmax.f32 %v4330, 0.0
      %v5929 = vmax.f32 %v4811, 0.0
      %v5930 = vmax.f32 %v4813, 0.0
      %v5931 = vmax.f32 %v5294, 0.0
      %v5932 = vmax.f32 %v5296, 0.0
      %v5933 = vmax.f32 %v5777, 0.0
      %v5934 = vmax.f32 %v5779, 0.0
      %v5935 = vmax.f32 %v4332, 0.0
      %v5936 = vmax.f32 %v4334, 0.0
      %v5937 = vmax.f32 %v4815, 0.0
      %v5938 = vmax.f32 %v4817, 0.0
      %v5939 = vmax.f32 %v5298, 0.0
      %v5940 = vmax.f32 %v5300, 0.0
      %v5941 = vmax.f32 %v5781, 0.0
      %v5942 = vmax.f32 %v5783, 0.0
      %v5943 = vmax.f32 %v4338, 0.0
      %v5944 = vmax.f32 %v4340, 0.0
      %v5945 = vmax.f32 %v4821, 0.0
      %v5946 = vmax.f32 %v4823, 0.0
      %v5947 = vmax.f32 %v5304, 0.0
      %v5948 = vmax.f32 %v5306, 0.0
      %v5949 = vmax.f32 %v5787, 0.0
      %v5950 = vmax.f32 %v5789, 0.0
      %v5951 = vmax.f32 %v4342, 0.0
      %v5952 = vmax.f32 %v4344, 0.0
      %v5953 = vmax.f32 %v4825, 0.0
      %v5954 = vmax.f32 %v4827, 0.0
      %v5955 = vmax.f32 %v5308, 0.0
      %v5956 = vmax.f32 %v5310, 0.0
      %v5957 = vmax.f32 %v5791, 0.0
      %v5958 = vmax.f32 %v5793, 0.0
      %v5959 = vmax.f32 %v4348, 0.0
      %v5960 = vmax.f32 %v4350, 0.0
      %v5961 = vmax.f32 %v4831, 0.0
      %v5962 = vmax.f32 %v4833, 0.0
      %v5963 = vmax.f32 %v5314, 0.0
      %v5964 = vmax.f32 %v5316, 0.0
      %v5965 = vmax.f32 %v5797, 0.0
      %v5966 = vmax.f32 %v5799, 0.0
      %v5967 = vmax.f32 %v4352, 0.0
      %v5968 = vmax.f32 %v4354, 0.0
      %v5969 = vmax.f32 %v4835, 0.0
      %v5970 = vmax.f32 %v4837, 0.0
      %v5971 = vmax.f32 %v5318, 0.0
      %v5972 = vmax.f32 %v5320, 0.0
      %v5973 = vmax.f32 %v5801, 0.0
      %v5974 = vmax.f32 %v5803, 0.0
      %v5975 = vmax.f32 %v4358, 0.0
      %v5976 = vmax.f32 %v4360, 0.0
      %v5977 = vmax.f32 %v4841, 0.0
      %v5978 = vmax.f32 %v4843, 0.0
      %v5979 = vmax.f32 %v5324, 0.0
      %v5980 = vmax.f32 %v5326, 0.0
      %v5981 = vmax.f32 %v5807, 0.0
      %v5982 = vmax.f32 %v5809, 0.0
      %v5983 = vmax.f32 %v4362, 0.0
      %v5984 = vmax.f32 %v4364, 0.0
      %v5985 = vmax.f32 %v4845, 0.0
      %v5986 = vmax.f32 %v4847, 0.0
      %v5987 = vmax.f32 %v5328, 0.0
      %v5988 = vmax.f32 %v5330, 0.0
      %v5989 = vmax.f32 %v5811, 0.0
      %v5990 = vmax.f32 %v5813, 0.0
      %v5991 = vmax.f32 %v4368, 0.0
      %v5992 = vmax.f32 %v4370, 0.0
      %v5993 = vmax.f32 %v4851, 0.0
      %v5994 = vmax.f32 %v4853, 0.0
      %v5995 = vmax.f32 %v5334, 0.0
      %v5996 = vmax.f32 %v5336, 0.0
      %v5997 = vmax.f32 %v5817, 0.0
      %v5998 = vmax.f32 %v5819, 0.0
      %v5999 = vmax.f32 %v4372, 0.0
      %v6000 = vmax.f32 %v4374, 0.0
      %v6001 = vmax.f32 %v4855, 0.0
      %v6002 = vmax.f32 %v4857, 0.0
      %v6003 = vmax.f32 %v5338, 0.0
      %v6004 = vmax.f32 %v5340, 0.0
      %v6005 = vmax.f32 %v5821, 0.0
      %v6006 = vmax.f32 %v5823, 0.0
      %v6007 = vmax.f32 %v4378, 0.0
      %v6008 = vmax.f32 %v4380, 0.0
      %v6009 = vmax.f32 %v4861, 0.0
      %v6010 = vmax.f32 %v4863, 0.0
      %v6011 = vmax.f32 %v5344, 0.0
      %v6012 = vmax.f32 %v5346, 0.0
      %v6013 = vmax.f32 %v5827, 0.0
      %v6014 = vmax.f32 %v5829, 0.0
      %v6015 = vmax.f32 %v4382, 0.0
      %v6016 = vmax.f32 %v4384, 0.0
      %v6017 = vmax.f32 %v4865, 0.0
      %v6018 = vmax.f32 %v4867, 0.0
      %v6019 = vmax.f32 %v5348, 0.0
      %v6020 = vmax.f32 %v5350, 0.0
      %v6021 = vmax.f32 %v5831, 0.0
      %v6022 = vmax.f32 %v5833, 0.0
      %v6023 = vmax.f32 %v4388, 0.0
      %v6024 = vmax.f32 %v4390, 0.0
      %v6025 = vmax.f32 %v4871, 0.0
      %v6026 = vmax.f32 %v4873, 0.0
      %v6027 = vmax.f32 %v5354, 0.0
      %v6028 = vmax.f32 %v5356, 0.0
      %v6029 = vmax.f32 %v5837, 0.0
      %v6030 = vmax.f32 %v5839, 0.0
      %v6031 = vmax.f32 %v4392, 0.0
      %v6032 = vmax.f32 %v4394, 0.0
      %v6033 = vmax.f32 %v4875, 0.0
      %v6034 = vmax.f32 %v4877, 0.0
      %v6035 = vmax.f32 %v5358, 0.0
      %v6036 = vmax.f32 %v5360, 0.0
      %v6037 = vmax.f32 %v5841, 0.0
      %v6038 = vmax.f32 %v5843, 0.0
      %v6039 = vmax.f32 %v4398, 0.0
      %v6040 = vmax.f32 %v4400, 0.0
      %v6041 = vmax.f32 %v4881, 0.0
      %v6042 = vmax.f32 %v4883, 0.0
      %v6043 = vmax.f32 %v5364, 0.0
      %v6044 = vmax.f32 %v5366, 0.0
      %v6045 = vmax.f32 %v5847, 0.0
      %v6046 = vmax.f32 %v5849, 0.0
      %v6047 = vmax.f32 %v4402, 0.0
      %v6048 = vmax.f32 %v4404, 0.0
      %v6049 = vmax.f32 %v4885, 0.0
      %v6050 = vmax.f32 %v4887, 0.0
      %v6051 = vmax.f32 %v5368, 0.0
      %v6052 = vmax.f32 %v5370, 0.0
      %v6053 = vmax.f32 %v5851, 0.0
      %v6054 = vmax.f32 %v5853, 0.0
      %v6055 = vmax.f32 %v4408, 0.0
      %v6056 = vmax.f32 %v4410, 0.0
      %v6057 = vmax.f32 %v4891, 0.0
      %v6058 = vmax.f32 %v4893, 0.0
      %v6059 = vmax.f32 %v5374, 0.0
      %v6060 = vmax.f32 %v5376, 0.0
      %v6061 = vmax.f32 %v5857, 0.0
      %v6062 = vmax.f32 %v5859, 0.0
      %v6063 = vpack.c.bf16 %v5871, %v5863
      %v6064 = vpack.c.bf16 %v5872, %v5864
      %v6065 = vpack.c.bf16 %v5873, %v5865
      %v6066 = vpack.c.bf16 %v5874, %v5866
      %v6067 = vpack.c.bf16 %v5875, %v5867
      %v6068 = vpack.c.bf16 %v5876, %v5868
      %v6069 = vpack.c.bf16 %v5877, %v5869
      %v6070 = vpack.c.bf16 %v5878, %v5870
      %v6071 = vpack.c.bf16 %v5887, %v5879
      %v6072 = vpack.c.bf16 %v5888, %v5880
      %v6073 = vpack.c.bf16 %v5889, %v5881
      %v6074 = vpack.c.bf16 %v5890, %v5882
      %v6075 = vpack.c.bf16 %v5891, %v5883
      %v6076 = vpack.c.bf16 %v5892, %v5884
      %v6077 = vpack.c.bf16 %v5893, %v5885
      %v6078 = vpack.c.bf16 %v5894, %v5886
      %v6079 = vpack.c.bf16 %v5903, %v5895
      %v6080 = vpack.c.bf16 %v5904, %v5896
      %v6081 = vpack.c.bf16 %v5905, %v5897
      %v6082 = vpack.c.bf16 %v5906, %v5898
      %v6083 = vpack.c.bf16 %v5907, %v5899
      %v6084 = vpack.c.bf16 %v5908, %v5900
      %v6085 = vpack.c.bf16 %v5909, %v5901
      %v6086 = vpack.c.bf16 %v5910, %v5902
      %v6087 = vpack.c.bf16 %v5919, %v5911
      %v6088 = vpack.c.bf16 %v5920, %v5912
      %v6089 = vpack.c.bf16 %v5921, %v5913
      %v6090 = vpack.c.bf16 %v5922, %v5914
      %v6091 = vpack.c.bf16 %v5923, %v5915
      %v6092 = vpack.c.bf16 %v5924, %v5916
      %v6093 = vpack.c.bf16 %v5925, %v5917
      %v6094 = vpack.c.bf16 %v5926, %v5918
      %v6095 = vpack.c.bf16 %v5935, %v5927
      %v6096 = vpack.c.bf16 %v5936, %v5928
      %v6097 = vpack.c.bf16 %v5937, %v5929
      %v6098 = vpack.c.bf16 %v5938, %v5930
      %v6099 = vpack.c.bf16 %v5939, %v5931
      %v6100 = vpack.c.bf16 %v5940, %v5932
      %v6101 = vpack.c.bf16 %v5941, %v5933
      %v6102 = vpack.c.bf16 %v5942, %v5934
      %v6103 = vpack.c.bf16 %v5951, %v5943
      %v6104 = vpack.c.bf16 %v5952, %v5944
      %v6105 = vpack.c.bf16 %v5953, %v5945
      %v6106 = vpack.c.bf16 %v5954, %v5946
      %v6107 = vpack.c.bf16 %v5955, %v5947
      %v6108 = vpack.c.bf16 %v5956, %v5948
      %v6109 = vpack.c.bf16 %v5957, %v5949
      %v6110 = vpack.c.bf16 %v5958, %v5950
      %v6111 = vpack.c.bf16 %v5967, %v5959
      %v6112 = vpack.c.bf16 %v5968, %v5960
      %v6113 = vpack.c.bf16 %v5969, %v5961
      %v6114 = vpack.c.bf16 %v5970, %v5962
      %v6115 = vpack.c.bf16 %v5971, %v5963
      %v6116 = vpack.c.bf16 %v5972, %v5964
      %v6117 = vpack.c.bf16 %v5973, %v5965
      %v6118 = vpack.c.bf16 %v5974, %v5966
      %v6119 = vpack.c.bf16 %v5983, %v5975
      %v6120 = vpack.c.bf16 %v5984, %v5976
      %v6121 = vpack.c.bf16 %v5985, %v5977
      %v6122 = vpack.c.bf16 %v5986, %v5978
      %v6123 = vpack.c.bf16 %v5987, %v5979
      %v6124 = vpack.c.bf16 %v5988, %v5980
      %v6125 = vpack.c.bf16 %v5989, %v5981
      %v6126 = vpack.c.bf16 %v5990, %v5982
      %v6127 = vpack.c.bf16 %v5999, %v5991
      %v6128 = vpack.c.bf16 %v6000, %v5992
      %v6129 = vpack.c.bf16 %v6001, %v5993
      %v6130 = vpack.c.bf16 %v6002, %v5994
      %v6131 = vpack.c.bf16 %v6003, %v5995
      %v6132 = vpack.c.bf16 %v6004, %v5996
      %v6133 = vpack.c.bf16 %v6005, %v5997
      %v6134 = vpack.c.bf16 %v6006, %v5998
      %v6135 = vpack.c.bf16 %v6015, %v6007
      %v6136 = vpack.c.bf16 %v6016, %v6008
      %v6137 = vpack.c.bf16 %v6017, %v6009
      %v6138 = vpack.c.bf16 %v6018, %v6010
      %v6139 = vpack.c.bf16 %v6019, %v6011
      %v6140 = vpack.c.bf16 %v6020, %v6012
      %v6141 = vpack.c.bf16 %v6021, %v6013
      %v6142 = vpack.c.bf16 %v6022, %v6014
      %v6143 = vpack.c.bf16 %v6031, %v6023
      %v6144 = vpack.c.bf16 %v6032, %v6024
      %v6145 = vpack.c.bf16 %v6033, %v6025
      %v6146 = vpack.c.bf16 %v6034, %v6026
      %v6147 = vpack.c.bf16 %v6035, %v6027
      %v6148 = vpack.c.bf16 %v6036, %v6028
      %v6149 = vpack.c.bf16 %v6037, %v6029
      %v6150 = vpack.c.bf16 %v6038, %v6030
      %v6151 = vpack.c.bf16 %v6047, %v6039
      %v6152 = vpack.c.bf16 %v6048, %v6040
      %v6153 = vpack.c.bf16 %v6049, %v6041
      %v6154 = vpack.c.bf16 %v6050, %v6042
      %v6155 = vpack.c.bf16 %v6051, %v6043
      %v6156 = vpack.c.bf16 %v6052, %v6044
      %v6157 = vpack.c.bf16 %v6053, %v6045
      %v6158 = vpack.c.bf16 %v6054, %v6046
      %v6159 = vpack.c.bf16 %v6055, %v6055
      %v6160 = vpack.c.bf16 %v6056, %v6056
      %v6161 = vpack.c.bf16 %v6057, %v6057
      %v6162 = vpack.c.bf16 %v6058, %v6058
      %v6163 = vpack.c.bf16 %v6059, %v6059
      %v6164 = vpack.c.bf16 %v6060, %v6060
      %v6165 = vpack.c.bf16 %v6061, %v6061
      %v6166 = vpack.c.bf16 %v6062, %v6062
      %v6167 = vld [vmem:[%s4] sm:$0xff]
      %v6168 = vld [vmem:[%s4 + $0x8] sm:$0xff]
      %v6169 = vld [vmem:[%s4 + $0x10] sm:$0xff]
      %v6170 = vld [vmem:[%s4 + $0x18] sm:$0xff]
      %v6171 = vld [vmem:[%s4 + $0x20] sm:$0xff]
      %v6172 = vld [vmem:[%s4 + $0x28] sm:$0xff]
      %v6173 = vld [vmem:[%s4 + $0x30] sm:$0xff]
      %v6174 = vld [vmem:[%s4 + $0x38] sm:$0xff]
      %v6175 = vld [vmem:[%s4 + $0x40] sm:$0xff]
      %v6176 = vld [vmem:[%s4 + $0x48] sm:$0xff]
      %v6177 = vld [vmem:[%s4 + $0x50] sm:$0xff]
      %v6178 = vld [vmem:[%s4 + $0x58] sm:$0xff]
      %v6179 = vld [vmem:[%s4 + $0x60] sm:$0xff]
      %v6180 = vld [vmem:[%s4 + $0x68] sm:$0xff]
      %v6181 = vld [vmem:[%s4 + $0x70] sm:$0xff]
      %v6182 = vld [vmem:[%s4 + $0x78] sm:$0xff]
      %v6183 = vld [vmem:[%s4 + $0x80] sm:$0xff]
      %v6184 = vld [vmem:[%s4 + $0x88] sm:$0xff]
      %v6185 = vld [vmem:[%s4 + $0x90] sm:$0xff]
      %v6186 = vld [vmem:[%s4 + $0x98] sm:$0xff]
      %v6187 = vld [vmem:[%s4 + $0xa0] sm:$0xff]
      %v6188 = vld [vmem:[%s4 + $0xa8] sm:$0xff]
      %v6189 = vld [vmem:[%s4 + $0xb0] sm:$0xff]
      %v6190 = vld [vmem:[%s4 + $0xb8] sm:$0xff]
      %v6191 = vld [vmem:[%s4 + $0xc0] sm:$0xff]
      %v6192 = vld [vmem:[%s4 + $0xc8] sm:$0xff]
      %v6193 = vld [vmem:[%s4 + $0xd0] sm:$0xff]
      %v6194 = vld [vmem:[%s4 + $0xd8] sm:$0xff]
      %v6195 = vld [vmem:[%s4 + $0xe0] sm:$0xff]
      %v6196 = vld [vmem:[%s4 + $0xe8] sm:$0xff]
      %v6197 = vld [vmem:[%s4 + $0xf0] sm:$0xff]
      %v6198 = vld [vmem:[%s4 + $0xf8] sm:$0xff]
      %v6199 = vld [vmem:[%s6] sm:$0xff]
      %v6200 = vld [vmem:[%s6 + $0x8] sm:$0xff]
      %v6201 = vld [vmem:[%s6 + $0x10] sm:$0xff]
      %v6202 = vld [vmem:[%s6 + $0x18] sm:$0xff]
      %v6203 = vld [vmem:[%s6 + $0x20] sm:$0xff]
      %v6204 = vld [vmem:[%s6 + $0x28] sm:$0xff]
      %v6205 = vld [vmem:[%s6 + $0x30] sm:$0xff]
      %v6206 = vld [vmem:[%s6 + $0x38] sm:$0xff]
      %v6207 = vld [vmem:[%s6 + $0x40] sm:$0xff]
      %v6208 = vld [vmem:[%s6 + $0x48] sm:$0xff]
      %v6209 = vld [vmem:[%s6 + $0x50] sm:$0xff]
      %v6210 = vld [vmem:[%s6 + $0x58] sm:$0xff]
      %v6211 = vld [vmem:[%s6 + $0x60] sm:$0xff]
      %v6212 = vld [vmem:[%s6 + $0x68] sm:$0xff]
      %v6213 = vld [vmem:[%s6 + $0x70] sm:$0xff]
      %v6214 = vld [vmem:[%s6 + $0x78] sm:$0xff]
      %v6215 = vld [vmem:[%s6 + $0x80] sm:$0xff]
      %v6216 = vld [vmem:[%s6 + $0x88] sm:$0xff]
      %v6217 = vld [vmem:[%s6 + $0x90] sm:$0xff]
      %v6218 = vld [vmem:[%s6 + $0x98] sm:$0xff]
      %v6219 = vld [vmem:[%s6 + $0xa0] sm:$0xff]
      %v6220 = vld [vmem:[%s6 + $0xa8] sm:$0xff]
      %v6221 = vld [vmem:[%s6 + $0xb0] sm:$0xff]
      %v6222 = vld [vmem:[%s6 + $0xb8] sm:$0xff]
      %v6223 = vld [vmem:[%s6 + $0xc0] sm:$0xff]
      %v6224 = vld [vmem:[%s6 + $0xc8] sm:$0xff]
      %v6225 = vld [vmem:[%s6 + $0xd0] sm:$0xff]
      %v6226 = vld [vmem:[%s6 + $0xd8] sm:$0xff]
      %v6227 = vld [vmem:[%s6 + $0xe0] sm:$0xff]
      %v6228 = vld [vmem:[%s6 + $0xe8] sm:$0xff]
      %v6229 = vld [vmem:[%s6 + $0xf0] sm:$0xff]
      %v6230 = vld [vmem:[%s6 + $0xf8] sm:$0xff]
      %v6231 = vld [vmem:[%s8] sm:$0xff]
      %v6232 = vld [vmem:[%s8 + $0x8] sm:$0xff]
      %v6233 = vld [vmem:[%s8 + $0x10] sm:$0xff]
      %v6234 = vld [vmem:[%s8 + $0x18] sm:$0xff]
      %v6235 = vld [vmem:[%s8 + $0x20] sm:$0xff]
      %v6236 = vld [vmem:[%s8 + $0x28] sm:$0xff]
      %v6237 = vld [vmem:[%s8 + $0x30] sm:$0xff]
      %v6238 = vld [vmem:[%s8 + $0x38] sm:$0xff]
      %v6239 = vld [vmem:[%s8 + $0x40] sm:$0xff]
      %v6240 = vld [vmem:[%s8 + $0x48] sm:$0xff]
      %v6241 = vld [vmem:[%s8 + $0x50] sm:$0xff]
      %v6242 = vld [vmem:[%s8 + $0x58] sm:$0xff]
      %v6243 = vld [vmem:[%s8 + $0x60] sm:$0xff]
      %v6244 = vld [vmem:[%s8 + $0x68] sm:$0xff]
      %v6245 = vld [vmem:[%s8 + $0x70] sm:$0xff]
      %v6246 = vld [vmem:[%s8 + $0x78] sm:$0xff]
      %v6247 = vld [vmem:[%s8 + $0x80] sm:$0xff]
      %v6248 = vld [vmem:[%s8 + $0x88] sm:$0xff]
      %v6249 = vld [vmem:[%s8 + $0x90] sm:$0xff]
      %v6250 = vld [vmem:[%s8 + $0x98] sm:$0xff]
      %v6251 = vld [vmem:[%s8 + $0xa0] sm:$0xff]
      %v6252 = vld [vmem:[%s8 + $0xa8] sm:$0xff]
      %v6253 = vld [vmem:[%s8 + $0xb0] sm:$0xff]
      %v6254 = vld [vmem:[%s8 + $0xb8] sm:$0xff]
      %v6255 = vld [vmem:[%s8 + $0xc0] sm:$0xff]
      %v6256 = vld [vmem:[%s8 + $0xc8] sm:$0xff]
      %v6257 = vld [vmem:[%s8 + $0xd0] sm:$0xff]
      %v6258 = vld [vmem:[%s8 + $0xd8] sm:$0xff]
      %v6259 = vld [vmem:[%s8 + $0xe0] sm:$0xff]
      %v6260 = vld [vmem:[%s8 + $0xe8] sm:$0xff]
      %v6261 = vld [vmem:[%s8 + $0xf0] sm:$0xff]
      %v6262 = vld [vmem:[%s8 + $0xf8] sm:$0xff]
      %v6263 = vld [vmem:[%s5] sm:$0x3]
      %v6264 = vld [vmem:[%s7] sm:$0x3]
      %v6265 = vld [vmem:[%s9] sm:$0x3]
      %v6267 = vlaneseq
      %v6268 = vshrl.u32 %v6267, 7
      %v6269 = vsub.s32 0, %v6268
      %v6270 = vrot.slane %v6263, %v6269
      %v6271 = vlaneseq
      %v6272 = vshrl.u32 %v6271, 7
      %v6273 = vsub.s32 1, %v6272
      %v6274 = vrot.slane %v6263, %v6273
      %v6309 = vunpack.c.l.b16 %v6167
      %v6310 = vunpack.c.h.b16 %v6167
      %v6311 = vunpack.c.l.b16 %v6168
      %v6312 = vunpack.c.h.b16 %v6168
      %v6313 = vunpack.c.l.b16 %v6169
      %v6314 = vunpack.c.h.b16 %v6169
      %v6315 = vunpack.c.l.b16 %v6170
      %v6316 = vunpack.c.h.b16 %v6170
      %v6317 = vunpack.c.l.b16 %v6171
      %v6318 = vunpack.c.h.b16 %v6171
      %v6319 = vunpack.c.l.b16 %v6172
      %v6320 = vunpack.c.h.b16 %v6172
      %v6321 = vunpack.c.l.b16 %v6173
      %v6322 = vunpack.c.h.b16 %v6173
      %v6323 = vunpack.c.l.b16 %v6174
      %v6324 = vunpack.c.h.b16 %v6174
      %v6325 = vunpack.c.l.b16 %v6175
      %v6326 = vunpack.c.h.b16 %v6175
      %v6327 = vunpack.c.l.b16 %v6176
      %v6328 = vunpack.c.h.b16 %v6176
      %v6329 = vunpack.c.l.b16 %v6177
      %v6330 = vunpack.c.h.b16 %v6177
      %v6331 = vunpack.c.l.b16 %v6178
      %v6332 = vunpack.c.h.b16 %v6178
      %v6333 = vunpack.c.l.b16 %v6179
      %v6334 = vunpack.c.h.b16 %v6179
      %v6335 = vunpack.c.l.b16 %v6180
      %v6336 = vunpack.c.h.b16 %v6180
      %v6337 = vunpack.c.l.b16 %v6181
      %v6338 = vunpack.c.h.b16 %v6181
      %v6339 = vunpack.c.l.b16 %v6182
      %v6340 = vunpack.c.h.b16 %v6182
      %v6341 = vunpack.c.l.b16 %v6183
      %v6342 = vunpack.c.h.b16 %v6183
      %v6343 = vunpack.c.l.b16 %v6184
      %v6344 = vunpack.c.h.b16 %v6184
      %v6345 = vunpack.c.l.b16 %v6185
      %v6346 = vunpack.c.h.b16 %v6185
      %v6347 = vunpack.c.l.b16 %v6186
      %v6348 = vunpack.c.h.b16 %v6186
      %v6349 = vunpack.c.l.b16 %v6187
      %v6350 = vunpack.c.h.b16 %v6187
      %v6351 = vunpack.c.l.b16 %v6188
      %v6352 = vunpack.c.h.b16 %v6188
      %v6353 = vunpack.c.l.b16 %v6189
      %v6354 = vunpack.c.h.b16 %v6189
      %v6355 = vunpack.c.l.b16 %v6190
      %v6356 = vunpack.c.h.b16 %v6190
      %v6357 = vunpack.c.l.b16 %v6191
      %v6358 = vunpack.c.h.b16 %v6191
      %v6359 = vunpack.c.l.b16 %v6192
      %v6360 = vunpack.c.h.b16 %v6192
      %v6361 = vunpack.c.l.b16 %v6193
      %v6362 = vunpack.c.h.b16 %v6193
      %v6363 = vunpack.c.l.b16 %v6194
      %v6364 = vunpack.c.h.b16 %v6194
      %v6365 = vunpack.c.l.b16 %v6195
      %v6366 = vunpack.c.h.b16 %v6195
      %v6367 = vunpack.c.l.b16 %v6196
      %v6368 = vunpack.c.h.b16 %v6196
      %v6369 = vunpack.c.l.b16 %v6197
      %v6370 = vunpack.c.h.b16 %v6197
      %v6371 = vunpack.c.l.b16 %v6198
      %v6372 = vunpack.c.h.b16 %v6198
      %v6373 = vpack.c.b16 %v6311, %v6309
      %v6374 = vpack.c.b16 %v6312, %v6310
      %v6375 = vpack.c.b16 %v6315, %v6313
      %v6376 = vpack.c.b16 %v6316, %v6314
      %v6377 = vpack.c.b16 %v6319, %v6317
      %v6378 = vpack.c.b16 %v6320, %v6318
      %v6379 = vpack.c.b16 %v6323, %v6321
      %v6380 = vpack.c.b16 %v6324, %v6322
      %v6381 = vpack.c.b16 %v6327, %v6325
      %v6382 = vpack.c.b16 %v6328, %v6326
      %v6383 = vpack.c.b16 %v6331, %v6329
      %v6384 = vpack.c.b16 %v6332, %v6330
      %v6385 = vpack.c.b16 %v6335, %v6333
      %v6386 = vpack.c.b16 %v6336, %v6334
      %v6387 = vpack.c.b16 %v6339, %v6337
      %v6388 = vpack.c.b16 %v6340, %v6338
      %v6389 = vpack.c.b16 %v6343, %v6341
      %v6390 = vpack.c.b16 %v6344, %v6342
      %v6391 = vpack.c.b16 %v6347, %v6345
      %v6392 = vpack.c.b16 %v6348, %v6346
      %v6393 = vpack.c.b16 %v6351, %v6349
      %v6394 = vpack.c.b16 %v6352, %v6350
      %v6395 = vpack.c.b16 %v6355, %v6353
      %v6396 = vpack.c.b16 %v6356, %v6354
      %v6397 = vpack.c.b16 %v6359, %v6357
      %v6398 = vpack.c.b16 %v6360, %v6358
      %v6399 = vpack.c.b16 %v6363, %v6361
      %v6400 = vpack.c.b16 %v6364, %v6362
      %v6401 = vpack.c.b16 %v6367, %v6365
      %v6402 = vpack.c.b16 %v6368, %v6366
      %v6403 = vpack.c.b16 %v6371, %v6369
      %v6404 = vpack.c.b16 %v6372, %v6370
      %6437 = vmatprep.subr.bf16.mxu0 %v6374
      %6438 = vmatpush1.bf16.msra.mxu0 %v6373
      %6439 = vmatprep.subr.bf16.mxu0 %v6376
      %6440 = vmatpush1.bf16.msra.mxu0 %v6375
      %6441 = vmatprep.subr.bf16.mxu0 %v6378
      %6442 = vmatpush1.bf16.msra.mxu0 %v6377
      %6443 = vmatprep.subr.bf16.mxu0 %v6380
      %6444 = vmatpush1.bf16.msra.mxu0 %v6379
      %6445 = vmatprep.subr.bf16.mxu0 %v6382
      %6446 = vmatpush1.bf16.msra.mxu0 %v6381
      %6447 = vmatprep.subr.bf16.mxu0 %v6384
      %6448 = vmatpush1.bf16.msra.mxu0 %v6383
      %6449 = vmatprep.subr.bf16.mxu0 %v6386
      %6450 = vmatpush1.bf16.msra.mxu0 %v6385
      %6451 = vmatprep.subr.bf16.mxu0 %v6388
      %6452 = vmatpush1.bf16.msra.mxu0 %v6387
      %6453 = vmatprep.subr.bf16.mxu0 %v6390
      %6454 = vmatpush1.bf16.msra.mxu0 %v6389
      %6455 = vmatprep.subr.bf16.mxu0 %v6392
      %6456 = vmatpush1.bf16.msra.mxu0 %v6391
      %6457 = vmatprep.subr.bf16.mxu0 %v6394
      %6458 = vmatpush1.bf16.msra.mxu0 %v6393
      %6459 = vmatprep.subr.bf16.mxu0 %v6396
      %6460 = vmatpush1.bf16.msra.mxu0 %v6395
      %6461 = vmatprep.subr.bf16.mxu0 %v6398
      %6462 = vmatpush1.bf16.msra.mxu0 %v6397
      %6463 = vmatprep.subr.bf16.mxu0 %v6400
      %6464 = vmatpush1.bf16.msra.mxu0 %v6399
      %6465 = vmatprep.subr.bf16.mxu0 %v6402
      %6466 = vmatpush1.bf16.msra.mxu0 %v6401
      %6467 = vmatprep.subr.bf16.mxu0 %v6404
      %6468 = vmatpush1.bf16.msra.mxu0 %v6403
      %6469 = vmatprep.mubr.bf16.mxu0 %v6064
      %6470 = vmatmul.mubr.bf16.gmra.mrb[0].mxu0 %v6063
      %v6471 = vpop.f32.mrb[0].mxu0
      %v6472 = vadd.f32 %v6270, %v6471
      %v6473 = vpop.f32.mrb[0].mxu0
      %v6474 = vadd.f32 %v6274, %v6473
      %v6475 = vpop.f32.mrb[0].mxu0
      %v6476 = vadd.f32 %v6270, %v6475
      %v6477 = vpop.f32.mrb[0].mxu0
      %v6478 = vadd.f32 %v6274, %v6477
      %6479 = vmatprep.mubr.bf16.mxu0 %v6072
      %6480 = vmatmul.mubr.bf16.gmra.mrb[0].mxu0 %v6071
      %v6481 = vpop.f32.mrb[0].mxu0
      %v6482 = vadd.f32 %v6270, %v6481
      %v6483 = vpop.f32.mrb[0].mxu0
      %v6484 = vadd.f32 %v6274, %v6483
      %v6485 = vpop.f32.mrb[0].mxu0
      %v6486 = vadd.f32 %v6270, %v6485
      %v6487 = vpop.f32.mrb[0].mxu0
      %v6488 = vadd.f32 %v6274, %v6487
      %6489 = vmatprep.mubr.bf16.mxu0 %v6080
      %6490 = vmatmul.mubr.bf16.gmra.mrb[0].mxu0 %v6079
      %v6491 = vpop.f32.mrb[0].mxu0
      %v6492 = vadd.f32 %v6270, %v6491
      %v6493 = vpop.f32.mrb[0].mxu0
      %v6494 = vadd.f32 %v6274, %v6493
      %v6495 = vpop.f32.mrb[0].mxu0
      %v6496 = vadd.f32 %v6270, %v6495
      %v6497 = vpop.f32.mrb[0].mxu0
      %v6498 = vadd.f32 %v6274, %v6497
      %6499 = vmatprep.mubr.bf16.mxu0 %v6088
      %6500 = vmatmul.mubr.bf16.gmra.mrb[0].mxu0 %v6087
      %v6501 = vpop.f32.mrb[0].mxu0
      %v6502 = vadd.f32 %v6270, %v6501
      %v6503 = vpop.f32.mrb[0].mxu0
      %v6504 = vadd.f32 %v6274, %v6503
      %v6505 = vpop.f32.mrb[0].mxu0
      %v6506 = vadd.f32 %v6270, %v6505
      %v6507 = vpop.f32.mrb[0].mxu0
      %v6508 = vadd.f32 %v6274, %v6507
      %6509 = vmatprep.mubr.bf16.mxu0 %v6096
      %6510 = vmatmul.mubr.bf16.gmra.mrb[0].mxu0 %v6095
      %v6511 = vpop.f32.mrb[0].mxu0
      %v6512 = vadd.f32 %v6270, %v6511
      %v6513 = vpop.f32.mrb[0].mxu0
      %v6514 = vadd.f32 %v6274, %v6513
      %v6515 = vpop.f32.mrb[0].mxu0
      %v6516 = vadd.f32 %v6270, %v6515
      %v6517 = vpop.f32.mrb[0].mxu0
      %v6518 = vadd.f32 %v6274, %v6517
      %6519 = vmatprep.mubr.bf16.mxu0 %v6104
      %6520 = vmatmul.mubr.bf16.gmra.mrb[0].mxu0 %v6103
      %v6521 = vpop.f32.mrb[0].mxu0
      %v6522 = vadd.f32 %v6270, %v6521
      %v6523 = vpop.f32.mrb[0].mxu0
      %v6524 = vadd.f32 %v6274, %v6523
      %v6525 = vpop.f32.mrb[0].mxu0
      %v6526 = vadd.f32 %v6270, %v6525
      %v6527 = vpop.f32.mrb[0].mxu0
      %v6528 = vadd.f32 %v6274, %v6527
      %6529 = vmatprep.mubr.bf16.mxu0 %v6112
      %6530 = vmatmul.mubr.bf16.gmra.mrb[0].mxu0 %v6111
      %v6531 = vpop.f32.mrb[0].mxu0
      %v6532 = vadd.f32 %v6270, %v6531
      %v6533 = vpop.f32.mrb[0].mxu0
      %v6534 = vadd.f32 %v6274, %v6533
      %v6535 = vpop.f32.mrb[0].mxu0
      %v6536 = vadd.f32 %v6270, %v6535
      %v6537 = vpop.f32.mrb[0].mxu0
      %v6538 = vadd.f32 %v6274, %v6537
      %6539 = vmatprep.mubr.bf16.mxu0 %v6120
      %6540 = vmatmul.mubr.bf16.gmra.mrb[0].mxu0 %v6119
      %v6541 = vpop.f32.mrb[0].mxu0
      %v6542 = vadd.f32 %v6270, %v6541
      %v6543 = vpop.f32.mrb[0].mxu0
      %v6544 = vadd.f32 %v6274, %v6543
      %v6545 = vpop.f32.mrb[0].mxu0
      %v6546 = vadd.f32 %v6270, %v6545
      %v6547 = vpop.f32.mrb[0].mxu0
      %v6548 = vadd.f32 %v6274, %v6547
      %6549 = vmatprep.mubr.bf16.mxu0 %v6128
      %6550 = vmatmul.mubr.bf16.gmra.mrb[0].mxu0 %v6127
      %v6551 = vpop.f32.mrb[0].mxu0
      %v6552 = vadd.f32 %v6270, %v6551
      %v6553 = vpop.f32.mrb[0].mxu0
      %v6554 = vadd.f32 %v6274, %v6553
      %v6555 = vpop.f32.mrb[0].mxu0
      %v6556 = vadd.f32 %v6270, %v6555
      %v6557 = vpop.f32.mrb[0].mxu0
      %v6558 = vadd.f32 %v6274, %v6557
      %6559 = vmatprep.mubr.bf16.mxu0 %v6136
      %6560 = vmatmul.mubr.bf16.gmra.mrb[0].mxu0 %v6135
      %v6561 = vpop.f32.mrb[0].mxu0
      %v6562 = vadd.f32 %v6270, %v6561
      %v6563 = vpop.f32.mrb[0].mxu0
      %v6564 = vadd.f32 %v6274, %v6563
      %v6565 = vpop.f32.mrb[0].mxu0
      %v6566 = vadd.f32 %v6270, %v6565
      %v6567 = vpop.f32.mrb[0].mxu0
      %v6568 = vadd.f32 %v6274, %v6567
      %6569 = vmatprep.mubr.bf16.mxu0 %v6144
      %6570 = vmatmul.mubr.bf16.gmra.mrb[0].mxu0 %v6143
      %v6571 = vpop.f32.mrb[0].mxu0
      %v6572 = vadd.f32 %v6270, %v6571
      %v6573 = vpop.f32.mrb[0].mxu0
      %v6574 = vadd.f32 %v6274, %v6573
      %v6575 = vpop.f32.mrb[0].mxu0
      %v6576 = vadd.f32 %v6270, %v6575
      %v6577 = vpop.f32.mrb[0].mxu0
      %v6578 = vadd.f32 %v6274, %v6577
      %6579 = vmatprep.mubr.bf16.mxu0 %v6152
      %6580 = vmatmul.mubr.bf16.gmra.mrb[0].mxu0 %v6151
      %v6581 = vpop.f32.mrb[0].mxu0
      %v6582 = vadd.f32 %v6270, %v6581
      %v6583 = vpop.f32.mrb[0].mxu0
      %v6584 = vadd.f32 %v6274, %v6583
      %v6585 = vpop.f32.mrb[0].mxu0
      %v6586 = vadd.f32 %v6270, %v6585
      %v6587 = vpop.f32.mrb[0].mxu0
      %v6588 = vadd.f32 %v6274, %v6587
      %6589 = vmatprep.mubr.bf16.mxu0 %v6160
      %6590 = vmatmul.mubr.bf16.gmra.mrb[0].mxu0 %v6159
      %v6591 = vpop.f32.mrb[0].mxu0
      %v6592 = vadd.f32 %v6270, %v6591
      %v6593 = vpop.f32.mrb[0].mxu0
      %v6594 = vadd.f32 %v6274, %v6593
      %v6595 = vpop.f32.mrb[0].mxu0
      %v6596 = vpop.f32.mrb[0].mxu0
      %6597 = vdwg.mxu0
      %v6598 = vmax.f32 %v6472, 0.0
      %v6599 = vmax.f32 %v6474, 0.0
      %v6600 = vmax.f32 %v6476, 0.0
      %v6601 = vmax.f32 %v6478, 0.0
      %v6602 = vmax.f32 %v6482, 0.0
      %v6603 = vmax.f32 %v6484, 0.0
      %v6604 = vmax.f32 %v6486, 0.0
      %v6605 = vmax.f32 %v6488, 0.0
      %v6606 = vmax.f32 %v6492, 0.0
      %v6607 = vmax.f32 %v6494, 0.0
      %v6608 = vmax.f32 %v6496, 0.0
      %v6609 = vmax.f32 %v6498, 0.0
      %v6610 = vmax.f32 %v6502, 0.0
      %v6611 = vmax.f32 %v6504, 0.0
      %v6612 = vmax.f32 %v6506, 0.0
      %v6613 = vmax.f32 %v6508, 0.0
      %v6614 = vmax.f32 %v6512, 0.0
      %v6615 = vmax.f32 %v6514, 0.0
      %v6616 = vmax.f32 %v6516, 0.0
      %v6617 = vmax.f32 %v6518, 0.0
      %v6618 = vmax.f32 %v6522, 0.0
      %v6619 = vmax.f32 %v6524, 0.0
      %v6620 = vmax.f32 %v6526, 0.0
      %v6621 = vmax.f32 %v6528, 0.0
      %v6622 = vmax.f32 %v6532, 0.0
      %v6623 = vmax.f32 %v6534, 0.0
      %v6624 = vmax.f32 %v6536, 0.0
      %v6625 = vmax.f32 %v6538, 0.0
      %v6626 = vmax.f32 %v6542, 0.0
      %v6627 = vmax.f32 %v6544, 0.0
      %v6628 = vmax.f32 %v6546, 0.0
      %v6629 = vmax.f32 %v6548, 0.0
      %v6630 = vmax.f32 %v6552, 0.0
      %v6631 = vmax.f32 %v6554, 0.0
      %v6632 = vmax.f32 %v6556, 0.0
      %v6633 = vmax.f32 %v6558, 0.0
      %v6634 = vmax.f32 %v6562, 0.0
      %v6635 = vmax.f32 %v6564, 0.0
      %v6636 = vmax.f32 %v6566, 0.0
      %v6637 = vmax.f32 %v6568, 0.0
      %v6638 = vmax.f32 %v6572, 0.0
      %v6639 = vmax.f32 %v6574, 0.0
      %v6640 = vmax.f32 %v6576, 0.0
      %v6641 = vmax.f32 %v6578, 0.0
      %v6642 = vmax.f32 %v6582, 0.0
      %v6643 = vmax.f32 %v6584, 0.0
      %v6644 = vmax.f32 %v6586, 0.0
      %v6645 = vmax.f32 %v6588, 0.0
      %v6646 = vmax.f32 %v6592, 0.0
      %v6647 = vmax.f32 %v6594, 0.0
      %v6648 = vpack.c.bf16 %v6600, %v6598
      %v6649 = vpack.c.bf16 %v6601, %v6599
      %v6650 = vpack.c.bf16 %v6604, %v6602
      %v6651 = vpack.c.bf16 %v6605, %v6603
      %v6652 = vpack.c.bf16 %v6608, %v6606
      %v6653 = vpack.c.bf16 %v6609, %v6607
      %v6654 = vpack.c.bf16 %v6612, %v6610
      %v6655 = vpack.c.bf16 %v6613, %v6611
      %v6656 = vpack.c.bf16 %v6616, %v6614
      %v6657 = vpack.c.bf16 %v6617, %v6615
      %v6658 = vpack.c.bf16 %v6620, %v6618
      %v6659 = vpack.c.bf16 %v6621, %v6619
      %v6660 = vpack.c.bf16 %v6624, %v6622
      %v6661 = vpack.c.bf16 %v6625, %v6623
      %v6662 = vpack.c.bf16 %v6628, %v6626
      %v6663 = vpack.c.bf16 %v6629, %v6627
      %v6664 = vpack.c.bf16 %v6632, %v6630
      %v6665 = vpack.c.bf16 %v6633, %v6631
      %v6666 = vpack.c.bf16 %v6636, %v6634
      %v6667 = vpack.c.bf16 %v6637, %v6635
      %v6668 = vpack.c.bf16 %v6640, %v6638
      %v6669 = vpack.c.bf16 %v6641, %v6639
      %v6670 = vpack.c.bf16 %v6644, %v6642
      %v6671 = vpack.c.bf16 %v6645, %v6643
      %v6672 = vpack.c.bf16 %v6646, %v6646
      %v6673 = vpack.c.bf16 %v6647, %v6647
      %v6675 = vlaneseq
      %v6676 = vshrl.u32 %v6675, 7
      %v6677 = vsub.s32 0, %v6676
      %v6678 = vrot.slane %v6264, %v6677
      %v6679 = vlaneseq
      %v6680 = vshrl.u32 %v6679, 7
      %v6681 = vsub.s32 1, %v6680
      %v6682 = vrot.slane %v6264, %v6681
      %v6717 = vunpack.c.l.b16 %v6199
      %v6718 = vunpack.c.h.b16 %v6199
      %v6719 = vunpack.c.l.b16 %v6200
      %v6720 = vunpack.c.h.b16 %v6200
      %v6721 = vunpack.c.l.b16 %v6201
      %v6722 = vunpack.c.h.b16 %v6201
      %v6723 = vunpack.c.l.b16 %v6202
      %v6724 = vunpack.c.h.b16 %v6202
      %v6725 = vunpack.c.l.b16 %v6203
      %v6726 = vunpack.c.h.b16 %v6203
      %v6727 = vunpack.c.l.b16 %v6204
      %v6728 = vunpack.c.h.b16 %v6204
      %v6729 = vunpack.c.l.b16 %v6205
      %v6730 = vunpack.c.h.b16 %v6205
      %v6731 = vunpack.c.l.b16 %v6206
      %v6732 = vunpack.c.h.b16 %v6206
      %v6733 = vunpack.c.l.b16 %v6207
      %v6734 = vunpack.c.h.b16 %v6207
      %v6735 = vunpack.c.l.b16 %v6208
      %v6736 = vunpack.c.h.b16 %v6208
      %v6737 = vunpack.c.l.b16 %v6209
      %v6738 = vunpack.c.h.b16 %v6209
      %v6739 = vunpack.c.l.b16 %v6210
      %v6740 = vunpack.c.h.b16 %v6210
      %v6741 = vunpack.c.l.b16 %v6211
      %v6742 = vunpack.c.h.b16 %v6211
      %v6743 = vunpack.c.l.b16 %v6212
      %v6744 = vunpack.c.h.b16 %v6212
      %v6745 = vunpack.c.l.b16 %v6213
      %v6746 = vunpack.c.h.b16 %v6213
      %v6747 = vunpack.c.l.b16 %v6214
      %v6748 = vunpack.c.h.b16 %v6214
      %v6749 = vunpack.c.l.b16 %v6215
      %v6750 = vunpack.c.h.b16 %v6215
      %v6751 = vunpack.c.l.b16 %v6216
      %v6752 = vunpack.c.h.b16 %v6216
      %v6753 = vunpack.c.l.b16 %v6217
      %v6754 = vunpack.c.h.b16 %v6217
      %v6755 = vunpack.c.l.b16 %v6218
      %v6756 = vunpack.c.h.b16 %v6218
      %v6757 = vunpack.c.l.b16 %v6219
      %v6758 = vunpack.c.h.b16 %v6219
      %v6759 = vunpack.c.l.b16 %v6220
      %v6760 = vunpack.c.h.b16 %v6220
      %v6761 = vunpack.c.l.b16 %v6221
      %v6762 = vunpack.c.h.b16 %v6221
      %v6763 = vunpack.c.l.b16 %v6222
      %v6764 = vunpack.c.h.b16 %v6222
      %v6765 = vunpack.c.l.b16 %v6223
      %v6766 = vunpack.c.h.b16 %v6223
      %v6767 = vunpack.c.l.b16 %v6224
      %v6768 = vunpack.c.h.b16 %v6224
      %v6769 = vunpack.c.l.b16 %v6225
      %v6770 = vunpack.c.h.b16 %v6225
      %v6771 = vunpack.c.l.b16 %v6226
      %v6772 = vunpack.c.h.b16 %v6226
      %v6773 = vunpack.c.l.b16 %v6227
      %v6774 = vunpack.c.h.b16 %v6227
      %v6775 = vunpack.c.l.b16 %v6228
      %v6776 = vunpack.c.h.b16 %v6228
      %v6777 = vunpack.c.l.b16 %v6229
      %v6778 = vunpack.c.h.b16 %v6229
      %v6779 = vunpack.c.l.b16 %v6230
      %v6780 = vunpack.c.h.b16 %v6230
      %v6781 = vpack.c.b16 %v6719, %v6717
      %v6782 = vpack.c.b16 %v6720, %v6718
      %v6783 = vpack.c.b16 %v6723, %v6721
      %v6784 = vpack.c.b16 %v6724, %v6722
      %v6785 = vpack.c.b16 %v6727, %v6725
      %v6786 = vpack.c.b16 %v6728, %v6726
      %v6787 = vpack.c.b16 %v6731, %v6729
      %v6788 = vpack.c.b16 %v6732, %v6730
      %v6789 = vpack.c.b16 %v6735, %v6733
      %v6790 = vpack.c.b16 %v6736, %v6734
      %v6791 = vpack.c.b16 %v6739, %v6737
      %v6792 = vpack.c.b16 %v6740, %v6738
      %v6793 = vpack.c.b16 %v6743, %v6741
      %v6794 = vpack.c.b16 %v6744, %v6742
      %v6795 = vpack.c.b16 %v6747, %v6745
      %v6796 = vpack.c.b16 %v6748, %v6746
      %v6797 = vpack.c.b16 %v6751, %v6749
      %v6798 = vpack.c.b16 %v6752, %v6750
      %v6799 = vpack.c.b16 %v6755, %v6753
      %v6800 = vpack.c.b16 %v6756, %v6754
      %v6801 = vpack.c.b16 %v6759, %v6757
      %v6802 = vpack.c.b16 %v6760, %v6758
      %v6803 = vpack.c.b16 %v6763, %v6761
      %v6804 = vpack.c.b16 %v6764, %v6762
      %v6805 = vpack.c.b16 %v6767, %v6765
      %v6806 = vpack.c.b16 %v6768, %v6766
      %v6807 = vpack.c.b16 %v6771, %v6769
      %v6808 = vpack.c.b16 %v6772, %v6770
      %v6809 = vpack.c.b16 %v6775, %v6773
      %v6810 = vpack.c.b16 %v6776, %v6774
      %v6811 = vpack.c.b16 %v6779, %v6777
      %v6812 = vpack.c.b16 %v6780, %v6778
      %6845 = vmatprep.subr.bf16.mxu0 %v6782
      %6846 = vmatpush1.bf16.msra.mxu0 %v6781
      %6847 = vmatprep.subr.bf16.mxu0 %v6784
      %6848 = vmatpush1.bf16.msra.mxu0 %v6783
      %6849 = vmatprep.subr.bf16.mxu0 %v6786
      %6850 = vmatpush1.bf16.msra.mxu0 %v6785
      %6851 = vmatprep.subr.bf16.mxu0 %v6788
      %6852 = vmatpush1.bf16.msra.mxu0 %v6787
      %6853 = vmatprep.subr.bf16.mxu0 %v6790
      %6854 = vmatpush1.bf16.msra.mxu0 %v6789
      %6855 = vmatprep.subr.bf16.mxu0 %v6792
      %6856 = vmatpush1.bf16.msra.mxu0 %v6791
      %6857 = vmatprep.subr.bf16.mxu0 %v6794
      %6858 = vmatpush1.bf16.msra.mxu0 %v6793
      %6859 = vmatprep.subr.bf16.mxu0 %v6796
      %6860 = vmatpush1.bf16.msra.mxu0 %v6795
      %6861 = vmatprep.subr.bf16.mxu0 %v6798
      %6862 = vmatpush1.bf16.msra.mxu0 %v6797
      %6863 = vmatprep.subr.bf16.mxu0 %v6800
      %6864 = vmatpush1.bf16.msra.mxu0 %v6799
      %6865 = vmatprep.subr.bf16.mxu0 %v6802
      %6866 = vmatpush1.bf16.msra.mxu0 %v6801
      %6867 = vmatprep.subr.bf16.mxu0 %v6804
      %6868 = vmatpush1.bf16.msra.mxu0 %v6803
      %6869 = vmatprep.subr.bf16.mxu0 %v6806
      %6870 = vmatpush1.bf16.msra.mxu0 %v6805
      %6871 = vmatprep.subr.bf16.mxu0 %v6808
      %6872 = vmatpush1.bf16.msra.mxu0 %v6807
      %6873 = vmatprep.subr.bf16.mxu0 %v6810
      %6874 = vmatpush1.bf16.msra.mxu0 %v6809
      %6875 = vmatprep.subr.bf16.mxu0 %v6812
      %6876 = vmatpush1.bf16.msra.mxu0 %v6811
      %6877 = vmatprep.mubr.bf16.mxu0 %v6649
      %6878 = vmatmul.mubr.bf16.gmra.mrb[0].mxu0 %v6648
      %v6879 = vpop.f32.mrb[0].mxu0
      %v6880 = vadd.f32 %v6678, %v6879
      %v6881 = vpop.f32.mrb[0].mxu0
      %v6882 = vadd.f32 %v6682, %v6881
      %v6883 = vpop.f32.mrb[0].mxu0
      %v6884 = vadd.f32 %v6678, %v6883
      %v6885 = vpop.f32.mrb[0].mxu0
      %v6886 = vadd.f32 %v6682, %v6885
      %6887 = vmatprep.mubr.bf16.mxu0 %v6651
      %6888 = vmatmul.mubr.bf16.gmra.mrb[0].mxu0 %v6650
      %v6889 = vpop.f32.mrb[0].mxu0
      %v6890 = vadd.f32 %v6678, %v6889
      %v6891 = vpop.f32.mrb[0].mxu0
      %v6892 = vadd.f32 %v6682, %v6891
      %v6893 = vpop.f32.mrb[0].mxu0
      %v6894 = vadd.f32 %v6678, %v6893
      %v6895 = vpop.f32.mrb[0].mxu0
      %v6896 = vadd.f32 %v6682, %v6895
      %6897 = vmatprep.mubr.bf16.mxu0 %v6653
      %6898 = vmatmul.mubr.bf16.gmra.mrb[0].mxu0 %v6652
      %v6899 = vpop.f32.mrb[0].mxu0
      %v6900 = vadd.f32 %v6678, %v6899
      %v6901 = vpop.f32.mrb[0].mxu0
      %v6902 = vadd.f32 %v6682, %v6901
      %v6903 = vpop.f32.mrb[0].mxu0
      %v6904 = vadd.f32 %v6678, %v6903
      %v6905 = vpop.f32.mrb[0].mxu0
      %v6906 = vadd.f32 %v6682, %v6905
      %6907 = vmatprep.mubr.bf16.mxu0 %v6655
      %6908 = vmatmul.mubr.bf16.gmra.mrb[0].mxu0 %v6654
      %v6909 = vpop.f32.mrb[0].mxu0
      %v6910 = vadd.f32 %v6678, %v6909
      %v6911 = vpop.f32.mrb[0].mxu0
      %v6912 = vadd.f32 %v6682, %v6911
      %v6913 = vpop.f32.mrb[0].mxu0
      %v6914 = vadd.f32 %v6678, %v6913
      %v6915 = vpop.f32.mrb[0].mxu0
      %v6916 = vadd.f32 %v6682, %v6915
      %6917 = vmatprep.mubr.bf16.mxu0 %v6657
      %6918 = vmatmul.mubr.bf16.gmra.mrb[0].mxu0 %v6656
      %v6919 = vpop.f32.mrb[0].mxu0
      %v6920 = vadd.f32 %v6678, %v6919
      %v6921 = vpop.f32.mrb[0].mxu0
      %v6922 = vadd.f32 %v6682, %v6921
      %v6923 = vpop.f32.mrb[0].mxu0
      %v6924 = vadd.f32 %v6678, %v6923
      %v6925 = vpop.f32.mrb[0].mxu0
      %v6926 = vadd.f32 %v6682, %v6925
      %6927 = vmatprep.mubr.bf16.mxu0 %v6659
      %6928 = vmatmul.mubr.bf16.gmra.mrb[0].mxu0 %v6658
      %v6929 = vpop.f32.mrb[0].mxu0
      %v6930 = vadd.f32 %v6678, %v6929
      %v6931 = vpop.f32.mrb[0].mxu0
      %v6932 = vadd.f32 %v6682, %v6931
      %v6933 = vpop.f32.mrb[0].mxu0
      %v6934 = vadd.f32 %v6678, %v6933
      %v6935 = vpop.f32.mrb[0].mxu0
      %v6936 = vadd.f32 %v6682, %v6935
      %6937 = vmatprep.mubr.bf16.mxu0 %v6661
      %6938 = vmatmul.mubr.bf16.gmra.mrb[0].mxu0 %v6660
      %v6939 = vpop.f32.mrb[0].mxu0
      %v6940 = vadd.f32 %v6678, %v6939
      %v6941 = vpop.f32.mrb[0].mxu0
      %v6942 = vadd.f32 %v6682, %v6941
      %v6943 = vpop.f32.mrb[0].mxu0
      %v6944 = vadd.f32 %v6678, %v6943
      %v6945 = vpop.f32.mrb[0].mxu0
      %v6946 = vadd.f32 %v6682, %v6945
      %6947 = vmatprep.mubr.bf16.mxu0 %v6663
      %6948 = vmatmul.mubr.bf16.gmra.mrb[0].mxu0 %v6662
      %v6949 = vpop.f32.mrb[0].mxu0
      %v6950 = vadd.f32 %v6678, %v6949
      %v6951 = vpop.f32.mrb[0].mxu0
      %v6952 = vadd.f32 %v6682, %v6951
      %v6953 = vpop.f32.mrb[0].mxu0
      %v6954 = vadd.f32 %v6678, %v6953
      %v6955 = vpop.f32.mrb[0].mxu0
      %v6956 = vadd.f32 %v6682, %v6955
      %6957 = vmatprep.mubr.bf16.mxu0 %v6665
      %6958 = vmatmul.mubr.bf16.gmra.mrb[0].mxu0 %v6664
      %v6959 = vpop.f32.mrb[0].mxu0
      %v6960 = vadd.f32 %v6678, %v6959
      %v6961 = vpop.f32.mrb[0].mxu0
      %v6962 = vadd.f32 %v6682, %v6961
      %v6963 = vpop.f32.mrb[0].mxu0
      %v6964 = vadd.f32 %v6678, %v6963
      %v6965 = vpop.f32.mrb[0].mxu0
      %v6966 = vadd.f32 %v6682, %v6965
      %6967 = vmatprep.mubr.bf16.mxu0 %v6667
      %6968 = vmatmul.mubr.bf16.gmra.mrb[0].mxu0 %v6666
      %v6969 = vpop.f32.mrb[0].mxu0
      %v6970 = vadd.f32 %v6678, %v6969
      %v6971 = vpop.f32.mrb[0].mxu0
      %v6972 = vadd.f32 %v6682, %v6971
      %v6973 = vpop.f32.mrb[0].mxu0
      %v6974 = vadd.f32 %v6678, %v6973
      %v6975 = vpop.f32.mrb[0].mxu0
      %v6976 = vadd.f32 %v6682, %v6975
      %6977 = vmatprep.mubr.bf16.mxu0 %v6669
      %6978 = vmatmul.mubr.bf16.gmra.mrb[0].mxu0 %v6668
      %v6979 = vpop.f32.mrb[0].mxu0
      %v6980 = vadd.f32 %v6678, %v6979
      %v6981 = vpop.f32.mrb[0].mxu0
      %v6982 = vadd.f32 %v6682, %v6981
      %v6983 = vpop.f32.mrb[0].mxu0
      %v6984 = vadd.f32 %v6678, %v6983
      %v6985 = vpop.f32.mrb[0].mxu0
      %v6986 = vadd.f32 %v6682, %v6985
      %6987 = vmatprep.mubr.bf16.mxu0 %v6671
      %6988 = vmatmul.mubr.bf16.gmra.mrb[0].mxu0 %v6670
      %v6989 = vpop.f32.mrb[0].mxu0
      %v6990 = vadd.f32 %v6678, %v6989
      %v6991 = vpop.f32.mrb[0].mxu0
      %v6992 = vadd.f32 %v6682, %v6991
      %v6993 = vpop.f32.mrb[0].mxu0
      %v6994 = vadd.f32 %v6678, %v6993
      %v6995 = vpop.f32.mrb[0].mxu0
      %v6996 = vadd.f32 %v6682, %v6995
      %6997 = vmatprep.mubr.bf16.mxu0 %v6673
      %6998 = vmatmul.mubr.bf16.gmra.mrb[0].mxu0 %v6672
      %v6999 = vpop.f32.mrb[0].mxu0
      %v7000 = vadd.f32 %v6678, %v6999
      %v7001 = vpop.f32.mrb[0].mxu0
      %v7002 = vadd.f32 %v6682, %v7001
      %v7003 = vpop.f32.mrb[0].mxu0
      %v7004 = vpop.f32.mrb[0].mxu0
      %7005 = vdwg.mxu0
      %v7006 = vmax.f32 %v6880, 0.0
      %v7007 = vmax.f32 %v6882, 0.0
      %v7008 = vmax.f32 %v6884, 0.0
      %v7009 = vmax.f32 %v6886, 0.0
      %v7010 = vmax.f32 %v6890, 0.0
      %v7011 = vmax.f32 %v6892, 0.0
      %v7012 = vmax.f32 %v6894, 0.0
      %v7013 = vmax.f32 %v6896, 0.0
      %v7014 = vmax.f32 %v6900, 0.0
      %v7015 = vmax.f32 %v6902, 0.0
      %v7016 = vmax.f32 %v6904, 0.0
      %v7017 = vmax.f32 %v6906, 0.0
      %v7018 = vmax.f32 %v6910, 0.0
      %v7019 = vmax.f32 %v6912, 0.0
      %v7020 = vmax.f32 %v6914, 0.0
      %v7021 = vmax.f32 %v6916, 0.0
      %v7022 = vmax.f32 %v6920, 0.0
      %v7023 = vmax.f32 %v6922, 0.0
      %v7024 = vmax.f32 %v6924, 0.0
      %v7025 = vmax.f32 %v6926, 0.0
      %v7026 = vmax.f32 %v6930, 0.0
      %v7027 = vmax.f32 %v6932, 0.0
      %v7028 = vmax.f32 %v6934, 0.0
      %v7029 = vmax.f32 %v6936, 0.0
      %v7030 = vmax.f32 %v6940, 0.0
      %v7031 = vmax.f32 %v6942, 0.0
      %v7032 = vmax.f32 %v6944, 0.0
      %v7033 = vmax.f32 %v6946, 0.0
      %v7034 = vmax.f32 %v6950, 0.0
      %v7035 = vmax.f32 %v6952, 0.0
      %v7036 = vmax.f32 %v6954, 0.0
      %v7037 = vmax.f32 %v6956, 0.0
      %v7038 = vmax.f32 %v6960, 0.0
      %v7039 = vmax.f32 %v6962, 0.0
      %v7040 = vmax.f32 %v6964, 0.0
      %v7041 = vmax.f32 %v6966, 0.0
      %v7042 = vmax.f32 %v6970, 0.0
      %v7043 = vmax.f32 %v6972, 0.0
      %v7044 = vmax.f32 %v6974, 0.0
      %v7045 = vmax.f32 %v6976, 0.0
      %v7046 = vmax.f32 %v6980, 0.0
      %v7047 = vmax.f32 %v6982, 0.0
      %v7048 = vmax.f32 %v6984, 0.0
      %v7049 = vmax.f32 %v6986, 0.0
      %v7050 = vmax.f32 %v6990, 0.0
      %v7051 = vmax.f32 %v6992, 0.0
      %v7052 = vmax.f32 %v6994, 0.0
      %v7053 = vmax.f32 %v6996, 0.0
      %v7054 = vmax.f32 %v7000, 0.0
      %v7055 = vmax.f32 %v7002, 0.0
      %v7056 = vpack.c.bf16 %v7008, %v7006
      %v7057 = vpack.c.bf16 %v7009, %v7007
      %v7058 = vpack.c.bf16 %v7012, %v7010
      %v7059 = vpack.c.bf16 %v7013, %v7011
      %v7060 = vpack.c.bf16 %v7016, %v7014
      %v7061 = vpack.c.bf16 %v7017, %v7015
      %v7062 = vpack.c.bf16 %v7020, %v7018
      %v7063 = vpack.c.bf16 %v7021, %v7019
      %v7064 = vpack.c.bf16 %v7024, %v7022
      %v7065 = vpack.c.bf16 %v7025, %v7023
      %v7066 = vpack.c.bf16 %v7028, %v7026
      %v7067 = vpack.c.bf16 %v7029, %v7027
      %v7068 = vpack.c.bf16 %v7032, %v7030
      %v7069 = vpack.c.bf16 %v7033, %v7031
      %v7070 = vpack.c.bf16 %v7036, %v7034
      %v7071 = vpack.c.bf16 %v7037, %v7035
      %v7072 = vpack.c.bf16 %v7040, %v7038
      %v7073 = vpack.c.bf16 %v7041, %v7039
      %v7074 = vpack.c.bf16 %v7044, %v7042
      %v7075 = vpack.c.bf16 %v7045, %v7043
      %v7076 = vpack.c.bf16 %v7048, %v7046
      %v7077 = vpack.c.bf16 %v7049, %v7047
      %v7078 = vpack.c.bf16 %v7052, %v7050
      %v7079 = vpack.c.bf16 %v7053, %v7051
      %v7080 = vpack.c.bf16 %v7054, %v7054
      %v7081 = vpack.c.bf16 %v7055, %v7055
      %v7083 = vlaneseq
      %v7084 = vshrl.u32 %v7083, 7
      %v7085 = vsub.s32 0, %v7084
      %v7086 = vrot.slane %v6265, %v7085
      %v7087 = vlaneseq
      %v7088 = vshrl.u32 %v7087, 7
      %v7089 = vsub.s32 1, %v7088
      %v7090 = vrot.slane %v6265, %v7089
      %v7125 = vunpack.c.l.b16 %v6231
      %v7126 = vunpack.c.h.b16 %v6231
      %v7127 = vunpack.c.l.b16 %v6232
      %v7128 = vunpack.c.h.b16 %v6232
      %v7129 = vunpack.c.l.b16 %v6233
      %v7130 = vunpack.c.h.b16 %v6233
      %v7131 = vunpack.c.l.b16 %v6234
      %v7132 = vunpack.c.h.b16 %v6234
      %v7133 = vunpack.c.l.b16 %v6235
      %v7134 = vunpack.c.h.b16 %v6235
      %v7135 = vunpack.c.l.b16 %v6236
      %v7136 = vunpack.c.h.b16 %v6236
      %v7137 = vunpack.c.l.b16 %v6237
      %v7138 = vunpack.c.h.b16 %v6237
      %v7139 = vunpack.c.l.b16 %v6238
      %v7140 = vunpack.c.h.b16 %v6238
      %v7141 = vunpack.c.l.b16 %v6239
      %v7142 = vunpack.c.h.b16 %v6239
      %v7143 = vunpack.c.l.b16 %v6240
      %v7144 = vunpack.c.h.b16 %v6240
      %v7145 = vunpack.c.l.b16 %v6241
      %v7146 = vunpack.c.h.b16 %v6241
      %v7147 = vunpack.c.l.b16 %v6242
      %v7148 = vunpack.c.h.b16 %v6242
      %v7149 = vunpack.c.l.b16 %v6243
      %v7150 = vunpack.c.h.b16 %v6243
      %v7151 = vunpack.c.l.b16 %v6244
      %v7152 = vunpack.c.h.b16 %v6244
      %v7153 = vunpack.c.l.b16 %v6245
      %v7154 = vunpack.c.h.b16 %v6245
      %v7155 = vunpack.c.l.b16 %v6246
      %v7156 = vunpack.c.h.b16 %v6246
      %v7157 = vunpack.c.l.b16 %v6247
      %v7158 = vunpack.c.h.b16 %v6247
      %v7159 = vunpack.c.l.b16 %v6248
      %v7160 = vunpack.c.h.b16 %v6248
      %v7161 = vunpack.c.l.b16 %v6249
      %v7162 = vunpack.c.h.b16 %v6249
      %v7163 = vunpack.c.l.b16 %v6250
      %v7164 = vunpack.c.h.b16 %v6250
      %v7165 = vunpack.c.l.b16 %v6251
      %v7166 = vunpack.c.h.b16 %v6251
      %v7167 = vunpack.c.l.b16 %v6252
      %v7168 = vunpack.c.h.b16 %v6252
      %v7169 = vunpack.c.l.b16 %v6253
      %v7170 = vunpack.c.h.b16 %v6253
      %v7171 = vunpack.c.l.b16 %v6254
      %v7172 = vunpack.c.h.b16 %v6254
      %v7173 = vunpack.c.l.b16 %v6255
      %v7174 = vunpack.c.h.b16 %v6255
      %v7175 = vunpack.c.l.b16 %v6256
      %v7176 = vunpack.c.h.b16 %v6256
      %v7177 = vunpack.c.l.b16 %v6257
      %v7178 = vunpack.c.h.b16 %v6257
      %v7179 = vunpack.c.l.b16 %v6258
      %v7180 = vunpack.c.h.b16 %v6258
      %v7181 = vunpack.c.l.b16 %v6259
      %v7182 = vunpack.c.h.b16 %v6259
      %v7183 = vunpack.c.l.b16 %v6260
      %v7184 = vunpack.c.h.b16 %v6260
      %v7185 = vunpack.c.l.b16 %v6261
      %v7186 = vunpack.c.h.b16 %v6261
      %v7187 = vunpack.c.l.b16 %v6262
      %v7188 = vunpack.c.h.b16 %v6262
      %v7189 = vpack.c.b16 %v7127, %v7125
      %v7190 = vpack.c.b16 %v7128, %v7126
      %v7191 = vpack.c.b16 %v7131, %v7129
      %v7192 = vpack.c.b16 %v7132, %v7130
      %v7193 = vpack.c.b16 %v7135, %v7133
      %v7194 = vpack.c.b16 %v7136, %v7134
      %v7195 = vpack.c.b16 %v7139, %v7137
      %v7196 = vpack.c.b16 %v7140, %v7138
      %v7197 = vpack.c.b16 %v7143, %v7141
      %v7198 = vpack.c.b16 %v7144, %v7142
      %v7199 = vpack.c.b16 %v7147, %v7145
      %v7200 = vpack.c.b16 %v7148, %v7146
      %v7201 = vpack.c.b16 %v7151, %v7149
      %v7202 = vpack.c.b16 %v7152, %v7150
      %v7203 = vpack.c.b16 %v7155, %v7153
      %v7204 = vpack.c.b16 %v7156, %v7154
      %v7205 = vpack.c.b16 %v7159, %v7157
      %v7206 = vpack.c.b16 %v7160, %v7158
      %v7207 = vpack.c.b16 %v7163, %v7161
      %v7208 = vpack.c.b16 %v7164, %v7162
      %v7209 = vpack.c.b16 %v7167, %v7165
      %v7210 = vpack.c.b16 %v7168, %v7166
      %v7211 = vpack.c.b16 %v7171, %v7169
      %v7212 = vpack.c.b16 %v7172, %v7170
      %v7213 = vpack.c.b16 %v7175, %v7173
      %v7214 = vpack.c.b16 %v7176, %v7174
      %v7215 = vpack.c.b16 %v7179, %v7177
      %v7216 = vpack.c.b16 %v7180, %v7178
      %v7217 = vpack.c.b16 %v7183, %v7181
      %v7218 = vpack.c.b16 %v7184, %v7182
      %v7219 = vpack.c.b16 %v7187, %v7185
      %v7220 = vpack.c.b16 %v7188, %v7186
      %7253 = vmatprep.subr.bf16.mxu0 %v7190
      %7254 = vmatpush1.bf16.msra.mxu0 %v7189
      %7255 = vmatprep.subr.bf16.mxu0 %v7192
      %7256 = vmatpush1.bf16.msra.mxu0 %v7191
      %7257 = vmatprep.subr.bf16.mxu0 %v7194
      %7258 = vmatpush1.bf16.msra.mxu0 %v7193
      %7259 = vmatprep.subr.bf16.mxu0 %v7196
      %7260 = vmatpush1.bf16.msra.mxu0 %v7195
      %7261 = vmatprep.subr.bf16.mxu0 %v7198
      %7262 = vmatpush1.bf16.msra.mxu0 %v7197
      %7263 = vmatprep.subr.bf16.mxu0 %v7200
      %7264 = vmatpush1.bf16.msra.mxu0 %v7199
      %7265 = vmatprep.subr.bf16.mxu0 %v7202
      %7266 = vmatpush1.bf16.msra.mxu0 %v7201
      %7267 = vmatprep.subr.bf16.mxu0 %v7204
      %7268 = vmatpush1.bf16.msra.mxu0 %v7203
      %7269 = vmatprep.subr.bf16.mxu0 %v7206
      %7270 = vmatpush1.bf16.msra.mxu0 %v7205
      %7271 = vmatprep.subr.bf16.mxu0 %v7208
      %7272 = vmatpush1.bf16.msra.mxu0 %v7207
      %7273 = vmatprep.subr.bf16.mxu0 %v7210
      %7274 = vmatpush1.bf16.msra.mxu0 %v7209
      %7275 = vmatprep.subr.bf16.mxu0 %v7212
      %7276 = vmatpush1.bf16.msra.mxu0 %v7211
      %7277 = vmatprep.subr.bf16.mxu0 %v7214
      %7278 = vmatpush1.bf16.msra.mxu0 %v7213
      %7279 = vmatprep.subr.bf16.mxu0 %v7216
      %7280 = vmatpush1.bf16.msra.mxu0 %v7215
      %7281 = vmatprep.subr.bf16.mxu0 %v7218
      %7282 = vmatpush1.bf16.msra.mxu0 %v7217
      %7283 = vmatprep.subr.bf16.mxu0 %v7220
      %7284 = vmatpush1.bf16.msra.mxu0 %v7219
      %7285 = vmatprep.mubr.bf16.mxu0 %v7057
      %7286 = vmatmul.mubr.bf16.gmra.mrb[0].mxu0 %v7056
      %v7287 = vpop.f32.mrb[0].mxu0
      %v7288 = vadd.f32 %v7086, %v7287
      %v7289 = vpop.f32.mrb[0].mxu0
      %v7290 = vadd.f32 %v7090, %v7289
      %v7291 = vpop.f32.mrb[0].mxu0
      %v7292 = vadd.f32 %v7086, %v7291
      %v7293 = vpop.f32.mrb[0].mxu0
      %v7294 = vadd.f32 %v7090, %v7293
      %7295 = vmatprep.mubr.bf16.mxu0 %v7059
      %7296 = vmatmul.mubr.bf16.gmra.mrb[0].mxu0 %v7058
      %v7297 = vpop.f32.mrb[0].mxu0
      %v7298 = vadd.f32 %v7086, %v7297
      %v7299 = vpop.f32.mrb[0].mxu0
      %v7300 = vadd.f32 %v7090, %v7299
      %v7301 = vpop.f32.mrb[0].mxu0
      %v7302 = vadd.f32 %v7086, %v7301
      %v7303 = vpop.f32.mrb[0].mxu0
      %v7304 = vadd.f32 %v7090, %v7303
      %7305 = vmatprep.mubr.bf16.mxu0 %v7061
      %7306 = vmatmul.mubr.bf16.gmra.mrb[0].mxu0 %v7060
      %v7307 = vpop.f32.mrb[0].mxu0
      %v7308 = vadd.f32 %v7086, %v7307
      %v7309 = vpop.f32.mrb[0].mxu0
      %v7310 = vadd.f32 %v7090, %v7309
      %v7311 = vpop.f32.mrb[0].mxu0
      %v7312 = vadd.f32 %v7086, %v7311
      %v7313 = vpop.f32.mrb[0].mxu0
      %v7314 = vadd.f32 %v7090, %v7313
      %7315 = vmatprep.mubr.bf16.mxu0 %v7063
      %7316 = vmatmul.mubr.bf16.gmra.mrb[0].mxu0 %v7062
      %v7317 = vpop.f32.mrb[0].mxu0
      %v7318 = vadd.f32 %v7086, %v7317
      %v7319 = vpop.f32.mrb[0].mxu0
      %v7320 = vadd.f32 %v7090, %v7319
      %v7321 = vpop.f32.mrb[0].mxu0
      %v7322 = vadd.f32 %v7086, %v7321
      %v7323 = vpop.f32.mrb[0].mxu0
      %v7324 = vadd.f32 %v7090, %v7323
      %7325 = vmatprep.mubr.bf16.mxu0 %v7065
      %7326 = vmatmul.mubr.bf16.gmra.mrb[0].mxu0 %v7064
      %v7327 = vpop.f32.mrb[0].mxu0
      %v7328 = vadd.f32 %v7086, %v7327
      %v7329 = vpop.f32.mrb[0].mxu0
      %v7330 = vadd.f32 %v7090, %v7329
      %v7331 = vpop.f32.mrb[0].mxu0
      %v7332 = vadd.f32 %v7086, %v7331
      %v7333 = vpop.f32.mrb[0].mxu0
      %v7334 = vadd.f32 %v7090, %v7333
      %7335 = vmatprep.mubr.bf16.mxu0 %v7067
      %7336 = vmatmul.mubr.bf16.gmra.mrb[0].mxu0 %v7066
      %v7337 = vpop.f32.mrb[0].mxu0
      %v7338 = vadd.f32 %v7086, %v7337
      %v7339 = vpop.f32.mrb[0].mxu0
      %v7340 = vadd.f32 %v7090, %v7339
      %v7341 = vpop.f32.mrb[0].mxu0
      %v7342 = vadd.f32 %v7086, %v7341
      %v7343 = vpop.f32.mrb[0].mxu0
      %v7344 = vadd.f32 %v7090, %v7343
      %7345 = vmatprep.mubr.bf16.mxu0 %v7069
      %7346 = vmatmul.mubr.bf16.gmra.mrb[0].mxu0 %v7068
      %v7347 = vpop.f32.mrb[0].mxu0
      %v7348 = vadd.f32 %v7086, %v7347
      %v7349 = vpop.f32.mrb[0].mxu0
      %v7350 = vadd.f32 %v7090, %v7349
      %v7351 = vpop.f32.mrb[0].mxu0
      %v7352 = vadd.f32 %v7086, %v7351
      %v7353 = vpop.f32.mrb[0].mxu0
      %v7354 = vadd.f32 %v7090, %v7353
      %7355 = vmatprep.mubr.bf16.mxu0 %v7071
      %7356 = vmatmul.mubr.bf16.gmra.mrb[0].mxu0 %v7070
      %v7357 = vpop.f32.mrb[0].mxu0
      %v7358 = vadd.f32 %v7086, %v7357
      %v7359 = vpop.f32.mrb[0].mxu0
      %v7360 = vadd.f32 %v7090, %v7359
      %v7361 = vpop.f32.mrb[0].mxu0
      %v7362 = vadd.f32 %v7086, %v7361
      %v7363 = vpop.f32.mrb[0].mxu0
      %v7364 = vadd.f32 %v7090, %v7363
      %7365 = vmatprep.mubr.bf16.mxu0 %v7073
      %7366 = vmatmul.mubr.bf16.gmra.mrb[0].mxu0 %v7072
      %v7367 = vpop.f32.mrb[0].mxu0
      %v7368 = vadd.f32 %v7086, %v7367
      %v7369 = vpop.f32.mrb[0].mxu0
      %v7370 = vadd.f32 %v7090, %v7369
      %v7371 = vpop.f32.mrb[0].mxu0
      %v7372 = vadd.f32 %v7086, %v7371
      %v7373 = vpop.f32.mrb[0].mxu0
      %v7374 = vadd.f32 %v7090, %v7373
      %7375 = vmatprep.mubr.bf16.mxu0 %v7075
      %7376 = vmatmul.mubr.bf16.gmra.mrb[0].mxu0 %v7074
      %v7377 = vpop.f32.mrb[0].mxu0
      %v7378 = vadd.f32 %v7086, %v7377
      %v7379 = vpop.f32.mrb[0].mxu0
      %v7380 = vadd.f32 %v7090, %v7379
      %v7381 = vpop.f32.mrb[0].mxu0
      %v7382 = vadd.f32 %v7086, %v7381
      %v7383 = vpop.f32.mrb[0].mxu0
      %v7384 = vadd.f32 %v7090, %v7383
      %7385 = vmatprep.mubr.bf16.mxu0 %v7077
      %7386 = vmatmul.mubr.bf16.gmra.mrb[0].mxu0 %v7076
      %v7387 = vpop.f32.mrb[0].mxu0
      %v7388 = vadd.f32 %v7086, %v7387
      %v7389 = vpop.f32.mrb[0].mxu0
      %v7390 = vadd.f32 %v7090, %v7389
      %v7391 = vpop.f32.mrb[0].mxu0
      %v7392 = vadd.f32 %v7086, %v7391
      %v7393 = vpop.f32.mrb[0].mxu0
      %v7394 = vadd.f32 %v7090, %v7393
      %7395 = vmatprep.mubr.bf16.mxu0 %v7079
      %7396 = vmatmul.mubr.bf16.gmra.mrb[0].mxu0 %v7078
      %v7397 = vpop.f32.mrb[0].mxu0
      %v7398 = vadd.f32 %v7086, %v7397
      %v7399 = vpop.f32.mrb[0].mxu0
      %v7400 = vadd.f32 %v7090, %v7399
      %v7401 = vpop.f32.mrb[0].mxu0
      %v7402 = vadd.f32 %v7086, %v7401
      %v7403 = vpop.f32.mrb[0].mxu0
      %v7404 = vadd.f32 %v7090, %v7403
      %7405 = vmatprep.mubr.bf16.mxu0 %v7081
      %7406 = vmatmul.mubr.bf16.gmra.mrb[0].mxu0 %v7080
      %v7407 = vpop.f32.mrb[0].mxu0
      %v7408 = vadd.f32 %v7086, %v7407
      %v7409 = vpop.f32.mrb[0].mxu0
      %v7410 = vadd.f32 %v7090, %v7409
      %v7411 = vpop.f32.mrb[0].mxu0
      %v7412 = vpop.f32.mrb[0].mxu0
      %7413 = vdwg.mxu0
      %7414 = vmatprep.subr.bf16.mxu0 %v6374
      %7415 = vmatpush1.bf16.msra.mxu0 %v6373
      %7416 = vmatprep.subr.bf16.mxu0 %v6376
      %7417 = vmatpush1.bf16.msra.mxu0 %v6375
      %7418 = vmatprep.subr.bf16.mxu0 %v6378
      %7419 = vmatpush1.bf16.msra.mxu0 %v6377
      %7420 = vmatprep.subr.bf16.mxu0 %v6380
      %7421 = vmatpush1.bf16.msra.mxu0 %v6379
      %7422 = vmatprep.subr.bf16.mxu0 %v6382
      %7423 = vmatpush1.bf16.msra.mxu0 %v6381
      %7424 = vmatprep.subr.bf16.mxu0 %v6384
      %7425 = vmatpush1.bf16.msra.mxu0 %v6383
      %7426 = vmatprep.subr.bf16.mxu0 %v6386
      %7427 = vmatpush1.bf16.msra.mxu0 %v6385
      %7428 = vmatprep.subr.bf16.mxu0 %v6388
      %7429 = vmatpush1.bf16.msra.mxu0 %v6387
      %7430 = vmatprep.subr.bf16.mxu0 %v6390
      %7431 = vmatpush1.bf16.msra.mxu0 %v6389
      %7432 = vmatprep.subr.bf16.mxu0 %v6392
      %7433 = vmatpush1.bf16.msra.mxu0 %v6391
      %7434 = vmatprep.subr.bf16.mxu0 %v6394
      %7435 = vmatpush1.bf16.msra.mxu0 %v6393
      %7436 = vmatprep.subr.bf16.mxu0 %v6396
      %7437 = vmatpush1.bf16.msra.mxu0 %v6395
      %7438 = vmatprep.subr.bf16.mxu0 %v6398
      %7439 = vmatpush1.bf16.msra.mxu0 %v6397
      %7440 = vmatprep.subr.bf16.mxu0 %v6400
      %7441 = vmatpush1.bf16.msra.mxu0 %v6399
      %7442 = vmatprep.subr.bf16.mxu0 %v6402
      %7443 = vmatpush1.bf16.msra.mxu0 %v6401
      %7444 = vmatprep.subr.bf16.mxu0 %v6404
      %7445 = vmatpush1.bf16.msra.mxu0 %v6403
      %7446 = vmatprep.mubr.bf16.mxu0 %v6066
      %7447 = vmatmul.mubr.bf16.gmra.mrb[0].mxu0 %v6065
      %v7448 = vpop.f32.mrb[0].mxu0
      %v7449 = vadd.f32 %v6270, %v7448
      %v7450 = vpop.f32.mrb[0].mxu0
      %v7451 = vadd.f32 %v6274, %v7450
      %v7452 = vpop.f32.mrb[0].mxu0
      %v7453 = vadd.f32 %v6270, %v7452
      %v7454 = vpop.f32.mrb[0].mxu0
      %v7455 = vadd.f32 %v6274, %v7454
      %7456 = vmatprep.mubr.bf16.mxu0 %v6074
      %7457 = vmatmul.mubr.bf16.gmra.mrb[0].mxu0 %v6073
      %v7458 = vpop.f32.mrb[0].mxu0
      %v7459 = vadd.f32 %v6270, %v7458
      %v7460 = vpop.f32.mrb[0].mxu0
      %v7461 = vadd.f32 %v6274, %v7460
      %v7462 = vpop.f32.mrb[0].mxu0
      %v7463 = vadd.f32 %v6270, %v7462
      %v7464 = vpop.f32.mrb[0].mxu0
      %v7465 = vadd.f32 %v6274, %v7464
      %7466 = vmatprep.mubr.bf16.mxu0 %v6082
      %7467 = vmatmul.mubr.bf16.gmra.mrb[0].mxu0 %v6081
      %v7468 = vpop.f32.mrb[0].mxu0
      %v7469 = vadd.f32 %v6270, %v7468
      %v7470 = vpop.f32.mrb[0].mxu0
      %v7471 = vadd.f32 %v6274, %v7470
      %v7472 = vpop.f32.mrb[0].mxu0
      %v7473 = vadd.f32 %v6270, %v7472
      %v7474 = vpop.f32.mrb[0].mxu0
      %v7475 = vadd.f32 %v6274, %v7474
      %7476 = vmatprep.mubr.bf16.mxu0 %v6090
      %7477 = vmatmul.mubr.bf16.gmra.mrb[0].mxu0 %v6089
      %v7478 = vpop.f32.mrb[0].mxu0
      %v7479 = vadd.f32 %v6270, %v7478
      %v7480 = vpop.f32.mrb[0].mxu0
      %v7481 = vadd.f32 %v6274, %v7480
      %v7482 = vpop.f32.mrb[0].mxu0
      %v7483 = vadd.f32 %v6270, %v7482
      %v7484 = vpop.f32.mrb[0].mxu0
      %v7485 = vadd.f32 %v6274, %v7484
      %7486 = vmatprep.mubr.bf16.mxu0 %v6098
      %7487 = vmatmul.mubr.bf16.gmra.mrb[0].mxu0 %v6097
      %v7488 = vpop.f32.mrb[0].mxu0
      %v7489 = vadd.f32 %v6270, %v7488
      %v7490 = vpop.f32.mrb[0].mxu0
      %v7491 = vadd.f32 %v6274, %v7490
      %v7492 = vpop.f32.mrb[0].mxu0
      %v7493 = vadd.f32 %v6270, %v7492
      %v7494 = vpop.f32.mrb[0].mxu0
      %v7495 = vadd.f32 %v6274, %v7494
      %7496 = vmatprep.mubr.bf16.mxu0 %v6106
      %7497 = vmatmul.mubr.bf16.gmra.mrb[0].mxu0 %v6105
      %v7498 = vpop.f32.mrb[0].mxu0
      %v7499 = vadd.f32 %v6270, %v7498
      %v7500 = vpop.f32.mrb[0].mxu0
      %v7501 = vadd.f32 %v6274, %v7500
      %v7502 = vpop.f32.mrb[0].mxu0
      %v7503 = vadd.f32 %v6270, %v7502
      %v7504 = vpop.f32.mrb[0].mxu0
      %v7505 = vadd.f32 %v6274, %v7504
      %7506 = vmatprep.mubr.bf16.mxu0 %v6114
      %7507 = vmatmul.mubr.bf16.gmra.mrb[0].mxu0 %v6113
      %v7508 = vpop.f32.mrb[0].mxu0
      %v7509 = vadd.f32 %v6270, %v7508
      %v7510 = vpop.f32.mrb[0].mxu0
      %v7511 = vadd.f32 %v6274, %v7510
      %v7512 = vpop.f32.mrb[0].mxu0
      %v7513 = vadd.f32 %v6270, %v7512
      %v7514 = vpop.f32.mrb[0].mxu0
      %v7515 = vadd.f32 %v6274, %v7514
      %7516 = vmatprep.mubr.bf16.mxu0 %v6122
      %7517 = vmatmul.mubr.bf16.gmra.mrb[0].mxu0 %v6121
      %v7518 = vpop.f32.mrb[0].mxu0
      %v7519 = vadd.f32 %v6270, %v7518
      %v7520 = vpop.f32.mrb[0].mxu0
      %v7521 = vadd.f32 %v6274, %v7520
      %v7522 = vpop.f32.mrb[0].mxu0
      %v7523 = vadd.f32 %v6270, %v7522
      %v7524 = vpop.f32.mrb[0].mxu0
      %v7525 = vadd.f32 %v6274, %v7524
      %7526 = vmatprep.mubr.bf16.mxu0 %v6130
      %7527 = vmatmul.mubr.bf16.gmra.mrb[0].mxu0 %v6129
      %v7528 = vpop.f32.mrb[0].mxu0
      %v7529 = vadd.f32 %v6270, %v7528
      %v7530 = vpop.f32.mrb[0].mxu0
      %v7531 = vadd.f32 %v6274, %v7530
      %v7532 = vpop.f32.mrb[0].mxu0
      %v7533 = vadd.f32 %v6270, %v7532
      %v7534 = vpop.f32.mrb[0].mxu0
      %v7535 = vadd.f32 %v6274, %v7534
      %7536 = vmatprep.mubr.bf16.mxu0 %v6138
      %7537 = vmatmul.mubr.bf16.gmra.mrb[0].mxu0 %v6137
      %v7538 = vpop.f32.mrb[0].mxu0
      %v7539 = vadd.f32 %v6270, %v7538
      %v7540 = vpop.f32.mrb[0].mxu0
      %v7541 = vadd.f32 %v6274, %v7540
      %v7542 = vpop.f32.mrb[0].mxu0
      %v7543 = vadd.f32 %v6270, %v7542
      %v7544 = vpop.f32.mrb[0].mxu0
      %v7545 = vadd.f32 %v6274, %v7544
      %7546 = vmatprep.mubr.bf16.mxu0 %v6146
      %7547 = vmatmul.mubr.bf16.gmra.mrb[0].mxu0 %v6145
      %v7548 = vpop.f32.mrb[0].mxu0
      %v7549 = vadd.f32 %v6270, %v7548
      %v7550 = vpop.f32.mrb[0].mxu0
      %v7551 = vadd.f32 %v6274, %v7550
      %v7552 = vpop.f32.mrb[0].mxu0
      %v7553 = vadd.f32 %v6270, %v7552
      %v7554 = vpop.f32.mrb[0].mxu0
      %v7555 = vadd.f32 %v6274, %v7554
      %7556 = vmatprep.mubr.bf16.mxu0 %v6154
      %7557 = vmatmul.mubr.bf16.gmra.mrb[0].mxu0 %v6153
      %v7558 = vpop.f32.mrb[0].mxu0
      %v7559 = vadd.f32 %v6270, %v7558
      %v7560 = vpop.f32.mrb[0].mxu0
      %v7561 = vadd.f32 %v6274, %v7560
      %v7562 = vpop.f32.mrb[0].mxu0
      %v7563 = vadd.f32 %v6270, %v7562
      %v7564 = vpop.f32.mrb[0].mxu0
      %v7565 = vadd.f32 %v6274, %v7564
      %7566 = vmatprep.mubr.bf16.mxu0 %v6162
      %7567 = vmatmul.mubr.bf16.gmra.mrb[0].mxu0 %v6161
      %v7568 = vpop.f32.mrb[0].mxu0
      %v7569 = vadd.f32 %v6270, %v7568
      %v7570 = vpop.f32.mrb[0].mxu0
      %v7571 = vadd.f32 %v6274, %v7570
      %v7572 = vpop.f32.mrb[0].mxu0
      %v7573 = vpop.f32.mrb[0].mxu0
      %7574 = vdwg.mxu0
      %v7575 = vmax.f32 %v7449, 0.0
      %v7576 = vmax.f32 %v7451, 0.0
      %v7577 = vmax.f32 %v7453, 0.0
      %v7578 = vmax.f32 %v7455, 0.0
      %v7579 = vmax.f32 %v7459, 0.0
      %v7580 = vmax.f32 %v7461, 0.0
      %v7581 = vmax.f32 %v7463, 0.0
      %v7582 = vmax.f32 %v7465, 0.0
      %v7583 = vmax.f32 %v7469, 0.0
      %v7584 = vmax.f32 %v7471, 0.0
      %v7585 = vmax.f32 %v7473, 0.0
      %v7586 = vmax.f32 %v7475, 0.0
      %v7587 = vmax.f32 %v7479, 0.0
      %v7588 = vmax.f32 %v7481, 0.0
      %v7589 = vmax.f32 %v7483, 0.0
      %v7590 = vmax.f32 %v7485, 0.0
      %v7591 = vmax.f32 %v7489, 0.0
      %v7592 = vmax.f32 %v7491, 0.0
      %v7593 = vmax.f32 %v7493, 0.0
      %v7594 = vmax.f32 %v7495, 0.0
      %v7595 = vmax.f32 %v7499, 0.0
      %v7596 = vmax.f32 %v7501, 0.0
      %v7597 = vmax.f32 %v7503, 0.0
      %v7598 = vmax.f32 %v7505, 0.0
      %v7599 = vmax.f32 %v7509, 0.0
      %v7600 = vmax.f32 %v7511, 0.0
      %v7601 = vmax.f32 %v7513, 0.0
      %v7602 = vmax.f32 %v7515, 0.0
      %v7603 = vmax.f32 %v7519, 0.0
      %v7604 = vmax.f32 %v7521, 0.0
      %v7605 = vmax.f32 %v7523, 0.0
      %v7606 = vmax.f32 %v7525, 0.0
      %v7607 = vmax.f32 %v7529, 0.0
      %v7608 = vmax.f32 %v7531, 0.0
      %v7609 = vmax.f32 %v7533, 0.0
      %v7610 = vmax.f32 %v7535, 0.0
      %v7611 = vmax.f32 %v7539, 0.0
      %v7612 = vmax.f32 %v7541, 0.0
      %v7613 = vmax.f32 %v7543, 0.0
      %v7614 = vmax.f32 %v7545, 0.0
      %v7615 = vmax.f32 %v7549, 0.0
      %v7616 = vmax.f32 %v7551, 0.0
      %v7617 = vmax.f32 %v7553, 0.0
      %v7618 = vmax.f32 %v7555, 0.0
      %v7619 = vmax.f32 %v7559, 0.0
      %v7620 = vmax.f32 %v7561, 0.0
      %v7621 = vmax.f32 %v7563, 0.0
      %v7622 = vmax.f32 %v7565, 0.0
      %v7623 = vmax.f32 %v7569, 0.0
      %v7624 = vmax.f32 %v7571, 0.0
      %v7625 = vpack.c.bf16 %v7577, %v7575
      %v7626 = vpack.c.bf16 %v7578, %v7576
      %v7627 = vpack.c.bf16 %v7581, %v7579
      %v7628 = vpack.c.bf16 %v7582, %v7580
      %v7629 = vpack.c.bf16 %v7585, %v7583
      %v7630 = vpack.c.bf16 %v7586, %v7584
      %v7631 = vpack.c.bf16 %v7589, %v7587
      %v7632 = vpack.c.bf16 %v7590, %v7588
      %v7633 = vpack.c.bf16 %v7593, %v7591
      %v7634 = vpack.c.bf16 %v7594, %v7592
      %v7635 = vpack.c.bf16 %v7597, %v7595
      %v7636 = vpack.c.bf16 %v7598, %v7596
      %v7637 = vpack.c.bf16 %v7601, %v7599
      %v7638 = vpack.c.bf16 %v7602, %v7600
      %v7639 = vpack.c.bf16 %v7605, %v7603
      %v7640 = vpack.c.bf16 %v7606, %v7604
      %v7641 = vpack.c.bf16 %v7609, %v7607
      %v7642 = vpack.c.bf16 %v7610, %v7608
      %v7643 = vpack.c.bf16 %v7613, %v7611
      %v7644 = vpack.c.bf16 %v7614, %v7612
      %v7645 = vpack.c.bf16 %v7617, %v7615
      %v7646 = vpack.c.bf16 %v7618, %v7616
      %v7647 = vpack.c.bf16 %v7621, %v7619
      %v7648 = vpack.c.bf16 %v7622, %v7620
      %v7649 = vpack.c.bf16 %v7623, %v7623
      %v7650 = vpack.c.bf16 %v7624, %v7624
      %7651 = vmatprep.subr.bf16.mxu0 %v6782
      %7652 = vmatpush1.bf16.msra.mxu0 %v6781
      %7653 = vmatprep.subr.bf16.mxu0 %v6784
      %7654 = vmatpush1.bf16.msra.mxu0 %v6783
      %7655 = vmatprep.subr.bf16.mxu0 %v6786
      %7656 = vmatpush1.bf16.msra.mxu0 %v6785
      %7657 = vmatprep.subr.bf16.mxu0 %v6788
      %7658 = vmatpush1.bf16.msra.mxu0 %v6787
      %7659 = vmatprep.subr.bf16.mxu0 %v6790
      %7660 = vmatpush1.bf16.msra.mxu0 %v6789
      %7661 = vmatprep.subr.bf16.mxu0 %v6792
      %7662 = vmatpush1.bf16.msra.mxu0 %v6791
      %7663 = vmatprep.subr.bf16.mxu0 %v6794
      %7664 = vmatpush1.bf16.msra.mxu0 %v6793
      %7665 = vmatprep.subr.bf16.mxu0 %v6796
      %7666 = vmatpush1.bf16.msra.mxu0 %v6795
      %7667 = vmatprep.subr.bf16.mxu0 %v6798
      %7668 = vmatpush1.bf16.msra.mxu0 %v6797
      %7669 = vmatprep.subr.bf16.mxu0 %v6800
      %7670 = vmatpush1.bf16.msra.mxu0 %v6799
      %7671 = vmatprep.subr.bf16.mxu0 %v6802
      %7672 = vmatpush1.bf16.msra.mxu0 %v6801
      %7673 = vmatprep.subr.bf16.mxu0 %v6804
      %7674 = vmatpush1.bf16.msra.mxu0 %v6803
      %7675 = vmatprep.subr.bf16.mxu0 %v6806
      %7676 = vmatpush1.bf16.msra.mxu0 %v6805
      %7677 = vmatprep.subr.bf16.mxu0 %v6808
      %7678 = vmatpush1.bf16.msra.mxu0 %v6807
      %7679 = vmatprep.subr.bf16.mxu0 %v6810
      %7680 = vmatpush1.bf16.msra.mxu0 %v6809
      %7681 = vmatprep.subr.bf16.mxu0 %v6812
      %7682 = vmatpush1.bf16.msra.mxu0 %v6811
      %7683 = vmatprep.mubr.bf16.mxu0 %v7626
      %7684 = vmatmul.mubr.bf16.gmra.mrb[0].mxu0 %v7625
      %v7685 = vpop.f32.mrb[0].mxu0
      %v7686 = vadd.f32 %v6678, %v7685
      %v7687 = vpop.f32.mrb[0].mxu0
      %v7688 = vadd.f32 %v6682, %v7687
      %v7689 = vpop.f32.mrb[0].mxu0
      %v7690 = vadd.f32 %v6678, %v7689
      %v7691 = vpop.f32.mrb[0].mxu0
      %v7692 = vadd.f32 %v6682, %v7691
      %7693 = vmatprep.mubr.bf16.mxu0 %v7628
      %7694 = vmatmul.mubr.bf16.gmra.mrb[0].mxu0 %v7627
      %v7695 = vpop.f32.mrb[0].mxu0
      %v7696 = vadd.f32 %v6678, %v7695
      %v7697 = vpop.f32.mrb[0].mxu0
      %v7698 = vadd.f32 %v6682, %v7697
      %v7699 = vpop.f32.mrb[0].mxu0
      %v7700 = vadd.f32 %v6678, %v7699
      %v7701 = vpop.f32.mrb[0].mxu0
      %v7702 = vadd.f32 %v6682, %v7701
      %7703 = vmatprep.mubr.bf16.mxu0 %v7630
      %7704 = vmatmul.mubr.bf16.gmra.mrb[0].mxu0 %v7629
      %v7705 = vpop.f32.mrb[0].mxu0
      %v7706 = vadd.f32 %v6678, %v7705
      %v7707 = vpop.f32.mrb[0].mxu0
      %v7708 = vadd.f32 %v6682, %v7707
      %v7709 = vpop.f32.mrb[0].mxu0
      %v7710 = vadd.f32 %v6678, %v7709
      %v7711 = vpop.f32.mrb[0].mxu0
      %v7712 = vadd.f32 %v6682, %v7711
      %7713 = vmatprep.mubr.bf16.mxu0 %v7632
      %7714 = vmatmul.mubr.bf16.gmra.mrb[0].mxu0 %v7631
      %v7715 = vpop.f32.mrb[0].mxu0
      %v7716 = vadd.f32 %v6678, %v7715
      %v7717 = vpop.f32.mrb[0].mxu0
      %v7718 = vadd.f32 %v6682, %v7717
      %v7719 = vpop.f32.mrb[0].mxu0
      %v7720 = vadd.f32 %v6678, %v7719
      %v7721 = vpop.f32.mrb[0].mxu0
      %v7722 = vadd.f32 %v6682, %v7721
      %7723 = vmatprep.mubr.bf16.mxu0 %v7634
      %7724 = vmatmul.mubr.bf16.gmra.mrb[0].mxu0 %v7633
      %v7725 = vpop.f32.mrb[0].mxu0
      %v7726 = vadd.f32 %v6678, %v7725
      %v7727 = vpop.f32.mrb[0].mxu0
      %v7728 = vadd.f32 %v6682, %v7727
      %v7729 = vpop.f32.mrb[0].mxu0
      %v7730 = vadd.f32 %v6678, %v7729
      %v7731 = vpop.f32.mrb[0].mxu0
      %v7732 = vadd.f32 %v6682, %v7731
      %7733 = vmatprep.mubr.bf16.mxu0 %v7636
      %7734 = vmatmul.mubr.bf16.gmra.mrb[0].mxu0 %v7635
      %v7735 = vpop.f32.mrb[0].mxu0
      %v7736 = vadd.f32 %v6678, %v7735
      %v7737 = vpop.f32.mrb[0].mxu0
      %v7738 = vadd.f32 %v6682, %v7737
      %v7739 = vpop.f32.mrb[0].mxu0
      %v7740 = vadd.f32 %v6678, %v7739
      %v7741 = vpop.f32.mrb[0].mxu0
      %v7742 = vadd.f32 %v6682, %v7741
      %7743 = vmatprep.mubr.bf16.mxu0 %v7638
      %7744 = vmatmul.mubr.bf16.gmra.mrb[0].mxu0 %v7637
      %v7745 = vpop.f32.mrb[0].mxu0
      %v7746 = vadd.f32 %v6678, %v7745
      %v7747 = vpop.f32.mrb[0].mxu0
      %v7748 = vadd.f32 %v6682, %v7747
      %v7749 = vpop.f32.mrb[0].mxu0
      %v7750 = vadd.f32 %v6678, %v7749
      %v7751 = vpop.f32.mrb[0].mxu0
      %v7752 = vadd.f32 %v6682, %v7751
      %7753 = vmatprep.mubr.bf16.mxu0 %v7640
      %7754 = vmatmul.mubr.bf16.gmra.mrb[0].mxu0 %v7639
      %v7755 = vpop.f32.mrb[0].mxu0
      %v7756 = vadd.f32 %v6678, %v7755
      %v7757 = vpop.f32.mrb[0].mxu0
      %v7758 = vadd.f32 %v6682, %v7757
      %v7759 = vpop.f32.mrb[0].mxu0
      %v7760 = vadd.f32 %v6678, %v7759
      %v7761 = vpop.f32.mrb[0].mxu0
      %v7762 = vadd.f32 %v6682, %v7761
      %7763 = vmatprep.mubr.bf16.mxu0 %v7642
      %7764 = vmatmul.mubr.bf16.gmra.mrb[0].mxu0 %v7641
      %v7765 = vpop.f32.mrb[0].mxu0
      %v7766 = vadd.f32 %v6678, %v7765
      %v7767 = vpop.f32.mrb[0].mxu0
      %v7768 = vadd.f32 %v6682, %v7767
      %v7769 = vpop.f32.mrb[0].mxu0
      %v7770 = vadd.f32 %v6678, %v7769
      %v7771 = vpop.f32.mrb[0].mxu0
      %v7772 = vadd.f32 %v6682, %v7771
      %7773 = vmatprep.mubr.bf16.mxu0 %v7644
      %7774 = vmatmul.mubr.bf16.gmra.mrb[0].mxu0 %v7643
      %v7775 = vpop.f32.mrb[0].mxu0
      %v7776 = vadd.f32 %v6678, %v7775
      %v7777 = vpop.f32.mrb[0].mxu0
      %v7778 = vadd.f32 %v6682, %v7777
      %v7779 = vpop.f32.mrb[0].mxu0
      %v7780 = vadd.f32 %v6678, %v7779
      %v7781 = vpop.f32.mrb[0].mxu0
      %v7782 = vadd.f32 %v6682, %v7781
      %7783 = vmatprep.mubr.bf16.mxu0 %v7646
      %7784 = vmatmul.mubr.bf16.gmra.mrb[0].mxu0 %v7645
      %v7785 = vpop.f32.mrb[0].mxu0
      %v7786 = vadd.f32 %v6678, %v7785
      %v7787 = vpop.f32.mrb[0].mxu0
      %v7788 = vadd.f32 %v6682, %v7787
      %v7789 = vpop.f32.mrb[0].mxu0
      %v7790 = vadd.f32 %v6678, %v7789
      %v7791 = vpop.f32.mrb[0].mxu0
      %v7792 = vadd.f32 %v6682, %v7791
      %7793 = vmatprep.mubr.bf16.mxu0 %v7648
      %7794 = vmatmul.mubr.bf16.gmra.mrb[0].mxu0 %v7647
      %v7795 = vpop.f32.mrb[0].mxu0
      %v7796 = vadd.f32 %v6678, %v7795
      %v7797 = vpop.f32.mrb[0].mxu0
      %v7798 = vadd.f32 %v6682, %v7797
      %v7799 = vpop.f32.mrb[0].mxu0
      %v7800 = vadd.f32 %v6678, %v7799
      %v7801 = vpop.f32.mrb[0].mxu0
      %v7802 = vadd.f32 %v6682, %v7801
      %7803 = vmatprep.mubr.bf16.mxu0 %v7650
      %7804 = vmatmul.mubr.bf16.gmra.mrb[0].mxu0 %v7649
      %v7805 = vpop.f32.mrb[0].mxu0
      %v7806 = vadd.f32 %v6678, %v7805
      %v7807 = vpop.f32.mrb[0].mxu0
      %v7808 = vadd.f32 %v6682, %v7807
      %v7809 = vpop.f32.mrb[0].mxu0
      %v7810 = vpop.f32.mrb[0].mxu0
      %7811 = vdwg.mxu0
      %v7812 = vmax.f32 %v7686, 0.0
      %v7813 = vmax.f32 %v7688, 0.0
      %v7814 = vmax.f32 %v7690, 0.0
      %v7815 = vmax.f32 %v7692, 0.0
      %v7816 = vmax.f32 %v7696, 0.0
      %v7817 = vmax.f32 %v7698, 0.0
      %v7818 = vmax.f32 %v7700, 0.0
      %v7819 = vmax.f32 %v7702, 0.0
      %v7820 = vmax.f32 %v7706, 0.0
      %v7821 = vmax.f32 %v7708, 0.0
      %v7822 = vmax.f32 %v7710, 0.0
      %v7823 = vmax.f32 %v7712, 0.0
      %v7824 = vmax.f32 %v7716, 0.0
      %v7825 = vmax.f32 %v7718, 0.0
      %v7826 = vmax.f32 %v7720, 0.0
      %v7827 = vmax.f32 %v7722, 0.0
      %v7828 = vmax.f32 %v7726, 0.0
      %v7829 = vmax.f32 %v7728, 0.0
      %v7830 = vmax.f32 %v7730, 0.0
      %v7831 = vmax.f32 %v7732, 0.0
      %v7832 = vmax.f32 %v7736, 0.0
      %v7833 = vmax.f32 %v7738, 0.0
      %v7834 = vmax.f32 %v7740, 0.0
      %v7835 = vmax.f32 %v7742, 0.0
      %v7836 = vmax.f32 %v7746, 0.0
      %v7837 = vmax.f32 %v7748, 0.0
      %v7838 = vmax.f32 %v7750, 0.0
      %v7839 = vmax.f32 %v7752, 0.0
      %v7840 = vmax.f32 %v7756, 0.0
      %v7841 = vmax.f32 %v7758, 0.0
      %v7842 = vmax.f32 %v7760, 0.0
      %v7843 = vmax.f32 %v7762, 0.0
      %v7844 = vmax.f32 %v7766, 0.0
      %v7845 = vmax.f32 %v7768, 0.0
      %v7846 = vmax.f32 %v7770, 0.0
      %v7847 = vmax.f32 %v7772, 0.0
      %v7848 = vmax.f32 %v7776, 0.0
      %v7849 = vmax.f32 %v7778, 0.0
      %v7850 = vmax.f32 %v7780, 0.0
      %v7851 = vmax.f32 %v7782, 0.0
      %v7852 = vmax.f32 %v7786, 0.0
      %v7853 = vmax.f32 %v7788, 0.0
      %v7854 = vmax.f32 %v7790, 0.0
      %v7855 = vmax.f32 %v7792, 0.0
      %v7856 = vmax.f32 %v7796, 0.0
      %v7857 = vmax.f32 %v7798, 0.0
      %v7858 = vmax.f32 %v7800, 0.0
      %v7859 = vmax.f32 %v7802, 0.0
      %v7860 = vmax.f32 %v7806, 0.0
      %v7861 = vmax.f32 %v7808, 0.0
      %v7862 = vpack.c.bf16 %v7814, %v7812
      %v7863 = vpack.c.bf16 %v7815, %v7813
      %v7864 = vpack.c.bf16 %v7818, %v7816
      %v7865 = vpack.c.bf16 %v7819, %v7817
      %v7866 = vpack.c.bf16 %v7822, %v7820
      %v7867 = vpack.c.bf16 %v7823, %v7821
      %v7868 = vpack.c.bf16 %v7826, %v7824
      %v7869 = vpack.c.bf16 %v7827, %v7825
      %v7870 = vpack.c.bf16 %v7830, %v7828
      %v7871 = vpack.c.bf16 %v7831, %v7829
      %v7872 = vpack.c.bf16 %v7834, %v7832
      %v7873 = vpack.c.bf16 %v7835, %v7833
      %v7874 = vpack.c.bf16 %v7838, %v7836
      %v7875 = vpack.c.bf16 %v7839, %v7837
      %v7876 = vpack.c.bf16 %v7842, %v7840
      %v7877 = vpack.c.bf16 %v7843, %v7841
      %v7878 = vpack.c.bf16 %v7846, %v7844
      %v7879 = vpack.c.bf16 %v7847, %v7845
      %v7880 = vpack.c.bf16 %v7850, %v7848
      %v7881 = vpack.c.bf16 %v7851, %v7849
      %v7882 = vpack.c.bf16 %v7854, %v7852
      %v7883 = vpack.c.bf16 %v7855, %v7853
      %v7884 = vpack.c.bf16 %v7858, %v7856
      %v7885 = vpack.c.bf16 %v7859, %v7857
      %v7886 = vpack.c.bf16 %v7860, %v7860
      %v7887 = vpack.c.bf16 %v7861, %v7861
      %7888 = vmatprep.subr.bf16.mxu0 %v7190
      %7889 = vmatpush1.bf16.msra.mxu0 %v7189
      %7890 = vmatprep.subr.bf16.mxu0 %v7192
      %7891 = vmatpush1.bf16.msra.mxu0 %v7191
      %7892 = vmatprep.subr.bf16.mxu0 %v7194
      %7893 = vmatpush1.bf16.msra.mxu0 %v7193
      %7894 = vmatprep.subr.bf16.mxu0 %v7196
      %7895 = vmatpush1.bf16.msra.mxu0 %v7195
      %7896 = vmatprep.subr.bf16.mxu0 %v7198
      %7897 = vmatpush1.bf16.msra.mxu0 %v7197
      %7898 = vmatprep.subr.bf16.mxu0 %v7200
      %7899 = vmatpush1.bf16.msra.mxu0 %v7199
      %7900 = vmatprep.subr.bf16.mxu0 %v7202
      %7901 = vmatpush1.bf16.msra.mxu0 %v7201
      %7902 = vmatprep.subr.bf16.mxu0 %v7204
      %7903 = vmatpush1.bf16.msra.mxu0 %v7203
      %7904 = vmatprep.subr.bf16.mxu0 %v7206
      %7905 = vmatpush1.bf16.msra.mxu0 %v7205
      %7906 = vmatprep.subr.bf16.mxu0 %v7208
      %7907 = vmatpush1.bf16.msra.mxu0 %v7207
      %7908 = vmatprep.subr.bf16.mxu0 %v7210
      %7909 = vmatpush1.bf16.msra.mxu0 %v7209
      %7910 = vmatprep.subr.bf16.mxu0 %v7212
      %7911 = vmatpush1.bf16.msra.mxu0 %v7211
      %7912 = vmatprep.subr.bf16.mxu0 %v7214
      %7913 = vmatpush1.bf16.msra.mxu0 %v7213
      %7914 = vmatprep.subr.bf16.mxu0 %v7216
      %7915 = vmatpush1.bf16.msra.mxu0 %v7215
      %7916 = vmatprep.subr.bf16.mxu0 %v7218
      %7917 = vmatpush1.bf16.msra.mxu0 %v7217
      %7918 = vmatprep.subr.bf16.mxu0 %v7220
      %7919 = vmatpush1.bf16.msra.mxu0 %v7219
      %7920 = vmatprep.mubr.bf16.mxu0 %v7863
      %7921 = vmatmul.mubr.bf16.gmra.mrb[0].mxu0 %v7862
      %v7922 = vpop.f32.mrb[0].mxu0
      %v7923 = vadd.f32 %v7086, %v7922
      %v7924 = vpop.f32.mrb[0].mxu0
      %v7925 = vadd.f32 %v7090, %v7924
      %v7926 = vpop.f32.mrb[0].mxu0
      %v7927 = vadd.f32 %v7086, %v7926
      %v7928 = vpop.f32.mrb[0].mxu0
      %v7929 = vadd.f32 %v7090, %v7928
      %7930 = vmatprep.mubr.bf16.mxu0 %v7865
      %7931 = vmatmul.mubr.bf16.gmra.mrb[0].mxu0 %v7864
      %v7932 = vpop.f32.mrb[0].mxu0
      %v7933 = vadd.f32 %v7086, %v7932
      %v7934 = vpop.f32.mrb[0].mxu0
      %v7935 = vadd.f32 %v7090, %v7934
      %v7936 = vpop.f32.mrb[0].mxu0
      %v7937 = vadd.f32 %v7086, %v7936
      %v7938 = vpop.f32.mrb[0].mxu0
      %v7939 = vadd.f32 %v7090, %v7938
      %7940 = vmatprep.mubr.bf16.mxu0 %v7867
      %7941 = vmatmul.mubr.bf16.gmra.mrb[0].mxu0 %v7866
      %v7942 = vpop.f32.mrb[0].mxu0
      %v7943 = vadd.f32 %v7086, %v7942
      %v7944 = vpop.f32.mrb[0].mxu0
      %v7945 = vadd.f32 %v7090, %v7944
      %v7946 = vpop.f32.mrb[0].mxu0
      %v7947 = vadd.f32 %v7086, %v7946
      %v7948 = vpop.f32.mrb[0].mxu0
      %v7949 = vadd.f32 %v7090, %v7948
      %7950 = vmatprep.mubr.bf16.mxu0 %v7869
      %7951 = vmatmul.mubr.bf16.gmra.mrb[0].mxu0 %v7868
      %v7952 = vpop.f32.mrb[0].mxu0
      %v7953 = vadd.f32 %v7086, %v7952
      %v7954 = vpop.f32.mrb[0].mxu0
      %v7955 = vadd.f32 %v7090, %v7954
      %v7956 = vpop.f32.mrb[0].mxu0
      %v7957 = vadd.f32 %v7086, %v7956
      %v7958 = vpop.f32.mrb[0].mxu0
      %v7959 = vadd.f32 %v7090, %v7958
      %7960 = vmatprep.mubr.bf16.mxu0 %v7871
      %7961 = vmatmul.mubr.bf16.gmra.mrb[0].mxu0 %v7870
      %v7962 = vpop.f32.mrb[0].mxu0
      %v7963 = vadd.f32 %v7086, %v7962
      %v7964 = vpop.f32.mrb[0].mxu0
      %v7965 = vadd.f32 %v7090, %v7964
      %v7966 = vpop.f32.mrb[0].mxu0
      %v7967 = vadd.f32 %v7086, %v7966
      %v7968 = vpop.f32.mrb[0].mxu0
      %v7969 = vadd.f32 %v7090, %v7968
      %7970 = vmatprep.mubr.bf16.mxu0 %v7873
      %7971 = vmatmul.mubr.bf16.gmra.mrb[0].mxu0 %v7872
      %v7972 = vpop.f32.mrb[0].mxu0
      %v7973 = vadd.f32 %v7086, %v7972
      %v7974 = vpop.f32.mrb[0].mxu0
      %v7975 = vadd.f32 %v7090, %v7974
      %v7976 = vpop.f32.mrb[0].mxu0
      %v7977 = vadd.f32 %v7086, %v7976
      %v7978 = vpop.f32.mrb[0].mxu0
      %v7979 = vadd.f32 %v7090, %v7978
      %7980 = vmatprep.mubr.bf16.mxu0 %v7875
      %7981 = vmatmul.mubr.bf16.gmra.mrb[0].mxu0 %v7874
      %v7982 = vpop.f32.mrb[0].mxu0
      %v7983 = vadd.f32 %v7086, %v7982
      %v7984 = vpop.f32.mrb[0].mxu0
      %v7985 = vadd.f32 %v7090, %v7984
      %v7986 = vpop.f32.mrb[0].mxu0
      %v7987 = vadd.f32 %v7086, %v7986
      %v7988 = vpop.f32.mrb[0].mxu0
      %v7989 = vadd.f32 %v7090, %v7988
      %7990 = vmatprep.mubr.bf16.mxu0 %v7877
      %7991 = vmatmul.mubr.bf16.gmra.mrb[0].mxu0 %v7876
      %v7992 = vpop.f32.mrb[0].mxu0
      %v7993 = vadd.f32 %v7086, %v7992
      %v7994 = vpop.f32.mrb[0].mxu0
      %v7995 = vadd.f32 %v7090, %v7994
      %v7996 = vpop.f32.mrb[0].mxu0
      %v7997 = vadd.f32 %v7086, %v7996
      %v7998 = vpop.f32.mrb[0].mxu0
      %v7999 = vadd.f32 %v7090, %v7998
      %8000 = vmatprep.mubr.bf16.mxu0 %v7879
      %8001 = vmatmul.mubr.bf16.gmra.mrb[0].mxu0 %v7878
      %v8002 = vpop.f32.mrb[0].mxu0
      %v8003 = vadd.f32 %v7086, %v8002
      %v8004 = vpop.f32.mrb[0].mxu0
      %v8005 = vadd.f32 %v7090, %v8004
      %v8006 = vpop.f32.mrb[0].mxu0
      %v8007 = vadd.f32 %v7086, %v8006
      %v8008 = vpop.f32.mrb[0].mxu0
      %v8009 = vadd.f32 %v7090, %v8008
      %8010 = vmatprep.mubr.bf16.mxu0 %v7881
      %8011 = vmatmul.mubr.bf16.gmra.mrb[0].mxu0 %v7880
      %v8012 = vpop.f32.mrb[0].mxu0
      %v8013 = vadd.f32 %v7086, %v8012
      %v8014 = vpop.f32.mrb[0].mxu0
      %v8015 = vadd.f32 %v7090, %v8014
      %v8016 = vpop.f32.mrb[0].mxu0
      %v8017 = vadd.f32 %v7086, %v8016
      %v8018 = vpop.f32.mrb[0].mxu0
      %v8019 = vadd.f32 %v7090, %v8018
      %8020 = vmatprep.mubr.bf16.mxu0 %v7883
      %8021 = vmatmul.mubr.bf16.gmra.mrb[0].mxu0 %v7882
      %v8022 = vpop.f32.mrb[0].mxu0
      %v8023 = vadd.f32 %v7086, %v8022
      %v8024 = vpop.f32.mrb[0].mxu0
      %v8025 = vadd.f32 %v7090, %v8024
      %v8026 = vpop.f32.mrb[0].mxu0
      %v8027 = vadd.f32 %v7086, %v8026
      %v8028 = vpop.f32.mrb[0].mxu0
      %v8029 = vadd.f32 %v7090, %v8028
      %8030 = vmatprep.mubr.bf16.mxu0 %v7885
      %8031 = vmatmul.mubr.bf16.gmra.mrb[0].mxu0 %v7884
      %v8032 = vpop.f32.mrb[0].mxu0
      %v8033 = vadd.f32 %v7086, %v8032
      %v8034 = vpop.f32.mrb[0].mxu0
      %v8035 = vadd.f32 %v7090, %v8034
      %v8036 = vpop.f32.mrb[0].mxu0
      %v8037 = vadd.f32 %v7086, %v8036
      %v8038 = vpop.f32.mrb[0].mxu0
      %v8039 = vadd.f32 %v7090, %v8038
      %8040 = vmatprep.mubr.bf16.mxu0 %v7887
      %8041 = vmatmul.mubr.bf16.gmra.mrb[0].mxu0 %v7886
      %v8042 = vpop.f32.mrb[0].mxu0
      %v8043 = vadd.f32 %v7086, %v8042
      %v8044 = vpop.f32.mrb[0].mxu0
      %v8045 = vadd.f32 %v7090, %v8044
      %v8046 = vpop.f32.mrb[0].mxu0
      %v8047 = vpop.f32.mrb[0].mxu0
      %8048 = vdwg.mxu0
      %8049 = vmatprep.subr.bf16.mxu0 %v6374
      %8050 = vmatpush1.bf16.msra.mxu0 %v6373
      %8051 = vmatprep.subr.bf16.mxu0 %v6376
      %8052 = vmatpush1.bf16.msra.mxu0 %v6375
      %8053 = vmatprep.subr.bf16.mxu0 %v6378
      %8054 = vmatpush1.bf16.msra.mxu0 %v6377
      %8055 = vmatprep.subr.bf16.mxu0 %v6380
      %8056 = vmatpush1.bf16.msra.mxu0 %v6379
      %8057 = vmatprep.subr.bf16.mxu0 %v6382
      %8058 = vmatpush1.bf16.msra.mxu0 %v6381
      %8059 = vmatprep.subr.bf16.mxu0 %v6384
      %8060 = vmatpush1.bf16.msra.mxu0 %v6383
      %8061 = vmatprep.subr.bf16.mxu0 %v6386
      %8062 = vmatpush1.bf16.msra.mxu0 %v6385
      %8063 = vmatprep.subr.bf16.mxu0 %v6388
      %8064 = vmatpush1.bf16.msra.mxu0 %v6387
      %8065 = vmatprep.subr.bf16.mxu0 %v6390
      %8066 = vmatpush1.bf16.msra.mxu0 %v6389
      %8067 = vmatprep.subr.bf16.mxu0 %v6392
      %8068 = vmatpush1.bf16.msra.mxu0 %v6391
      %8069 = vmatprep.subr.bf16.mxu0 %v6394
      %8070 = vmatpush1.bf16.msra.mxu0 %v6393
      %8071 = vmatprep.subr.bf16.mxu0 %v6396
      %8072 = vmatpush1.bf16.msra.mxu0 %v6395
      %8073 = vmatprep.subr.bf16.mxu0 %v6398
      %8074 = vmatpush1.bf16.msra.mxu0 %v6397
      %8075 = vmatprep.subr.bf16.mxu0 %v6400
      %8076 = vmatpush1.bf16.msra.mxu0 %v6399
      %8077 = vmatprep.subr.bf16.mxu0 %v6402
      %8078 = vmatpush1.bf16.msra.mxu0 %v6401
      %8079 = vmatprep.subr.bf16.mxu0 %v6404
      %8080 = vmatpush1.bf16.msra.mxu0 %v6403
      %8081 = vmatprep.mubr.bf16.mxu0 %v6068
      %8082 = vmatmul.mubr.bf16.gmra.mrb[0].mxu0 %v6067
      %v8083 = vpop.f32.mrb[0].mxu0
      %v8084 = vadd.f32 %v6270, %v8083
      %v8085 = vpop.f32.mrb[0].mxu0
      %v8086 = vadd.f32 %v6274, %v8085
      %v8087 = vpop.f32.mrb[0].mxu0
      %v8088 = vadd.f32 %v6270, %v8087
      %v8089 = vpop.f32.mrb[0].mxu0
      %v8090 = vadd.f32 %v6274, %v8089
      %8091 = vmatprep.mubr.bf16.mxu0 %v6076
      %8092 = vmatmul.mubr.bf16.gmra.mrb[0].mxu0 %v6075
      %v8093 = vpop.f32.mrb[0].mxu0
      %v8094 = vadd.f32 %v6270, %v8093
      %v8095 = vpop.f32.mrb[0].mxu0
      %v8096 = vadd.f32 %v6274, %v8095
      %v8097 = vpop.f32.mrb[0].mxu0
      %v8098 = vadd.f32 %v6270, %v8097
      %v8099 = vpop.f32.mrb[0].mxu0
      %v8100 = vadd.f32 %v6274, %v8099
      %8101 = vmatprep.mubr.bf16.mxu0 %v6084
      %8102 = vmatmul.mubr.bf16.gmra.mrb[0].mxu0 %v6083
      %v8103 = vpop.f32.mrb[0].mxu0
      %v8104 = vadd.f32 %v6270, %v8103
      %v8105 = vpop.f32.mrb[0].mxu0
      %v8106 = vadd.f32 %v6274, %v8105
      %v8107 = vpop.f32.mrb[0].mxu0
      %v8108 = vadd.f32 %v6270, %v8107
      %v8109 = vpop.f32.mrb[0].mxu0
      %v8110 = vadd.f32 %v6274, %v8109
      %8111 = vmatprep.mubr.bf16.mxu0 %v6092
      %8112 = vmatmul.mubr.bf16.gmra.mrb[0].mxu0 %v6091
      %v8113 = vpop.f32.mrb[0].mxu0
      %v8114 = vadd.f32 %v6270, %v8113
      %v8115 = vpop.f32.mrb[0].mxu0
      %v8116 = vadd.f32 %v6274, %v8115
      %v8117 = vpop.f32.mrb[0].mxu0
      %v8118 = vadd.f32 %v6270, %v8117
      %v8119 = vpop.f32.mrb[0].mxu0
      %v8120 = vadd.f32 %v6274, %v8119
      %8121 = vmatprep.mubr.bf16.mxu0 %v6100
      %8122 = vmatmul.mubr.bf16.gmra.mrb[0].mxu0 %v6099
      %v8123 = vpop.f32.mrb[0].mxu0
      %v8124 = vadd.f32 %v6270, %v8123
      %v8125 = vpop.f32.mrb[0].mxu0
      %v8126 = vadd.f32 %v6274, %v8125
      %v8127 = vpop.f32.mrb[0].mxu0
      %v8128 = vadd.f32 %v6270, %v8127
      %v8129 = vpop.f32.mrb[0].mxu0
      %v8130 = vadd.f32 %v6274, %v8129
      %8131 = vmatprep.mubr.bf16.mxu0 %v6108
      %8132 = vmatmul.mubr.bf16.gmra.mrb[0].mxu0 %v6107
      %v8133 = vpop.f32.mrb[0].mxu0
      %v8134 = vadd.f32 %v6270, %v8133
      %v8135 = vpop.f32.mrb[0].mxu0
      %v8136 = vadd.f32 %v6274, %v8135
      %v8137 = vpop.f32.mrb[0].mxu0
      %v8138 = vadd.f32 %v6270, %v8137
      %v8139 = vpop.f32.mrb[0].mxu0
      %v8140 = vadd.f32 %v6274, %v8139
      %8141 = vmatprep.mubr.bf16.mxu0 %v6116
      %8142 = vmatmul.mubr.bf16.gmra.mrb[0].mxu0 %v6115
      %v8143 = vpop.f32.mrb[0].mxu0
      %v8144 = vadd.f32 %v6270, %v8143
      %v8145 = vpop.f32.mrb[0].mxu0
      %v8146 = vadd.f32 %v6274, %v8145
      %v8147 = vpop.f32.mrb[0].mxu0
      %v8148 = vadd.f32 %v6270, %v8147
      %v8149 = vpop.f32.mrb[0].mxu0
      %v8150 = vadd.f32 %v6274, %v8149
      %8151 = vmatprep.mubr.bf16.mxu0 %v6124
      %8152 = vmatmul.mubr.bf16.gmra.mrb[0].mxu0 %v6123
      %v8153 = vpop.f32.mrb[0].mxu0
      %v8154 = vadd.f32 %v6270, %v8153
      %v8155 = vpop.f32.mrb[0].mxu0
      %v8156 = vadd.f32 %v6274, %v8155
      %v8157 = vpop.f32.mrb[0].mxu0
      %v8158 = vadd.f32 %v6270, %v8157
      %v8159 = vpop.f32.mrb[0].mxu0
      %v8160 = vadd.f32 %v6274, %v8159
      %8161 = vmatprep.mubr.bf16.mxu0 %v6132
      %8162 = vmatmul.mubr.bf16.gmra.mrb[0].mxu0 %v6131
      %v8163 = vpop.f32.mrb[0].mxu0
      %v8164 = vadd.f32 %v6270, %v8163
      %v8165 = vpop.f32.mrb[0].mxu0
      %v8166 = vadd.f32 %v6274, %v8165
      %v8167 = vpop.f32.mrb[0].mxu0
      %v8168 = vadd.f32 %v6270, %v8167
      %v8169 = vpop.f32.mrb[0].mxu0
      %v8170 = vadd.f32 %v6274, %v8169
      %8171 = vmatprep.mubr.bf16.mxu0 %v6140
      %8172 = vmatmul.mubr.bf16.gmra.mrb[0].mxu0 %v6139
      %v8173 = vpop.f32.mrb[0].mxu0
      %v8174 = vadd.f32 %v6270, %v8173
      %v8175 = vpop.f32.mrb[0].mxu0
      %v8176 = vadd.f32 %v6274, %v8175
      %v8177 = vpop.f32.mrb[0].mxu0
      %v8178 = vadd.f32 %v6270, %v8177
      %v8179 = vpop.f32.mrb[0].mxu0
      %v8180 = vadd.f32 %v6274, %v8179
      %8181 = vmatprep.mubr.bf16.mxu0 %v6148
      %8182 = vmatmul.mubr.bf16.gmra.mrb[0].mxu0 %v6147
      %v8183 = vpop.f32.mrb[0].mxu0
      %v8184 = vadd.f32 %v6270, %v8183
      %v8185 = vpop.f32.mrb[0].mxu0
      %v8186 = vadd.f32 %v6274, %v8185
      %v8187 = vpop.f32.mrb[0].mxu0
      %v8188 = vadd.f32 %v6270, %v8187
      %v8189 = vpop.f32.mrb[0].mxu0
      %v8190 = vadd.f32 %v6274, %v8189
      %8191 = vmatprep.mubr.bf16.mxu0 %v6156
      %8192 = vmatmul.mubr.bf16.gmra.mrb[0].mxu0 %v6155
      %v8193 = vpop.f32.mrb[0].mxu0
      %v8194 = vadd.f32 %v6270, %v8193
      %v8195 = vpop.f32.mrb[0].mxu0
      %v8196 = vadd.f32 %v6274, %v8195
      %v8197 = vpop.f32.mrb[0].mxu0
      %v8198 = vadd.f32 %v6270, %v8197
      %v8199 = vpop.f32.mrb[0].mxu0
      %v8200 = vadd.f32 %v6274, %v8199
      %8201 = vmatprep.mubr.bf16.mxu0 %v6164
      %8202 = vmatmul.mubr.bf16.gmra.mrb[0].mxu0 %v6163
      %v8203 = vpop.f32.mrb[0].mxu0
      %v8204 = vadd.f32 %v6270, %v8203
      %v8205 = vpop.f32.mrb[0].mxu0
      %v8206 = vadd.f32 %v6274, %v8205
      %v8207 = vpop.f32.mrb[0].mxu0
      %v8208 = vpop.f32.mrb[0].mxu0
      %8209 = vdwg.mxu0
      %v8210 = vmax.f32 %v8084, 0.0
      %v8211 = vmax.f32 %v8086, 0.0
      %v8212 = vmax.f32 %v8088, 0.0
      %v8213 = vmax.f32 %v8090, 0.0
      %v8214 = vmax.f32 %v8094, 0.0
      %v8215 = vmax.f32 %v8096, 0.0
      %v8216 = vmax.f32 %v8098, 0.0
      %v8217 = vmax.f32 %v8100, 0.0
      %v8218 = vmax.f32 %v8104, 0.0
      %v8219 = vmax.f32 %v8106, 0.0
      %v8220 = vmax.f32 %v8108, 0.0
      %v8221 = vmax.f32 %v8110, 0.0
      %v8222 = vmax.f32 %v8114, 0.0
      %v8223 = vmax.f32 %v8116, 0.0
      %v8224 = vmax.f32 %v8118, 0.0
      %v8225 = vmax.f32 %v8120, 0.0
      %v8226 = vmax.f32 %v8124, 0.0
      %v8227 = vmax.f32 %v8126, 0.0
      %v8228 = vmax.f32 %v8128, 0.0
      %v8229 = vmax.f32 %v8130, 0.0
      %v8230 = vmax.f32 %v8134, 0.0
      %v8231 = vmax.f32 %v8136, 0.0
      %v8232 = vmax.f32 %v8138, 0.0
      %v8233 = vmax.f32 %v8140, 0.0
      %v8234 = vmax.f32 %v8144, 0.0
      %v8235 = vmax.f32 %v8146, 0.0
      %v8236 = vmax.f32 %v8148, 0.0
      %v8237 = vmax.f32 %v8150, 0.0
      %v8238 = vmax.f32 %v8154, 0.0
      %v8239 = vmax.f32 %v8156, 0.0
      %v8240 = vmax.f32 %v8158, 0.0
      %v8241 = vmax.f32 %v8160, 0.0
      %v8242 = vmax.f32 %v8164, 0.0
      %v8243 = vmax.f32 %v8166, 0.0
      %v8244 = vmax.f32 %v8168, 0.0
      %v8245 = vmax.f32 %v8170, 0.0
      %v8246 = vmax.f32 %v8174, 0.0
      %v8247 = vmax.f32 %v8176, 0.0
      %v8248 = vmax.f32 %v8178, 0.0
      %v8249 = vmax.f32 %v8180, 0.0
      %v8250 = vmax.f32 %v8184, 0.0
      %v8251 = vmax.f32 %v8186, 0.0
      %v8252 = vmax.f32 %v8188, 0.0
      %v8253 = vmax.f32 %v8190, 0.0
      %v8254 = vmax.f32 %v8194, 0.0
      %v8255 = vmax.f32 %v8196, 0.0
      %v8256 = vmax.f32 %v8198, 0.0
      %v8257 = vmax.f32 %v8200, 0.0
      %v8258 = vmax.f32 %v8204, 0.0
      %v8259 = vmax.f32 %v8206, 0.0
      %v8260 = vpack.c.bf16 %v8212, %v8210
      %v8261 = vpack.c.bf16 %v8213, %v8211
      %v8262 = vpack.c.bf16 %v8216, %v8214
      %v8263 = vpack.c.bf16 %v8217, %v8215
      %v8264 = vpack.c.bf16 %v8220, %v8218
      %v8265 = vpack.c.bf16 %v8221, %v8219
      %v8266 = vpack.c.bf16 %v8224, %v8222
      %v8267 = vpack.c.bf16 %v8225, %v8223
      %v8268 = vpack.c.bf16 %v8228, %v8226
      %v8269 = vpack.c.bf16 %v8229, %v8227
      %v8270 = vpack.c.bf16 %v8232, %v8230
      %v8271 = vpack.c.bf16 %v8233, %v8231
      %v8272 = vpack.c.bf16 %v8236, %v8234
      %v8273 = vpack.c.bf16 %v8237, %v8235
      %v8274 = vpack.c.bf16 %v8240, %v8238
      %v8275 = vpack.c.bf16 %v8241, %v8239
      %v8276 = vpack.c.bf16 %v8244, %v8242
      %v8277 = vpack.c.bf16 %v8245, %v8243
      %v8278 = vpack.c.bf16 %v8248, %v8246
      %v8279 = vpack.c.bf16 %v8249, %v8247
      %v8280 = vpack.c.bf16 %v8252, %v8250
      %v8281 = vpack.c.bf16 %v8253, %v8251
      %v8282 = vpack.c.bf16 %v8256, %v8254
      %v8283 = vpack.c.bf16 %v8257, %v8255
      %v8284 = vpack.c.bf16 %v8258, %v8258
      %v8285 = vpack.c.bf16 %v8259, %v8259
      %8286 = vmatprep.subr.bf16.mxu0 %v6782
      %8287 = vmatpush1.bf16.msra.mxu0 %v6781
      %8288 = vmatprep.subr.bf16.mxu0 %v6784
      %8289 = vmatpush1.bf16.msra.mxu0 %v6783
      %8290 = vmatprep.subr.bf16.mxu0 %v6786
      %8291 = vmatpush1.bf16.msra.mxu0 %v6785
      %8292 = vmatprep.subr.bf16.mxu0 %v6788
      %8293 = vmatpush1.bf16.msra.mxu0 %v6787
      %8294 = vmatprep.subr.bf16.mxu0 %v6790
      %8295 = vmatpush1.bf16.msra.mxu0 %v6789
      %8296 = vmatprep.subr.bf16.mxu0 %v6792
      %8297 = vmatpush1.bf16.msra.mxu0 %v6791
      %8298 = vmatprep.subr.bf16.mxu0 %v6794
      %8299 = vmatpush1.bf16.msra.mxu0 %v6793
      %8300 = vmatprep.subr.bf16.mxu0 %v6796
      %8301 = vmatpush1.bf16.msra.mxu0 %v6795
      %8302 = vmatprep.subr.bf16.mxu0 %v6798
      %8303 = vmatpush1.bf16.msra.mxu0 %v6797
      %8304 = vmatprep.subr.bf16.mxu0 %v6800
      %8305 = vmatpush1.bf16.msra.mxu0 %v6799
      %8306 = vmatprep.subr.bf16.mxu0 %v6802
      %8307 = vmatpush1.bf16.msra.mxu0 %v6801
      %8308 = vmatprep.subr.bf16.mxu0 %v6804
      %8309 = vmatpush1.bf16.msra.mxu0 %v6803
      %8310 = vmatprep.subr.bf16.mxu0 %v6806
      %8311 = vmatpush1.bf16.msra.mxu0 %v6805
      %8312 = vmatprep.subr.bf16.mxu0 %v6808
      %8313 = vmatpush1.bf16.msra.mxu0 %v6807
      %8314 = vmatprep.subr.bf16.mxu0 %v6810
      %8315 = vmatpush1.bf16.msra.mxu0 %v6809
      %8316 = vmatprep.subr.bf16.mxu0 %v6812
      %8317 = vmatpush1.bf16.msra.mxu0 %v6811
      %8318 = vmatprep.mubr.bf16.mxu0 %v8261
      %8319 = vmatmul.mubr.bf16.gmra.mrb[0].mxu0 %v8260
      %v8320 = vpop.f32.mrb[0].mxu0
      %v8321 = vadd.f32 %v6678, %v8320
      %v8322 = vpop.f32.mrb[0].mxu0
      %v8323 = vadd.f32 %v6682, %v8322
      %v8324 = vpop.f32.mrb[0].mxu0
      %v8325 = vadd.f32 %v6678, %v8324
      %v8326 = vpop.f32.mrb[0].mxu0
      %v8327 = vadd.f32 %v6682, %v8326
      %8328 = vmatprep.mubr.bf16.mxu0 %v8263
      %8329 = vmatmul.mubr.bf16.gmra.mrb[0].mxu0 %v8262
      %v8330 = vpop.f32.mrb[0].mxu0
      %v8331 = vadd.f32 %v6678, %v8330
      %v8332 = vpop.f32.mrb[0].mxu0
      %v8333 = vadd.f32 %v6682, %v8332
      %v8334 = vpop.f32.mrb[0].mxu0
      %v8335 = vadd.f32 %v6678, %v8334
      %v8336 = vpop.f32.mrb[0].mxu0
      %v8337 = vadd.f32 %v6682, %v8336
      %8338 = vmatprep.mubr.bf16.mxu0 %v8265
      %8339 = vmatmul.mubr.bf16.gmra.mrb[0].mxu0 %v8264
      %v8340 = vpop.f32.mrb[0].mxu0
      %v8341 = vadd.f32 %v6678, %v8340
      %v8342 = vpop.f32.mrb[0].mxu0
      %v8343 = vadd.f32 %v6682, %v8342
      %v8344 = vpop.f32.mrb[0].mxu0
      %v8345 = vadd.f32 %v6678, %v8344
      %v8346 = vpop.f32.mrb[0].mxu0
      %v8347 = vadd.f32 %v6682, %v8346
      %8348 = vmatprep.mubr.bf16.mxu0 %v8267
      %8349 = vmatmul.mubr.bf16.gmra.mrb[0].mxu0 %v8266
      %v8350 = vpop.f32.mrb[0].mxu0
      %v8351 = vadd.f32 %v6678, %v8350
      %v8352 = vpop.f32.mrb[0].mxu0
      %v8353 = vadd.f32 %v6682, %v8352
      %v8354 = vpop.f32.mrb[0].mxu0
      %v8355 = vadd.f32 %v6678, %v8354
      %v8356 = vpop.f32.mrb[0].mxu0
      %v8357 = vadd.f32 %v6682, %v8356
      %8358 = vmatprep.mubr.bf16.mxu0 %v8269
      %8359 = vmatmul.mubr.bf16.gmra.mrb[0].mxu0 %v8268
      %v8360 = vpop.f32.mrb[0].mxu0
      %v8361 = vadd.f32 %v6678, %v8360
      %v8362 = vpop.f32.mrb[0].mxu0
      %v8363 = vadd.f32 %v6682, %v8362
      %v8364 = vpop.f32.mrb[0].mxu0
      %v8365 = vadd.f32 %v6678, %v8364
      %v8366 = vpop.f32.mrb[0].mxu0
      %v8367 = vadd.f32 %v6682, %v8366
      %8368 = vmatprep.mubr.bf16.mxu0 %v8271
      %8369 = vmatmul.mubr.bf16.gmra.mrb[0].mxu0 %v8270
      %v8370 = vpop.f32.mrb[0].mxu0
      %v8371 = vadd.f32 %v6678, %v8370
      %v8372 = vpop.f32.mrb[0].mxu0
      %v8373 = vadd.f32 %v6682, %v8372
      %v8374 = vpop.f32.mrb[0].mxu0
      %v8375 = vadd.f32 %v6678, %v8374
      %v8376 = vpop.f32.mrb[0].mxu0
      %v8377 = vadd.f32 %v6682, %v8376
      %8378 = vmatprep.mubr.bf16.mxu0 %v8273
      %8379 = vmatmul.mubr.bf16.gmra.mrb[0].mxu0 %v8272
      %v8380 = vpop.f32.mrb[0].mxu0
      %v8381 = vadd.f32 %v6678, %v8380
      %v8382 = vpop.f32.mrb[0].mxu0
      %v8383 = vadd.f32 %v6682, %v8382
      %v8384 = vpop.f32.mrb[0].mxu0
      %v8385 = vadd.f32 %v6678, %v8384
      %v8386 = vpop.f32.mrb[0].mxu0
      %v8387 = vadd.f32 %v6682, %v8386
      %8388 = vmatprep.mubr.bf16.mxu0 %v8275
      %8389 = vmatmul.mubr.bf16.gmra.mrb[0].mxu0 %v8274
      %v8390 = vpop.f32.mrb[0].mxu0
      %v8391 = vadd.f32 %v6678, %v8390
      %v8392 = vpop.f32.mrb[0].mxu0
      %v8393 = vadd.f32 %v6682, %v8392
      %v8394 = vpop.f32.mrb[0].mxu0
      %v8395 = vadd.f32 %v6678, %v8394
      %v8396 = vpop.f32.mrb[0].mxu0
      %v8397 = vadd.f32 %v6682, %v8396
      %8398 = vmatprep.mubr.bf16.mxu0 %v8277
      %8399 = vmatmul.mubr.bf16.gmra.mrb[0].mxu0 %v8276
      %v8400 = vpop.f32.mrb[0].mxu0
      %v8401 = vadd.f32 %v6678, %v8400
      %v8402 = vpop.f32.mrb[0].mxu0
      %v8403 = vadd.f32 %v6682, %v8402
      %v8404 = vpop.f32.mrb[0].mxu0
      %v8405 = vadd.f32 %v6678, %v8404
      %v8406 = vpop.f32.mrb[0].mxu0
      %v8407 = vadd.f32 %v6682, %v8406
      %8408 = vmatprep.mubr.bf16.mxu0 %v8279
      %8409 = vmatmul.mubr.bf16.gmra.mrb[0].mxu0 %v8278
      %v8410 = vpop.f32.mrb[0].mxu0
      %v8411 = vadd.f32 %v6678, %v8410
      %v8412 = vpop.f32.mrb[0].mxu0
      %v8413 = vadd.f32 %v6682, %v8412
      %v8414 = vpop.f32.mrb[0].mxu0
      %v8415 = vadd.f32 %v6678, %v8414
      %v8416 = vpop.f32.mrb[0].mxu0
      %v8417 = vadd.f32 %v6682, %v8416
      %8418 = vmatprep.mubr.bf16.mxu0 %v8281
      %8419 = vmatmul.mubr.bf16.gmra.mrb[0].mxu0 %v8280
      %v8420 = vpop.f32.mrb[0].mxu0
      %v8421 = vadd.f32 %v6678, %v8420
      %v8422 = vpop.f32.mrb[0].mxu0
      %v8423 = vadd.f32 %v6682, %v8422
      %v8424 = vpop.f32.mrb[0].mxu0
      %v8425 = vadd.f32 %v6678, %v8424
      %v8426 = vpop.f32.mrb[0].mxu0
      %v8427 = vadd.f32 %v6682, %v8426
      %8428 = vmatprep.mubr.bf16.mxu0 %v8283
      %8429 = vmatmul.mubr.bf16.gmra.mrb[0].mxu0 %v8282
      %v8430 = vpop.f32.mrb[0].mxu0
      %v8431 = vadd.f32 %v6678, %v8430
      %v8432 = vpop.f32.mrb[0].mxu0
      %v8433 = vadd.f32 %v6682, %v8432
      %v8434 = vpop.f32.mrb[0].mxu0
      %v8435 = vadd.f32 %v6678, %v8434
      %v8436 = vpop.f32.mrb[0].mxu0
      %v8437 = vadd.f32 %v6682, %v8436
      %8438 = vmatprep.mubr.bf16.mxu0 %v8285
      %8439 = vmatmul.mubr.bf16.gmra.mrb[0].mxu0 %v8284
      %v8440 = vpop.f32.mrb[0].mxu0
      %v8441 = vadd.f32 %v6678, %v8440
      %v8442 = vpop.f32.mrb[0].mxu0
      %v8443 = vadd.f32 %v6682, %v8442
      %v8444 = vpop.f32.mrb[0].mxu0
      %v8445 = vpop.f32.mrb[0].mxu0
      %8446 = vdwg.mxu0
      %v8447 = vmax.f32 %v8321, 0.0
      %v8448 = vmax.f32 %v8323, 0.0
      %v8449 = vmax.f32 %v8325, 0.0
      %v8450 = vmax.f32 %v8327, 0.0
      %v8451 = vmax.f32 %v8331, 0.0
      %v8452 = vmax.f32 %v8333, 0.0
      %v8453 = vmax.f32 %v8335, 0.0
      %v8454 = vmax.f32 %v8337, 0.0
      %v8455 = vmax.f32 %v8341, 0.0
      %v8456 = vmax.f32 %v8343, 0.0
      %v8457 = vmax.f32 %v8345, 0.0
      %v8458 = vmax.f32 %v8347, 0.0
      %v8459 = vmax.f32 %v8351, 0.0
      %v8460 = vmax.f32 %v8353, 0.0
      %v8461 = vmax.f32 %v8355, 0.0
      %v8462 = vmax.f32 %v8357, 0.0
      %v8463 = vmax.f32 %v8361, 0.0
      %v8464 = vmax.f32 %v8363, 0.0
      %v8465 = vmax.f32 %v8365, 0.0
      %v8466 = vmax.f32 %v8367, 0.0
      %v8467 = vmax.f32 %v8371, 0.0
      %v8468 = vmax.f32 %v8373, 0.0
      %v8469 = vmax.f32 %v8375, 0.0
      %v8470 = vmax.f32 %v8377, 0.0
      %v8471 = vmax.f32 %v8381, 0.0
      %v8472 = vmax.f32 %v8383, 0.0
      %v8473 = vmax.f32 %v8385, 0.0
      %v8474 = vmax.f32 %v8387, 0.0
      %v8475 = vmax.f32 %v8391, 0.0
      %v8476 = vmax.f32 %v8393, 0.0
      %v8477 = vmax.f32 %v8395, 0.0
      %v8478 = vmax.f32 %v8397, 0.0
      %v8479 = vmax.f32 %v8401, 0.0
      %v8480 = vmax.f32 %v8403, 0.0
      %v8481 = vmax.f32 %v8405, 0.0
      %v8482 = vmax.f32 %v8407, 0.0
      %v8483 = vmax.f32 %v8411, 0.0
      %v8484 = vmax.f32 %v8413, 0.0
      %v8485 = vmax.f32 %v8415, 0.0
      %v8486 = vmax.f32 %v8417, 0.0
      %v8487 = vmax.f32 %v8421, 0.0
      %v8488 = vmax.f32 %v8423, 0.0
      %v8489 = vmax.f32 %v8425, 0.0
      %v8490 = vmax.f32 %v8427, 0.0
      %v8491 = vmax.f32 %v8431, 0.0
      %v8492 = vmax.f32 %v8433, 0.0
      %v8493 = vmax.f32 %v8435, 0.0
      %v8494 = vmax.f32 %v8437, 0.0
      %v8495 = vmax.f32 %v8441, 0.0
      %v8496 = vmax.f32 %v8443, 0.0
      %v8497 = vpack.c.bf16 %v8449, %v8447
      %v8498 = vpack.c.bf16 %v8450, %v8448
      %v8499 = vpack.c.bf16 %v8453, %v8451
      %v8500 = vpack.c.bf16 %v8454, %v8452
      %v8501 = vpack.c.bf16 %v8457, %v8455
      %v8502 = vpack.c.bf16 %v8458, %v8456
      %v8503 = vpack.c.bf16 %v8461, %v8459
      %v8504 = vpack.c.bf16 %v8462, %v8460
      %v8505 = vpack.c.bf16 %v8465, %v8463
      %v8506 = vpack.c.bf16 %v8466, %v8464
      %v8507 = vpack.c.bf16 %v8469, %v8467
      %v8508 = vpack.c.bf16 %v8470, %v8468
      %v8509 = vpack.c.bf16 %v8473, %v8471
      %v8510 = vpack.c.bf16 %v8474, %v8472
      %v8511 = vpack.c.bf16 %v8477, %v8475
      %v8512 = vpack.c.bf16 %v8478, %v8476
      %v8513 = vpack.c.bf16 %v8481, %v8479
      %v8514 = vpack.c.bf16 %v8482, %v8480
      %v8515 = vpack.c.bf16 %v8485, %v8483
      %v8516 = vpack.c.bf16 %v8486, %v8484
      %v8517 = vpack.c.bf16 %v8489, %v8487
      %v8518 = vpack.c.bf16 %v8490, %v8488
      %v8519 = vpack.c.bf16 %v8493, %v8491
      %v8520 = vpack.c.bf16 %v8494, %v8492
      %v8521 = vpack.c.bf16 %v8495, %v8495
      %v8522 = vpack.c.bf16 %v8496, %v8496
      %8523 = vmatprep.subr.bf16.mxu0 %v7190
      %8524 = vmatpush1.bf16.msra.mxu0 %v7189
      %8525 = vmatprep.subr.bf16.mxu0 %v7192
      %8526 = vmatpush1.bf16.msra.mxu0 %v7191
      %8527 = vmatprep.subr.bf16.mxu0 %v7194
      %8528 = vmatpush1.bf16.msra.mxu0 %v7193
      %8529 = vmatprep.subr.bf16.mxu0 %v7196
      %8530 = vmatpush1.bf16.msra.mxu0 %v7195
      %8531 = vmatprep.subr.bf16.mxu0 %v7198
      %8532 = vmatpush1.bf16.msra.mxu0 %v7197
      %8533 = vmatprep.subr.bf16.mxu0 %v7200
      %8534 = vmatpush1.bf16.msra.mxu0 %v7199
      %8535 = vmatprep.subr.bf16.mxu0 %v7202
      %8536 = vmatpush1.bf16.msra.mxu0 %v7201
      %8537 = vmatprep.subr.bf16.mxu0 %v7204
      %8538 = vmatpush1.bf16.msra.mxu0 %v7203
      %8539 = vmatprep.subr.bf16.mxu0 %v7206
      %8540 = vmatpush1.bf16.msra.mxu0 %v7205
      %8541 = vmatprep.subr.bf16.mxu0 %v7208
      %8542 = vmatpush1.bf16.msra.mxu0 %v7207
      %8543 = vmatprep.subr.bf16.mxu0 %v7210
      %8544 = vmatpush1.bf16.msra.mxu0 %v7209
      %8545 = vmatprep.subr.bf16.mxu0 %v7212
      %8546 = vmatpush1.bf16.msra.mxu0 %v7211
      %8547 = vmatprep.subr.bf16.mxu0 %v7214
      %8548 = vmatpush1.bf16.msra.mxu0 %v7213
      %8549 = vmatprep.subr.bf16.mxu0 %v7216
      %8550 = vmatpush1.bf16.msra.mxu0 %v7215
      %8551 = vmatprep.subr.bf16.mxu0 %v7218
      %8552 = vmatpush1.bf16.msra.mxu0 %v7217
      %8553 = vmatprep.subr.bf16.mxu0 %v7220
      %8554 = vmatpush1.bf16.msra.mxu0 %v7219
      %8555 = vmatprep.mubr.bf16.mxu0 %v8498
      %8556 = vmatmul.mubr.bf16.gmra.mrb[0].mxu0 %v8497
      %v8557 = vpop.f32.mrb[0].mxu0
      %v8558 = vadd.f32 %v7086, %v8557
      %v8559 = vpop.f32.mrb[0].mxu0
      %v8560 = vadd.f32 %v7090, %v8559
      %v8561 = vpop.f32.mrb[0].mxu0
      %v8562 = vadd.f32 %v7086, %v8561
      %v8563 = vpop.f32.mrb[0].mxu0
      %v8564 = vadd.f32 %v7090, %v8563
      %8565 = vmatprep.mubr.bf16.mxu0 %v8500
      %8566 = vmatmul.mubr.bf16.gmra.mrb[0].mxu0 %v8499
      %v8567 = vpop.f32.mrb[0].mxu0
      %v8568 = vadd.f32 %v7086, %v8567
      %v8569 = vpop.f32.mrb[0].mxu0
      %v8570 = vadd.f32 %v7090, %v8569
      %v8571 = vpop.f32.mrb[0].mxu0
      %v8572 = vadd.f32 %v7086, %v8571
      %v8573 = vpop.f32.mrb[0].mxu0
      %v8574 = vadd.f32 %v7090, %v8573
      %8575 = vmatprep.mubr.bf16.mxu0 %v8502
      %8576 = vmatmul.mubr.bf16.gmra.mrb[0].mxu0 %v8501
      %v8577 = vpop.f32.mrb[0].mxu0
      %v8578 = vadd.f32 %v7086, %v8577
      %v8579 = vpop.f32.mrb[0].mxu0
      %v8580 = vadd.f32 %v7090, %v8579
      %v8581 = vpop.f32.mrb[0].mxu0
      %v8582 = vadd.f32 %v7086, %v8581
      %v8583 = vpop.f32.mrb[0].mxu0
      %v8584 = vadd.f32 %v7090, %v8583
      %8585 = vmatprep.mubr.bf16.mxu0 %v8504
      %8586 = vmatmul.mubr.bf16.gmra.mrb[0].mxu0 %v8503
      %v8587 = vpop.f32.mrb[0].mxu0
      %v8588 = vadd.f32 %v7086, %v8587
      %v8589 = vpop.f32.mrb[0].mxu0
      %v8590 = vadd.f32 %v7090, %v8589
      %v8591 = vpop.f32.mrb[0].mxu0
      %v8592 = vadd.f32 %v7086, %v8591
      %v8593 = vpop.f32.mrb[0].mxu0
      %v8594 = vadd.f32 %v7090, %v8593
      %8595 = vmatprep.mubr.bf16.mxu0 %v8506
      %8596 = vmatmul.mubr.bf16.gmra.mrb[0].mxu0 %v8505
      %v8597 = vpop.f32.mrb[0].mxu0
      %v8598 = vadd.f32 %v7086, %v8597
      %v8599 = vpop.f32.mrb[0].mxu0
      %v8600 = vadd.f32 %v7090, %v8599
      %v8601 = vpop.f32.mrb[0].mxu0
      %v8602 = vadd.f32 %v7086, %v8601
      %v8603 = vpop.f32.mrb[0].mxu0
      %v8604 = vadd.f32 %v7090, %v8603
      %8605 = vmatprep.mubr.bf16.mxu0 %v8508
      %8606 = vmatmul.mubr.bf16.gmra.mrb[0].mxu0 %v8507
      %v8607 = vpop.f32.mrb[0].mxu0
      %v8608 = vadd.f32 %v7086, %v8607
      %v8609 = vpop.f32.mrb[0].mxu0
      %v8610 = vadd.f32 %v7090, %v8609
      %v8611 = vpop.f32.mrb[0].mxu0
      %v8612 = vadd.f32 %v7086, %v8611
      %v8613 = vpop.f32.mrb[0].mxu0
      %v8614 = vadd.f32 %v7090, %v8613
      %8615 = vmatprep.mubr.bf16.mxu0 %v8510
      %8616 = vmatmul.mubr.bf16.gmra.mrb[0].mxu0 %v8509
      %v8617 = vpop.f32.mrb[0].mxu0
      %v8618 = vadd.f32 %v7086, %v8617
      %v8619 = vpop.f32.mrb[0].mxu0
      %v8620 = vadd.f32 %v7090, %v8619
      %v8621 = vpop.f32.mrb[0].mxu0
      %v8622 = vadd.f32 %v7086, %v8621
      %v8623 = vpop.f32.mrb[0].mxu0
      %v8624 = vadd.f32 %v7090, %v8623
      %8625 = vmatprep.mubr.bf16.mxu0 %v8512
      %8626 = vmatmul.mubr.bf16.gmra.mrb[0].mxu0 %v8511
      %v8627 = vpop.f32.mrb[0].mxu0
      %v8628 = vadd.f32 %v7086, %v8627
      %v8629 = vpop.f32.mrb[0].mxu0
      %v8630 = vadd.f32 %v7090, %v8629
      %v8631 = vpop.f32.mrb[0].mxu0
      %v8632 = vadd.f32 %v7086, %v8631
      %v8633 = vpop.f32.mrb[0].mxu0
      %v8634 = vadd.f32 %v7090, %v8633
      %8635 = vmatprep.mubr.bf16.mxu0 %v8514
      %8636 = vmatmul.mubr.bf16.gmra.mrb[0].mxu0 %v8513
      %v8637 = vpop.f32.mrb[0].mxu0
      %v8638 = vadd.f32 %v7086, %v8637
      %v8639 = vpop.f32.mrb[0].mxu0
      %v8640 = vadd.f32 %v7090, %v8639
      %v8641 = vpop.f32.mrb[0].mxu0
      %v8642 = vadd.f32 %v7086, %v8641
      %v8643 = vpop.f32.mrb[0].mxu0
      %v8644 = vadd.f32 %v7090, %v8643
      %8645 = vmatprep.mubr.bf16.mxu0 %v8516
      %8646 = vmatmul.mubr.bf16.gmra.mrb[0].mxu0 %v8515
      %v8647 = vpop.f32.mrb[0].mxu0
      %v8648 = vadd.f32 %v7086, %v8647
      %v8649 = vpop.f32.mrb[0].mxu0
      %v8650 = vadd.f32 %v7090, %v8649
      %v8651 = vpop.f32.mrb[0].mxu0
      %v8652 = vadd.f32 %v7086, %v8651
      %v8653 = vpop.f32.mrb[0].mxu0
      %v8654 = vadd.f32 %v7090, %v8653
      %8655 = vmatprep.mubr.bf16.mxu0 %v8518
      %8656 = vmatmul.mubr.bf16.gmra.mrb[0].mxu0 %v8517
      %v8657 = vpop.f32.mrb[0].mxu0
      %v8658 = vadd.f32 %v7086, %v8657
      %v8659 = vpop.f32.mrb[0].mxu0
      %v8660 = vadd.f32 %v7090, %v8659
      %v8661 = vpop.f32.mrb[0].mxu0
      %v8662 = vadd.f32 %v7086, %v8661
      %v8663 = vpop.f32.mrb[0].mxu0
      %v8664 = vadd.f32 %v7090, %v8663
      %8665 = vmatprep.mubr.bf16.mxu0 %v8520
      %8666 = vmatmul.mubr.bf16.gmra.mrb[0].mxu0 %v8519
      %v8667 = vpop.f32.mrb[0].mxu0
      %v8668 = vadd.f32 %v7086, %v8667
      %v8669 = vpop.f32.mrb[0].mxu0
      %v8670 = vadd.f32 %v7090, %v8669
      %v8671 = vpop.f32.mrb[0].mxu0
      %v8672 = vadd.f32 %v7086, %v8671
      %v8673 = vpop.f32.mrb[0].mxu0
      %v8674 = vadd.f32 %v7090, %v8673
      %8675 = vmatprep.mubr.bf16.mxu0 %v8522
      %8676 = vmatmul.mubr.bf16.gmra.mrb[0].mxu0 %v8521
      %v8677 = vpop.f32.mrb[0].mxu0
      %v8678 = vadd.f32 %v7086, %v8677
      %v8679 = vpop.f32.mrb[0].mxu0
      %v8680 = vadd.f32 %v7090, %v8679
      %v8681 = vpop.f32.mrb[0].mxu0
      %v8682 = vpop.f32.mrb[0].mxu0
      %8683 = vdwg.mxu0
      %8684 = vmatprep.subr.bf16.mxu0 %v6374
      %8685 = vmatpush1.bf16.msra.mxu0 %v6373
      %8686 = vmatprep.subr.bf16.mxu0 %v6376
      %8687 = vmatpush1.bf16.msra.mxu0 %v6375
      %8688 = vmatprep.subr.bf16.mxu0 %v6378
      %8689 = vmatpush1.bf16.msra.mxu0 %v6377
      %8690 = vmatprep.subr.bf16.mxu0 %v6380
      %8691 = vmatpush1.bf16.msra.mxu0 %v6379
      %8692 = vmatprep.subr.bf16.mxu0 %v6382
      %8693 = vmatpush1.bf16.msra.mxu0 %v6381
      %8694 = vmatprep.subr.bf16.mxu0 %v6384
      %8695 = vmatpush1.bf16.msra.mxu0 %v6383
      %8696 = vmatprep.subr.bf16.mxu0 %v6386
      %8697 = vmatpush1.bf16.msra.mxu0 %v6385
      %8698 = vmatprep.subr.bf16.mxu0 %v6388
      %8699 = vmatpush1.bf16.msra.mxu0 %v6387
      %8700 = vmatprep.subr.bf16.mxu0 %v6390
      %8701 = vmatpush1.bf16.msra.mxu0 %v6389
      %8702 = vmatprep.subr.bf16.mxu0 %v6392
      %8703 = vmatpush1.bf16.msra.mxu0 %v6391
      %8704 = vmatprep.subr.bf16.mxu0 %v6394
      %8705 = vmatpush1.bf16.msra.mxu0 %v6393
      %8706 = vmatprep.subr.bf16.mxu0 %v6396
      %8707 = vmatpush1.bf16.msra.mxu0 %v6395
      %8708 = vmatprep.subr.bf16.mxu0 %v6398
      %8709 = vmatpush1.bf16.msra.mxu0 %v6397
      %8710 = vmatprep.subr.bf16.mxu0 %v6400
      %8711 = vmatpush1.bf16.msra.mxu0 %v6399
      %8712 = vmatprep.subr.bf16.mxu0 %v6402
      %8713 = vmatpush1.bf16.msra.mxu0 %v6401
      %8714 = vmatprep.subr.bf16.mxu0 %v6404
      %8715 = vmatpush1.bf16.msra.mxu0 %v6403
      %8716 = vmatprep.mubr.bf16.mxu0 %v6070
      %8717 = vmatmul.mubr.bf16.gmra.mrb[0].mxu0 %v6069
      %v8718 = vpop.f32.mrb[0].mxu0
      %v8719 = vadd.f32 %v6270, %v8718
      %v8720 = vpop.f32.mrb[0].mxu0
      %v8721 = vadd.f32 %v6274, %v8720
      %v8722 = vpop.f32.mrb[0].mxu0
      %v8723 = vadd.f32 %v6270, %v8722
      %v8724 = vpop.f32.mrb[0].mxu0
      %v8725 = vadd.f32 %v6274, %v8724
      %8726 = vmatprep.mubr.bf16.mxu0 %v6078
      %8727 = vmatmul.mubr.bf16.gmra.mrb[0].mxu0 %v6077
      %v8728 = vpop.f32.mrb[0].mxu0
      %v8729 = vadd.f32 %v6270, %v8728
      %v8730 = vpop.f32.mrb[0].mxu0
      %v8731 = vadd.f32 %v6274, %v8730
      %v8732 = vpop.f32.mrb[0].mxu0
      %v8733 = vadd.f32 %v6270, %v8732
      %v8734 = vpop.f32.mrb[0].mxu0
      %v8735 = vadd.f32 %v6274, %v8734
      %8736 = vmatprep.mubr.bf16.mxu0 %v6086
      %8737 = vmatmul.mubr.bf16.gmra.mrb[0].mxu0 %v6085
      %v8738 = vpop.f32.mrb[0].mxu0
      %v8739 = vadd.f32 %v6270, %v8738
      %v8740 = vpop.f32.mrb[0].mxu0
      %v8741 = vadd.f32 %v6274, %v8740
      %v8742 = vpop.f32.mrb[0].mxu0
      %v8743 = vadd.f32 %v6270, %v8742
      %v8744 = vpop.f32.mrb[0].mxu0
      %v8745 = vadd.f32 %v6274, %v8744
      %8746 = vmatprep.mubr.bf16.mxu0 %v6094
      %8747 = vmatmul.mubr.bf16.gmra.mrb[0].mxu0 %v6093
      %v8748 = vpop.f32.mrb[0].mxu0
      %v8749 = vadd.f32 %v6270, %v8748
      %v8750 = vpop.f32.mrb[0].mxu0
      %v8751 = vadd.f32 %v6274, %v8750
      %v8752 = vpop.f32.mrb[0].mxu0
      %v8753 = vadd.f32 %v6270, %v8752
      %v8754 = vpop.f32.mrb[0].mxu0
      %v8755 = vadd.f32 %v6274, %v8754
      %8756 = vmatprep.mubr.bf16.mxu0 %v6102
      %8757 = vmatmul.mubr.bf16.gmra.mrb[0].mxu0 %v6101
      %v8758 = vpop.f32.mrb[0].mxu0
      %v8759 = vadd.f32 %v6270, %v8758
      %v8760 = vpop.f32.mrb[0].mxu0
      %v8761 = vadd.f32 %v6274, %v8760
      %v8762 = vpop.f32.mrb[0].mxu0
      %v8763 = vadd.f32 %v6270, %v8762
      %v8764 = vpop.f32.mrb[0].mxu0
      %v8765 = vadd.f32 %v6274, %v8764
      %8766 = vmatprep.mubr.bf16.mxu0 %v6110
      %8767 = vmatmul.mubr.bf16.gmra.mrb[0].mxu0 %v6109
      %v8768 = vpop.f32.mrb[0].mxu0
      %v8769 = vadd.f32 %v6270, %v8768
      %v8770 = vpop.f32.mrb[0].mxu0
      %v8771 = vadd.f32 %v6274, %v8770
      %v8772 = vpop.f32.mrb[0].mxu0
      %v8773 = vadd.f32 %v6270, %v8772
      %v8774 = vpop.f32.mrb[0].mxu0
      %v8775 = vadd.f32 %v6274, %v8774
      %8776 = vmatprep.mubr.bf16.mxu0 %v6118
      %8777 = vmatmul.mubr.bf16.gmra.mrb[0].mxu0 %v6117
      %v8778 = vpop.f32.mrb[0].mxu0
      %v8779 = vadd.f32 %v6270, %v8778
      %v8780 = vpop.f32.mrb[0].mxu0
      %v8781 = vadd.f32 %v6274, %v8780
      %v8782 = vpop.f32.mrb[0].mxu0
      %v8783 = vadd.f32 %v6270, %v8782
      %v8784 = vpop.f32.mrb[0].mxu0
      %v8785 = vadd.f32 %v6274, %v8784
      %8786 = vmatprep.mubr.bf16.mxu0 %v6126
      %8787 = vmatmul.mubr.bf16.gmra.mrb[0].mxu0 %v6125
      %v8788 = vpop.f32.mrb[0].mxu0
      %v8789 = vadd.f32 %v6270, %v8788
      %v8790 = vpop.f32.mrb[0].mxu0
      %v8791 = vadd.f32 %v6274, %v8790
      %v8792 = vpop.f32.mrb[0].mxu0
      %v8793 = vadd.f32 %v6270, %v8792
      %v8794 = vpop.f32.mrb[0].mxu0
      %v8795 = vadd.f32 %v6274, %v8794
      %8796 = vmatprep.mubr.bf16.mxu0 %v6134
      %8797 = vmatmul.mubr.bf16.gmra.mrb[0].mxu0 %v6133
      %v8798 = vpop.f32.mrb[0].mxu0
      %v8799 = vadd.f32 %v6270, %v8798
      %v8800 = vpop.f32.mrb[0].mxu0
      %v8801 = vadd.f32 %v6274, %v8800
      %v8802 = vpop.f32.mrb[0].mxu0
      %v8803 = vadd.f32 %v6270, %v8802
      %v8804 = vpop.f32.mrb[0].mxu0
      %v8805 = vadd.f32 %v6274, %v8804
      %8806 = vmatprep.mubr.bf16.mxu0 %v6142
      %8807 = vmatmul.mubr.bf16.gmra.mrb[0].mxu0 %v6141
      %v8808 = vpop.f32.mrb[0].mxu0
      %v8809 = vadd.f32 %v6270, %v8808
      %v8810 = vpop.f32.mrb[0].mxu0
      %v8811 = vadd.f32 %v6274, %v8810
      %v8812 = vpop.f32.mrb[0].mxu0
      %v8813 = vadd.f32 %v6270, %v8812
      %v8814 = vpop.f32.mrb[0].mxu0
      %v8815 = vadd.f32 %v6274, %v8814
      %8816 = vmatprep.mubr.bf16.mxu0 %v6150
      %8817 = vmatmul.mubr.bf16.gmra.mrb[0].mxu0 %v6149
      %v8818 = vpop.f32.mrb[0].mxu0
      %v8819 = vadd.f32 %v6270, %v8818
      %v8820 = vpop.f32.mrb[0].mxu0
      %v8821 = vadd.f32 %v6274, %v8820
      %v8822 = vpop.f32.mrb[0].mxu0
      %v8823 = vadd.f32 %v6270, %v8822
      %v8824 = vpop.f32.mrb[0].mxu0
      %v8825 = vadd.f32 %v6274, %v8824
      %8826 = vmatprep.mubr.bf16.mxu0 %v6158
      %8827 = vmatmul.mubr.bf16.gmra.mrb[0].mxu0 %v6157
      %v8828 = vpop.f32.mrb[0].mxu0
      %v8829 = vadd.f32 %v6270, %v8828
      %v8830 = vpop.f32.mrb[0].mxu0
      %v8831 = vadd.f32 %v6274, %v8830
      %v8832 = vpop.f32.mrb[0].mxu0
      %v8833 = vadd.f32 %v6270, %v8832
      %v8834 = vpop.f32.mrb[0].mxu0
      %v8835 = vadd.f32 %v6274, %v8834
      %8836 = vmatprep.mubr.bf16.mxu0 %v6166
      %8837 = vmatmul.mubr.bf16.gmra.mrb[0].mxu0 %v6165
      %v8838 = vpop.f32.mrb[0].mxu0
      %v8839 = vadd.f32 %v6270, %v8838
      %v8840 = vpop.f32.mrb[0].mxu0
      %v8841 = vadd.f32 %v6274, %v8840
      %v8842 = vpop.f32.mrb[0].mxu0
      %v8843 = vpop.f32.mrb[0].mxu0
      %8844 = vdwg.mxu0
      %v8845 = vmax.f32 %v8719, 0.0
      %v8846 = vmax.f32 %v8721, 0.0
      %v8847 = vmax.f32 %v8723, 0.0
      %v8848 = vmax.f32 %v8725, 0.0
      %v8849 = vmax.f32 %v8729, 0.0
      %v8850 = vmax.f32 %v8731, 0.0
      %v8851 = vmax.f32 %v8733, 0.0
      %v8852 = vmax.f32 %v8735, 0.0
      %v8853 = vmax.f32 %v8739, 0.0
      %v8854 = vmax.f32 %v8741, 0.0
      %v8855 = vmax.f32 %v8743, 0.0
      %v8856 = vmax.f32 %v8745, 0.0
      %v8857 = vmax.f32 %v8749, 0.0
      %v8858 = vmax.f32 %v8751, 0.0
      %v8859 = vmax.f32 %v8753, 0.0
      %v8860 = vmax.f32 %v8755, 0.0
      %v8861 = vmax.f32 %v8759, 0.0
      %v8862 = vmax.f32 %v8761, 0.0
      %v8863 = vmax.f32 %v8763, 0.0
      %v8864 = vmax.f32 %v8765, 0.0
      %v8865 = vmax.f32 %v8769, 0.0
      %v8866 = vmax.f32 %v8771, 0.0
      %v8867 = vmax.f32 %v8773, 0.0
      %v8868 = vmax.f32 %v8775, 0.0
      %v8869 = vmax.f32 %v8779, 0.0
      %v8870 = vmax.f32 %v8781, 0.0
      %v8871 = vmax.f32 %v8783, 0.0
      %v8872 = vmax.f32 %v8785, 0.0
      %v8873 = vmax.f32 %v8789, 0.0
      %v8874 = vmax.f32 %v8791, 0.0
      %v8875 = vmax.f32 %v8793, 0.0
      %v8876 = vmax.f32 %v8795, 0.0
      %v8877 = vmax.f32 %v8799, 0.0
      %v8878 = vmax.f32 %v8801, 0.0
      %v8879 = vmax.f32 %v8803, 0.0
      %v8880 = vmax.f32 %v8805, 0.0
      %v8881 = vmax.f32 %v8809, 0.0
      %v8882 = vmax.f32 %v8811, 0.0
      %v8883 = vmax.f32 %v8813, 0.0
      %v8884 = vmax.f32 %v8815, 0.0
      %v8885 = vmax.f32 %v8819, 0.0
      %v8886 = vmax.f32 %v8821, 0.0
      %v8887 = vmax.f32 %v8823, 0.0
      %v8888 = vmax.f32 %v8825, 0.0
      %v8889 = vmax.f32 %v8829, 0.0
      %v8890 = vmax.f32 %v8831, 0.0
      %v8891 = vmax.f32 %v8833, 0.0
      %v8892 = vmax.f32 %v8835, 0.0
      %v8893 = vmax.f32 %v8839, 0.0
      %v8894 = vmax.f32 %v8841, 0.0
      %v8895 = vpack.c.bf16 %v8847, %v8845
      %v8896 = vpack.c.bf16 %v8848, %v8846
      %v8897 = vpack.c.bf16 %v8851, %v8849
      %v8898 = vpack.c.bf16 %v8852, %v8850
      %v8899 = vpack.c.bf16 %v8855, %v8853
      %v8900 = vpack.c.bf16 %v8856, %v8854
      %v8901 = vpack.c.bf16 %v8859, %v8857
      %v8902 = vpack.c.bf16 %v8860, %v8858
      %v8903 = vpack.c.bf16 %v8863, %v8861
      %v8904 = vpack.c.bf16 %v8864, %v8862
      %v8905 = vpack.c.bf16 %v8867, %v8865
      %v8906 = vpack.c.bf16 %v8868, %v8866
      %v8907 = vpack.c.bf16 %v8871, %v8869
      %v8908 = vpack.c.bf16 %v8872, %v8870
      %v8909 = vpack.c.bf16 %v8875, %v8873
      %v8910 = vpack.c.bf16 %v8876, %v8874
      %v8911 = vpack.c.bf16 %v8879, %v8877
      %v8912 = vpack.c.bf16 %v8880, %v8878
      %v8913 = vpack.c.bf16 %v8883, %v8881
      %v8914 = vpack.c.bf16 %v8884, %v8882
      %v8915 = vpack.c.bf16 %v8887, %v8885
      %v8916 = vpack.c.bf16 %v8888, %v8886
      %v8917 = vpack.c.bf16 %v8891, %v8889
      %v8918 = vpack.c.bf16 %v8892, %v8890
      %v8919 = vpack.c.bf16 %v8893, %v8893
      %v8920 = vpack.c.bf16 %v8894, %v8894
      %8921 = vmatprep.subr.bf16.mxu0 %v6782
      %8922 = vmatpush1.bf16.msra.mxu0 %v6781
      %8923 = vmatprep.subr.bf16.mxu0 %v6784
      %8924 = vmatpush1.bf16.msra.mxu0 %v6783
      %8925 = vmatprep.subr.bf16.mxu0 %v6786
      %8926 = vmatpush1.bf16.msra.mxu0 %v6785
      %8927 = vmatprep.subr.bf16.mxu0 %v6788
      %8928 = vmatpush1.bf16.msra.mxu0 %v6787
      %8929 = vmatprep.subr.bf16.mxu0 %v6790
      %8930 = vmatpush1.bf16.msra.mxu0 %v6789
      %8931 = vmatprep.subr.bf16.mxu0 %v6792
      %8932 = vmatpush1.bf16.msra.mxu0 %v6791
      %8933 = vmatprep.subr.bf16.mxu0 %v6794
      %8934 = vmatpush1.bf16.msra.mxu0 %v6793
      %8935 = vmatprep.subr.bf16.mxu0 %v6796
      %8936 = vmatpush1.bf16.msra.mxu0 %v6795
      %8937 = vmatprep.subr.bf16.mxu0 %v6798
      %8938 = vmatpush1.bf16.msra.mxu0 %v6797
      %8939 = vmatprep.subr.bf16.mxu0 %v6800
      %8940 = vmatpush1.bf16.msra.mxu0 %v6799
      %8941 = vmatprep.subr.bf16.mxu0 %v6802
      %8942 = vmatpush1.bf16.msra.mxu0 %v6801
      %8943 = vmatprep.subr.bf16.mxu0 %v6804
      %8944 = vmatpush1.bf16.msra.mxu0 %v6803
      %8945 = vmatprep.subr.bf16.mxu0 %v6806
      %8946 = vmatpush1.bf16.msra.mxu0 %v6805
      %8947 = vmatprep.subr.bf16.mxu0 %v6808
      %8948 = vmatpush1.bf16.msra.mxu0 %v6807
      %8949 = vmatprep.subr.bf16.mxu0 %v6810
      %8950 = vmatpush1.bf16.msra.mxu0 %v6809
      %8951 = vmatprep.subr.bf16.mxu0 %v6812
      %8952 = vmatpush1.bf16.msra.mxu0 %v6811
      %8953 = vmatprep.mubr.bf16.mxu0 %v8896
      %8954 = vmatmul.mubr.bf16.gmra.mrb[0].mxu0 %v8895
      %v8955 = vpop.f32.mrb[0].mxu0
      %v8956 = vadd.f32 %v6678, %v8955
      %v8957 = vpop.f32.mrb[0].mxu0
      %v8958 = vadd.f32 %v6682, %v8957
      %v8959 = vpop.f32.mrb[0].mxu0
      %v8960 = vadd.f32 %v6678, %v8959
      %v8961 = vpop.f32.mrb[0].mxu0
      %v8962 = vadd.f32 %v6682, %v8961
      %8963 = vmatprep.mubr.bf16.mxu0 %v8898
      %8964 = vmatmul.mubr.bf16.gmra.mrb[0].mxu0 %v8897
      %v8965 = vpop.f32.mrb[0].mxu0
      %v8966 = vadd.f32 %v6678, %v8965
      %v8967 = vpop.f32.mrb[0].mxu0
      %v8968 = vadd.f32 %v6682, %v8967
      %v8969 = vpop.f32.mrb[0].mxu0
      %v8970 = vadd.f32 %v6678, %v8969
      %v8971 = vpop.f32.mrb[0].mxu0
      %v8972 = vadd.f32 %v6682, %v8971
      %8973 = vmatprep.mubr.bf16.mxu0 %v8900
      %8974 = vmatmul.mubr.bf16.gmra.mrb[0].mxu0 %v8899
      %v8975 = vpop.f32.mrb[0].mxu0
      %v8976 = vadd.f32 %v6678, %v8975
      %v8977 = vpop.f32.mrb[0].mxu0
      %v8978 = vadd.f32 %v6682, %v8977
      %v8979 = vpop.f32.mrb[0].mxu0
      %v8980 = vadd.f32 %v6678, %v8979
      %v8981 = vpop.f32.mrb[0].mxu0
      %v8982 = vadd.f32 %v6682, %v8981
      %8983 = vmatprep.mubr.bf16.mxu0 %v8902
      %8984 = vmatmul.mubr.bf16.gmra.mrb[0].mxu0 %v8901
      %v8985 = vpop.f32.mrb[0].mxu0
      %v8986 = vadd.f32 %v6678, %v8985
      %v8987 = vpop.f32.mrb[0].mxu0
      %v8988 = vadd.f32 %v6682, %v8987
      %v8989 = vpop.f32.mrb[0].mxu0
      %v8990 = vadd.f32 %v6678, %v8989
      %v8991 = vpop.f32.mrb[0].mxu0
      %v8992 = vadd.f32 %v6682, %v8991
      %8993 = vmatprep.mubr.bf16.mxu0 %v8904
      %8994 = vmatmul.mubr.bf16.gmra.mrb[0].mxu0 %v8903
      %v8995 = vpop.f32.mrb[0].mxu0
      %v8996 = vadd.f32 %v6678, %v8995
      %v8997 = vpop.f32.mrb[0].mxu0
      %v8998 = vadd.f32 %v6682, %v8997
      %v8999 = vpop.f32.mrb[0].mxu0
      %v9000 = vadd.f32 %v6678, %v8999
      %v9001 = vpop.f32.mrb[0].mxu0
      %v9002 = vadd.f32 %v6682, %v9001
      %9003 = vmatprep.mubr.bf16.mxu0 %v8906
      %9004 = vmatmul.mubr.bf16.gmra.mrb[0].mxu0 %v8905
      %v9005 = vpop.f32.mrb[0].mxu0
      %v9006 = vadd.f32 %v6678, %v9005
      %v9007 = vpop.f32.mrb[0].mxu0
      %v9008 = vadd.f32 %v6682, %v9007
      %v9009 = vpop.f32.mrb[0].mxu0
      %v9010 = vadd.f32 %v6678, %v9009
      %v9011 = vpop.f32.mrb[0].mxu0
      %v9012 = vadd.f32 %v6682, %v9011
      %9013 = vmatprep.mubr.bf16.mxu0 %v8908
      %9014 = vmatmul.mubr.bf16.gmra.mrb[0].mxu0 %v8907
      %v9015 = vpop.f32.mrb[0].mxu0
      %v9016 = vadd.f32 %v6678, %v9015
      %v9017 = vpop.f32.mrb[0].mxu0
      %v9018 = vadd.f32 %v6682, %v9017
      %v9019 = vpop.f32.mrb[0].mxu0
      %v9020 = vadd.f32 %v6678, %v9019
      %v9021 = vpop.f32.mrb[0].mxu0
      %v9022 = vadd.f32 %v6682, %v9021
      %9023 = vmatprep.mubr.bf16.mxu0 %v8910
      %9024 = vmatmul.mubr.bf16.gmra.mrb[0].mxu0 %v8909
      %v9025 = vpop.f32.mrb[0].mxu0
      %v9026 = vadd.f32 %v6678, %v9025
      %v9027 = vpop.f32.mrb[0].mxu0
      %v9028 = vadd.f32 %v6682, %v9027
      %v9029 = vpop.f32.mrb[0].mxu0
      %v9030 = vadd.f32 %v6678, %v9029
      %v9031 = vpop.f32.mrb[0].mxu0
      %v9032 = vadd.f32 %v6682, %v9031
      %9033 = vmatprep.mubr.bf16.mxu0 %v8912
      %9034 = vmatmul.mubr.bf16.gmra.mrb[0].mxu0 %v8911
      %v9035 = vpop.f32.mrb[0].mxu0
      %v9036 = vadd.f32 %v6678, %v9035
      %v9037 = vpop.f32.mrb[0].mxu0
      %v9038 = vadd.f32 %v6682, %v9037
      %v9039 = vpop.f32.mrb[0].mxu0
      %v9040 = vadd.f32 %v6678, %v9039
      %v9041 = vpop.f32.mrb[0].mxu0
      %v9042 = vadd.f32 %v6682, %v9041
      %9043 = vmatprep.mubr.bf16.mxu0 %v8914
      %9044 = vmatmul.mubr.bf16.gmra.mrb[0].mxu0 %v8913
      %v9045 = vpop.f32.mrb[0].mxu0
      %v9046 = vadd.f32 %v6678, %v9045
      %v9047 = vpop.f32.mrb[0].mxu0
      %v9048 = vadd.f32 %v6682, %v9047
      %v9049 = vpop.f32.mrb[0].mxu0
      %v9050 = vadd.f32 %v6678, %v9049
      %v9051 = vpop.f32.mrb[0].mxu0
      %v9052 = vadd.f32 %v6682, %v9051
      %9053 = vmatprep.mubr.bf16.mxu0 %v8916
      %9054 = vmatmul.mubr.bf16.gmra.mrb[0].mxu0 %v8915
      %v9055 = vpop.f32.mrb[0].mxu0
      %v9056 = vadd.f32 %v6678, %v9055
      %v9057 = vpop.f32.mrb[0].mxu0
      %v9058 = vadd.f32 %v6682, %v9057
      %v9059 = vpop.f32.mrb[0].mxu0
      %v9060 = vadd.f32 %v6678, %v9059
      %v9061 = vpop.f32.mrb[0].mxu0
      %v9062 = vadd.f32 %v6682, %v9061
      %9063 = vmatprep.mubr.bf16.mxu0 %v8918
      %9064 = vmatmul.mubr.bf16.gmra.mrb[0].mxu0 %v8917
      %v9065 = vpop.f32.mrb[0].mxu0
      %v9066 = vadd.f32 %v6678, %v9065
      %v9067 = vpop.f32.mrb[0].mxu0
      %v9068 = vadd.f32 %v6682, %v9067
      %v9069 = vpop.f32.mrb[0].mxu0
      %v9070 = vadd.f32 %v6678, %v9069
      %v9071 = vpop.f32.mrb[0].mxu0
      %v9072 = vadd.f32 %v6682, %v9071
      %9073 = vmatprep.mubr.bf16.mxu0 %v8920
      %9074 = vmatmul.mubr.bf16.gmra.mrb[0].mxu0 %v8919
      %v9075 = vpop.f32.mrb[0].mxu0
      %v9076 = vadd.f32 %v6678, %v9075
      %v9077 = vpop.f32.mrb[0].mxu0
      %v9078 = vadd.f32 %v6682, %v9077
      %v9079 = vpop.f32.mrb[0].mxu0
      %v9080 = vpop.f32.mrb[0].mxu0
      %9081 = vdwg.mxu0
      %v9082 = vmax.f32 %v8956, 0.0
      %v9083 = vmax.f32 %v8958, 0.0
      %v9084 = vmax.f32 %v8960, 0.0
      %v9085 = vmax.f32 %v8962, 0.0
      %v9086 = vmax.f32 %v8966, 0.0
      %v9087 = vmax.f32 %v8968, 0.0
      %v9088 = vmax.f32 %v8970, 0.0
      %v9089 = vmax.f32 %v8972, 0.0
      %v9090 = vmax.f32 %v8976, 0.0
      %v9091 = vmax.f32 %v8978, 0.0
      %v9092 = vmax.f32 %v8980, 0.0
      %v9093 = vmax.f32 %v8982, 0.0
      %v9094 = vmax.f32 %v8986, 0.0
      %v9095 = vmax.f32 %v8988, 0.0
      %v9096 = vmax.f32 %v8990, 0.0
      %v9097 = vmax.f32 %v8992, 0.0
      %v9098 = vmax.f32 %v8996, 0.0
      %v9099 = vmax.f32 %v8998, 0.0
      %v9100 = vmax.f32 %v9000, 0.0
      %v9101 = vmax.f32 %v9002, 0.0
      %v9102 = vmax.f32 %v9006, 0.0
      %v9103 = vmax.f32 %v9008, 0.0
      %v9104 = vmax.f32 %v9010, 0.0
      %v9105 = vmax.f32 %v9012, 0.0
      %v9106 = vmax.f32 %v9016, 0.0
      %v9107 = vmax.f32 %v9018, 0.0
      %v9108 = vmax.f32 %v9020, 0.0
      %v9109 = vmax.f32 %v9022, 0.0
      %v9110 = vmax.f32 %v9026, 0.0
      %v9111 = vmax.f32 %v9028, 0.0
      %v9112 = vmax.f32 %v9030, 0.0
      %v9113 = vmax.f32 %v9032, 0.0
      %v9114 = vmax.f32 %v9036, 0.0
      %v9115 = vmax.f32 %v9038, 0.0
      %v9116 = vmax.f32 %v9040, 0.0
      %v9117 = vmax.f32 %v9042, 0.0
      %v9118 = vmax.f32 %v9046, 0.0
      %v9119 = vmax.f32 %v9048, 0.0
      %v9120 = vmax.f32 %v9050, 0.0
      %v9121 = vmax.f32 %v9052, 0.0
      %v9122 = vmax.f32 %v9056, 0.0
      %v9123 = vmax.f32 %v9058, 0.0
      %v9124 = vmax.f32 %v9060, 0.0
      %v9125 = vmax.f32 %v9062, 0.0
      %v9126 = vmax.f32 %v9066, 0.0
      %v9127 = vmax.f32 %v9068, 0.0
      %v9128 = vmax.f32 %v9070, 0.0
      %v9129 = vmax.f32 %v9072, 0.0
      %v9130 = vmax.f32 %v9076, 0.0
      %v9131 = vmax.f32 %v9078, 0.0
      %v9132 = vpack.c.bf16 %v9084, %v9082
      %v9133 = vpack.c.bf16 %v9085, %v9083
      %v9134 = vpack.c.bf16 %v9088, %v9086
      %v9135 = vpack.c.bf16 %v9089, %v9087
      %v9136 = vpack.c.bf16 %v9092, %v9090
      %v9137 = vpack.c.bf16 %v9093, %v9091
      %v9138 = vpack.c.bf16 %v9096, %v9094
      %v9139 = vpack.c.bf16 %v9097, %v9095
      %v9140 = vpack.c.bf16 %v9100, %v9098
      %v9141 = vpack.c.bf16 %v9101, %v9099
      %v9142 = vpack.c.bf16 %v9104, %v9102
      %v9143 = vpack.c.bf16 %v9105, %v9103
      %v9144 = vpack.c.bf16 %v9108, %v9106
      %v9145 = vpack.c.bf16 %v9109, %v9107
      %v9146 = vpack.c.bf16 %v9112, %v9110
      %v9147 = vpack.c.bf16 %v9113, %v9111
      %v9148 = vpack.c.bf16 %v9116, %v9114
      %v9149 = vpack.c.bf16 %v9117, %v9115
      %v9150 = vpack.c.bf16 %v9120, %v9118
      %v9151 = vpack.c.bf16 %v9121, %v9119
      %v9152 = vpack.c.bf16 %v9124, %v9122
      %v9153 = vpack.c.bf16 %v9125, %v9123
      %v9154 = vpack.c.bf16 %v9128, %v9126
      %v9155 = vpack.c.bf16 %v9129, %v9127
      %v9156 = vpack.c.bf16 %v9130, %v9130
      %v9157 = vpack.c.bf16 %v9131, %v9131
      %9158 = vmatprep.subr.bf16.mxu0 %v7190
      %9159 = vmatpush1.bf16.msra.mxu0 %v7189
      %9160 = vmatprep.subr.bf16.mxu0 %v7192
      %9161 = vmatpush1.bf16.msra.mxu0 %v7191
      %9162 = vmatprep.subr.bf16.mxu0 %v7194
      %9163 = vmatpush1.bf16.msra.mxu0 %v7193
      %9164 = vmatprep.subr.bf16.mxu0 %v7196
      %9165 = vmatpush1.bf16.msra.mxu0 %v7195
      %9166 = vmatprep.subr.bf16.mxu0 %v7198
      %9167 = vmatpush1.bf16.msra.mxu0 %v7197
      %9168 = vmatprep.subr.bf16.mxu0 %v7200
      %9169 = vmatpush1.bf16.msra.mxu0 %v7199
      %9170 = vmatprep.subr.bf16.mxu0 %v7202
      %9171 = vmatpush1.bf16.msra.mxu0 %v7201
      %9172 = vmatprep.subr.bf16.mxu0 %v7204
      %9173 = vmatpush1.bf16.msra.mxu0 %v7203
      %9174 = vmatprep.subr.bf16.mxu0 %v7206
      %9175 = vmatpush1.bf16.msra.mxu0 %v7205
      %9176 = vmatprep.subr.bf16.mxu0 %v7208
      %9177 = vmatpush1.bf16.msra.mxu0 %v7207
      %9178 = vmatprep.subr.bf16.mxu0 %v7210
      %9179 = vmatpush1.bf16.msra.mxu0 %v7209
      %9180 = vmatprep.subr.bf16.mxu0 %v7212
      %9181 = vmatpush1.bf16.msra.mxu0 %v7211
      %9182 = vmatprep.subr.bf16.mxu0 %v7214
      %9183 = vmatpush1.bf16.msra.mxu0 %v7213
      %9184 = vmatprep.subr.bf16.mxu0 %v7216
      %9185 = vmatpush1.bf16.msra.mxu0 %v7215
      %9186 = vmatprep.subr.bf16.mxu0 %v7218
      %9187 = vmatpush1.bf16.msra.mxu0 %v7217
      %9188 = vmatprep.subr.bf16.mxu0 %v7220
      %9189 = vmatpush1.bf16.msra.mxu0 %v7219
      %9190 = vmatprep.mubr.bf16.mxu0 %v9133
      %9191 = vmatmul.mubr.bf16.gmra.mrb[0].mxu0 %v9132
      %v9192 = vpop.f32.mrb[0].mxu0
      %v9193 = vadd.f32 %v7086, %v9192
      %v9194 = vpop.f32.mrb[0].mxu0
      %v9195 = vadd.f32 %v7090, %v9194
      %v9196 = vpop.f32.mrb[0].mxu0
      %v9197 = vadd.f32 %v7086, %v9196
      %v9198 = vpop.f32.mrb[0].mxu0
      %v9199 = vadd.f32 %v7090, %v9198
      %9200 = vmatprep.mubr.bf16.mxu0 %v9135
      %9201 = vmatmul.mubr.bf16.gmra.mrb[0].mxu0 %v9134
      %v9202 = vpop.f32.mrb[0].mxu0
      %v9203 = vadd.f32 %v7086, %v9202
      %v9204 = vpop.f32.mrb[0].mxu0
      %v9205 = vadd.f32 %v7090, %v9204
      %v9206 = vpop.f32.mrb[0].mxu0
      %v9207 = vadd.f32 %v7086, %v9206
      %v9208 = vpop.f32.mrb[0].mxu0
      %v9209 = vadd.f32 %v7090, %v9208
      %9210 = vmatprep.mubr.bf16.mxu0 %v9137
      %9211 = vmatmul.mubr.bf16.gmra.mrb[0].mxu0 %v9136
      %v9212 = vpop.f32.mrb[0].mxu0
      %v9213 = vadd.f32 %v7086, %v9212
      %v9214 = vpop.f32.mrb[0].mxu0
      %v9215 = vadd.f32 %v7090, %v9214
      %v9216 = vpop.f32.mrb[0].mxu0
      %v9217 = vadd.f32 %v7086, %v9216
      %v9218 = vpop.f32.mrb[0].mxu0
      %v9219 = vadd.f32 %v7090, %v9218
      %9220 = vmatprep.mubr.bf16.mxu0 %v9139
      %9221 = vmatmul.mubr.bf16.gmra.mrb[0].mxu0 %v9138
      %v9222 = vpop.f32.mrb[0].mxu0
      %v9223 = vadd.f32 %v7086, %v9222
      %v9224 = vpop.f32.mrb[0].mxu0
      %v9225 = vadd.f32 %v7090, %v9224
      %v9226 = vpop.f32.mrb[0].mxu0
      %v9227 = vadd.f32 %v7086, %v9226
      %v9228 = vpop.f32.mrb[0].mxu0
      %v9229 = vadd.f32 %v7090, %v9228
      %9230 = vmatprep.mubr.bf16.mxu0 %v9141
      %9231 = vmatmul.mubr.bf16.gmra.mrb[0].mxu0 %v9140
      %v9232 = vpop.f32.mrb[0].mxu0
      %v9233 = vadd.f32 %v7086, %v9232
      %v9234 = vpop.f32.mrb[0].mxu0
      %v9235 = vadd.f32 %v7090, %v9234
      %v9236 = vpop.f32.mrb[0].mxu0
      %v9237 = vadd.f32 %v7086, %v9236
      %v9238 = vpop.f32.mrb[0].mxu0
      %v9239 = vadd.f32 %v7090, %v9238
      %9240 = vmatprep.mubr.bf16.mxu0 %v9143
      %9241 = vmatmul.mubr.bf16.gmra.mrb[0].mxu0 %v9142
      %v9242 = vpop.f32.mrb[0].mxu0
      %v9243 = vadd.f32 %v7086, %v9242
      %v9244 = vpop.f32.mrb[0].mxu0
      %v9245 = vadd.f32 %v7090, %v9244
      %v9246 = vpop.f32.mrb[0].mxu0
      %v9247 = vadd.f32 %v7086, %v9246
      %v9248 = vpop.f32.mrb[0].mxu0
      %v9249 = vadd.f32 %v7090, %v9248
      %9250 = vmatprep.mubr.bf16.mxu0 %v9145
      %9251 = vmatmul.mubr.bf16.gmra.mrb[0].mxu0 %v9144
      %v9252 = vpop.f32.mrb[0].mxu0
      %v9253 = vadd.f32 %v7086, %v9252
      %v9254 = vpop.f32.mrb[0].mxu0
      %v9255 = vadd.f32 %v7090, %v9254
      %v9256 = vpop.f32.mrb[0].mxu0
      %v9257 = vadd.f32 %v7086, %v9256
      %v9258 = vpop.f32.mrb[0].mxu0
      %v9259 = vadd.f32 %v7090, %v9258
      %9260 = vmatprep.mubr.bf16.mxu0 %v9147
      %9261 = vmatmul.mubr.bf16.gmra.mrb[0].mxu0 %v9146
      %v9262 = vpop.f32.mrb[0].mxu0
      %v9263 = vadd.f32 %v7086, %v9262
      %v9264 = vpop.f32.mrb[0].mxu0
      %v9265 = vadd.f32 %v7090, %v9264
      %v9266 = vpop.f32.mrb[0].mxu0
      %v9267 = vadd.f32 %v7086, %v9266
      %v9268 = vpop.f32.mrb[0].mxu0
      %v9269 = vadd.f32 %v7090, %v9268
      %9270 = vmatprep.mubr.bf16.mxu0 %v9149
      %9271 = vmatmul.mubr.bf16.gmra.mrb[0].mxu0 %v9148
      %v9272 = vpop.f32.mrb[0].mxu0
      %v9273 = vadd.f32 %v7086, %v9272
      %v9274 = vpop.f32.mrb[0].mxu0
      %v9275 = vadd.f32 %v7090, %v9274
      %v9276 = vpop.f32.mrb[0].mxu0
      %v9277 = vadd.f32 %v7086, %v9276
      %v9278 = vpop.f32.mrb[0].mxu0
      %v9279 = vadd.f32 %v7090, %v9278
      %9280 = vmatprep.mubr.bf16.mxu0 %v9151
      %9281 = vmatmul.mubr.bf16.gmra.mrb[0].mxu0 %v9150
      %v9282 = vpop.f32.mrb[0].mxu0
      %v9283 = vadd.f32 %v7086, %v9282
      %v9284 = vpop.f32.mrb[0].mxu0
      %v9285 = vadd.f32 %v7090, %v9284
      %v9286 = vpop.f32.mrb[0].mxu0
      %v9287 = vadd.f32 %v7086, %v9286
      %v9288 = vpop.f32.mrb[0].mxu0
      %v9289 = vadd.f32 %v7090, %v9288
      %9290 = vmatprep.mubr.bf16.mxu0 %v9153
      %9291 = vmatmul.mubr.bf16.gmra.mrb[0].mxu0 %v9152
      %v9292 = vpop.f32.mrb[0].mxu0
      %v9293 = vadd.f32 %v7086, %v9292
      %v9294 = vpop.f32.mrb[0].mxu0
      %v9295 = vadd.f32 %v7090, %v9294
      %v9296 = vpop.f32.mrb[0].mxu0
      %v9297 = vadd.f32 %v7086, %v9296
      %v9298 = vpop.f32.mrb[0].mxu0
      %v9299 = vadd.f32 %v7090, %v9298
      %9300 = vmatprep.mubr.bf16.mxu0 %v9155
      %9301 = vmatmul.mubr.bf16.gmra.mrb[0].mxu0 %v9154
      %v9302 = vpop.f32.mrb[0].mxu0
      %v9303 = vadd.f32 %v7086, %v9302
      %v9304 = vpop.f32.mrb[0].mxu0
      %v9305 = vadd.f32 %v7090, %v9304
      %v9306 = vpop.f32.mrb[0].mxu0
      %v9307 = vadd.f32 %v7086, %v9306
      %v9308 = vpop.f32.mrb[0].mxu0
      %v9309 = vadd.f32 %v7090, %v9308
      %9310 = vmatprep.mubr.bf16.mxu0 %v9157
      %9311 = vmatmul.mubr.bf16.gmra.mrb[0].mxu0 %v9156
      %v9312 = vpop.f32.mrb[0].mxu0
      %v9313 = vadd.f32 %v7086, %v9312
      %v9314 = vpop.f32.mrb[0].mxu0
      %v9315 = vadd.f32 %v7090, %v9314
      %v9316 = vpop.f32.mrb[0].mxu0
      %v9317 = vpop.f32.mrb[0].mxu0
      %9318 = vdwg.mxu0
      %9369 = vrot.lane.b32.xlu0 %v7923, 64
      %v9370 = vpop.permute.xlu0 %9369
      %9371 = vrot.lane.b32.xlu0 %v7925, 64
      %v9372 = vpop.permute.xlu0 %9371
      %9373 = vrot.lane.b32.xlu0 %v7927, 64
      %v9374 = vpop.permute.xlu0 %9373
      %9375 = vrot.lane.b32.xlu0 %v7929, 64
      %v9376 = vpop.permute.xlu0 %9375
      %9377 = vrot.lane.b32.xlu0 %v7933, 64
      %v9378 = vpop.permute.xlu0 %9377
      %9379 = vrot.lane.b32.xlu0 %v7935, 64
      %v9380 = vpop.permute.xlu0 %9379
      %9381 = vrot.lane.b32.xlu0 %v7937, 64
      %v9382 = vpop.permute.xlu0 %9381
      %9383 = vrot.lane.b32.xlu0 %v7939, 64
      %v9384 = vpop.permute.xlu0 %9383
      %9385 = vrot.lane.b32.xlu0 %v7943, 64
      %v9386 = vpop.permute.xlu0 %9385
      %9387 = vrot.lane.b32.xlu0 %v7945, 64
      %v9388 = vpop.permute.xlu0 %9387
      %9389 = vrot.lane.b32.xlu0 %v7947, 64
      %v9390 = vpop.permute.xlu0 %9389
      %9391 = vrot.lane.b32.xlu0 %v7949, 64
      %v9392 = vpop.permute.xlu0 %9391
      %9393 = vrot.lane.b32.xlu0 %v7953, 64
      %v9394 = vpop.permute.xlu0 %9393
      %9395 = vrot.lane.b32.xlu0 %v7955, 64
      %v9396 = vpop.permute.xlu0 %9395
      %9397 = vrot.lane.b32.xlu0 %v7957, 64
      %v9398 = vpop.permute.xlu0 %9397
      %9399 = vrot.lane.b32.xlu0 %v7959, 64
      %v9400 = vpop.permute.xlu0 %9399
      %9401 = vrot.lane.b32.xlu0 %v7963, 64
      %v9402 = vpop.permute.xlu0 %9401
      %9403 = vrot.lane.b32.xlu0 %v7965, 64
      %v9404 = vpop.permute.xlu0 %9403
      %9405 = vrot.lane.b32.xlu0 %v7967, 64
      %v9406 = vpop.permute.xlu0 %9405
      %9407 = vrot.lane.b32.xlu0 %v7969, 64
      %v9408 = vpop.permute.xlu0 %9407
      %9409 = vrot.lane.b32.xlu0 %v7973, 64
      %v9410 = vpop.permute.xlu0 %9409
      %9411 = vrot.lane.b32.xlu0 %v7975, 64
      %v9412 = vpop.permute.xlu0 %9411
      %9413 = vrot.lane.b32.xlu0 %v7977, 64
      %v9414 = vpop.permute.xlu0 %9413
      %9415 = vrot.lane.b32.xlu0 %v7979, 64
      %v9416 = vpop.permute.xlu0 %9415
      %9417 = vrot.lane.b32.xlu0 %v7983, 64
      %v9418 = vpop.permute.xlu0 %9417
      %9419 = vrot.lane.b32.xlu0 %v7985, 64
      %v9420 = vpop.permute.xlu0 %9419
      %9421 = vrot.lane.b32.xlu0 %v7987, 64
      %v9422 = vpop.permute.xlu0 %9421
      %9423 = vrot.lane.b32.xlu0 %v7989, 64
      %v9424 = vpop.permute.xlu0 %9423
      %9425 = vrot.lane.b32.xlu0 %v7993, 64
      %v9426 = vpop.permute.xlu0 %9425
      %9427 = vrot.lane.b32.xlu0 %v7995, 64
      %v9428 = vpop.permute.xlu0 %9427
      %9429 = vrot.lane.b32.xlu0 %v7997, 64
      %v9430 = vpop.permute.xlu0 %9429
      %9431 = vrot.lane.b32.xlu0 %v7999, 64
      %v9432 = vpop.permute.xlu0 %9431
      %9433 = vrot.lane.b32.xlu0 %v8003, 64
      %v9434 = vpop.permute.xlu0 %9433
      %9435 = vrot.lane.b32.xlu0 %v8005, 64
      %v9436 = vpop.permute.xlu0 %9435
      %9437 = vrot.lane.b32.xlu0 %v8007, 64
      %v9438 = vpop.permute.xlu0 %9437
      %9439 = vrot.lane.b32.xlu0 %v8009, 64
      %v9440 = vpop.permute.xlu0 %9439
      %9441 = vrot.lane.b32.xlu0 %v8013, 64
      %v9442 = vpop.permute.xlu0 %9441
      %9443 = vrot.lane.b32.xlu0 %v8015, 64
      %v9444 = vpop.permute.xlu0 %9443
      %9445 = vrot.lane.b32.xlu0 %v8017, 64
      %v9446 = vpop.permute.xlu0 %9445
      %9447 = vrot.lane.b32.xlu0 %v8019, 64
      %v9448 = vpop.permute.xlu0 %9447
      %9449 = vrot.lane.b32.xlu0 %v8023, 64
      %v9450 = vpop.permute.xlu0 %9449
      %9451 = vrot.lane.b32.xlu0 %v8025, 64
      %v9452 = vpop.permute.xlu0 %9451
      %9453 = vrot.lane.b32.xlu0 %v8027, 64
      %v9454 = vpop.permute.xlu0 %9453
      %9455 = vrot.lane.b32.xlu0 %v8029, 64
      %v9456 = vpop.permute.xlu0 %9455
      %9457 = vrot.lane.b32.xlu0 %v8033, 64
      %v9458 = vpop.permute.xlu0 %9457
      %9459 = vrot.lane.b32.xlu0 %v8035, 64
      %v9460 = vpop.permute.xlu0 %9459
      %9461 = vrot.lane.b32.xlu0 %v8037, 64
      %v9462 = vpop.permute.xlu0 %9461
      %9463 = vrot.lane.b32.xlu0 %v8039, 64
      %v9464 = vpop.permute.xlu0 %9463
      %9465 = vrot.lane.b32.xlu0 %v8043, 64
      %v9466 = vpop.permute.xlu0 %9465
      %9467 = vrot.lane.b32.xlu0 %v8045, 64
      %v9468 = vpop.permute.xlu0 %9467
      %vm9469 = vcmask 523264
      %v9470 = vsel %vm9469, %v9370, %v9372
      %v9471 = vsel %vm9469, %v9374, %v9376
      %v9472 = vsel %vm9469, %v9378, %v9380
      %v9473 = vsel %vm9469, %v9382, %v9384
      %v9474 = vsel %vm9469, %v9386, %v9388
      %v9475 = vsel %vm9469, %v9390, %v9392
      %v9476 = vsel %vm9469, %v9394, %v9396
      %v9477 = vsel %vm9469, %v9398, %v9400
      %v9478 = vsel %vm9469, %v9402, %v9404
      %v9479 = vsel %vm9469, %v9406, %v9408
      %v9480 = vsel %vm9469, %v9410, %v9412
      %v9481 = vsel %vm9469, %v9414, %v9416
      %v9482 = vsel %vm9469, %v9418, %v9420
      %v9483 = vsel %vm9469, %v9422, %v9424
      %v9484 = vsel %vm9469, %v9426, %v9428
      %v9485 = vsel %vm9469, %v9430, %v9432
      %v9486 = vsel %vm9469, %v9434, %v9436
      %v9487 = vsel %vm9469, %v9438, %v9440
      %v9488 = vsel %vm9469, %v9442, %v9444
      %v9489 = vsel %vm9469, %v9446, %v9448
      %v9490 = vsel %vm9469, %v9450, %v9452
      %v9491 = vsel %vm9469, %v9454, %v9456
      %v9492 = vsel %vm9469, %v9458, %v9460
      %v9493 = vsel %vm9469, %v9462, %v9464
      %v9494 = vsel %vm9469, %v9466, %v9468
      %9595 = vrot.lane.b32.xlu0 %v9193, 64
      %v9596 = vpop.permute.xlu0 %9595
      %9597 = vrot.lane.b32.xlu0 %v9195, 64
      %v9598 = vpop.permute.xlu0 %9597
      %9599 = vrot.lane.b32.xlu0 %v9197, 64
      %v9600 = vpop.permute.xlu0 %9599
      %9601 = vrot.lane.b32.xlu0 %v9199, 64
      %v9602 = vpop.permute.xlu0 %9601
      %9603 = vrot.lane.b32.xlu0 %v9203, 64
      %v9604 = vpop.permute.xlu0 %9603
      %9605 = vrot.lane.b32.xlu0 %v9205, 64
      %v9606 = vpop.permute.xlu0 %9605
      %9607 = vrot.lane.b32.xlu0 %v9207, 64
      %v9608 = vpop.permute.xlu0 %9607
      %9609 = vrot.lane.b32.xlu0 %v9209, 64
      %v9610 = vpop.permute.xlu0 %9609
      %9611 = vrot.lane.b32.xlu0 %v9213, 64
      %v9612 = vpop.permute.xlu0 %9611
      %9613 = vrot.lane.b32.xlu0 %v9215, 64
      %v9614 = vpop.permute.xlu0 %9613
      %9615 = vrot.lane.b32.xlu0 %v9217, 64
      %v9616 = vpop.permute.xlu0 %9615
      %9617 = vrot.lane.b32.xlu0 %v9219, 64
      %v9618 = vpop.permute.xlu0 %9617
      %9619 = vrot.lane.b32.xlu0 %v9223, 64
      %v9620 = vpop.permute.xlu0 %9619
      %9621 = vrot.lane.b32.xlu0 %v9225, 64
      %v9622 = vpop.permute.xlu0 %9621
      %9623 = vrot.lane.b32.xlu0 %v9227, 64
      %v9624 = vpop.permute.xlu0 %9623
      %9625 = vrot.lane.b32.xlu0 %v9229, 64
      %v9626 = vpop.permute.xlu0 %9625
      %9627 = vrot.lane.b32.xlu0 %v9233, 64
      %v9628 = vpop.permute.xlu0 %9627
      %9629 = vrot.lane.b32.xlu0 %v9235, 64
      %v9630 = vpop.permute.xlu0 %9629
      %9631 = vrot.lane.b32.xlu0 %v9237, 64
      %v9632 = vpop.permute.xlu0 %9631
      %9633 = vrot.lane.b32.xlu0 %v9239, 64
      %v9634 = vpop.permute.xlu0 %9633
      %9635 = vrot.lane.b32.xlu0 %v9243, 64
      %v9636 = vpop.permute.xlu0 %9635
      %9637 = vrot.lane.b32.xlu0 %v9245, 64
      %v9638 = vpop.permute.xlu0 %9637
      %9639 = vrot.lane.b32.xlu0 %v9247, 64
      %v9640 = vpop.permute.xlu0 %9639
      %9641 = vrot.lane.b32.xlu0 %v9249, 64
      %v9642 = vpop.permute.xlu0 %9641
      %9643 = vrot.lane.b32.xlu0 %v9253, 64
      %v9644 = vpop.permute.xlu0 %9643
      %9645 = vrot.lane.b32.xlu0 %v9255, 64
      %v9646 = vpop.permute.xlu0 %9645
      %9647 = vrot.lane.b32.xlu0 %v9257, 64
      %v9648 = vpop.permute.xlu0 %9647
      %9649 = vrot.lane.b32.xlu0 %v9259, 64
      %v9650 = vpop.permute.xlu0 %9649
      %9651 = vrot.lane.b32.xlu0 %v9263, 64
      %v9652 = vpop.permute.xlu0 %9651
      %9653 = vrot.lane.b32.xlu0 %v9265, 64
      %v9654 = vpop.permute.xlu0 %9653
      %9655 = vrot.lane.b32.xlu0 %v9267, 64
      %v9656 = vpop.permute.xlu0 %9655
      %9657 = vrot.lane.b32.xlu0 %v9269, 64
      %v9658 = vpop.permute.xlu0 %9657
      %9659 = vrot.lane.b32.xlu0 %v9273, 64
      %v9660 = vpop.permute.xlu0 %9659
      %9661 = vrot.lane.b32.xlu0 %v9275, 64
      %v9662 = vpop.permute.xlu0 %9661
      %9663 = vrot.lane.b32.xlu0 %v9277, 64
      %v9664 = vpop.permute.xlu0 %9663
      %9665 = vrot.lane.b32.xlu0 %v9279, 64
      %v9666 = vpop.permute.xlu0 %9665
      %9667 = vrot.lane.b32.xlu0 %v9283, 64
      %v9668 = vpop.permute.xlu0 %9667
      %9669 = vrot.lane.b32.xlu0 %v9285, 64
      %v9670 = vpop.permute.xlu0 %9669
      %9671 = vrot.lane.b32.xlu0 %v9287, 64
      %v9672 = vpop.permute.xlu0 %9671
      %9673 = vrot.lane.b32.xlu0 %v9289, 64
      %v9674 = vpop.permute.xlu0 %9673
      %9675 = vrot.lane.b32.xlu0 %v9293, 64
      %v9676 = vpop.permute.xlu0 %9675
      %9677 = vrot.lane.b32.xlu0 %v9295, 64
      %v9678 = vpop.permute.xlu0 %9677
      %9679 = vrot.lane.b32.xlu0 %v9297, 64
      %v9680 = vpop.permute.xlu0 %9679
      %9681 = vrot.lane.b32.xlu0 %v9299, 64
      %v9682 = vpop.permute.xlu0 %9681
      %9683 = vrot.lane.b32.xlu0 %v9303, 64
      %v9684 = vpop.permute.xlu0 %9683
      %9685 = vrot.lane.b32.xlu0 %v9305, 64
      %v9686 = vpop.permute.xlu0 %9685
      %9687 = vrot.lane.b32.xlu0 %v9307, 64
      %v9688 = vpop.permute.xlu0 %9687
      %9689 = vrot.lane.b32.xlu0 %v9309, 64
      %v9690 = vpop.permute.xlu0 %9689
      %9691 = vrot.lane.b32.xlu0 %v9313, 64
      %v9692 = vpop.permute.xlu0 %9691
      %9693 = vrot.lane.b32.xlu0 %v9315, 64
      %v9694 = vpop.permute.xlu0 %9693
      %v9695 = vsel %vm9469, %v9596, %v9598
      %v9696 = vsel %vm9469, %v9600, %v9602
      %v9697 = vsel %vm9469, %v9604, %v9606
      %v9698 = vsel %vm9469, %v9608, %v9610
      %v9699 = vsel %vm9469, %v9612, %v9614
      %v9700 = vsel %vm9469, %v9616, %v9618
      %v9701 = vsel %vm9469, %v9620, %v9622
      %v9702 = vsel %vm9469, %v9624, %v9626
      %v9703 = vsel %vm9469, %v9628, %v9630
      %v9704 = vsel %vm9469, %v9632, %v9634
      %v9705 = vsel %vm9469, %v9636, %v9638
      %v9706 = vsel %vm9469, %v9640, %v9642
      %v9707 = vsel %vm9469, %v9644, %v9646
      %v9708 = vsel %vm9469, %v9648, %v9650
      %v9709 = vsel %vm9469, %v9652, %v9654
      %v9710 = vsel %vm9469, %v9656, %v9658
      %v9711 = vsel %vm9469, %v9660, %v9662
      %v9712 = vsel %vm9469, %v9664, %v9666
      %v9713 = vsel %vm9469, %v9668, %v9670
      %v9714 = vsel %vm9469, %v9672, %v9674
      %v9715 = vsel %vm9469, %v9676, %v9678
      %v9716 = vsel %vm9469, %v9680, %v9682
      %v9717 = vsel %vm9469, %v9684, %v9686
      %v9718 = vsel %vm9469, %v9688, %v9690
      %v9719 = vsel %vm9469, %v9692, %v9694
      %v9770 = vsel %vm9469, %v7290, %v9370
      %v9771 = vsel %vm9469, %v7294, %v9374
      %v9772 = vsel %vm9469, %v7300, %v9378
      %v9773 = vsel %vm9469, %v7304, %v9382
      %v9774 = vsel %vm9469, %v7310, %v9386
      %v9775 = vsel %vm9469, %v7314, %v9390
      %v9776 = vsel %vm9469, %v7320, %v9394
      %v9777 = vsel %vm9469, %v7324, %v9398
      %v9778 = vsel %vm9469, %v7330, %v9402
      %v9779 = vsel %vm9469, %v7334, %v9406
      %v9780 = vsel %vm9469, %v7340, %v9410
      %v9781 = vsel %vm9469, %v7344, %v9414
      %v9782 = vsel %vm9469, %v7350, %v9418
      %v9783 = vsel %vm9469, %v7354, %v9422
      %v9784 = vsel %vm9469, %v7360, %v9426
      %v9785 = vsel %vm9469, %v7364, %v9430
      %v9786 = vsel %vm9469, %v7370, %v9434
      %v9787 = vsel %vm9469, %v7374, %v9438
      %v9788 = vsel %vm9469, %v7380, %v9442
      %v9789 = vsel %vm9469, %v7384, %v9446
      %v9790 = vsel %vm9469, %v7390, %v9450
      %v9791 = vsel %vm9469, %v7394, %v9454
      %v9792 = vsel %vm9469, %v7400, %v9458
      %v9793 = vsel %vm9469, %v7404, %v9462
      %v9794 = vsel %vm9469, %v7410, %v9466
      %v9795 = vsel %vm9469, %v8560, %v9596
      %v9796 = vsel %vm9469, %v8564, %v9600
      %v9797 = vsel %vm9469, %v8570, %v9604
      %v9798 = vsel %vm9469, %v8574, %v9608
      %v9799 = vsel %vm9469, %v8580, %v9612
      %v9800 = vsel %vm9469, %v8584, %v9616
      %v9801 = vsel %vm9469, %v8590, %v9620
      %v9802 = vsel %vm9469, %v8594, %v9624
      %v9803 = vsel %vm9469, %v8600, %v9628
      %v9804 = vsel %vm9469, %v8604, %v9632
      %v9805 = vsel %vm9469, %v8610, %v9636
      %v9806 = vsel %vm9469, %v8614, %v9640
      %v9807 = vsel %vm9469, %v8620, %v9644
      %v9808 = vsel %vm9469, %v8624, %v9648
      %v9809 = vsel %vm9469, %v8630, %v9652
      %v9810 = vsel %vm9469, %v8634, %v9656
      %v9811 = vsel %vm9469, %v8640, %v9660
      %v9812 = vsel %vm9469, %v8644, %v9664
      %v9813 = vsel %vm9469, %v8650, %v9668
      %v9814 = vsel %vm9469, %v8654, %v9672
      %v9815 = vsel %vm9469, %v8660, %v9676
      %v9816 = vsel %vm9469, %v8664, %v9680
      %v9817 = vsel %vm9469, %v8670, %v9684
      %v9818 = vsel %vm9469, %v8674, %v9688
      %v9819 = vsel %vm9469, %v8680, %v9692
      %v9820 = vmul.f32 %v7288, 0.5
      %v9821 = vmul.f32 %v9770, 0.5
      %v9822 = vmul.f32 %v9470, 0.5
      %v9823 = vmul.f32 %v8558, 0.5
      %v9824 = vmul.f32 %v9795, 0.5
      %v9825 = vmul.f32 %v9695, 0.5
      %v9826 = vmul.f32 %v7292, 0.5
      %v9827 = vmul.f32 %v9771, 0.5
      %v9828 = vmul.f32 %v9471, 0.5
      %v9829 = vmul.f32 %v8562, 0.5
      %v9830 = vmul.f32 %v9796, 0.5
      %v9831 = vmul.f32 %v9696, 0.5
      %v9832 = vmul.f32 %v7298, 0.5
      %v9833 = vmul.f32 %v9772, 0.5
      %v9834 = vmul.f32 %v9472, 0.5
      %v9835 = vmul.f32 %v8568, 0.5
      %v9836 = vmul.f32 %v9797, 0.5
      %v9837 = vmul.f32 %v9697, 0.5
      %v9838 = vmul.f32 %v7302, 0.5
      %v9839 = vmul.f32 %v9773, 0.5
      %v9840 = vmul.f32 %v9473, 0.5
      %v9841 = vmul.f32 %v8572, 0.5
      %v9842 = vmul.f32 %v9798, 0.5
      %v9843 = vmul.f32 %v9698, 0.5
      %v9844 = vmul.f32 %v7308, 0.5
      %v9845 = vmul.f32 %v9774, 0.5
      %v9846 = vmul.f32 %v9474, 0.5
      %v9847 = vmul.f32 %v8578, 0.5
      %v9848 = vmul.f32 %v9799, 0.5
      %v9849 = vmul.f32 %v9699, 0.5
      %v9850 = vmul.f32 %v7312, 0.5
      %v9851 = vmul.f32 %v9775, 0.5
      %v9852 = vmul.f32 %v9475, 0.5
      %v9853 = vmul.f32 %v8582, 0.5
      %v9854 = vmul.f32 %v9800, 0.5
      %v9855 = vmul.f32 %v9700, 0.5
      %v9856 = vmul.f32 %v7318, 0.5
      %v9857 = vmul.f32 %v9776, 0.5
      %v9858 = vmul.f32 %v9476, 0.5
      %v9859 = vmul.f32 %v8588, 0.5
      %v9860 = vmul.f32 %v9801, 0.5
      %v9861 = vmul.f32 %v9701, 0.5
      %v9862 = vmul.f32 %v7322, 0.5
      %v9863 = vmul.f32 %v9777, 0.5
      %v9864 = vmul.f32 %v9477, 0.5
      %v9865 = vmul.f32 %v8592, 0.5
      %v9866 = vmul.f32 %v9802, 0.5
      %v9867 = vmul.f32 %v9702, 0.5
      %v9868 = vmul.f32 %v7328, 0.5
      %v9869 = vmul.f32 %v9778, 0.5
      %v9870 = vmul.f32 %v9478, 0.5
      %v9871 = vmul.f32 %v8598, 0.5
      %v9872 = vmul.f32 %v9803, 0.5
      %v9873 = vmul.f32 %v9703, 0.5
      %v9874 = vmul.f32 %v7332, 0.5
      %v9875 = vmul.f32 %v9779, 0.5
      %v9876 = vmul.f32 %v9479, 0.5
      %v9877 = vmul.f32 %v8602, 0.5
      %v9878 = vmul.f32 %v9804, 0.5
      %v9879 = vmul.f32 %v9704, 0.5
      %v9880 = vmul.f32 %v7338, 0.5
      %v9881 = vmul.f32 %v9780, 0.5
      %v9882 = vmul.f32 %v9480, 0.5
      %v9883 = vmul.f32 %v8608, 0.5
      %v9884 = vmul.f32 %v9805, 0.5
      %v9885 = vmul.f32 %v9705, 0.5
      %v9886 = vmul.f32 %v7342, 0.5
      %v9887 = vmul.f32 %v9781, 0.5
      %v9888 = vmul.f32 %v9481, 0.5
      %v9889 = vmul.f32 %v8612, 0.5
      %v9890 = vmul.f32 %v9806, 0.5
      %v9891 = vmul.f32 %v9706, 0.5
      %v9892 = vmul.f32 %v7348, 0.5
      %v9893 = vmul.f32 %v9782, 0.5
      %v9894 = vmul.f32 %v9482, 0.5
      %v9895 = vmul.f32 %v8618, 0.5
      %v9896 = vmul.f32 %v9807, 0.5
      %v9897 = vmul.f32 %v9707, 0.5
      %v9898 = vmul.f32 %v7352, 0.5
      %v9899 = vmul.f32 %v9783, 0.5
      %v9900 = vmul.f32 %v9483, 0.5
      %v9901 = vmul.f32 %v8622, 0.5
      %v9902 = vmul.f32 %v9808, 0.5
      %v9903 = vmul.f32 %v9708, 0.5
      %v9904 = vmul.f32 %v7358, 0.5
      %v9905 = vmul.f32 %v9784, 0.5
      %v9906 = vmul.f32 %v9484, 0.5
      %v9907 = vmul.f32 %v8628, 0.5
      %v9908 = vmul.f32 %v9809, 0.5
      %v9909 = vmul.f32 %v9709, 0.5
      %v9910 = vmul.f32 %v7362, 0.5
      %v9911 = vmul.f32 %v9785, 0.5
      %v9912 = vmul.f32 %v9485, 0.5
      %v9913 = vmul.f32 %v8632, 0.5
      %v9914 = vmul.f32 %v9810, 0.5
      %v9915 = vmul.f32 %v9710, 0.5
      %v9916 = vmul.f32 %v7368, 0.5
      %v9917 = vmul.f32 %v9786, 0.5
      %v9918 = vmul.f32 %v9486, 0.5
      %v9919 = vmul.f32 %v8638, 0.5
      %v9920 = vmul.f32 %v9811, 0.5
      %v9921 = vmul.f32 %v9711, 0.5
      %v9922 = vmul.f32 %v7372, 0.5
      %v9923 = vmul.f32 %v9787, 0.5
      %v9924 = vmul.f32 %v9487, 0.5
      %v9925 = vmul.f32 %v8642, 0.5
      %v9926 = vmul.f32 %v9812, 0.5
      %v9927 = vmul.f32 %v9712, 0.5
      %v9928 = vmul.f32 %v7378, 0.5
      %v9929 = vmul.f32 %v9788, 0.5
      %v9930 = vmul.f32 %v9488, 0.5
      %v9931 = vmul.f32 %v8648, 0.5
      %v9932 = vmul.f32 %v9813, 0.5
      %v9933 = vmul.f32 %v9713, 0.5
      %v9934 = vmul.f32 %v7382, 0.5
      %v9935 = vmul.f32 %v9789, 0.5
      %v9936 = vmul.f32 %v9489, 0.5
      %v9937 = vmul.f32 %v8652, 0.5
      %v9938 = vmul.f32 %v9814, 0.5
      %v9939 = vmul.f32 %v9714, 0.5
      %v9940 = vmul.f32 %v7388, 0.5
      %v9941 = vmul.f32 %v9790, 0.5
      %v9942 = vmul.f32 %v9490, 0.5
      %v9943 = vmul.f32 %v8658, 0.5
      %v9944 = vmul.f32 %v9815, 0.5
      %v9945 = vmul.f32 %v9715, 0.5
      %v9946 = vmul.f32 %v7392, 0.5
      %v9947 = vmul.f32 %v9791, 0.5
      %v9948 = vmul.f32 %v9491, 0.5
      %v9949 = vmul.f32 %v8662, 0.5
      %v9950 = vmul.f32 %v9816, 0.5
      %v9951 = vmul.f32 %v9716, 0.5
      %v9952 = vmul.f32 %v7398, 0.5
      %v9953 = vmul.f32 %v9792, 0.5
      %v9954 = vmul.f32 %v9492, 0.5
      %v9955 = vmul.f32 %v8668, 0.5
      %v9956 = vmul.f32 %v9817, 0.5
      %v9957 = vmul.f32 %v9717, 0.5
      %v9958 = vmul.f32 %v7402, 0.5
      %v9959 = vmul.f32 %v9793, 0.5
      %v9960 = vmul.f32 %v9493, 0.5
      %v9961 = vmul.f32 %v8672, 0.5
      %v9962 = vmul.f32 %v9818, 0.5
      %v9963 = vmul.f32 %v9718, 0.5
      %v9964 = vmul.f32 %v7408, 0.5
      %v9965 = vmul.f32 %v9794, 0.5
      %v9966 = vmul.f32 %v9494, 0.5
      %v9967 = vmul.f32 %v8678, 0.5
      %v9968 = vmul.f32 %v9819, 0.5
      %v9969 = vmul.f32 %v9719, 0.5
      %v9970 = vtanh.pop %v9820
      %v9971 = vtanh.pop %v9821
      %v9972 = vtanh.pop %v9822
      %v9973 = vtanh.pop %v9823
      %v9974 = vtanh.pop %v9824
      %v9975 = vtanh.pop %v9825
      %v9976 = vtanh.pop %v9826
      %v9977 = vtanh.pop %v9827
      %v9978 = vtanh.pop %v9828
      %v9979 = vtanh.pop %v9829
      %v9980 = vtanh.pop %v9830
      %v9981 = vtanh.pop %v9831
      %v9982 = vtanh.pop %v9832
      %v9983 = vtanh.pop %v9833
      %v9984 = vtanh.pop %v9834
      %v9985 = vtanh.pop %v9835
      %v9986 = vtanh.pop %v9836
      %v9987 = vtanh.pop %v9837
      %v9988 = vtanh.pop %v9838
      %v9989 = vtanh.pop %v9839
      %v9990 = vtanh.pop %v9840
      %v9991 = vtanh.pop %v9841
      %v9992 = vtanh.pop %v9842
      %v9993 = vtanh.pop %v9843
      %v9994 = vtanh.pop %v9844
      %v9995 = vtanh.pop %v9845
      %v9996 = vtanh.pop %v9846
      %v9997 = vtanh.pop %v9847
      %v9998 = vtanh.pop %v9848
      %v9999 = vtanh.pop %v9849
      %v10000 = vtanh.pop %v9850
      %v10001 = vtanh.pop %v9851
      %v10002 = vtanh.pop %v9852
      %v10003 = vtanh.pop %v9853
      %v10004 = vtanh.pop %v9854
      %v10005 = vtanh.pop %v9855
      %v10006 = vtanh.pop %v9856
      %v10007 = vtanh.pop %v9857
      %v10008 = vtanh.pop %v9858
      %v10009 = vtanh.pop %v9859
      %v10010 = vtanh.pop %v9860
      %v10011 = vtanh.pop %v9861
      %v10012 = vtanh.pop %v9862
      %v10013 = vtanh.pop %v9863
      %v10014 = vtanh.pop %v9864
      %v10015 = vtanh.pop %v9865
      %v10016 = vtanh.pop %v9866
      %v10017 = vtanh.pop %v9867
      %v10018 = vtanh.pop %v9868
      %v10019 = vtanh.pop %v9869
      %v10020 = vtanh.pop %v9870
      %v10021 = vtanh.pop %v9871
      %v10022 = vtanh.pop %v9872
      %v10023 = vtanh.pop %v9873
      %v10024 = vtanh.pop %v9874
      %v10025 = vtanh.pop %v9875
      %v10026 = vtanh.pop %v9876
      %v10027 = vtanh.pop %v9877
      %v10028 = vtanh.pop %v9878
      %v10029 = vtanh.pop %v9879
      %v10030 = vtanh.pop %v9880
      %v10031 = vtanh.pop %v9881
      %v10032 = vtanh.pop %v9882
      %v10033 = vtanh.pop %v9883
      %v10034 = vtanh.pop %v9884
      %v10035 = vtanh.pop %v9885
      %v10036 = vtanh.pop %v9886
      %v10037 = vtanh.pop %v9887
      %v10038 = vtanh.pop %v9888
      %v10039 = vtanh.pop %v9889
      %v10040 = vtanh.pop %v9890
      %v10041 = vtanh.pop %v9891
      %v10042 = vtanh.pop %v9892
      %v10043 = vtanh.pop %v9893
      %v10044 = vtanh.pop %v9894
      %v10045 = vtanh.pop %v9895
      %v10046 = vtanh.pop %v9896
      %v10047 = vtanh.pop %v9897
      %v10048 = vtanh.pop %v9898
      %v10049 = vtanh.pop %v9899
      %v10050 = vtanh.pop %v9900
      %v10051 = vtanh.pop %v9901
      %v10052 = vtanh.pop %v9902
      %v10053 = vtanh.pop %v9903
      %v10054 = vtanh.pop %v9904
      %v10055 = vtanh.pop %v9905
      %v10056 = vtanh.pop %v9906
      %v10057 = vtanh.pop %v9907
      %v10058 = vtanh.pop %v9908
      %v10059 = vtanh.pop %v9909
      %v10060 = vtanh.pop %v9910
      %v10061 = vtanh.pop %v9911
      %v10062 = vtanh.pop %v9912
      %v10063 = vtanh.pop %v9913
      %v10064 = vtanh.pop %v9914
      %v10065 = vtanh.pop %v9915
      %v10066 = vtanh.pop %v9916
      %v10067 = vtanh.pop %v9917
      %v10068 = vtanh.pop %v9918
      %v10069 = vtanh.pop %v9919
      %v10070 = vtanh.pop %v9920
      %v10071 = vtanh.pop %v9921
      %v10072 = vtanh.pop %v9922
      %v10073 = vtanh.pop %v9923
      %v10074 = vtanh.pop %v9924
      %v10075 = vtanh.pop %v9925
      %v10076 = vtanh.pop %v9926
      %v10077 = vtanh.pop %v9927
      %v10078 = vtanh.pop %v9928
      %v10079 = vtanh.pop %v9929
      %v10080 = vtanh.pop %v9930
      %v10081 = vtanh.pop %v9931
      %v10082 = vtanh.pop %v9932
      %v10083 = vtanh.pop %v9933
      %v10084 = vtanh.pop %v9934
      %v10085 = vtanh.pop %v9935
      %v10086 = vtanh.pop %v9936
      %v10087 = vtanh.pop %v9937
      %v10088 = vtanh.pop %v9938
      %v10089 = vtanh.pop %v9939
      %v10090 = vtanh.pop %v9940
      %v10091 = vtanh.pop %v9941
      %v10092 = vtanh.pop %v9942
      %v10093 = vtanh.pop %v9943
      %v10094 = vtanh.pop %v9944
      %v10095 = vtanh.pop %v9945
      %v10096 = vtanh.pop %v9946
      %v10097 = vtanh.pop %v9947
      %v10098 = vtanh.pop %v9948
      %v10099 = vtanh.pop %v9949
      %v10100 = vtanh.pop %v9950
      %v10101 = vtanh.pop %v9951
      %v10102 = vtanh.pop %v9952
      %v10103 = vtanh.pop %v9953
      %v10104 = vtanh.pop %v9954
      %v10105 = vtanh.pop %v9955
      %v10106 = vtanh.pop %v9956
      %v10107 = vtanh.pop %v9957
      %v10108 = vtanh.pop %v9958
      %v10109 = vtanh.pop %v9959
      %v10110 = vtanh.pop %v9960
      %v10111 = vtanh.pop %v9961
      %v10112 = vtanh.pop %v9962
      %v10113 = vtanh.pop %v9963
      %v10114 = vtanh.pop %v9964
      %v10115 = vtanh.pop %v9965
      %v10116 = vtanh.pop %v9966
      %v10117 = vtanh.pop %v9967
      %v10118 = vtanh.pop %v9968
      %v10119 = vtanh.pop %v9969
      %v10120 = vadd.f32 %v9970, 1.0
      %v10121 = vadd.f32 %v9971, 1.0
      %v10122 = vadd.f32 %v9972, 1.0
      %v10123 = vadd.f32 %v9973, 1.0
      %v10124 = vadd.f32 %v9974, 1.0
      %v10125 = vadd.f32 %v9975, 1.0
      %v10126 = vadd.f32 %v9976, 1.0
      %v10127 = vadd.f32 %v9977, 1.0
      %v10128 = vadd.f32 %v9978, 1.0
      %v10129 = vadd.f32 %v9979, 1.0
      %v10130 = vadd.f32 %v9980, 1.0
      %v10131 = vadd.f32 %v9981, 1.0
      %v10132 = vadd.f32 %v9982, 1.0
      %v10133 = vadd.f32 %v9983, 1.0
      %v10134 = vadd.f32 %v9984, 1.0
      %v10135 = vadd.f32 %v9985, 1.0
      %v10136 = vadd.f32 %v9986, 1.0
      %v10137 = vadd.f32 %v9987, 1.0
      %v10138 = vadd.f32 %v9988, 1.0
      %v10139 = vadd.f32 %v9989, 1.0
      %v10140 = vadd.f32 %v9990, 1.0
      %v10141 = vadd.f32 %v9991, 1.0
      %v10142 = vadd.f32 %v9992, 1.0
      %v10143 = vadd.f32 %v9993, 1.0
      %v10144 = vadd.f32 %v9994, 1.0
      %v10145 = vadd.f32 %v9995, 1.0
      %v10146 = vadd.f32 %v9996, 1.0
      %v10147 = vadd.f32 %v9997, 1.0
      %v10148 = vadd.f32 %v9998, 1.0
      %v10149 = vadd.f32 %v9999, 1.0
      %v10150 = vadd.f32 %v10000, 1.0
      %v10151 = vadd.f32 %v10001, 1.0
      %v10152 = vadd.f32 %v10002, 1.0
      %v10153 = vadd.f32 %v10003, 1.0
      %v10154 = vadd.f32 %v10004, 1.0
      %v10155 = vadd.f32 %v10005, 1.0
      %v10156 = vadd.f32 %v10006, 1.0
      %v10157 = vadd.f32 %v10007, 1.0
      %v10158 = vadd.f32 %v10008, 1.0
      %v10159 = vadd.f32 %v10009, 1.0
      %v10160 = vadd.f32 %v10010, 1.0
      %v10161 = vadd.f32 %v10011, 1.0
      %v10162 = vadd.f32 %v10012, 1.0
      %v10163 = vadd.f32 %v10013, 1.0
      %v10164 = vadd.f32 %v10014, 1.0
      %v10165 = vadd.f32 %v10015, 1.0
      %v10166 = vadd.f32 %v10016, 1.0
      %v10167 = vadd.f32 %v10017, 1.0
      %v10168 = vadd.f32 %v10018, 1.0
      %v10169 = vadd.f32 %v10019, 1.0
      %v10170 = vadd.f32 %v10020, 1.0
      %v10171 = vadd.f32 %v10021, 1.0
      %v10172 = vadd.f32 %v10022, 1.0
      %v10173 = vadd.f32 %v10023, 1.0
      %v10174 = vadd.f32 %v10024, 1.0
      %v10175 = vadd.f32 %v10025, 1.0
      %v10176 = vadd.f32 %v10026, 1.0
      %v10177 = vadd.f32 %v10027, 1.0
      %v10178 = vadd.f32 %v10028, 1.0
      %v10179 = vadd.f32 %v10029, 1.0
      %v10180 = vadd.f32 %v10030, 1.0
      %v10181 = vadd.f32 %v10031, 1.0
      %v10182 = vadd.f32 %v10032, 1.0
      %v10183 = vadd.f32 %v10033, 1.0
      %v10184 = vadd.f32 %v10034, 1.0
      %v10185 = vadd.f32 %v10035, 1.0
      %v10186 = vadd.f32 %v10036, 1.0
      %v10187 = vadd.f32 %v10037, 1.0
      %v10188 = vadd.f32 %v10038, 1.0
      %v10189 = vadd.f32 %v10039, 1.0
      %v10190 = vadd.f32 %v10040, 1.0
      %v10191 = vadd.f32 %v10041, 1.0
      %v10192 = vadd.f32 %v10042, 1.0
      %v10193 = vadd.f32 %v10043, 1.0
      %v10194 = vadd.f32 %v10044, 1.0
      %v10195 = vadd.f32 %v10045, 1.0
      %v10196 = vadd.f32 %v10046, 1.0
      %v10197 = vadd.f32 %v10047, 1.0
      %v10198 = vadd.f32 %v10048, 1.0
      %v10199 = vadd.f32 %v10049, 1.0
      %v10200 = vadd.f32 %v10050, 1.0
      %v10201 = vadd.f32 %v10051, 1.0
      %v10202 = vadd.f32 %v10052, 1.0
      %v10203 = vadd.f32 %v10053, 1.0
      %v10204 = vadd.f32 %v10054, 1.0
      %v10205 = vadd.f32 %v10055, 1.0
      %v10206 = vadd.f32 %v10056, 1.0
      %v10207 = vadd.f32 %v10057, 1.0
      %v10208 = vadd.f32 %v10058, 1.0
      %v10209 = vadd.f32 %v10059, 1.0
      %v10210 = vadd.f32 %v10060, 1.0
      %v10211 = vadd.f32 %v10061, 1.0
      %v10212 = vadd.f32 %v10062, 1.0
      %v10213 = vadd.f32 %v10063, 1.0
      %v10214 = vadd.f32 %v10064, 1.0
      %v10215 = vadd.f32 %v10065, 1.0
      %v10216 = vadd.f32 %v10066, 1.0
      %v10217 = vadd.f32 %v10067, 1.0
      %v10218 = vadd.f32 %v10068, 1.0
      %v10219 = vadd.f32 %v10069, 1.0
      %v10220 = vadd.f32 %v10070, 1.0
      %v10221 = vadd.f32 %v10071, 1.0
      %v10222 = vadd.f32 %v10072, 1.0
      %v10223 = vadd.f32 %v10073, 1.0
      %v10224 = vadd.f32 %v10074, 1.0
      %v10225 = vadd.f32 %v10075, 1.0
      %v10226 = vadd.f32 %v10076, 1.0
      %v10227 = vadd.f32 %v10077, 1.0
      %v10228 = vadd.f32 %v10078, 1.0
      %v10229 = vadd.f32 %v10079, 1.0
      %v10230 = vadd.f32 %v10080, 1.0
      %v10231 = vadd.f32 %v10081, 1.0
      %v10232 = vadd.f32 %v10082, 1.0
      %v10233 = vadd.f32 %v10083, 1.0
      %v10234 = vadd.f32 %v10084, 1.0
      %v10235 = vadd.f32 %v10085, 1.0
      %v10236 = vadd.f32 %v10086, 1.0
      %v10237 = vadd.f32 %v10087, 1.0
      %v10238 = vadd.f32 %v10088, 1.0
      %v10239 = vadd.f32 %v10089, 1.0
      %v10240 = vadd.f32 %v10090, 1.0
      %v10241 = vadd.f32 %v10091, 1.0
      %v10242 = vadd.f32 %v10092, 1.0
      %v10243 = vadd.f32 %v10093, 1.0
      %v10244 = vadd.f32 %v10094, 1.0
      %v10245 = vadd.f32 %v10095, 1.0
      %v10246 = vadd.f32 %v10096, 1.0
      %v10247 = vadd.f32 %v10097, 1.0
      %v10248 = vadd.f32 %v10098, 1.0
      %v10249 = vadd.f32 %v10099, 1.0
      %v10250 = vadd.f32 %v10100, 1.0
      %v10251 = vadd.f32 %v10101, 1.0
      %v10252 = vadd.f32 %v10102, 1.0
      %v10253 = vadd.f32 %v10103, 1.0
      %v10254 = vadd.f32 %v10104, 1.0
      %v10255 = vadd.f32 %v10105, 1.0
      %v10256 = vadd.f32 %v10106, 1.0
      %v10257 = vadd.f32 %v10107, 1.0
      %v10258 = vadd.f32 %v10108, 1.0
      %v10259 = vadd.f32 %v10109, 1.0
      %v10260 = vadd.f32 %v10110, 1.0
      %v10261 = vadd.f32 %v10111, 1.0
      %v10262 = vadd.f32 %v10112, 1.0
      %v10263 = vadd.f32 %v10113, 1.0
      %v10264 = vadd.f32 %v10114, 1.0
      %v10265 = vadd.f32 %v10115, 1.0
      %v10266 = vadd.f32 %v10116, 1.0
      %v10267 = vadd.f32 %v10117, 1.0
      %v10268 = vadd.f32 %v10118, 1.0
      %v10269 = vadd.f32 %v10119, 1.0
      %v10270 = vmul.f32 %v10120, 0.5
      %v10271 = vmul.f32 %v10121, 0.5
      %v10272 = vmul.f32 %v10122, 0.5
      %v10273 = vmul.f32 %v10123, 0.5
      %v10274 = vmul.f32 %v10124, 0.5
      %v10275 = vmul.f32 %v10125, 0.5
      %v10276 = vmul.f32 %v10126, 0.5
      %v10277 = vmul.f32 %v10127, 0.5
      %v10278 = vmul.f32 %v10128, 0.5
      %v10279 = vmul.f32 %v10129, 0.5
      %v10280 = vmul.f32 %v10130, 0.5
      %v10281 = vmul.f32 %v10131, 0.5
      %v10282 = vmul.f32 %v10132, 0.5
      %v10283 = vmul.f32 %v10133, 0.5
      %v10284 = vmul.f32 %v10134, 0.5
      %v10285 = vmul.f32 %v10135, 0.5
      %v10286 = vmul.f32 %v10136, 0.5
      %v10287 = vmul.f32 %v10137, 0.5
      %v10288 = vmul.f32 %v10138, 0.5
      %v10289 = vmul.f32 %v10139, 0.5
      %v10290 = vmul.f32 %v10140, 0.5
      %v10291 = vmul.f32 %v10141, 0.5
      %v10292 = vmul.f32 %v10142, 0.5
      %v10293 = vmul.f32 %v10143, 0.5
      %v10294 = vmul.f32 %v10144, 0.5
      %v10295 = vmul.f32 %v10145, 0.5
      %v10296 = vmul.f32 %v10146, 0.5
      %v10297 = vmul.f32 %v10147, 0.5
      %v10298 = vmul.f32 %v10148, 0.5
      %v10299 = vmul.f32 %v10149, 0.5
      %v10300 = vmul.f32 %v10150, 0.5
      %v10301 = vmul.f32 %v10151, 0.5
      %v10302 = vmul.f32 %v10152, 0.5
      %v10303 = vmul.f32 %v10153, 0.5
      %v10304 = vmul.f32 %v10154, 0.5
      %v10305 = vmul.f32 %v10155, 0.5
      %v10306 = vmul.f32 %v10156, 0.5
      %v10307 = vmul.f32 %v10157, 0.5
      %v10308 = vmul.f32 %v10158, 0.5
      %v10309 = vmul.f32 %v10159, 0.5
      %v10310 = vmul.f32 %v10160, 0.5
      %v10311 = vmul.f32 %v10161, 0.5
      %v10312 = vmul.f32 %v10162, 0.5
      %v10313 = vmul.f32 %v10163, 0.5
      %v10314 = vmul.f32 %v10164, 0.5
      %v10315 = vmul.f32 %v10165, 0.5
      %v10316 = vmul.f32 %v10166, 0.5
      %v10317 = vmul.f32 %v10167, 0.5
      %v10318 = vmul.f32 %v10168, 0.5
      %v10319 = vmul.f32 %v10169, 0.5
      %v10320 = vmul.f32 %v10170, 0.5
      %v10321 = vmul.f32 %v10171, 0.5
      %v10322 = vmul.f32 %v10172, 0.5
      %v10323 = vmul.f32 %v10173, 0.5
      %v10324 = vmul.f32 %v10174, 0.5
      %v10325 = vmul.f32 %v10175, 0.5
      %v10326 = vmul.f32 %v10176, 0.5
      %v10327 = vmul.f32 %v10177, 0.5
      %v10328 = vmul.f32 %v10178, 0.5
      %v10329 = vmul.f32 %v10179, 0.5
      %v10330 = vmul.f32 %v10180, 0.5
      %v10331 = vmul.f32 %v10181, 0.5
      %v10332 = vmul.f32 %v10182, 0.5
      %v10333 = vmul.f32 %v10183, 0.5
      %v10334 = vmul.f32 %v10184, 0.5
      %v10335 = vmul.f32 %v10185, 0.5
      %v10336 = vmul.f32 %v10186, 0.5
      %v10337 = vmul.f32 %v10187, 0.5
      %v10338 = vmul.f32 %v10188, 0.5
      %v10339 = vmul.f32 %v10189, 0.5
      %v10340 = vmul.f32 %v10190, 0.5
      %v10341 = vmul.f32 %v10191, 0.5
      %v10342 = vmul.f32 %v10192, 0.5
      %v10343 = vmul.f32 %v10193, 0.5
      %v10344 = vmul.f32 %v10194, 0.5
      %v10345 = vmul.f32 %v10195, 0.5
      %v10346 = vmul.f32 %v10196, 0.5
      %v10347 = vmul.f32 %v10197, 0.5
      %v10348 = vmul.f32 %v10198, 0.5
      %v10349 = vmul.f32 %v10199, 0.5
      %v10350 = vmul.f32 %v10200, 0.5
      %v10351 = vmul.f32 %v10201, 0.5
      %v10352 = vmul.f32 %v10202, 0.5
      %v10353 = vmul.f32 %v10203, 0.5
      %v10354 = vmul.f32 %v10204, 0.5
      %v10355 = vmul.f32 %v10205, 0.5
      %v10356 = vmul.f32 %v10206, 0.5
      %v10357 = vmul.f32 %v10207, 0.5
      %v10358 = vmul.f32 %v10208, 0.5
      %v10359 = vmul.f32 %v10209, 0.5
      %v10360 = vmul.f32 %v10210, 0.5
      %v10361 = vmul.f32 %v10211, 0.5
      %v10362 = vmul.f32 %v10212, 0.5
      %v10363 = vmul.f32 %v10213, 0.5
      %v10364 = vmul.f32 %v10214, 0.5
      %v10365 = vmul.f32 %v10215, 0.5
      %v10366 = vmul.f32 %v10216, 0.5
      %v10367 = vmul.f32 %v10217, 0.5
      %v10368 = vmul.f32 %v10218, 0.5
      %v10369 = vmul.f32 %v10219, 0.5
      %v10370 = vmul.f32 %v10220, 0.5
      %v10371 = vmul.f32 %v10221, 0.5
      %v10372 = vmul.f32 %v10222, 0.5
      %v10373 = vmul.f32 %v10223, 0.5
      %v10374 = vmul.f32 %v10224, 0.5
      %v10375 = vmul.f32 %v10225, 0.5
      %v10376 = vmul.f32 %v10226, 0.5
      %v10377 = vmul.f32 %v10227, 0.5
      %v10378 = vmul.f32 %v10228, 0.5
      %v10379 = vmul.f32 %v10229, 0.5
      %v10380 = vmul.f32 %v10230, 0.5
      %v10381 = vmul.f32 %v10231, 0.5
      %v10382 = vmul.f32 %v10232, 0.5
      %v10383 = vmul.f32 %v10233, 0.5
      %v10384 = vmul.f32 %v10234, 0.5
      %v10385 = vmul.f32 %v10235, 0.5
      %v10386 = vmul.f32 %v10236, 0.5
      %v10387 = vmul.f32 %v10237, 0.5
      %v10388 = vmul.f32 %v10238, 0.5
      %v10389 = vmul.f32 %v10239, 0.5
      %v10390 = vmul.f32 %v10240, 0.5
      %v10391 = vmul.f32 %v10241, 0.5
      %v10392 = vmul.f32 %v10242, 0.5
      %v10393 = vmul.f32 %v10243, 0.5
      %v10394 = vmul.f32 %v10244, 0.5
      %v10395 = vmul.f32 %v10245, 0.5
      %v10396 = vmul.f32 %v10246, 0.5
      %v10397 = vmul.f32 %v10247, 0.5
      %v10398 = vmul.f32 %v10248, 0.5
      %v10399 = vmul.f32 %v10249, 0.5
      %v10400 = vmul.f32 %v10250, 0.5
      %v10401 = vmul.f32 %v10251, 0.5
      %v10402 = vmul.f32 %v10252, 0.5
      %v10403 = vmul.f32 %v10253, 0.5
      %v10404 = vmul.f32 %v10254, 0.5
      %v10405 = vmul.f32 %v10255, 0.5
      %v10406 = vmul.f32 %v10256, 0.5
      %v10407 = vmul.f32 %v10257, 0.5
      %v10408 = vmul.f32 %v10258, 0.5
      %v10409 = vmul.f32 %v10259, 0.5
      %v10410 = vmul.f32 %v10260, 0.5
      %v10411 = vmul.f32 %v10261, 0.5
      %v10412 = vmul.f32 %v10262, 0.5
      %v10413 = vmul.f32 %v10263, 0.5
      %v10414 = vmul.f32 %v10264, 0.5
      %v10415 = vmul.f32 %v10265, 0.5
      %v10416 = vmul.f32 %v10266, 0.5
      %v10417 = vmul.f32 %v10267, 0.5
      %v10418 = vmul.f32 %v10268, 0.5
      %v10419 = vmul.f32 %v10269, 0.5
      %10420 = vst [vmem:[%s359] sm:$0xff] %v10270
      %10421 = vst [vmem:[%s359 + $0x8] sm:$0xff] %v10271
      %10422 = vst [vmem:[%s359 + $0x10] sm:$0xff] %v10272
      %10423 = vst [vmem:[%s359 + $0x18] sm:$0xff] %v10273
      %10424 = vst [vmem:[%s359 + $0x20] sm:$0xff] %v10274
      %10425 = vst [vmem:[%s359 + $0x28] sm:$0xff] %v10275
      %10426 = vst [vmem:[%s359 + $0x30] sm:$0xff] %v10276
      %10427 = vst [vmem:[%s359 + $0x38] sm:$0xff] %v10277
      %10428 = vst [vmem:[%s359 + $0x40] sm:$0xff] %v10278
      %10429 = vst [vmem:[%s359 + $0x48] sm:$0xff] %v10279
      %10430 = vst [vmem:[%s359 + $0x50] sm:$0xff] %v10280
      %10431 = vst [vmem:[%s359 + $0x58] sm:$0xff] %v10281
      %10432 = vst [vmem:[%s359 + $0x60] sm:$0xff] %v10282
      %10433 = vst [vmem:[%s359 + $0x68] sm:$0xff] %v10283
      %10434 = vst [vmem:[%s359 + $0x70] sm:$0xff] %v10284
      %10435 = vst [vmem:[%s359 + $0x78] sm:$0xff] %v10285
      %10436 = vst [vmem:[%s359 + $0x80] sm:$0xff] %v10286
      %10437 = vst [vmem:[%s359 + $0x88] sm:$0xff] %v10287
      %10438 = vst [vmem:[%s359 + $0x90] sm:$0xff] %v10288
      %10439 = vst [vmem:[%s359 + $0x98] sm:$0xff] %v10289
      %10440 = vst [vmem:[%s359 + $0xa0] sm:$0xff] %v10290
      %10441 = vst [vmem:[%s359 + $0xa8] sm:$0xff] %v10291
      %10442 = vst [vmem:[%s359 + $0xb0] sm:$0xff] %v10292
      %10443 = vst [vmem:[%s359 + $0xb8] sm:$0xff] %v10293
      %10444 = vst [vmem:[%s359 + $0xc0] sm:$0xff] %v10294
      %10445 = vst [vmem:[%s359 + $0xc8] sm:$0xff] %v10295
      %10446 = vst [vmem:[%s359 + $0xd0] sm:$0xff] %v10296
      %10447 = vst [vmem:[%s359 + $0xd8] sm:$0xff] %v10297
      %10448 = vst [vmem:[%s359 + $0xe0] sm:$0xff] %v10298
      %10449 = vst [vmem:[%s359 + $0xe8] sm:$0xff] %v10299
      %10450 = vst [vmem:[%s359 + $0xf0] sm:$0xff] %v10300
      %10451 = vst [vmem:[%s359 + $0xf8] sm:$0xff] %v10301
      %10452 = vst [vmem:[%s359 + $0x100] sm:$0xff] %v10302
      %10453 = vst [vmem:[%s359 + $0x108] sm:$0xff] %v10303
      %10454 = vst [vmem:[%s359 + $0x110] sm:$0xff] %v10304
      %10455 = vst [vmem:[%s359 + $0x118] sm:$0xff] %v10305
      %10456 = vst [vmem:[%s359 + $0x120] sm:$0xff] %v10306
      %10457 = vst [vmem:[%s359 + $0x128] sm:$0xff] %v10307
      %10458 = vst [vmem:[%s359 + $0x130] sm:$0xff] %v10308
      %10459 = vst [vmem:[%s359 + $0x138] sm:$0xff] %v10309
      %10460 = vst [vmem:[%s359 + $0x140] sm:$0xff] %v10310
      %10461 = vst [vmem:[%s359 + $0x148] sm:$0xff] %v10311
      %10462 = vst [vmem:[%s359 + $0x150] sm:$0xff] %v10312
      %10463 = vst [vmem:[%s359 + $0x158] sm:$0xff] %v10313
      %10464 = vst [vmem:[%s359 + $0x160] sm:$0xff] %v10314
      %10465 = vst [vmem:[%s359 + $0x168] sm:$0xff] %v10315
      %10466 = vst [vmem:[%s359 + $0x170] sm:$0xff] %v10316
      %10467 = vst [vmem:[%s359 + $0x178] sm:$0xff] %v10317
      %10468 = vst [vmem:[%s359 + $0x180] sm:$0xff] %v10318
      %10469 = vst [vmem:[%s359 + $0x188] sm:$0xff] %v10319
      %10470 = vst [vmem:[%s359 + $0x190] sm:$0xff] %v10320
      %10471 = vst [vmem:[%s359 + $0x198] sm:$0xff] %v10321
      %10472 = vst [vmem:[%s359 + $0x1a0] sm:$0xff] %v10322
      %10473 = vst [vmem:[%s359 + $0x1a8] sm:$0xff] %v10323
      %10474 = vst [vmem:[%s359 + $0x1b0] sm:$0xff] %v10324
      %10475 = vst [vmem:[%s359 + $0x1b8] sm:$0xff] %v10325
      %10476 = vst [vmem:[%s359 + $0x1c0] sm:$0xff] %v10326
      %10477 = vst [vmem:[%s359 + $0x1c8] sm:$0xff] %v10327
      %10478 = vst [vmem:[%s359 + $0x1d0] sm:$0xff] %v10328
      %10479 = vst [vmem:[%s359 + $0x1d8] sm:$0xff] %v10329
      %10480 = vst [vmem:[%s359 + $0x1e0] sm:$0xff] %v10330
      %10481 = vst [vmem:[%s359 + $0x1e8] sm:$0xff] %v10331
      %10482 = vst [vmem:[%s359 + $0x1f0] sm:$0xff] %v10332
      %10483 = vst [vmem:[%s359 + $0x1f8] sm:$0xff] %v10333
      %10484 = vst [vmem:[%s359 + $0x200] sm:$0xff] %v10334
      %10485 = vst [vmem:[%s359 + $0x208] sm:$0xff] %v10335
      %10486 = vst [vmem:[%s359 + $0x210] sm:$0xff] %v10336
      %10487 = vst [vmem:[%s359 + $0x218] sm:$0xff] %v10337
      %10488 = vst [vmem:[%s359 + $0x220] sm:$0xff] %v10338
      %10489 = vst [vmem:[%s359 + $0x228] sm:$0xff] %v10339
      %10490 = vst [vmem:[%s359 + $0x230] sm:$0xff] %v10340
      %10491 = vst [vmem:[%s359 + $0x238] sm:$0xff] %v10341
      %10492 = vst [vmem:[%s359 + $0x240] sm:$0xff] %v10342
      %10493 = vst [vmem:[%s359 + $0x248] sm:$0xff] %v10343
      %10494 = vst [vmem:[%s359 + $0x250] sm:$0xff] %v10344
      %10495 = vst [vmem:[%s359 + $0x258] sm:$0xff] %v10345
      %10496 = vst [vmem:[%s359 + $0x260] sm:$0xff] %v10346
      %10497 = vst [vmem:[%s359 + $0x268] sm:$0xff] %v10347
      %10498 = vst [vmem:[%s359 + $0x270] sm:$0xff] %v10348
      %10499 = vst [vmem:[%s359 + $0x278] sm:$0xff] %v10349
      %10500 = vst [vmem:[%s359 + $0x280] sm:$0xff] %v10350
      %10501 = vst [vmem:[%s359 + $0x288] sm:$0xff] %v10351
      %10502 = vst [vmem:[%s359 + $0x290] sm:$0xff] %v10352
      %10503 = vst [vmem:[%s359 + $0x298] sm:$0xff] %v10353
      %10504 = vst [vmem:[%s359 + $0x2a0] sm:$0xff] %v10354
      %10505 = vst [vmem:[%s359 + $0x2a8] sm:$0xff] %v10355
      %10506 = vst [vmem:[%s359 + $0x2b0] sm:$0xff] %v10356
      %10507 = vst [vmem:[%s359 + $0x2b8] sm:$0xff] %v10357
      %10508 = vst [vmem:[%s359 + $0x2c0] sm:$0xff] %v10358
      %10509 = vst [vmem:[%s359 + $0x2c8] sm:$0xff] %v10359
      %10510 = vst [vmem:[%s359 + $0x2d0] sm:$0xff] %v10360
      %10511 = vst [vmem:[%s359 + $0x2d8] sm:$0xff] %v10361
      %10512 = vst [vmem:[%s359 + $0x2e0] sm:$0xff] %v10362
      %10513 = vst [vmem:[%s359 + $0x2e8] sm:$0xff] %v10363
      %10514 = vst [vmem:[%s359 + $0x2f0] sm:$0xff] %v10364
      %10515 = vst [vmem:[%s359 + $0x2f8] sm:$0xff] %v10365
      %10516 = vst [vmem:[%s359 + $0x300] sm:$0xff] %v10366
      %10517 = vst [vmem:[%s359 + $0x308] sm:$0xff] %v10367
      %10518 = vst [vmem:[%s359 + $0x310] sm:$0xff] %v10368
      %10519 = vst [vmem:[%s359 + $0x318] sm:$0xff] %v10369
      %10520 = vst [vmem:[%s359 + $0x320] sm:$0xff] %v10370
      %10521 = vst [vmem:[%s359 + $0x328] sm:$0xff] %v10371
      %10522 = vst [vmem:[%s359 + $0x330] sm:$0xff] %v10372
      %10523 = vst [vmem:[%s359 + $0x338] sm:$0xff] %v10373
      %10524 = vst [vmem:[%s359 + $0x340] sm:$0xff] %v10374
      %10525 = vst [vmem:[%s359 + $0x348] sm:$0xff] %v10375
      %10526 = vst [vmem:[%s359 + $0x350] sm:$0xff] %v10376
      %10527 = vst [vmem:[%s359 + $0x358] sm:$0xff] %v10377
      %10528 = vst [vmem:[%s359 + $0x360] sm:$0xff] %v10378
      %10529 = vst [vmem:[%s359 + $0x368] sm:$0xff] %v10379
      %10530 = vst [vmem:[%s359 + $0x370] sm:$0xff] %v10380
      %10531 = vst [vmem:[%s359 + $0x378] sm:$0xff] %v10381
      %10532 = vst [vmem:[%s359 + $0x380] sm:$0xff] %v10382
      %10533 = vst [vmem:[%s359 + $0x388] sm:$0xff] %v10383
      %10534 = vst [vmem:[%s359 + $0x390] sm:$0xff] %v10384
      %10535 = vst [vmem:[%s359 + $0x398] sm:$0xff] %v10385
      %10536 = vst [vmem:[%s359 + $0x3a0] sm:$0xff] %v10386
      %10537 = vst [vmem:[%s359 + $0x3a8] sm:$0xff] %v10387
      %10538 = vst [vmem:[%s359 + $0x3b0] sm:$0xff] %v10388
      %10539 = vst [vmem:[%s359 + $0x3b8] sm:$0xff] %v10389
      %10540 = vst [vmem:[%s359 + $0x3c0] sm:$0xff] %v10390
      %10541 = vst [vmem:[%s359 + $0x3c8] sm:$0xff] %v10391
      %10542 = vst [vmem:[%s359 + $0x3d0] sm:$0xff] %v10392
      %10543 = vst [vmem:[%s359 + $0x3d8] sm:$0xff] %v10393
      %10544 = vst [vmem:[%s359 + $0x3e0] sm:$0xff] %v10394
      %10545 = vst [vmem:[%s359 + $0x3e8] sm:$0xff] %v10395
      %10546 = vst [vmem:[%s359 + $0x3f0] sm:$0xff] %v10396
      %10547 = vst [vmem:[%s359 + $0x3f8] sm:$0xff] %v10397
      %10548 = vst [vmem:[%s359 + $0x400] sm:$0xff] %v10398
      %10549 = vst [vmem:[%s359 + $0x408] sm:$0xff] %v10399
      %10550 = vst [vmem:[%s359 + $0x410] sm:$0xff] %v10400
      %10551 = vst [vmem:[%s359 + $0x418] sm:$0xff] %v10401
      %10552 = vst [vmem:[%s359 + $0x420] sm:$0xff] %v10402
      %10553 = vst [vmem:[%s359 + $0x428] sm:$0xff] %v10403
      %10554 = vst [vmem:[%s359 + $0x430] sm:$0xff] %v10404
      %10555 = vst [vmem:[%s359 + $0x438] sm:$0xff] %v10405
      %10556 = vst [vmem:[%s359 + $0x440] sm:$0xff] %v10406
      %10557 = vst [vmem:[%s359 + $0x448] sm:$0xff] %v10407
      %10558 = vst [vmem:[%s359 + $0x450] sm:$0xff] %v10408
      %10559 = vst [vmem:[%s359 + $0x458] sm:$0xff] %v10409
      %10560 = vst [vmem:[%s359 + $0x460] sm:$0xff] %v10410
      %10561 = vst [vmem:[%s359 + $0x468] sm:$0xff] %v10411
      %10562 = vst [vmem:[%s359 + $0x470] sm:$0xff] %v10412
      %10563 = vst [vmem:[%s359 + $0x478] sm:$0xff] %v10413
      %10564 = vst [vmem:[%s359 + $0x480] sm:$0xf] %v10414
      %10565 = vst [vmem:[%s359 + $0x488] sm:$0xf] %v10415
      %10566 = vst [vmem:[%s359 + $0x490] sm:$0xf] %v10416
      %10567 = vst [vmem:[%s359 + $0x498] sm:$0xf] %v10417
      %10568 = vst [vmem:[%s359 + $0x4a0] sm:$0xf] %v10418
      %10569 = vst [vmem:[%s359 + $0x4a8] sm:$0xf] %v10419
      %p10570 = scmp.lt.s32.totalorder %s21, 1
      %s10571 = scalar_select %p10570, %s21, 1
      %s10572 = smul.addr %s10571, 150
      %s10573 = smul.addr %s10572, 8
      %s10574 = scalar_lea.vmem %s10, %s10573
      // Predicated region
      $region61: #{forward.1} parent=59 // pred_check
        %p10575 = pneg %p254
      $region62: #{forward.1} parent=59 // pred_check_branch
        %10577 = sbr.rel (%p10575) target = $region64
      $region63: #{forward.1} parent=59 // pred_region
        _
      $region64: #{forward.1} parent=59 // pred_fallthru
        _
    $region60: #{forward.1} parent=5 // pred_fallthru
      _
    %p10578 = scmp.le.s32.totalorder 2, %s16
    // Predicated region
    $region65: #{forward.1} parent=5 // pred_check
      %p10579 = pneg %p10578
    $region66: #{forward.1} parent=5 // pred_check_branch
      %10581 = sbr.rel (%p10579) target = $region68
    $region67: #{forward.1} parent=5 // pred_region
      %s10582 = ssub.s32 %s16, 2
      // Predicated region
      $region69: #{forward.1} parent=67 // pred_check
        %p10583 = pneg %p260
      $region70: #{forward.1} parent=67 // pred_check_branch
        %10585 = sbr.rel (%p10583) target = $region72
      $region71: #{forward.1} parent=67 // pred_region
        %p10586 = scmp.lt.s32.totalorder %s22, 1
        %s10587 = scalar_select %p10586, %s22, 1
        %s10588 = smul.addr %s10587, 150
        %s10589 = smul.addr %s10588, 8
        %s10590 = scalar_lea.vmem %s10, %s10589
      $region72: #{forward.1} parent=67 // pred_fallthru
        _
    $region68: #{forward.1} parent=5 // pred_fallthru
      _
  $region6: #{forward.1} parent=0 // loop_footer
    %s20 = sadd.s32 1, %s16
  $region7: #{forward.1} parent=0 // loop_footer_branch
    %15 = sbr.rel target = $region3
  $region8: #{forward.1} parent=0 // loop_exit
    _

</llo_original>
